<compile_context>
chip_gen: v7x
topology: tpu7x:2x2x1
jax: 0.10.0
libtpu: 0.0.40
codegen_flags: <defaults>
</compile_context>

<pallas_src>
import jax
import jax.numpy as jnp
from jax.experimental import pallas as pl
from jax.experimental.pallas import tpu as pltpu


# ----------------------------------------------------------------------------
# Encoder configuration (matches the PyTorch module)
# ----------------------------------------------------------------------------
LAYER_CFGS = [
    dict(ic=4,  oc=64, ksize=(2, 5), stride=(1, 2), pad=(0, 0, 1, 0)),
    dict(ic=64, oc=64, ksize=(2, 3), stride=(1, 2), pad=(0, 0, 1, 0)),
    dict(ic=64, oc=64, ksize=(2, 3), stride=(1, 2), pad=(0, 0, 1, 0)),
    dict(ic=64, oc=64, ksize=(2, 3), stride=(1, 2), pad=(0, 0, 1, 0)),
    dict(ic=64, oc=64, ksize=(2, 3), stride=(1, 2), pad=(0, 0, 1, 0)),
]
IN_EPS = 1e-5      # PyTorch InstanceNorm2d default
OCP = 128          # padded output channels (one full lane tile); real OC = 64


def _round_up(x, m):
    return ((x + m - 1) // m) * m


# ----------------------------------------------------------------------------
# Fused per-layer kernel:
#   acc = P @ [Wc | Wg] + [bc | bg]        (MXU, f32 accumulation)
#   y   = acc[:, :128] * sigmoid(acc[:, 128:])
#   out = PReLU(InstanceNorm_affine(y))    (per-sample stats over the S rows)
# One grid step == one sample; block covers the sample's whole (S, Kp) patch slab.
# ----------------------------------------------------------------------------
def _fused_layer_kernel(p_ref, w_ref, b_ref, gm_ref, bt_ref, al_ref, o_ref):
    acc = jnp.dot(p_ref[...], w_ref[...], preferred_element_type=jnp.float32)
    acc = acc + b_ref[...]                       # single (1, 256) broadcast add
    a = acc[:, :OCP]                             # conv branch   (lane-tile aligned)
    g = acc[:, OCP:]                             # gate branch
    gate = 1.0 / (1.0 + jnp.exp(-g))             # exact sigmoid (EUP exp, f32 divide)
    y = a * gate                                 # (S, 128) f32

    # InstanceNorm (per-channel stats over the spatial axis) + affine + PReLU.
    mean = jnp.mean(y, axis=0, keepdims=True)    # (1, 128)
    ctr = y - mean
    var = jnp.mean(ctr * ctr, axis=0, keepdims=True)
    yn = ctr * jax.lax.rsqrt(var + IN_EPS)
    yn = yn * gm_ref[...] + bt_ref[...]
    o_ref[...] = jnp.where(yn >= 0.0, yn, al_ref[...] * yn).astype(o_ref.dtype)


def _fused_layer_call(patches, lp):
    """patches: (N, S, Kp) bf16.  Returns (N, S, 128) f32 (padded lanes are 0)."""
    n, s, kp = patches.shape
    return pl.pallas_call(
        _fused_layer_kernel,
        out_shape=jax.ShapeDtypeStruct((n, s, OCP), jnp.float32),
        grid_spec=pltpu.PrefetchScalarGridSpec(
            num_scalar_prefetch=0,
            grid=(n,),                                            # one sample / step
            in_specs=[
                pl.BlockSpec((None, s, kp), lambda i: (i, 0, 0)),  # per-sample patches
                pl.BlockSpec((kp, 2 * OCP), lambda i: (0, 0)),     # fused weight (resident)
                pl.BlockSpec((1, 2 * OCP), lambda i: (0, 0)),      # fused bias
                pl.BlockSpec((1, OCP), lambda i: (0, 0)),          # gamma
                pl.BlockSpec((1, OCP), lambda i: (0, 0)),          # beta
                pl.BlockSpec((1, OCP), lambda i: (0, 0)),          # prelu alpha
            ],
            out_specs=pl.BlockSpec((None, s, OCP), lambda i: (i, 0, 0)),
        ),
        compiler_params=pltpu.CompilerParams(dimension_semantics=("parallel",)),
    )(patches, lp["w_fused"], lp["b_fused"], lp["gamma"], lp["beta"], lp["alpha"])


# ----------------------------------------------------------------------------
# XLA-side glue: NHWC im2col (strided slices + one lane-axis concat)
# ----------------------------------------------------------------------------
def _layer_forward(x_nhwc, lp, cfg):
    """x_nhwc: (N, H, W, Cin) f32 (Cin=4 for layer 1, 128 padded afterwards)."""
    n, h, w, c = x_nhwc.shape
    kh, kw = cfg["ksize"]
    sh, sw = cfg["stride"]
    p_l, p_r, p_t, p_b = cfg["pad"]              # ConstantPad2d: (left, right, top, bottom)

    xp = jnp.pad(x_nhwc, ((0, 0), (p_t, p_b), (p_l, p_r), (0, 0))).astype(jnp.bfloat16)
    hp, wp = h + p_t + p_b, w + p_l + p_r
    oh = (hp - kh) // sh + 1
    ow = (wp - kw) // sw + 1

    cols = []
    for i in range(kh):
        for j in range(kw):
            cols.append(jax.lax.slice(
                xp, (0, i, j, 0),
                (n, i + sh * (oh - 1) + 1, j + sw * (ow - 1) + 1, c),
                (1, sh, sw, 1)))
    patches = jnp.concatenate(cols, axis=-1).reshape(n, oh * ow, kh * kw * c)

    kp = lp["w_fused"].shape[0]
    if kp != patches.shape[-1]:                  # layer 1 only: K=40 -> 128 lanes
        patches = jnp.pad(patches, ((0, 0), (0, 0), (0, kp - patches.shape[-1])))

    out = _fused_layer_call(patches, lp)         # (N, S, 128) f32
    return out.reshape(n, oh, ow, OCP)


# ----------------------------------------------------------------------------
# Parameter packing (done once, outside the jitted forward)
# ----------------------------------------------------------------------------
def prepare_encoder_params(params):
    prepared = []
    icp = LAYER_CFGS[0]["ic"]                    # raw input channels for layer 1
    for cfg, p in zip(LAYER_CFGS, params):
        kh, kw = cfg["ksize"]
        ic, oc = cfg["ic"], cfg["oc"]
        k = kh * kw * icp
        kp = _round_up(k, 128)

        def pack(wgt, bias):
            wt = jnp.transpose(wgt, (2, 3, 1, 0))                        # (kh, kw, ic, oc)
            wt = jnp.pad(wt, ((0, 0), (0, 0), (0, icp - ic), (0, OCP - oc)))
            wt = wt.reshape(k, OCP)
            wt = jnp.pad(wt, ((0, kp - k), (0, 0)))
            return wt, jnp.pad(bias, (0, OCP - oc))

        wc, bc = pack(p["w_conv"], p["b_conv"])
        wg, bg = pack(p["w_gate"], p["b_gate"])
        prepared.append(dict(
            w_fused=jnp.concatenate([wc, wg], axis=1).astype(jnp.bfloat16),   # (Kp, 256)
            b_fused=jnp.concatenate([bc, bg]).reshape(1, 2 * OCP).astype(jnp.float32),
            gamma=jnp.pad(p["gamma"], (0, OCP - oc)).reshape(1, OCP).astype(jnp.float32),
            beta=jnp.pad(p["beta"], (0, OCP - oc)).reshape(1, OCP).astype(jnp.float32),
            alpha=jnp.pad(p["alpha"], (0, OCP - oc)).reshape(1, OCP).astype(jnp.float32),
        ))
        icp = OCP                               # subsequent layers consume padded 128-ch acts
    return prepared


# ----------------------------------------------------------------------------
# Encoder forward
# ----------------------------------------------------------------------------
@jax.jit
def encoder_forward(x_nchw, prepared_params):
    """x_nchw: (N, C, H, W) f32. Returns (x, x_list) in NCHW like the PyTorch module."""
    h = jnp.transpose(x_nchw, (0, 2, 3, 1))      # NHWC internally (channels in lanes)
    outs = []
    for cfg, lp in zip(LAYER_CFGS, prepared_params):
        h = _layer_forward(h, lp, cfg)           # (N, OH, OW, 128); padded lanes stay 0
        outs.append(jnp.transpose(h[..., :cfg["oc"]], (0, 3, 1, 2)))
    return outs[-1], outs


def init_encoder_params(key):
    params = []
    for cfg in LAYER_CFGS:
        key, k0, k1, k2, k3, k4, k5, k6 = jax.random.split(key, 8)
        ic, oc = cfg["ic"], cfg["oc"]
        kh, kw = cfg["ksize"]
        scale = (ic * kh * kw) ** -0.5
        params.append(dict(
            w_conv=scale * jax.random.normal(k0, (oc, ic, kh, kw), jnp.float32),
            b_conv=scale * jax.random.normal(k1, (oc,), jnp.float32),
            w_gate=scale * jax.random.normal(k2, (oc, ic, kh, kw), jnp.float32),
            b_gate=scale * jax.random.normal(k3, (oc,), jnp.float32),
            gamma=1.0 + 0.1 * jax.random.normal(k4, (oc,), jnp.float32),
            beta=0.1 * jax.random.normal(k5, (oc,), jnp.float32),
            alpha=0.25 + 0.05 * jax.random.normal(k6, (oc,), jnp.float32),
        ))
    return params


# ----------------------------------------------------------------------------
# Pure-JAX reference (same bf16-input / f32-accumulate recipe, lax.conv based,
# identical sigmoid / rsqrt formulas so both paths track numerically).
# ----------------------------------------------------------------------------
@jax.jit
def encoder_reference(x_nchw, params):
    dn = ("NCHW", "OIHW", "NCHW")
    h = x_nchw
    outs = []
    for cfg, p in zip(LAYER_CFGS, params):
        p_l, p_r, p_t, p_b = cfg["pad"]
        xp = jnp.pad(h, ((0, 0), (0, 0), (p_t, p_b), (p_l, p_r))).astype(jnp.bfloat16)
        a = jax.lax.conv_general_dilated(
            xp, p["w_conv"].astype(jnp.bfloat16), cfg["stride"], "VALID",
            dimension_numbers=dn, preferred_element_type=jnp.float32)
        a = a + p["b_conv"][None, :, None, None]
        g = jax.lax.conv_general_dilated(
            xp, p["w_gate"].astype(jnp.bfloat16), cfg["stride"], "VALID",
            dimension_numbers=dn, preferred_element_type=jnp.float32)
        g = g + p["b_gate"][None, :, None, None]
        y = a * (1.0 / (1.0 + jnp.exp(-g)))
        mean = jnp.mean(y, axis=(2, 3), keepdims=True)
        var = jnp.mean(jnp.square(y - mean), axis=(2, 3), keepdims=True)
        yn = (y - mean) * jax.lax.rsqrt(var + IN_EPS)
        yn = yn * p["gamma"][None, :, None, None] + p["beta"][None, :, None, None]
        h = jnp.where(yn >= 0.0, yn, p["alpha"][None, :, None, None] * yn)
        outs.append(h)
    return outs[-1], outs


# ----------------------------------------------------------------------------
if __name__ == "__main__":
    key = jax.random.PRNGKey(0)
    kx, kparam = jax.random.split(key)

    # Spectrogram-like input: (batch=2, channels=4, frames=16, freq=101).
    # W must survive five stride-2 reductions with kernel widths (5,3,3,3,3).
    N, C, H, W = 2, 4, 16, 101
    x = jax.random.normal(kx, (N, C, H, W), jnp.float32)
    params = init_encoder_params(kparam)
    prepared = prepare_encoder_params(params)

    out, out_list = encoder_forward(x, prepared)
    out = jax.block_until_ready(out)

    ref_out, ref_list = encoder_reference(x, params)
    ref_out = jax.block_until_ready(ref_out)

    assert out.shape == ref_out.shape, (out.shape, ref_out.shape)
    assert len(out_list) == len(ref_list) == len(LAYER_CFGS)
    for o, r in zip(out_list, ref_list):
        assert o.shape == r.shape, (o.shape, r.shape)
        assert jnp.allclose(o, r, atol=2e-2, rtol=2e-2), float(jnp.max(jnp.abs(o - r)))

    print("KERNEL_OK")
</pallas_src>

<mosaic_0001>
module attributes {stable_mosaic.version = 11 : i64} {
  func.func @_fused_layer_kernel(%arg0: i32, %arg1: memref<1x784x128xbf16, #tpu.memory_space<vmem>>, %arg2: memref<128x256xbf16, #tpu.memory_space<vmem>>, %arg3: memref<1x256xf32, #tpu.memory_space<vmem>>, %arg4: memref<1x128xf32, #tpu.memory_space<vmem>>, %arg5: memref<1x128xf32, #tpu.memory_space<vmem>>, %arg6: memref<1x128xf32, #tpu.memory_space<vmem>>, %arg7: memref<1x784x128xf32, #tpu.memory_space<vmem>>) attributes {dimension_semantics = [#tpu.dimension_semantics<parallel>], iteration_bounds = array<i64: 2>, scalar_prefetch = 0 : i64, scratch_operands = 0 : i64, tpu.core_type = #tpu.core_type<tc>, window_params = [{transform_indices = @transform_0, window_bounds = array<i64: 1, 784, 128>}, {pipeline_mode = #tpu.pipeline_mode<synchronous>, transform_indices = @transform_1, window_bounds = array<i64: 128, 256>}, {pipeline_mode = #tpu.pipeline_mode<synchronous>, transform_indices = @transform_2, window_bounds = array<i64: 1, 256>}, {pipeline_mode = #tpu.pipeline_mode<synchronous>, transform_indices = @transform_3, window_bounds = array<i64: 1, 128>}, {pipeline_mode = #tpu.pipeline_mode<synchronous>, transform_indices = @transform_4, window_bounds = array<i64: 1, 128>}, {pipeline_mode = #tpu.pipeline_mode<synchronous>, transform_indices = @transform_5, window_bounds = array<i64: 1, 128>}, {transform_indices = @transform_6, window_bounds = array<i64: 1, 784, 128>}]} {
    %c0 = arith.constant 0 : index
    %c0_0 = arith.constant 0 : index
    %c0_1 = arith.constant 0 : index
    %0 = vector.load %arg1[%c0, %c0_0, %c0_1] : memref<1x784x128xbf16, #tpu.memory_space<vmem>>, vector<1x784x128xbf16>
    %1 = vector.shape_cast %0 : vector<1x784x128xbf16> to vector<784x128xbf16>
    %c0_2 = arith.constant 0 : index
    %c0_3 = arith.constant 0 : index
    %2 = vector.load %arg2[%c0_2, %c0_3] : memref<128x256xbf16, #tpu.memory_space<vmem>>, vector<128x256xbf16>
    %cst = arith.constant dense<0.000000e+00> : vector<784x256xf32>
    %3 = tpu.matmul %1, %2, %cst {dimension_numbers = #tpu.dot_dimension_numbers<[1], [0], [0], [1], [0, 0, 1, 1], [], []>} : vector<784x128xbf16>, vector<128x256xbf16>, vector<784x256xf32> -> vector<784x256xf32>
    %c0_4 = arith.constant 0 : index
    %c0_5 = arith.constant 0 : index
    %4 = vector.load %arg3[%c0_4, %c0_5] : memref<1x256xf32, #tpu.memory_space<vmem>>, vector<1x256xf32>
    %5 = vector.broadcast %4 : vector<1x256xf32> to vector<784x256xf32>
    %6 = arith.addf %3, %5 : vector<784x256xf32>
    %7 = vector.extract_strided_slice %6 {offsets = [0, 0], sizes = [784, 128], strides = [1, 1]} : vector<784x256xf32> to vector<784x128xf32>
    %8 = vector.extract_strided_slice %6 {offsets = [0, 128], sizes = [784, 128], strides = [1, 1]} : vector<784x256xf32> to vector<784x128xf32>
    %cst_6 = arith.constant 0.000000e+00 : f32
    %9 = vector.broadcast %cst_6 : f32 to vector<784x128xf32>
    %10 = arith.subf %9, %8 : vector<784x128xf32>
    %11 = math.exp %10 : vector<784x128xf32>
    %cst_7 = arith.constant 1.000000e+00 : f32
    %12 = vector.broadcast %cst_7 : f32 to vector<784x128xf32>
    %13 = arith.addf %12, %11 : vector<784x128xf32>
    %cst_8 = arith.constant 1.000000e+00 : f32
    %14 = vector.broadcast %cst_8 : f32 to vector<784x128xf32>
    %15 = arith.divf %14, %13 : vector<784x128xf32>
    %16 = arith.mulf %7, %15 : vector<784x128xf32>
    %cst_9 = arith.constant dense<0.000000e+00> : vector<128xf32>
    %17 = vector.multi_reduction <add>, %16, %cst_9 [0] : vector<784x128xf32> to vector<128xf32>
    %18 = vector.shape_cast %17 : vector<128xf32> to vector<1x128xf32>
    %cst_10 = arith.constant 7.840000e+02 : f32
    %19 = vector.broadcast %cst_10 : f32 to vector<1x128xf32>
    %20 = arith.divf %18, %19 : vector<1x128xf32>
    %21 = vector.broadcast %20 : vector<1x128xf32> to vector<784x128xf32>
    %22 = arith.subf %16, %21 : vector<784x128xf32>
    %23 = arith.mulf %22, %22 : vector<784x128xf32>
    %cst_11 = arith.constant dense<0.000000e+00> : vector<128xf32>
    %24 = vector.multi_reduction <add>, %23, %cst_11 [0] : vector<784x128xf32> to vector<128xf32>
    %25 = vector.shape_cast %24 : vector<128xf32> to vector<1x128xf32>
    %cst_12 = arith.constant 7.840000e+02 : f32
    %26 = vector.broadcast %cst_12 : f32 to vector<1x128xf32>
    %27 = arith.divf %25, %26 : vector<1x128xf32>
    %cst_13 = arith.constant 9.99999974E-6 : f32
    %28 = vector.broadcast %cst_13 : f32 to vector<1x128xf32>
    %29 = arith.addf %27, %28 : vector<1x128xf32>
    %30 = math.rsqrt %29 : vector<1x128xf32>
    %31 = vector.broadcast %30 : vector<1x128xf32> to vector<784x128xf32>
    %32 = arith.mulf %22, %31 : vector<784x128xf32>
    %c0_14 = arith.constant 0 : index
    %c0_15 = arith.constant 0 : index
    %33 = vector.load %arg4[%c0_14, %c0_15] : memref<1x128xf32, #tpu.memory_space<vmem>>, vector<1x128xf32>
    %34 = vector.broadcast %33 : vector<1x128xf32> to vector<784x128xf32>
    %35 = arith.mulf %32, %34 : vector<784x128xf32>
    %c0_16 = arith.constant 0 : index
    %c0_17 = arith.constant 0 : index
    %36 = vector.load %arg5[%c0_16, %c0_17] : memref<1x128xf32, #tpu.memory_space<vmem>>, vector<1x128xf32>
    %37 = vector.broadcast %36 : vector<1x128xf32> to vector<784x128xf32>
    %38 = arith.addf %35, %37 : vector<784x128xf32>
    %cst_18 = arith.constant 0.000000e+00 : f32
    %39 = vector.broadcast %cst_18 : f32 to vector<784x128xf32>
    %40 = arith.cmpf oge, %38, %39 : vector<784x128xf32>
    %c0_19 = arith.constant 0 : index
    %c0_20 = arith.constant 0 : index
    %41 = vector.load %arg6[%c0_19, %c0_20] : memref<1x128xf32, #tpu.memory_space<vmem>>, vector<1x128xf32>
    %42 = vector.broadcast %41 : vector<1x128xf32> to vector<784x128xf32>
    %43 = arith.mulf %42, %38 : vector<784x128xf32>
    %44 = arith.select %40, %38, %43 : vector<784x128xi1>, vector<784x128xf32>
    %c0_21 = arith.constant 0 : index
    %c0_22 = arith.constant 0 : index
    %c0_23 = arith.constant 0 : index
    %45 = vector.load %arg7[%c0_21, %c0_22, %c0_23] : memref<1x784x128xf32, #tpu.memory_space<vmem>>, vector<1x784x128xf32>
    %46 = vector.shape_cast %45 : vector<1x784x128xf32> to vector<784x128xf32>
    %47 = vector.shape_cast %44 : vector<784x128xf32> to vector<1x784x128xf32>
    tpu.vector_store %arg7[%c0_21, %c0_22, %c0_23], %47 {strides = array<i32>} : memref<1x784x128xf32, #tpu.memory_space<vmem>>, vector<1x784x128xf32>,
    return
  }
  func.func @transform_0(%arg0: i32) -> (i32, i32, i32) {
    %c0_i32 = arith.constant 0 : i32
    %c0_i32_0 = arith.constant 0 : i32
    %c0_i32_1 = arith.constant 0 : i32
    return %arg0, %c0_i32, %c0_i32_0 : i32, i32, i32
  }
  func.func @transform_1(%arg0: i32) -> (i32, i32) {
    %c0_i32 = arith.constant 0 : i32
    %c0_i32_0 = arith.constant 0 : i32
    %c0_i32_1 = arith.constant 0 : i32
    return %c0_i32, %c0_i32_0 : i32, i32
  }
  func.func @transform_2(%arg0: i32) -> (i32, i32) {
    %c0_i32 = arith.constant 0 : i32
    %c0_i32_0 = arith.constant 0 : i32
    %c0_i32_1 = arith.constant 0 : i32
    return %c0_i32, %c0_i32_0 : i32, i32
  }
  func.func @transform_3(%arg0: i32) -> (i32, i32) {
    %c0_i32 = arith.constant 0 : i32
    %c0_i32_0 = arith.constant 0 : i32
    %c0_i32_1 = arith.constant 0 : i32
    return %c0_i32, %c0_i32_0 : i32, i32
  }
  func.func @transform_4(%arg0: i32) -> (i32, i32) {
    %c0_i32 = arith.constant 0 : i32
    %c0_i32_0 = arith.constant 0 : i32
    %c0_i32_1 = arith.constant 0 : i32
    return %c0_i32, %c0_i32_0 : i32, i32
  }
  func.func @transform_5(%arg0: i32) -> (i32, i32) {
    %c0_i32 = arith.constant 0 : i32
    %c0_i32_0 = arith.constant 0 : i32
    %c0_i32_1 = arith.constant 0 : i32
    return %c0_i32, %c0_i32_0 : i32, i32
  }
  func.func @transform_6(%arg0: i32) -> (i32, i32, i32) {
    %c0_i32 = arith.constant 0 : i32
    %c0_i32_0 = arith.constant 0 : i32
    %c0_i32_1 = arith.constant 0 : i32
    return %arg0, %c0_i32, %c0_i32_0 : i32, i32, i32
  }
}

module attributes {stable_mosaic.version = 11 : i64} {
  func.func @_fused_layer_kernel(%arg0: i32, %arg1: memref<1x384x768xbf16, #tpu.memory_space<vmem>>, %arg2: memref<768x256xbf16, #tpu.memory_space<vmem>>, %arg3: memref<1x256xf32, #tpu.memory_space<vmem>>, %arg4: memref<1x128xf32, #tpu.memory_space<vmem>>, %arg5: memref<1x128xf32, #tpu.memory_space<vmem>>, %arg6: memref<1x128xf32, #tpu.memory_space<vmem>>, %arg7: memref<1x384x128xf32, #tpu.memory_space<vmem>>) attributes {dimension_semantics = [#tpu.dimension_semantics<parallel>], iteration_bounds = array<i64: 2>, scalar_prefetch = 0 : i64, scratch_operands = 0 : i64, tpu.core_type = #tpu.core_type<tc>, window_params = [{transform_indices = @transform_0, window_bounds = array<i64: 1, 384, 768>}, {pipeline_mode = #tpu.pipeline_mode<synchronous>, transform_indices = @transform_1, window_bounds = array<i64: 768, 256>}, {pipeline_mode = #tpu.pipeline_mode<synchronous>, transform_indices = @transform_2, window_bounds = array<i64: 1, 256>}, {pipeline_mode = #tpu.pipeline_mode<synchronous>, transform_indices = @transform_3, window_bounds = array<i64: 1, 128>}, {pipeline_mode = #tpu.pipeline_mode<synchronous>, transform_indices = @transform_4, window_bounds = array<i64: 1, 128>}, {pipeline_mode = #tpu.pipeline_mode<synchronous>, transform_indices = @transform_5, window_bounds = array<i64: 1, 128>}, {transform_indices = @transform_6, window_bounds = array<i64: 1, 384, 128>}]} {
    %c0 = arith.constant 0 : index
    %c0_0 = arith.constant 0 : index
    %c0_1 = arith.constant 0 : index
    %0 = vector.load %arg1[%c0, %c0_0, %c0_1] : memref<1x384x768xbf16, #tpu.memory_space<vmem>>, vector<1x384x768xbf16>
    %1 = vector.shape_cast %0 : vector<1x384x768xbf16> to vector<384x768xbf16>
    %c0_2 = arith.constant 0 : index
    %c0_3 = arith.constant 0 : index
    %2 = vector.load %arg2[%c0_2, %c0_3] : memref<768x256xbf16, #tpu.memory_space<vmem>>, vector<768x256xbf16>
    %cst = arith.constant dense<0.000000e+00> : vector<384x256xf32>
    %3 = tpu.matmul %1, %2, %cst {dimension_numbers = #tpu.dot_dimension_numbers<[1], [0], [0], [1], [0, 0, 1, 1], [], []>} : vector<384x768xbf16>, vector<768x256xbf16>, vector<384x256xf32> -> vector<384x256xf32>
    %c0_4 = arith.constant 0 : index
    %c0_5 = arith.constant 0 : index
    %4 = vector.load %arg3[%c0_4, %c0_5] : memref<1x256xf32, #tpu.memory_space<vmem>>, vector<1x256xf32>
    %5 = vector.broadcast %4 : vector<1x256xf32> to vector<384x256xf32>
    %6 = arith.addf %3, %5 : vector<384x256xf32>
    %7 = vector.extract_strided_slice %6 {offsets = [0, 0], sizes = [384, 128], strides = [1, 1]} : vector<384x256xf32> to vector<384x128xf32>
    %8 = vector.extract_strided_slice %6 {offsets = [0, 128], sizes = [384, 128], strides = [1, 1]} : vector<384x256xf32> to vector<384x128xf32>
    %cst_6 = arith.constant 0.000000e+00 : f32
    %9 = vector.broadcast %cst_6 : f32 to vector<384x128xf32>
    %10 = arith.subf %9, %8 : vector<384x128xf32>
    %11 = math.exp %10 : vector<384x128xf32>
    %cst_7 = arith.constant 1.000000e+00 : f32
    %12 = vector.broadcast %cst_7 : f32 to vector<384x128xf32>
    %13 = arith.addf %12, %11 : vector<384x128xf32>
    %cst_8 = arith.constant 1.000000e+00 : f32
    %14 = vector.broadcast %cst_8 : f32 to vector<384x128xf32>
    %15 = arith.divf %14, %13 : vector<384x128xf32>
    %16 = arith.mulf %7, %15 : vector<384x128xf32>
    %cst_9 = arith.constant dense<0.000000e+00> : vector<128xf32>
    %17 = vector.multi_reduction <add>, %16, %cst_9 [0] : vector<384x128xf32> to vector<128xf32>
    %18 = vector.shape_cast %17 : vector<128xf32> to vector<1x128xf32>
    %cst_10 = arith.constant 3.840000e+02 : f32
    %19 = vector.broadcast %cst_10 : f32 to vector<1x128xf32>
    %20 = arith.divf %18, %19 : vector<1x128xf32>
    %21 = vector.broadcast %20 : vector<1x128xf32> to vector<384x128xf32>
    %22 = arith.subf %16, %21 : vector<384x128xf32>
    %23 = arith.mulf %22, %22 : vector<384x128xf32>
    %cst_11 = arith.constant dense<0.000000e+00> : vector<128xf32>
    %24 = vector.multi_reduction <add>, %23, %cst_11 [0] : vector<384x128xf32> to vector<128xf32>
    %25 = vector.shape_cast %24 : vector<128xf32> to vector<1x128xf32>
    %cst_12 = arith.constant 3.840000e+02 : f32
    %26 = vector.broadcast %cst_12 : f32 to vector<1x128xf32>
    %27 = arith.divf %25, %26 : vector<1x128xf32>
    %cst_13 = arith.constant 9.99999974E-6 : f32
    %28 = vector.broadcast %cst_13 : f32 to vector<1x128xf32>
    %29 = arith.addf %27, %28 : vector<1x128xf32>
    %30 = math.rsqrt %29 : vector<1x128xf32>
    %31 = vector.broadcast %30 : vector<1x128xf32> to vector<384x128xf32>
    %32 = arith.mulf %22, %31 : vector<384x128xf32>
    %c0_14 = arith.constant 0 : index
    %c0_15 = arith.constant 0 : index
    %33 = vector.load %arg4[%c0_14, %c0_15] : memref<1x128xf32, #tpu.memory_space<vmem>>, vector<1x128xf32>
    %34 = vector.broadcast %33 : vector<1x128xf32> to vector<384x128xf32>
    %35 = arith.mulf %32, %34 : vector<384x128xf32>
    %c0_16 = arith.constant 0 : index
    %c0_17 = arith.constant 0 : index
    %36 = vector.load %arg5[%c0_16, %c0_17] : memref<1x128xf32, #tpu.memory_space<vmem>>, vector<1x128xf32>
    %37 = vector.broadcast %36 : vector<1x128xf32> to vector<384x128xf32>
    %38 = arith.addf %35, %37 : vector<384x128xf32>
    %cst_18 = arith.constant 0.000000e+00 : f32
    %39 = vector.broadcast %cst_18 : f32 to vector<384x128xf32>
    %40 = arith.cmpf oge, %38, %39 : vector<384x128xf32>
    %c0_19 = arith.constant 0 : index
    %c0_20 = arith.constant 0 : index
    %41 = vector.load %arg6[%c0_19, %c0_20] : memref<1x128xf32, #tpu.memory_space<vmem>>, vector<1x128xf32>
    %42 = vector.broadcast %41 : vector<1x128xf32> to vector<384x128xf32>
    %43 = arith.mulf %42, %38 : vector<384x128xf32>
    %44 = arith.select %40, %38, %43 : vector<384x128xi1>, vector<384x128xf32>
    %c0_21 = arith.constant 0 : index
    %c0_22 = arith.constant 0 : index
    %c0_23 = arith.constant 0 : index
    %45 = vector.load %arg7[%c0_21, %c0_22, %c0_23] : memref<1x384x128xf32, #tpu.memory_space<vmem>>, vector<1x384x128xf32>
    %46 = vector.shape_cast %45 : vector<1x384x128xf32> to vector<384x128xf32>
    %47 = vector.shape_cast %44 : vector<384x128xf32> to vector<1x384x128xf32>
    tpu.vector_store %arg7[%c0_21, %c0_22, %c0_23], %47 {strides = array<i32>} : memref<1x384x128xf32, #tpu.memory_space<vmem>>, vector<1x384x128xf32>,
    return
  }
  func.func @transform_0(%arg0: i32) -> (i32, i32, i32) {
    %c0_i32 = arith.constant 0 : i32
    %c0_i32_0 = arith.constant 0 : i32
    %c0_i32_1 = arith.constant 0 : i32
    return %arg0, %c0_i32, %c0_i32_0 : i32, i32, i32
  }
  func.func @transform_1(%arg0: i32) -> (i32, i32) {
    %c0_i32 = arith.constant 0 : i32
    %c0_i32_0 = arith.constant 0 : i32
    %c0_i32_1 = arith.constant 0 : i32
    return %c0_i32, %c0_i32_0 : i32, i32
  }
  func.func @transform_2(%arg0: i32) -> (i32, i32) {
    %c0_i32 = arith.constant 0 : i32
    %c0_i32_0 = arith.constant 0 : i32
    %c0_i32_1 = arith.constant 0 : i32
    return %c0_i32, %c0_i32_0 : i32, i32
  }
  func.func @transform_3(%arg0: i32) -> (i32, i32) {
    %c0_i32 = arith.constant 0 : i32
    %c0_i32_0 = arith.constant 0 : i32
    %c0_i32_1 = arith.constant 0 : i32
    return %c0_i32, %c0_i32_0 : i32, i32
  }
  func.func @transform_4(%arg0: i32) -> (i32, i32) {
    %c0_i32 = arith.constant 0 : i32
    %c0_i32_0 = arith.constant 0 : i32
    %c0_i32_1 = arith.constant 0 : i32
    return %c0_i32, %c0_i32_0 : i32, i32
  }
  func.func @transform_5(%arg0: i32) -> (i32, i32) {
    %c0_i32 = arith.constant 0 : i32
    %c0_i32_0 = arith.constant 0 : i32
    %c0_i32_1 = arith.constant 0 : i32
    return %c0_i32, %c0_i32_0 : i32, i32
  }
  func.func @transform_6(%arg0: i32) -> (i32, i32, i32) {
    %c0_i32 = arith.constant 0 : i32
    %c0_i32_0 = arith.constant 0 : i32
    %c0_i32_1 = arith.constant 0 : i32
    return %arg0, %c0_i32, %c0_i32_0 : i32, i32, i32
  }
}

module attributes {stable_mosaic.version = 11 : i64} {
  func.func @_fused_layer_kernel(%arg0: i32, %arg1: memref<1x176x768xbf16, #tpu.memory_space<vmem>>, %arg2: memref<768x256xbf16, #tpu.memory_space<vmem>>, %arg3: memref<1x256xf32, #tpu.memory_space<vmem>>, %arg4: memref<1x128xf32, #tpu.memory_space<vmem>>, %arg5: memref<1x128xf32, #tpu.memory_space<vmem>>, %arg6: memref<1x128xf32, #tpu.memory_space<vmem>>, %arg7: memref<1x176x128xf32, #tpu.memory_space<vmem>>) attributes {dimension_semantics = [#tpu.dimension_semantics<parallel>], iteration_bounds = array<i64: 2>, scalar_prefetch = 0 : i64, scratch_operands = 0 : i64, tpu.core_type = #tpu.core_type<tc>, window_params = [{transform_indices = @transform_0, window_bounds = array<i64: 1, 176, 768>}, {pipeline_mode = #tpu.pipeline_mode<synchronous>, transform_indices = @transform_1, window_bounds = array<i64: 768, 256>}, {pipeline_mode = #tpu.pipeline_mode<synchronous>, transform_indices = @transform_2, window_bounds = array<i64: 1, 256>}, {pipeline_mode = #tpu.pipeline_mode<synchronous>, transform_indices = @transform_3, window_bounds = array<i64: 1, 128>}, {pipeline_mode = #tpu.pipeline_mode<synchronous>, transform_indices = @transform_4, window_bounds = array<i64: 1, 128>}, {pipeline_mode = #tpu.pipeline_mode<synchronous>, transform_indices = @transform_5, window_bounds = array<i64: 1, 128>}, {transform_indices = @transform_6, window_bounds = array<i64: 1, 176, 128>}]} {
    %c0 = arith.constant 0 : index
    %c0_0 = arith.constant 0 : index
    %c0_1 = arith.constant 0 : index
    %0 = vector.load %arg1[%c0, %c0_0, %c0_1] : memref<1x176x768xbf16, #tpu.memory_space<vmem>>, vector<1x176x768xbf16>
    %1 = vector.shape_cast %0 : vector<1x176x768xbf16> to vector<176x768xbf16>
    %c0_2 = arith.constant 0 : index
    %c0_3 = arith.constant 0 : index
    %2 = vector.load %arg2[%c0_2, %c0_3] : memref<768x256xbf16, #tpu.memory_space<vmem>>, vector<768x256xbf16>
    %cst = arith.constant dense<0.000000e+00> : vector<176x256xf32>
    %3 = tpu.matmul %1, %2, %cst {dimension_numbers = #tpu.dot_dimension_numbers<[1], [0], [0], [1], [0, 0, 1, 1], [], []>} : vector<176x768xbf16>, vector<768x256xbf16>, vector<176x256xf32> -> vector<176x256xf32>
    %c0_4 = arith.constant 0 : index
    %c0_5 = arith.constant 0 : index
    %4 = vector.load %arg3[%c0_4, %c0_5] : memref<1x256xf32, #tpu.memory_space<vmem>>, vector<1x256xf32>
    %5 = vector.broadcast %4 : vector<1x256xf32> to vector<176x256xf32>
    %6 = arith.addf %3, %5 : vector<176x256xf32>
    %7 = vector.extract_strided_slice %6 {offsets = [0, 0], sizes = [176, 128], strides = [1, 1]} : vector<176x256xf32> to vector<176x128xf32>
    %8 = vector.extract_strided_slice %6 {offsets = [0, 128], sizes = [176, 128], strides = [1, 1]} : vector<176x256xf32> to vector<176x128xf32>
    %cst_6 = arith.constant 0.000000e+00 : f32
    %9 = vector.broadcast %cst_6 : f32 to vector<176x128xf32>
    %10 = arith.subf %9, %8 : vector<176x128xf32>
    %11 = math.exp %10 : vector<176x128xf32>
    %cst_7 = arith.constant 1.000000e+00 : f32
    %12 = vector.broadcast %cst_7 : f32 to vector<176x128xf32>
    %13 = arith.addf %12, %11 : vector<176x128xf32>
    %cst_8 = arith.constant 1.000000e+00 : f32
    %14 = vector.broadcast %cst_8 : f32 to vector<176x128xf32>
    %15 = arith.divf %14, %13 : vector<176x128xf32>
    %16 = arith.mulf %7, %15 : vector<176x128xf32>
    %cst_9 = arith.constant dense<0.000000e+00> : vector<128xf32>
    %17 = vector.multi_reduction <add>, %16, %cst_9 [0] : vector<176x128xf32> to vector<128xf32>
    %18 = vector.shape_cast %17 : vector<128xf32> to vector<1x128xf32>
    %cst_10 = arith.constant 1.760000e+02 : f32
    %19 = vector.broadcast %cst_10 : f32 to vector<1x128xf32>
    %20 = arith.divf %18, %19 : vector<1x128xf32>
    %21 = vector.broadcast %20 : vector<1x128xf32> to vector<176x128xf32>
    %22 = arith.subf %16, %21 : vector<176x128xf32>
    %23 = arith.mulf %22, %22 : vector<176x128xf32>
    %cst_11 = arith.constant dense<0.000000e+00> : vector<128xf32>
    %24 = vector.multi_reduction <add>, %23, %cst_11 [0] : vector<176x128xf32> to vector<128xf32>
    %25 = vector.shape_cast %24 : vector<128xf32> to vector<1x128xf32>
    %cst_12 = arith.constant 1.760000e+02 : f32
    %26 = vector.broadcast %cst_12 : f32 to vector<1x128xf32>
    %27 = arith.divf %25, %26 : vector<1x128xf32>
    %cst_13 = arith.constant 9.99999974E-6 : f32
    %28 = vector.broadcast %cst_13 : f32 to vector<1x128xf32>
    %29 = arith.addf %27, %28 : vector<1x128xf32>
    %30 = math.rsqrt %29 : vector<1x128xf32>
    %31 = vector.broadcast %30 : vector<1x128xf32> to vector<176x128xf32>
    %32 = arith.mulf %22, %31 : vector<176x128xf32>
    %c0_14 = arith.constant 0 : index
    %c0_15 = arith.constant 0 : index
    %33 = vector.load %arg4[%c0_14, %c0_15] : memref<1x128xf32, #tpu.memory_space<vmem>>, vector<1x128xf32>
    %34 = vector.broadcast %33 : vector<1x128xf32> to vector<176x128xf32>
    %35 = arith.mulf %32, %34 : vector<176x128xf32>
    %c0_16 = arith.constant 0 : index
    %c0_17 = arith.constant 0 : index
    %36 = vector.load %arg5[%c0_16, %c0_17] : memref<1x128xf32, #tpu.memory_space<vmem>>, vector<1x128xf32>
    %37 = vector.broadcast %36 : vector<1x128xf32> to vector<176x128xf32>
    %38 = arith.addf %35, %37 : vector<176x128xf32>
    %cst_18 = arith.constant 0.000000e+00 : f32
    %39 = vector.broadcast %cst_18 : f32 to vector<176x128xf32>
    %40 = arith.cmpf oge, %38, %39 : vector<176x128xf32>
    %c0_19 = arith.constant 0 : index
    %c0_20 = arith.constant 0 : index
    %41 = vector.load %arg6[%c0_19, %c0_20] : memref<1x128xf32, #tpu.memory_space<vmem>>, vector<1x128xf32>
    %42 = vector.broadcast %41 : vector<1x128xf32> to vector<176x128xf32>
    %43 = arith.mulf %42, %38 : vector<176x128xf32>
    %44 = arith.select %40, %38, %43 : vector<176x128xi1>, vector<176x128xf32>
    %c0_21 = arith.constant 0 : index
    %c0_22 = arith.constant 0 : index
    %c0_23 = arith.constant 0 : index
    %45 = vector.load %arg7[%c0_21, %c0_22, %c0_23] : memref<1x176x128xf32, #tpu.memory_space<vmem>>, vector<1x176x128xf32>
    %46 = vector.shape_cast %45 : vector<1x176x128xf32> to vector<176x128xf32>
    %47 = vector.shape_cast %44 : vector<176x128xf32> to vector<1x176x128xf32>
    tpu.vector_store %arg7[%c0_21, %c0_22, %c0_23], %47 {strides = array<i32>} : memref<1x176x128xf32, #tpu.memory_space<vmem>>, vector<1x176x128xf32>,
    return
  }
  func.func @transform_0(%arg0: i32) -> (i32, i32, i32) {
    %c0_i32 = arith.constant 0 : i32
    %c0_i32_0 = arith.constant 0 : i32
    %c0_i32_1 = arith.constant 0 : i32
    return %arg0, %c0_i32, %c0_i32_0 : i32, i32, i32
  }
  func.func @transform_1(%arg0: i32) -> (i32, i32) {
    %c0_i32 = arith.constant 0 : i32
    %c0_i32_0 = arith.constant 0 : i32
    %c0_i32_1 = arith.constant 0 : i32
    return %c0_i32, %c0_i32_0 : i32, i32
  }
  func.func @transform_2(%arg0: i32) -> (i32, i32) {
    %c0_i32 = arith.constant 0 : i32
    %c0_i32_0 = arith.constant 0 : i32
    %c0_i32_1 = arith.constant 0 : i32
    return %c0_i32, %c0_i32_0 : i32, i32
  }
  func.func @transform_3(%arg0: i32) -> (i32, i32) {
    %c0_i32 = arith.constant 0 : i32
    %c0_i32_0 = arith.constant 0 : i32
    %c0_i32_1 = arith.constant 0 : i32
    return %c0_i32, %c0_i32_0 : i32, i32
  }
  func.func @transform_4(%arg0: i32) -> (i32, i32) {
    %c0_i32 = arith.constant 0 : i32
    %c0_i32_0 = arith.constant 0 : i32
    %c0_i32_1 = arith.constant 0 : i32
    return %c0_i32, %c0_i32_0 : i32, i32
  }
  func.func @transform_5(%arg0: i32) -> (i32, i32) {
    %c0_i32 = arith.constant 0 : i32
    %c0_i32_0 = arith.constant 0 : i32
    %c0_i32_1 = arith.constant 0 : i32
    return %c0_i32, %c0_i32_0 : i32, i32
  }
  func.func @transform_6(%arg0: i32) -> (i32, i32, i32) {
    %c0_i32 = arith.constant 0 : i32
    %c0_i32_0 = arith.constant 0 : i32
    %c0_i32_1 = arith.constant 0 : i32
    return %arg0, %c0_i32, %c0_i32_0 : i32, i32, i32
  }
}

module attributes {stable_mosaic.version = 11 : i64} {
  func.func @_fused_layer_kernel(%arg0: i32, %arg1: memref<1x80x768xbf16, #tpu.memory_space<vmem>>, %arg2: memref<768x256xbf16, #tpu.memory_space<vmem>>, %arg3: memref<1x256xf32, #tpu.memory_space<vmem>>, %arg4: memref<1x128xf32, #tpu.memory_space<vmem>>, %arg5: memref<1x128xf32, #tpu.memory_space<vmem>>, %arg6: memref<1x128xf32, #tpu.memory_space<vmem>>, %arg7: memref<1x80x128xf32, #tpu.memory_space<vmem>>) attributes {dimension_semantics = [#tpu.dimension_semantics<parallel>], iteration_bounds = array<i64: 2>, scalar_prefetch = 0 : i64, scratch_operands = 0 : i64, tpu.core_type = #tpu.core_type<tc>, window_params = [{transform_indices = @transform_0, window_bounds = array<i64: 1, 80, 768>}, {pipeline_mode = #tpu.pipeline_mode<synchronous>, transform_indices = @transform_1, window_bounds = array<i64: 768, 256>}, {pipeline_mode = #tpu.pipeline_mode<synchronous>, transform_indices = @transform_2, window_bounds = array<i64: 1, 256>}, {pipeline_mode = #tpu.pipeline_mode<synchronous>, transform_indices = @transform_3, window_bounds = array<i64: 1, 128>}, {pipeline_mode = #tpu.pipeline_mode<synchronous>, transform_indices = @transform_4, window_bounds = array<i64: 1, 128>}, {pipeline_mode = #tpu.pipeline_mode<synchronous>, transform_indices = @transform_5, window_bounds = array<i64: 1, 128>}, {transform_indices = @transform_6, window_bounds = array<i64: 1, 80, 128>}]} {
    %c0 = arith.constant 0 : index
    %c0_0 = arith.constant 0 : index
    %c0_1 = arith.constant 0 : index
    %0 = vector.load %arg1[%c0, %c0_0, %c0_1] : memref<1x80x768xbf16, #tpu.memory_space<vmem>>, vector<1x80x768xbf16>
    %1 = vector.shape_cast %0 : vector<1x80x768xbf16> to vector<80x768xbf16>
    %c0_2 = arith.constant 0 : index
    %c0_3 = arith.constant 0 : index
    %2 = vector.load %arg2[%c0_2, %c0_3] : memref<768x256xbf16, #tpu.memory_space<vmem>>, vector<768x256xbf16>
    %cst = arith.constant dense<0.000000e+00> : vector<80x256xf32>
    %3 = tpu.matmul %1, %2, %cst {dimension_numbers = #tpu.dot_dimension_numbers<[1], [0], [0], [1], [0, 0, 1, 1], [], []>} : vector<80x768xbf16>, vector<768x256xbf16>, vector<80x256xf32> -> vector<80x256xf32>
    %c0_4 = arith.constant 0 : index
    %c0_5 = arith.constant 0 : index
    %4 = vector.load %arg3[%c0_4, %c0_5] : memref<1x256xf32, #tpu.memory_space<vmem>>, vector<1x256xf32>
    %5 = vector.broadcast %4 : vector<1x256xf32> to vector<80x256xf32>
    %6 = arith.addf %3, %5 : vector<80x256xf32>
    %7 = vector.extract_strided_slice %6 {offsets = [0, 0], sizes = [80, 128], strides = [1, 1]} : vector<80x256xf32> to vector<80x128xf32>
    %8 = vector.extract_strided_slice %6 {offsets = [0, 128], sizes = [80, 128], strides = [1, 1]} : vector<80x256xf32> to vector<80x128xf32>
    %cst_6 = arith.constant 0.000000e+00 : f32
    %9 = vector.broadcast %cst_6 : f32 to vector<80x128xf32>
    %10 = arith.subf %9, %8 : vector<80x128xf32>
    %11 = math.exp %10 : vector<80x128xf32>
    %cst_7 = arith.constant 1.000000e+00 : f32
    %12 = vector.broadcast %cst_7 : f32 to vector<80x128xf32>
    %13 = arith.addf %12, %11 : vector<80x128xf32>
    %cst_8 = arith.constant 1.000000e+00 : f32
    %14 = vector.broadcast %cst_8 : f32 to vector<80x128xf32>
    %15 = arith.divf %14, %13 : vector<80x128xf32>
    %16 = arith.mulf %7, %15 : vector<80x128xf32>
    %cst_9 = arith.constant dense<0.000000e+00> : vector<128xf32>
    %17 = vector.multi_reduction <add>, %16, %cst_9 [0] : vector<80x128xf32> to vector<128xf32>
    %18 = vector.shape_cast %17 : vector<128xf32> to vector<1x128xf32>
    %cst_10 = arith.constant 8.000000e+01 : f32
    %19 = vector.broadcast %cst_10 : f32 to vector<1x128xf32>
    %20 = arith.divf %18, %19 : vector<1x128xf32>
    %21 = vector.broadcast %20 : vector<1x128xf32> to vector<80x128xf32>
    %22 = arith.subf %16, %21 : vector<80x128xf32>
    %23 = arith.mulf %22, %22 : vector<80x128xf32>
    %cst_11 = arith.constant dense<0.000000e+00> : vector<128xf32>
    %24 = vector.multi_reduction <add>, %23, %cst_11 [0] : vector<80x128xf32> to vector<128xf32>
    %25 = vector.shape_cast %24 : vector<128xf32> to vector<1x128xf32>
    %cst_12 = arith.constant 8.000000e+01 : f32
    %26 = vector.broadcast %cst_12 : f32 to vector<1x128xf32>
    %27 = arith.divf %25, %26 : vector<1x128xf32>
    %cst_13 = arith.constant 9.99999974E-6 : f32
    %28 = vector.broadcast %cst_13 : f32 to vector<1x128xf32>
    %29 = arith.addf %27, %28 : vector<1x128xf32>
    %30 = math.rsqrt %29 : vector<1x128xf32>
    %31 = vector.broadcast %30 : vector<1x128xf32> to vector<80x128xf32>
    %32 = arith.mulf %22, %31 : vector<80x128xf32>
    %c0_14 = arith.constant 0 : index
    %c0_15 = arith.constant 0 : index
    %33 = vector.load %arg4[%c0_14, %c0_15] : memref<1x128xf32, #tpu.memory_space<vmem>>, vector<1x128xf32>
    %34 = vector.broadcast %33 : vector<1x128xf32> to vector<80x128xf32>
    %35 = arith.mulf %32, %34 : vector<80x128xf32>
    %c0_16 = arith.constant 0 : index
    %c0_17 = arith.constant 0 : index
    %36 = vector.load %arg5[%c0_16, %c0_17] : memref<1x128xf32, #tpu.memory_space<vmem>>, vector<1x128xf32>
    %37 = vector.broadcast %36 : vector<1x128xf32> to vector<80x128xf32>
    %38 = arith.addf %35, %37 : vector<80x128xf32>
    %cst_18 = arith.constant 0.000000e+00 : f32
    %39 = vector.broadcast %cst_18 : f32 to vector<80x128xf32>
    %40 = arith.cmpf oge, %38, %39 : vector<80x128xf32>
    %c0_19 = arith.constant 0 : index
    %c0_20 = arith.constant 0 : index
    %41 = vector.load %arg6[%c0_19, %c0_20] : memref<1x128xf32, #tpu.memory_space<vmem>>, vector<1x128xf32>
    %42 = vector.broadcast %41 : vector<1x128xf32> to vector<80x128xf32>
    %43 = arith.mulf %42, %38 : vector<80x128xf32>
    %44 = arith.select %40, %38, %43 : vector<80x128xi1>, vector<80x128xf32>
    %c0_21 = arith.constant 0 : index
    %c0_22 = arith.constant 0 : index
    %c0_23 = arith.constant 0 : index
    %45 = vector.load %arg7[%c0_21, %c0_22, %c0_23] : memref<1x80x128xf32, #tpu.memory_space<vmem>>, vector<1x80x128xf32>
    %46 = vector.shape_cast %45 : vector<1x80x128xf32> to vector<80x128xf32>
    %47 = vector.shape_cast %44 : vector<80x128xf32> to vector<1x80x128xf32>
    tpu.vector_store %arg7[%c0_21, %c0_22, %c0_23], %47 {strides = array<i32>} : memref<1x80x128xf32, #tpu.memory_space<vmem>>, vector<1x80x128xf32>,
    return
  }
  func.func @transform_0(%arg0: i32) -> (i32, i32, i32) {
    %c0_i32 = arith.constant 0 : i32
    %c0_i32_0 = arith.constant 0 : i32
    %c0_i32_1 = arith.constant 0 : i32
    return %arg0, %c0_i32, %c0_i32_0 : i32, i32, i32
  }
  func.func @transform_1(%arg0: i32) -> (i32, i32) {
    %c0_i32 = arith.constant 0 : i32
    %c0_i32_0 = arith.constant 0 : i32
    %c0_i32_1 = arith.constant 0 : i32
    return %c0_i32, %c0_i32_0 : i32, i32
  }
  func.func @transform_2(%arg0: i32) -> (i32, i32) {
    %c0_i32 = arith.constant 0 : i32
    %c0_i32_0 = arith.constant 0 : i32
    %c0_i32_1 = arith.constant 0 : i32
    return %c0_i32, %c0_i32_0 : i32, i32
  }
  func.func @transform_3(%arg0: i32) -> (i32, i32) {
    %c0_i32 = arith.constant 0 : i32
    %c0_i32_0 = arith.constant 0 : i32
    %c0_i32_1 = arith.constant 0 : i32
    return %c0_i32, %c0_i32_0 : i32, i32
  }
  func.func @transform_4(%arg0: i32) -> (i32, i32) {
    %c0_i32 = arith.constant 0 : i32
    %c0_i32_0 = arith.constant 0 : i32
    %c0_i32_1 = arith.constant 0 : i32
    return %c0_i32, %c0_i32_0 : i32, i32
  }
  func.func @transform_5(%arg0: i32) -> (i32, i32) {
    %c0_i32 = arith.constant 0 : i32
    %c0_i32_0 = arith.constant 0 : i32
    %c0_i32_1 = arith.constant 0 : i32
    return %c0_i32, %c0_i32_0 : i32, i32
  }
  func.func @transform_6(%arg0: i32) -> (i32, i32, i32) {
    %c0_i32 = arith.constant 0 : i32
    %c0_i32_0 = arith.constant 0 : i32
    %c0_i32_1 = arith.constant 0 : i32
    return %arg0, %c0_i32, %c0_i32_0 : i32, i32, i32
  }
}

module attributes {stable_mosaic.version = 11 : i64} {
  func.func @_fused_layer_kernel(%arg0: i32, %arg1: memref<1x32x768xbf16, #tpu.memory_space<vmem>>, %arg2: memref<768x256xbf16, #tpu.memory_space<vmem>>, %arg3: memref<1x256xf32, #tpu.memory_space<vmem>>, %arg4: memref<1x128xf32, #tpu.memory_space<vmem>>, %arg5: memref<1x128xf32, #tpu.memory_space<vmem>>, %arg6: memref<1x128xf32, #tpu.memory_space<vmem>>, %arg7: memref<1x32x128xf32, #tpu.memory_space<vmem>>) attributes {dimension_semantics = [#tpu.dimension_semantics<parallel>], iteration_bounds = array<i64: 2>, scalar_prefetch = 0 : i64, scratch_operands = 0 : i64, tpu.core_type = #tpu.core_type<tc>, window_params = [{transform_indices = @transform_0, window_bounds = array<i64: 1, 32, 768>}, {pipeline_mode = #tpu.pipeline_mode<synchronous>, transform_indices = @transform_1, window_bounds = array<i64: 768, 256>}, {pipeline_mode = #tpu.pipeline_mode<synchronous>, transform_indices = @transform_2, window_bounds = array<i64: 1, 256>}, {pipeline_mode = #tpu.pipeline_mode<synchronous>, transform_indices = @transform_3, window_bounds = array<i64: 1, 128>}, {pipeline_mode = #tpu.pipeline_mode<synchronous>, transform_indices = @transform_4, window_bounds = array<i64: 1, 128>}, {pipeline_mode = #tpu.pipeline_mode<synchronous>, transform_indices = @transform_5, window_bounds = array<i64: 1, 128>}, {transform_indices = @transform_6, window_bounds = array<i64: 1, 32, 128>}]} {
    %c0 = arith.constant 0 : index
    %c0_0 = arith.constant 0 : index
    %c0_1 = arith.constant 0 : index
    %0 = vector.load %arg1[%c0, %c0_0, %c0_1] : memref<1x32x768xbf16, #tpu.memory_space<vmem>>, vector<1x32x768xbf16>
    %1 = vector.shape_cast %0 : vector<1x32x768xbf16> to vector<32x768xbf16>
    %c0_2 = arith.constant 0 : index
    %c0_3 = arith.constant 0 : index
    %2 = vector.load %arg2[%c0_2, %c0_3] : memref<768x256xbf16, #tpu.memory_space<vmem>>, vector<768x256xbf16>
    %cst = arith.constant dense<0.000000e+00> : vector<32x256xf32>
    %3 = tpu.matmul %1, %2, %cst {dimension_numbers = #tpu.dot_dimension_numbers<[1], [0], [0], [1], [0, 0, 1, 1], [], []>} : vector<32x768xbf16>, vector<768x256xbf16>, vector<32x256xf32> -> vector<32x256xf32>
    %c0_4 = arith.constant 0 : index
    %c0_5 = arith.constant 0 : index
    %4 = vector.load %arg3[%c0_4, %c0_5] : memref<1x256xf32, #tpu.memory_space<vmem>>, vector<1x256xf32>
    %5 = vector.broadcast %4 : vector<1x256xf32> to vector<32x256xf32>
    %6 = arith.addf %3, %5 : vector<32x256xf32>
    %7 = vector.extract_strided_slice %6 {offsets = [0, 0], sizes = [32, 128], strides = [1, 1]} : vector<32x256xf32> to vector<32x128xf32>
    %8 = vector.extract_strided_slice %6 {offsets = [0, 128], sizes = [32, 128], strides = [1, 1]} : vector<32x256xf32> to vector<32x128xf32>
    %cst_6 = arith.constant 0.000000e+00 : f32
    %9 = vector.broadcast %cst_6 : f32 to vector<32x128xf32>
    %10 = arith.subf %9, %8 : vector<32x128xf32>
    %11 = math.exp %10 : vector<32x128xf32>
    %cst_7 = arith.constant 1.000000e+00 : f32
    %12 = vector.broadcast %cst_7 : f32 to vector<32x128xf32>
    %13 = arith.addf %12, %11 : vector<32x128xf32>
    %cst_8 = arith.constant 1.000000e+00 : f32
    %14 = vector.broadcast %cst_8 : f32 to vector<32x128xf32>
    %15 = arith.divf %14, %13 : vector<32x128xf32>
    %16 = arith.mulf %7, %15 : vector<32x128xf32>
    %cst_9 = arith.constant dense<0.000000e+00> : vector<128xf32>
    %17 = vector.multi_reduction <add>, %16, %cst_9 [0] : vector<32x128xf32> to vector<128xf32>
    %18 = vector.shape_cast %17 : vector<128xf32> to vector<1x128xf32>
    %cst_10 = arith.constant 3.200000e+01 : f32
    %19 = vector.broadcast %cst_10 : f32 to vector<1x128xf32>
    %20 = arith.divf %18, %19 : vector<1x128xf32>
    %21 = vector.broadcast %20 : vector<1x128xf32> to vector<32x128xf32>
    %22 = arith.subf %16, %21 : vector<32x128xf32>
    %23 = arith.mulf %22, %22 : vector<32x128xf32>
    %cst_11 = arith.constant dense<0.000000e+00> : vector<128xf32>
    %24 = vector.multi_reduction <add>, %23, %cst_11 [0] : vector<32x128xf32> to vector<128xf32>
    %25 = vector.shape_cast %24 : vector<128xf32> to vector<1x128xf32>
    %cst_12 = arith.constant 3.200000e+01 : f32
    %26 = vector.broadcast %cst_12 : f32 to vector<1x128xf32>
    %27 = arith.divf %25, %26 : vector<1x128xf32>
    %cst_13 = arith.constant 9.99999974E-6 : f32
    %28 = vector.broadcast %cst_13 : f32 to vector<1x128xf32>
    %29 = arith.addf %27, %28 : vector<1x128xf32>
    %30 = math.rsqrt %29 : vector<1x128xf32>
    %31 = vector.broadcast %30 : vector<1x128xf32> to vector<32x128xf32>
    %32 = arith.mulf %22, %31 : vector<32x128xf32>
    %c0_14 = arith.constant 0 : index
    %c0_15 = arith.constant 0 : index
    %33 = vector.load %arg4[%c0_14, %c0_15] : memref<1x128xf32, #tpu.memory_space<vmem>>, vector<1x128xf32>
    %34 = vector.broadcast %33 : vector<1x128xf32> to vector<32x128xf32>
    %35 = arith.mulf %32, %34 : vector<32x128xf32>
    %c0_16 = arith.constant 0 : index
    %c0_17 = arith.constant 0 : index
    %36 = vector.load %arg5[%c0_16, %c0_17] : memref<1x128xf32, #tpu.memory_space<vmem>>, vector<1x128xf32>
    %37 = vector.broadcast %36 : vector<1x128xf32> to vector<32x128xf32>
    %38 = arith.addf %35, %37 : vector<32x128xf32>
    %cst_18 = arith.constant 0.000000e+00 : f32
    %39 = vector.broadcast %cst_18 : f32 to vector<32x128xf32>
    %40 = arith.cmpf oge, %38, %39 : vector<32x128xf32>
    %c0_19 = arith.constant 0 : index
    %c0_20 = arith.constant 0 : index
    %41 = vector.load %arg6[%c0_19, %c0_20] : memref<1x128xf32, #tpu.memory_space<vmem>>, vector<1x128xf32>
    %42 = vector.broadcast %41 : vector<1x128xf32> to vector<32x128xf32>
    %43 = arith.mulf %42, %38 : vector<32x128xf32>
    %44 = arith.select %40, %38, %43 : vector<32x128xi1>, vector<32x128xf32>
    %c0_21 = arith.constant 0 : index
    %c0_22 = arith.constant 0 : index
    %c0_23 = arith.constant 0 : index
    %45 = vector.load %arg7[%c0_21, %c0_22, %c0_23] : memref<1x32x128xf32, #tpu.memory_space<vmem>>, vector<1x32x128xf32>
    %46 = vector.shape_cast %45 : vector<1x32x128xf32> to vector<32x128xf32>
    %47 = vector.shape_cast %44 : vector<32x128xf32> to vector<1x32x128xf32>
    tpu.vector_store %arg7[%c0_21, %c0_22, %c0_23], %47 {strides = array<i32>} : memref<1x32x128xf32, #tpu.memory_space<vmem>>, vector<1x32x128xf32>,
    return
  }
  func.func @transform_0(%arg0: i32) -> (i32, i32, i32) {
    %c0_i32 = arith.constant 0 : i32
    %c0_i32_0 = arith.constant 0 : i32
    %c0_i32_1 = arith.constant 0 : i32
    return %arg0, %c0_i32, %c0_i32_0 : i32, i32, i32
  }
  func.func @transform_1(%arg0: i32) -> (i32, i32) {
    %c0_i32 = arith.constant 0 : i32
    %c0_i32_0 = arith.constant 0 : i32
    %c0_i32_1 = arith.constant 0 : i32
    return %c0_i32, %c0_i32_0 : i32, i32
  }
  func.func @transform_2(%arg0: i32) -> (i32, i32) {
    %c0_i32 = arith.constant 0 : i32
    %c0_i32_0 = arith.constant 0 : i32
    %c0_i32_1 = arith.constant 0 : i32
    return %c0_i32, %c0_i32_0 : i32, i32
  }
  func.func @transform_3(%arg0: i32) -> (i32, i32) {
    %c0_i32 = arith.constant 0 : i32
    %c0_i32_0 = arith.constant 0 : i32
    %c0_i32_1 = arith.constant 0 : i32
    return %c0_i32, %c0_i32_0 : i32, i32
  }
  func.func @transform_4(%arg0: i32) -> (i32, i32) {
    %c0_i32 = arith.constant 0 : i32
    %c0_i32_0 = arith.constant 0 : i32
    %c0_i32_1 = arith.constant 0 : i32
    return %c0_i32, %c0_i32_0 : i32, i32
  }
  func.func @transform_5(%arg0: i32) -> (i32, i32) {
    %c0_i32 = arith.constant 0 : i32
    %c0_i32_0 = arith.constant 0 : i32
    %c0_i32_1 = arith.constant 0 : i32
    return %c0_i32, %c0_i32_0 : i32, i32
  }
  func.func @transform_6(%arg0: i32) -> (i32, i32, i32) {
    %c0_i32 = arith.constant 0 : i32
    %c0_i32_0 = arith.constant 0 : i32
    %c0_i32_1 = arith.constant 0 : i32
    return %arg0, %c0_i32, %c0_i32_0 : i32, i32, i32
  }
}

</mosaic_0001>

<llo_original>
// kernel: encoder_forward.5
$region0: #{encoder_forward.5}
  #allocation0 [shape = 'u32[]', space=smem, size = 0x4, offset = 0x4, fixed_abs, tag = 'smem constant byte address 0x4 - core index']
  #allocation1 [shape = 'u32[144,128]{1,0:T(1,128)}', space=vmem, size = 0x12000, scoped, tag = 'internal scratch']
  %s0 = inlined_call_operand.vmem [shape: bf16[2,784,128], index: 0, kind: input, shape index: {}]
  %s1 = inlined_call_operand.vmem [shape: bf16[128,256], index: 1, kind: input, shape index: {}]
  %s2 = inlined_call_operand.vmem [shape: f32[1,256], index: 2, kind: input, shape index: {}]
  %s3 = inlined_call_operand.vmem [shape: f32[1,128], index: 3, kind: input, shape index: {}]
  %s4 = inlined_call_operand.vmem [shape: f32[1,128], index: 4, kind: input, shape index: {}]
  %s5 = inlined_call_operand.vmem [shape: f32[1,128], index: 5, kind: input, shape index: {}]
  %s6 = inlined_call_operand.vmem [shape: f32[2,784,128], index: 6, kind: output, shape index: {}]
  %s7 = sld [smem:[#allocation0]]
  $region57: #{encoder_forward.5} parent=0
    _
  %s9 = ssub.s32 1, %s7
  %s10 = scalar_select 0, %s9, %s7
  loop: start=0, step=1, limit=4
  $region2: #{encoder_forward.5} parent=0 // loop_pre_header
    _
  $region3: #{encoder_forward.5} parent=0 // loop_header
    %s12 = sphi 0, %s16
    %p13 = scmp.ge.s32.totalorder %s12, 4
    %s22 = sphi 0, %s24
    %s25 = sphi 0, %s22
    %s26 = sphi 0, %s25
    %s42 = sphi 0, %s26
    %s46 = sphi 0, %s46
    %s48 = sphi 0, %s46
    %s49 = sphi 0, %s48
    %s63 = sphi 0, %s49
    %s67 = sphi 0, %s67
    %s69 = sphi 0, %s67
    %s70 = sphi 0, %s69
    %s84 = sphi 0, %s70
    %s88 = sphi 0, %s88
    %s90 = sphi 0, %s88
    %s91 = sphi 0, %s90
    %s105 = sphi 0, %s91
    %s109 = sphi 0, %s109
    %s111 = sphi 0, %s109
    %s112 = sphi 0, %s111
    %s126 = sphi 0, %s112
    %s130 = sphi 0, %s130
    %s132 = sphi 0, %s130
    %s133 = sphi 0, %s132
    %s147 = sphi 0, %s133
    %s153 = sphi 0, %s155
    %s156 = sphi 0, %s153
    %s157 = sphi 0, %s156
    %s173 = sphi 0, %s157
  $region4: #{encoder_forward.5} parent=0 // loop_header_branch
    %15 = sbr.rel (%p13) target = $region8
  $region5: #{encoder_forward.5} parent=0 // loop_body
    %s17 = ssub.s32 %s12, 1
    %s18 = ssub.s32 %s12, 2
    %s19 = sadd.s32 %s12, 1
    %s20 = ssub.s32 %s12, %s19
    %p21 = scmp.eq.s32.totalorder %s20, 0
    %s23 = sadd.s32 %s22, 1
    %s24 = scalar_select %p21, %s22, %s23
    %p27 = pneg %p21
    %p28 = scmp.eq.s32.totalorder %s12, 1
    %p29 = por %p27, %p28
    %p30 = scmp.ne.s32.totalorder %s22, %s25
    %p31 = scmp.eq.s32.totalorder %s12, 0
    %p32 = por %p30, %p31
    %p33 = scmp.ne.s32.totalorder %s22, %s25
    %p34 = scmp.eq.s32.totalorder %s17, 1
    %p35 = por %p33, %p34
    %p36 = scmp.ne.s32.totalorder %s25, %s26
    %p37 = scmp.eq.s32.totalorder %s17, 0
    %p38 = por %p36, %p37
    %p39 = scmp.ne.s32.totalorder %s25, %s26
    %p40 = scmp.eq.s32.totalorder %s18, 1
    %p41 = por %p39, %p40
    %p43 = scmp.ne.s32.totalorder %s26, %s42
    %p44 = scmp.eq.s32.totalorder %s18, 0
    %p45 = por %p43, %p44
    %s47 = sadd.s32 %s46, 1
    %p50 = scmp.eq.s32.totalorder %s12, 1
    %p51 = scmp.ne.s32.totalorder %s46, %s48
    %p52 = scmp.eq.s32.totalorder %s12, 0
    %p53 = por %p51, %p52
    %p54 = scmp.ne.s32.totalorder %s46, %s48
    %p55 = scmp.eq.s32.totalorder %s17, 1
    %p56 = por %p54, %p55
    %p57 = scmp.ne.s32.totalorder %s48, %s49
    %p58 = scmp.eq.s32.totalorder %s17, 0
    %p59 = por %p57, %p58
    %p60 = scmp.ne.s32.totalorder %s48, %s49
    %p61 = scmp.eq.s32.totalorder %s18, 1
    %p62 = por %p60, %p61
    %p64 = scmp.ne.s32.totalorder %s49, %s63
    %p65 = scmp.eq.s32.totalorder %s18, 0
    %p66 = por %p64, %p65
    %s68 = sadd.s32 %s67, 1
    %p71 = scmp.eq.s32.totalorder %s12, 1
    %p72 = scmp.ne.s32.totalorder %s67, %s69
    %p73 = scmp.eq.s32.totalorder %s12, 0
    %p74 = por %p72, %p73
    %p75 = scmp.ne.s32.totalorder %s67, %s69
    %p76 = scmp.eq.s32.totalorder %s17, 1
    %p77 = por %p75, %p76
    %p78 = scmp.ne.s32.totalorder %s69, %s70
    %p79 = scmp.eq.s32.totalorder %s17, 0
    %p80 = por %p78, %p79
    %p81 = scmp.ne.s32.totalorder %s69, %s70
    %p82 = scmp.eq.s32.totalorder %s18, 1
    %p83 = por %p81, %p82
    %p85 = scmp.ne.s32.totalorder %s70, %s84
    %p86 = scmp.eq.s32.totalorder %s18, 0
    %p87 = por %p85, %p86
    %s89 = sadd.s32 %s88, 1
    %p92 = scmp.eq.s32.totalorder %s12, 1
    %p93 = scmp.ne.s32.totalorder %s88, %s90
    %p94 = scmp.eq.s32.totalorder %s12, 0
    %p95 = por %p93, %p94
    %p96 = scmp.ne.s32.totalorder %s88, %s90
    %p97 = scmp.eq.s32.totalorder %s17, 1
    %p98 = por %p96, %p97
    %p99 = scmp.ne.s32.totalorder %s90, %s91
    %p100 = scmp.eq.s32.totalorder %s17, 0
    %p101 = por %p99, %p100
    %p102 = scmp.ne.s32.totalorder %s90, %s91
    %p103 = scmp.eq.s32.totalorder %s18, 1
    %p104 = por %p102, %p103
    %p106 = scmp.ne.s32.totalorder %s91, %s105
    %p107 = scmp.eq.s32.totalorder %s18, 0
    %p108 = por %p106, %p107
    %s110 = sadd.s32 %s109, 1
    %p113 = scmp.eq.s32.totalorder %s12, 1
    %p114 = scmp.ne.s32.totalorder %s109, %s111
    %p115 = scmp.eq.s32.totalorder %s12, 0
    %p116 = por %p114, %p115
    %p117 = scmp.ne.s32.totalorder %s109, %s111
    %p118 = scmp.eq.s32.totalorder %s17, 1
    %p119 = por %p117, %p118
    %p120 = scmp.ne.s32.totalorder %s111, %s112
    %p121 = scmp.eq.s32.totalorder %s17, 0
    %p122 = por %p120, %p121
    %p123 = scmp.ne.s32.totalorder %s111, %s112
    %p124 = scmp.eq.s32.totalorder %s18, 1
    %p125 = por %p123, %p124
    %p127 = scmp.ne.s32.totalorder %s112, %s126
    %p128 = scmp.eq.s32.totalorder %s18, 0
    %p129 = por %p127, %p128
    %s131 = sadd.s32 %s130, 1
    %p134 = scmp.eq.s32.totalorder %s12, 1
    %p135 = scmp.ne.s32.totalorder %s130, %s132
    %p136 = scmp.eq.s32.totalorder %s12, 0
    %p137 = por %p135, %p136
    %p138 = scmp.ne.s32.totalorder %s130, %s132
    %p139 = scmp.eq.s32.totalorder %s17, 1
    %p140 = por %p138, %p139
    %p141 = scmp.ne.s32.totalorder %s132, %s133
    %p142 = scmp.eq.s32.totalorder %s17, 0
    %p143 = por %p141, %p142
    %p144 = scmp.ne.s32.totalorder %s132, %s133
    %p145 = scmp.eq.s32.totalorder %s18, 1
    %p146 = por %p144, %p145
    %p148 = scmp.ne.s32.totalorder %s133, %s147
    %p149 = scmp.eq.s32.totalorder %s18, 0
    %p150 = por %p148, %p149
    %s151 = ssub.s32 %s12, %s19
    %p152 = scmp.eq.s32.totalorder %s151, 0
    %s154 = sadd.s32 %s153, 1
    %s155 = scalar_select %p152, %s153, %s154
    %p158 = pneg %p152
    %p159 = scmp.eq.s32.totalorder %s12, 1
    %p160 = por %p158, %p159
    %p161 = scmp.ne.s32.totalorder %s153, %s156
    %p162 = scmp.eq.s32.totalorder %s12, 0
    %p163 = por %p161, %p162
    %p164 = scmp.ne.s32.totalorder %s153, %s156
    %p165 = scmp.eq.s32.totalorder %s17, 1
    %p166 = por %p164, %p165
    %p167 = scmp.ne.s32.totalorder %s156, %s157
    %p168 = scmp.eq.s32.totalorder %s17, 0
    %p169 = por %p167, %p168
    %p170 = scmp.ne.s32.totalorder %s156, %s157
    %p171 = scmp.eq.s32.totalorder %s18, 1
    %p172 = por %p170, %p171
    %p174 = scmp.ne.s32.totalorder %s157, %s173
    %p175 = scmp.eq.s32.totalorder %s18, 0
    %p176 = por %p174, %p175
    %p177 = scmp.le.s32.totalorder 1, %s12
    %p178 = scmp.lt.s32.totalorder %s12, 3
    %p179 = pnand %p177, %p178
    %p180 = pneg %p179
    // Predicated region
    $region9: #{encoder_forward.5} parent=5 // pred_check
      _
    $region10: #{encoder_forward.5} parent=5 // pred_check_branch
      %182 = sbr.rel (%p179) target = $region12
    $region11: #{encoder_forward.5} parent=5 // pred_region
      %s183 = ssub.s32 %s12, 1
      // Predicated region
      $region13: #{encoder_forward.5} parent=11 // pred_check
        %p184 = pneg %p59
      $region14: #{encoder_forward.5} parent=11 // pred_check_branch
        %186 = sbr.rel (%p184) target = $region16
      $region15: #{encoder_forward.5} parent=11 // pred_region
        _
      $region16: #{encoder_forward.5} parent=11 // pred_fallthru
        _
      // Predicated region
      $region17: #{encoder_forward.5} parent=11 // pred_check
        %p187 = pneg %p80
      $region18: #{encoder_forward.5} parent=11 // pred_check_branch
        %189 = sbr.rel (%p187) target = $region20
      $region19: #{encoder_forward.5} parent=11 // pred_region
        _
      $region20: #{encoder_forward.5} parent=11 // pred_fallthru
        _
      // Predicated region
      $region21: #{encoder_forward.5} parent=11 // pred_check
        %p190 = pneg %p101
      $region22: #{encoder_forward.5} parent=11 // pred_check_branch
        %192 = sbr.rel (%p190) target = $region24
      $region23: #{encoder_forward.5} parent=11 // pred_region
        _
      $region24: #{encoder_forward.5} parent=11 // pred_fallthru
        _
      // Predicated region
      $region25: #{encoder_forward.5} parent=11 // pred_check
        %p193 = pneg %p122
      $region26: #{encoder_forward.5} parent=11 // pred_check_branch
        %195 = sbr.rel (%p193) target = $region28
      $region27: #{encoder_forward.5} parent=11 // pred_region
        _
      $region28: #{encoder_forward.5} parent=11 // pred_fallthru
        _
      // Predicated region
      $region29: #{encoder_forward.5} parent=11 // pred_check
        %p196 = pneg %p143
      $region30: #{encoder_forward.5} parent=11 // pred_check_branch
        %198 = sbr.rel (%p196) target = $region32
      $region31: #{encoder_forward.5} parent=11 // pred_region
        _
      $region32: #{encoder_forward.5} parent=11 // pred_fallthru
        _
    $region12: #{encoder_forward.5} parent=5 // pred_fallthru
      _
    %p199 = scmp.lt.s32.totalorder %s12, 2
    // Predicated region
    $region33: #{encoder_forward.5} parent=5 // pred_check
      %p200 = pneg %p199
    $region34: #{encoder_forward.5} parent=5 // pred_check_branch
      %202 = sbr.rel (%p200) target = $region36
    $region35: #{encoder_forward.5} parent=5 // pred_region
      // Predicated region
      $region37: #{encoder_forward.5} parent=35 // pred_check
        %p203 = pneg %p32
      $region38: #{encoder_forward.5} parent=35 // pred_check_branch
        %205 = sbr.rel (%p203) target = $region40
      $region39: #{encoder_forward.5} parent=35 // pred_region
        %p206 = scmp.lt.s32.totalorder %s12, 1
        %s207 = scalar_select %p206, %s12, 1
        %s208 = smul.addr %s207, 98
        %s209 = smul.addr %s208, 4
        %s210 = scalar_lea.vmem %s0, %s209
      $region40: #{encoder_forward.5} parent=35 // pred_fallthru
        _
    $region36: #{encoder_forward.5} parent=5 // pred_fallthru
      _
    %p211 = scmp.le.s32.totalorder 1, %s12
    %p212 = scmp.lt.s32.totalorder %s12, 3
    %p213 = pnand %p211, %p212
    %p214 = pneg %p213
    // Predicated region
    $region41: #{encoder_forward.5} parent=5 // pred_check
      _
    $region42: #{encoder_forward.5} parent=5 // pred_check_branch
      %216 = sbr.rel (%p213) target = $region44
    $region43: #{encoder_forward.5} parent=5 // pred_region
      %s217 = ssub.s32 %s12, 1
      %p218 = scmp.lt.s32.totalorder %s17, 1
      %s219 = scalar_select %p218, %s17, 1
      %s220 = smul.addr %s219, 98
      %s221 = smul.addr %s220, 4
      %s222 = scalar_lea.vmem %s0, %s221
      %p223 = pneg %p38
      %p224 = pneg %p35
      %p225 = pneg %p59
      %p226 = pneg %p56
      %p227 = pneg %p80
      %p228 = pneg %p77
      %p229 = pneg %p101
      %p230 = pneg %p98
      %p231 = pneg %p122
      %p232 = pneg %p119
      %p233 = pneg %p143
      %p234 = pneg %p140
      %p235 = pneg %p169
      %p236 = pneg %p166
      %p237 = scmp.lt.s32.totalorder %s17, 1
      %s238 = scalar_select %p237, %s17, 1
      %s239 = smul.addr %s238, 98
      %s240 = smul.addr %s239, 8
      %s241 = scalar_lea.vmem %s6, %s240
      %p242 = scmp.lt.s32.totalorder %s17, 1
      %s243 = scalar_select %p242, %s17, 1
      %s244 = smul.addr %s243, 98
      %s245 = smul.addr %s244, 4
      %s246 = scalar_lea.vmem %s0, %s245
      %p247 = scmp.lt.s32.totalorder %s17, 1
      %s248 = scalar_select %p247, %s17, 1
      %s249 = smul.addr %s248, 98
      %s250 = smul.addr %s249, 8
      %s251 = scalar_lea.vmem %s6, %s250
      %v253 = vld [vmem:[%s246] sm:$0xf]
      %v254 = vld [vmem:[%s246 + $0x4] sm:$0xf]
      %v255 = vld [vmem:[%s246 + $0x8] sm:$0xf]
      %v256 = vld [vmem:[%s246 + $0xc] sm:$0xf]
      %v257 = vld [vmem:[%s246 + $0x10] sm:$0xf]
      %v258 = vld [vmem:[%s246 + $0x14] sm:$0xf]
      %v259 = vld [vmem:[%s246 + $0x18] sm:$0xf]
      %v260 = vld [vmem:[%s246 + $0x1c] sm:$0xf]
      %v261 = vld [vmem:[%s246 + $0x20] sm:$0xf]
      %v262 = vld [vmem:[%s246 + $0x24] sm:$0xf]
      %v263 = vld [vmem:[%s246 + $0x28] sm:$0xf]
      %v264 = vld [vmem:[%s246 + $0x2c] sm:$0xf]
      %v265 = vld [vmem:[%s246 + $0x30] sm:$0xf]
      %v266 = vld [vmem:[%s246 + $0x34] sm:$0xf]
      %v267 = vld [vmem:[%s246 + $0x38] sm:$0xf]
      %v268 = vld [vmem:[%s246 + $0x3c] sm:$0xf]
      %v269 = vld [vmem:[%s246 + $0x40] sm:$0xf]
      %v270 = vld [vmem:[%s246 + $0x44] sm:$0xf]
      %v271 = vld [vmem:[%s246 + $0x48] sm:$0xf]
      %v272 = vld [vmem:[%s246 + $0x4c] sm:$0xf]
      %v273 = vld [vmem:[%s246 + $0x50] sm:$0xf]
      %v274 = vld [vmem:[%s246 + $0x54] sm:$0xf]
      %v275 = vld [vmem:[%s246 + $0x58] sm:$0xf]
      %v276 = vld [vmem:[%s246 + $0x5c] sm:$0xf]
      %v277 = vld [vmem:[%s246 + $0x60] sm:$0xf]
      %v278 = vld [vmem:[%s246 + $0x64] sm:$0xf]
      %v279 = vld [vmem:[%s246 + $0x68] sm:$0xf]
      %v280 = vld [vmem:[%s246 + $0x6c] sm:$0xf]
      %v281 = vld [vmem:[%s246 + $0x70] sm:$0xf]
      %v282 = vld [vmem:[%s246 + $0x74] sm:$0xf]
      %v283 = vld [vmem:[%s246 + $0x78] sm:$0xf]
      %v284 = vld [vmem:[%s246 + $0x7c] sm:$0xf]
      %v285 = vld [vmem:[%s246 + $0x80] sm:$0xf]
      %v286 = vld [vmem:[%s246 + $0x84] sm:$0xf]
      %v287 = vld [vmem:[%s246 + $0x88] sm:$0xf]
      %v288 = vld [vmem:[%s246 + $0x8c] sm:$0xf]
      %v289 = vld [vmem:[%s246 + $0x90] sm:$0xf]
      %v290 = vld [vmem:[%s246 + $0x94] sm:$0xf]
      %v291 = vld [vmem:[%s246 + $0x98] sm:$0xf]
      %v292 = vld [vmem:[%s246 + $0x9c] sm:$0xf]
      %v293 = vld [vmem:[%s246 + $0xa0] sm:$0xf]
      %v294 = vld [vmem:[%s246 + $0xa4] sm:$0xf]
      %v295 = vld [vmem:[%s246 + $0xa8] sm:$0xf]
      %v296 = vld [vmem:[%s246 + $0xac] sm:$0xf]
      %v297 = vld [vmem:[%s246 + $0xb0] sm:$0xf]
      %v298 = vld [vmem:[%s246 + $0xb4] sm:$0xf]
      %v299 = vld [vmem:[%s246 + $0xb8] sm:$0xf]
      %v300 = vld [vmem:[%s246 + $0xbc] sm:$0xf]
      %v301 = vld [vmem:[%s246 + $0xc0] sm:$0xf]
      %v302 = vld [vmem:[%s246 + $0xc4] sm:$0xf]
      %v303 = vld [vmem:[%s246 + $0xc8] sm:$0xf]
      %v304 = vld [vmem:[%s246 + $0xcc] sm:$0xf]
      %v305 = vld [vmem:[%s246 + $0xd0] sm:$0xf]
      %v306 = vld [vmem:[%s246 + $0xd4] sm:$0xf]
      %v307 = vld [vmem:[%s246 + $0xd8] sm:$0xf]
      %v308 = vld [vmem:[%s246 + $0xdc] sm:$0xf]
      %v309 = vld [vmem:[%s246 + $0xe0] sm:$0xf]
      %v310 = vld [vmem:[%s246 + $0xe4] sm:$0xf]
      %v311 = vld [vmem:[%s246 + $0xe8] sm:$0xf]
      %v312 = vld [vmem:[%s246 + $0xec] sm:$0xf]
      %v313 = vld [vmem:[%s246 + $0xf0] sm:$0xf]
      %v314 = vld [vmem:[%s246 + $0xf4] sm:$0xf]
      %v315 = vld [vmem:[%s246 + $0xf8] sm:$0xf]
      %v316 = vld [vmem:[%s246 + $0xfc] sm:$0xf]
      %v317 = vld [vmem:[%s246 + $0x100] sm:$0xf]
      %v318 = vld [vmem:[%s246 + $0x104] sm:$0xf]
      %v319 = vld [vmem:[%s246 + $0x108] sm:$0xf]
      %v320 = vld [vmem:[%s246 + $0x10c] sm:$0xf]
      %v321 = vld [vmem:[%s246 + $0x110] sm:$0xf]
      %v322 = vld [vmem:[%s246 + $0x114] sm:$0xf]
      %v323 = vld [vmem:[%s246 + $0x118] sm:$0xf]
      %v324 = vld [vmem:[%s246 + $0x11c] sm:$0xf]
      %v325 = vld [vmem:[%s246 + $0x120] sm:$0xf]
      %v326 = vld [vmem:[%s246 + $0x124] sm:$0xf]
      %v327 = vld [vmem:[%s246 + $0x128] sm:$0xf]
      %v328 = vld [vmem:[%s246 + $0x12c] sm:$0xf]
      %v329 = vld [vmem:[%s246 + $0x130] sm:$0xf]
      %v330 = vld [vmem:[%s246 + $0x134] sm:$0xf]
      %v331 = vld [vmem:[%s246 + $0x138] sm:$0xf]
      %v332 = vld [vmem:[%s246 + $0x13c] sm:$0xf]
      %v333 = vld [vmem:[%s246 + $0x140] sm:$0xf]
      %v334 = vld [vmem:[%s246 + $0x144] sm:$0xf]
      %v335 = vld [vmem:[%s246 + $0x148] sm:$0xf]
      %v336 = vld [vmem:[%s246 + $0x14c] sm:$0xf]
      %v337 = vld [vmem:[%s246 + $0x150] sm:$0xf]
      %v338 = vld [vmem:[%s246 + $0x154] sm:$0xf]
      %v339 = vld [vmem:[%s246 + $0x158] sm:$0xf]
      %v340 = vld [vmem:[%s246 + $0x15c] sm:$0xf]
      %v341 = vld [vmem:[%s246 + $0x160] sm:$0xf]
      %v342 = vld [vmem:[%s246 + $0x164] sm:$0xf]
      %v343 = vld [vmem:[%s246 + $0x168] sm:$0xf]
      %v344 = vld [vmem:[%s246 + $0x16c] sm:$0xf]
      %v345 = vld [vmem:[%s246 + $0x170] sm:$0xf]
      %v346 = vld [vmem:[%s246 + $0x174] sm:$0xf]
      %v347 = vld [vmem:[%s246 + $0x178] sm:$0xf]
      %v348 = vld [vmem:[%s246 + $0x17c] sm:$0xf]
      %v349 = vld [vmem:[%s246 + $0x180] sm:$0xf]
      %v350 = vld [vmem:[%s246 + $0x184] sm:$0xf]
      %v351 = vld [vmem:[%s1] sm:$0xff]
      %v352 = vld [vmem:[%s1 + $0x8] sm:$0xff]
      %v353 = vld [vmem:[%s1 + $0x10] sm:$0xff]
      %v354 = vld [vmem:[%s1 + $0x18] sm:$0xff]
      %v355 = vld [vmem:[%s1 + $0x20] sm:$0xff]
      %v356 = vld [vmem:[%s1 + $0x28] sm:$0xff]
      %v357 = vld [vmem:[%s1 + $0x30] sm:$0xff]
      %v358 = vld [vmem:[%s1 + $0x38] sm:$0xff]
      %v359 = vld [vmem:[%s1 + $0x40] sm:$0xff]
      %v360 = vld [vmem:[%s1 + $0x48] sm:$0xff]
      %v361 = vld [vmem:[%s1 + $0x50] sm:$0xff]
      %v362 = vld [vmem:[%s1 + $0x58] sm:$0xff]
      %v363 = vld [vmem:[%s1 + $0x60] sm:$0xff]
      %v364 = vld [vmem:[%s1 + $0x68] sm:$0xff]
      %v365 = vld [vmem:[%s1 + $0x70] sm:$0xff]
      %v366 = vld [vmem:[%s1 + $0x78] sm:$0xff]
      %v367 = vld [vmem:[%s2] sm:$0x3]
      %v369 = vlaneseq
      %v370 = vshrl.u32 %v369, 7
      %v371 = vsub.s32 0, %v370
      %v372 = vrot.slane %v367, %v371
      %v373 = vlaneseq
      %v374 = vshrl.u32 %v373, 7
      %v375 = vsub.s32 1, %v374
      %v376 = vrot.slane %v367, %v375
      %v477 = vunpack.c.l.b16 %v253
      %v478 = vunpack.c.l.b16 %v254
      %v479 = vunpack.c.l.b16 %v255
      %v480 = vunpack.c.l.b16 %v256
      %v481 = vunpack.c.l.b16 %v257
      %v482 = vunpack.c.l.b16 %v258
      %v483 = vunpack.c.l.b16 %v259
      %v484 = vunpack.c.l.b16 %v260
      %v485 = vunpack.c.l.b16 %v261
      %v486 = vunpack.c.l.b16 %v262
      %v487 = vunpack.c.l.b16 %v263
      %v488 = vunpack.c.l.b16 %v264
      %v489 = vunpack.c.l.b16 %v265
      %v490 = vunpack.c.l.b16 %v266
      %v491 = vunpack.c.l.b16 %v267
      %v492 = vunpack.c.l.b16 %v268
      %v493 = vunpack.c.l.b16 %v269
      %v494 = vunpack.c.l.b16 %v270
      %v495 = vunpack.c.l.b16 %v271
      %v496 = vunpack.c.l.b16 %v272
      %v497 = vunpack.c.l.b16 %v273
      %v498 = vunpack.c.l.b16 %v274
      %v499 = vunpack.c.l.b16 %v275
      %v500 = vunpack.c.l.b16 %v276
      %v501 = vunpack.c.l.b16 %v277
      %v502 = vunpack.c.l.b16 %v278
      %v503 = vunpack.c.l.b16 %v279
      %v504 = vunpack.c.l.b16 %v280
      %v505 = vunpack.c.l.b16 %v281
      %v506 = vunpack.c.l.b16 %v282
      %v507 = vunpack.c.l.b16 %v283
      %v508 = vunpack.c.l.b16 %v284
      %v509 = vunpack.c.l.b16 %v285
      %v510 = vunpack.c.l.b16 %v286
      %v511 = vunpack.c.l.b16 %v287
      %v512 = vunpack.c.l.b16 %v288
      %v513 = vunpack.c.l.b16 %v289
      %v514 = vunpack.c.l.b16 %v290
      %v515 = vunpack.c.l.b16 %v291
      %v516 = vunpack.c.l.b16 %v292
      %v517 = vunpack.c.l.b16 %v293
      %v518 = vunpack.c.l.b16 %v294
      %v519 = vunpack.c.l.b16 %v295
      %v520 = vunpack.c.l.b16 %v296
      %v521 = vunpack.c.l.b16 %v297
      %v522 = vunpack.c.l.b16 %v298
      %v523 = vunpack.c.l.b16 %v299
      %v524 = vunpack.c.l.b16 %v300
      %v525 = vunpack.c.l.b16 %v301
      %v526 = vunpack.c.l.b16 %v302
      %v527 = vunpack.c.l.b16 %v303
      %v528 = vunpack.c.l.b16 %v304
      %v529 = vunpack.c.l.b16 %v305
      %v530 = vunpack.c.l.b16 %v306
      %v531 = vunpack.c.l.b16 %v307
      %v532 = vunpack.c.l.b16 %v308
      %v533 = vunpack.c.l.b16 %v309
      %v534 = vunpack.c.l.b16 %v310
      %v535 = vunpack.c.l.b16 %v311
      %v536 = vunpack.c.l.b16 %v312
      %v537 = vunpack.c.l.b16 %v313
      %v538 = vunpack.c.l.b16 %v314
      %v539 = vunpack.c.l.b16 %v315
      %v540 = vunpack.c.l.b16 %v316
      %v541 = vunpack.c.l.b16 %v317
      %v542 = vunpack.c.l.b16 %v318
      %v543 = vunpack.c.l.b16 %v319
      %v544 = vunpack.c.l.b16 %v320
      %v545 = vunpack.c.l.b16 %v321
      %v546 = vunpack.c.l.b16 %v322
      %v547 = vunpack.c.l.b16 %v323
      %v548 = vunpack.c.l.b16 %v324
      %v549 = vunpack.c.l.b16 %v325
      %v550 = vunpack.c.l.b16 %v326
      %v551 = vunpack.c.l.b16 %v327
      %v552 = vunpack.c.l.b16 %v328
      %v553 = vunpack.c.l.b16 %v329
      %v554 = vunpack.c.l.b16 %v330
      %v555 = vunpack.c.l.b16 %v331
      %v556 = vunpack.c.l.b16 %v332
      %v557 = vunpack.c.l.b16 %v333
      %v558 = vunpack.c.l.b16 %v334
      %v559 = vunpack.c.l.b16 %v335
      %v560 = vunpack.c.l.b16 %v336
      %v561 = vunpack.c.l.b16 %v337
      %v562 = vunpack.c.l.b16 %v338
      %v563 = vunpack.c.l.b16 %v339
      %v564 = vunpack.c.l.b16 %v340
      %v565 = vunpack.c.l.b16 %v341
      %v566 = vunpack.c.l.b16 %v342
      %v567 = vunpack.c.l.b16 %v343
      %v568 = vunpack.c.l.b16 %v344
      %v569 = vunpack.c.l.b16 %v345
      %v570 = vunpack.c.l.b16 %v346
      %v571 = vunpack.c.l.b16 %v347
      %v572 = vunpack.c.l.b16 %v348
      %v573 = vunpack.c.l.b16 %v349
      %v574 = vunpack.c.l.b16 %v350
      %v575 = vpack.c.b16 %v478, %v477
      %v576 = vpack.c.b16 %v480, %v479
      %v577 = vpack.c.b16 %v482, %v481
      %v578 = vpack.c.b16 %v484, %v483
      %v579 = vpack.c.b16 %v486, %v485
      %v580 = vpack.c.b16 %v488, %v487
      %v581 = vpack.c.b16 %v490, %v489
      %v582 = vpack.c.b16 %v492, %v491
      %v583 = vpack.c.b16 %v494, %v493
      %v584 = vpack.c.b16 %v496, %v495
      %v585 = vpack.c.b16 %v498, %v497
      %v586 = vpack.c.b16 %v500, %v499
      %v587 = vpack.c.b16 %v502, %v501
      %v588 = vpack.c.b16 %v504, %v503
      %v589 = vpack.c.b16 %v506, %v505
      %v590 = vpack.c.b16 %v508, %v507
      %v591 = vpack.c.b16 %v510, %v509
      %v592 = vpack.c.b16 %v512, %v511
      %v593 = vpack.c.b16 %v514, %v513
      %v594 = vpack.c.b16 %v516, %v515
      %v595 = vpack.c.b16 %v518, %v517
      %v596 = vpack.c.b16 %v520, %v519
      %v597 = vpack.c.b16 %v522, %v521
      %v598 = vpack.c.b16 %v524, %v523
      %v599 = vpack.c.b16 %v526, %v525
      %v600 = vpack.c.b16 %v528, %v527
      %v601 = vpack.c.b16 %v530, %v529
      %v602 = vpack.c.b16 %v532, %v531
      %v603 = vpack.c.b16 %v534, %v533
      %v604 = vpack.c.b16 %v536, %v535
      %v605 = vpack.c.b16 %v538, %v537
      %v606 = vpack.c.b16 %v540, %v539
      %v607 = vpack.c.b16 %v542, %v541
      %v608 = vpack.c.b16 %v544, %v543
      %v609 = vpack.c.b16 %v546, %v545
      %v610 = vpack.c.b16 %v548, %v547
      %v611 = vpack.c.b16 %v550, %v549
      %v612 = vpack.c.b16 %v552, %v551
      %v613 = vpack.c.b16 %v554, %v553
      %v614 = vpack.c.b16 %v556, %v555
      %v615 = vpack.c.b16 %v558, %v557
      %v616 = vpack.c.b16 %v560, %v559
      %v617 = vpack.c.b16 %v562, %v561
      %v618 = vpack.c.b16 %v564, %v563
      %v619 = vpack.c.b16 %v566, %v565
      %v620 = vpack.c.b16 %v568, %v567
      %v621 = vpack.c.b16 %v570, %v569
      %v622 = vpack.c.b16 %v572, %v571
      %v623 = vpack.c.b16 %v574, %v573
      %v689 = vunpack.c.l.b16 %v351
      %v690 = vunpack.c.h.b16 %v351
      %v691 = vunpack.c.l.b16 %v352
      %v692 = vunpack.c.h.b16 %v352
      %v693 = vunpack.c.l.b16 %v353
      %v694 = vunpack.c.h.b16 %v353
      %v695 = vunpack.c.l.b16 %v354
      %v696 = vunpack.c.h.b16 %v354
      %v697 = vunpack.c.l.b16 %v355
      %v698 = vunpack.c.h.b16 %v355
      %v699 = vunpack.c.l.b16 %v356
      %v700 = vunpack.c.h.b16 %v356
      %v701 = vunpack.c.l.b16 %v357
      %v702 = vunpack.c.h.b16 %v357
      %v703 = vunpack.c.l.b16 %v358
      %v704 = vunpack.c.h.b16 %v358
      %v705 = vunpack.c.l.b16 %v359
      %v706 = vunpack.c.h.b16 %v359
      %v707 = vunpack.c.l.b16 %v360
      %v708 = vunpack.c.h.b16 %v360
      %v709 = vunpack.c.l.b16 %v361
      %v710 = vunpack.c.h.b16 %v361
      %v711 = vunpack.c.l.b16 %v362
      %v712 = vunpack.c.h.b16 %v362
      %v713 = vunpack.c.l.b16 %v363
      %v714 = vunpack.c.h.b16 %v363
      %v715 = vunpack.c.l.b16 %v364
      %v716 = vunpack.c.h.b16 %v364
      %v717 = vunpack.c.l.b16 %v365
      %v718 = vunpack.c.h.b16 %v365
      %v719 = vunpack.c.l.b16 %v366
      %v720 = vunpack.c.h.b16 %v366
      %v721 = vpack.c.b16 %v691, %v689
      %v722 = vpack.c.b16 %v692, %v690
      %v723 = vpack.c.b16 %v695, %v693
      %v724 = vpack.c.b16 %v696, %v694
      %v725 = vpack.c.b16 %v699, %v697
      %v726 = vpack.c.b16 %v700, %v698
      %v727 = vpack.c.b16 %v703, %v701
      %v728 = vpack.c.b16 %v704, %v702
      %v729 = vpack.c.b16 %v707, %v705
      %v730 = vpack.c.b16 %v708, %v706
      %v731 = vpack.c.b16 %v711, %v709
      %v732 = vpack.c.b16 %v712, %v710
      %v733 = vpack.c.b16 %v715, %v713
      %v734 = vpack.c.b16 %v716, %v714
      %v735 = vpack.c.b16 %v719, %v717
      %v736 = vpack.c.b16 %v720, %v718
      %753 = vmatprep.subr.bf16.mxu0 %v722
      %754 = vmatpush1.bf16.msra.mxu0 %v721
      %755 = vmatprep.subr.bf16.mxu0 %v724
      %756 = vmatpush1.bf16.msra.mxu0 %v723
      %757 = vmatprep.subr.bf16.mxu0 %v726
      %758 = vmatpush1.bf16.msra.mxu0 %v725
      %759 = vmatprep.subr.bf16.mxu0 %v728
      %760 = vmatpush1.bf16.msra.mxu0 %v727
      %761 = vmatprep.subr.bf16.mxu0 %v730
      %762 = vmatpush1.bf16.msra.mxu0 %v729
      %763 = vmatprep.subr.bf16.mxu0 %v732
      %764 = vmatpush1.bf16.msra.mxu0 %v731
      %765 = vmatprep.subr.bf16.mxu0 %v734
      %766 = vmatpush1.bf16.msra.mxu0 %v733
      %767 = vmatprep.subr.bf16.mxu0 %v736
      %768 = vmatpush1.bf16.msra.mxu0 %v735
      %769 = vmatprep.subr.bf16.mxu0 0
      %770 = vmatpush1.bf16.msra.mxu0 0
      %771 = vmatprep.subr.bf16.mxu0 0
      %772 = vmatpush1.bf16.msra.mxu0 0
      %773 = vmatprep.subr.bf16.mxu0 0
      %774 = vmatpush1.bf16.msra.mxu0 0
      %775 = vmatprep.subr.bf16.mxu0 0
      %776 = vmatpush1.bf16.msra.mxu0 0
      %777 = vmatprep.subr.bf16.mxu0 0
      %778 = vmatpush1.bf16.msra.mxu0 0
      %779 = vmatprep.subr.bf16.mxu0 0
      %780 = vmatpush1.bf16.msra.mxu0 0
      %781 = vmatprep.subr.bf16.mxu0 0
      %782 = vmatpush1.bf16.msra.mxu0 0
      %783 = vmatprep.subr.bf16.mxu0 0
      %784 = vmatpush1.bf16.msra.mxu0 0
      %785 = vmatprep.mubr.bf16.mxu0 0
      %786 = vmatmul.mubr.bf16.gmra.mrb[0].mxu0 %v575
      %v787 = vpop.f32.mrb[0].mxu0
      %v788 = vadd.f32 %v372, %v787
      %v789 = vpop.f32.mrb[0].mxu0
      %v790 = vadd.f32 %v376, %v789
      %v791 = vpop.f32.mrb[0].mxu0
      %v792 = vadd.f32 %v372, %v791
      %v793 = vpop.f32.mrb[0].mxu0
      %v794 = vadd.f32 %v376, %v793
      %795 = vmatprep.mubr.bf16.mxu0 0
      %796 = vmatmul.mubr.bf16.gmra.mrb[0].mxu0 %v576
      %v797 = vpop.f32.mrb[0].mxu0
      %v798 = vadd.f32 %v372, %v797
      %v799 = vpop.f32.mrb[0].mxu0
      %v800 = vadd.f32 %v376, %v799
      %v801 = vpop.f32.mrb[0].mxu0
      %v802 = vadd.f32 %v372, %v801
      %v803 = vpop.f32.mrb[0].mxu0
      %v804 = vadd.f32 %v376, %v803
      %805 = vmatprep.mubr.bf16.mxu0 0
      %806 = vmatmul.mubr.bf16.gmra.mrb[0].mxu0 %v577
      %v807 = vpop.f32.mrb[0].mxu0
      %v808 = vadd.f32 %v372, %v807
      %v809 = vpop.f32.mrb[0].mxu0
      %v810 = vadd.f32 %v376, %v809
      %v811 = vpop.f32.mrb[0].mxu0
      %v812 = vadd.f32 %v372, %v811
      %v813 = vpop.f32.mrb[0].mxu0
      %v814 = vadd.f32 %v376, %v813
      %815 = vmatprep.mubr.bf16.mxu0 0
      %816 = vmatmul.mubr.bf16.gmra.mrb[0].mxu0 %v578
      %v817 = vpop.f32.mrb[0].mxu0
      %v818 = vadd.f32 %v372, %v817
      %v819 = vpop.f32.mrb[0].mxu0
      %v820 = vadd.f32 %v376, %v819
      %v821 = vpop.f32.mrb[0].mxu0
      %v822 = vadd.f32 %v372, %v821
      %v823 = vpop.f32.mrb[0].mxu0
      %v824 = vadd.f32 %v376, %v823
      %825 = vmatprep.mubr.bf16.mxu0 0
      %826 = vmatmul.mubr.bf16.gmra.mrb[0].mxu0 %v579
      %v827 = vpop.f32.mrb[0].mxu0
      %v828 = vadd.f32 %v372, %v827
      %v829 = vpop.f32.mrb[0].mxu0
      %v830 = vadd.f32 %v376, %v829
      %v831 = vpop.f32.mrb[0].mxu0
      %v832 = vadd.f32 %v372, %v831
      %v833 = vpop.f32.mrb[0].mxu0
      %v834 = vadd.f32 %v376, %v833
      %835 = vmatprep.mubr.bf16.mxu0 0
      %836 = vmatmul.mubr.bf16.gmra.mrb[0].mxu0 %v580
      %v837 = vpop.f32.mrb[0].mxu0
      %v838 = vadd.f32 %v372, %v837
      %v839 = vpop.f32.mrb[0].mxu0
      %v840 = vadd.f32 %v376, %v839
      %v841 = vpop.f32.mrb[0].mxu0
      %v842 = vadd.f32 %v372, %v841
      %v843 = vpop.f32.mrb[0].mxu0
      %v844 = vadd.f32 %v376, %v843
      %845 = vmatprep.mubr.bf16.mxu0 0
      %846 = vmatmul.mubr.bf16.gmra.mrb[0].mxu0 %v581
      %v847 = vpop.f32.mrb[0].mxu0
      %v848 = vadd.f32 %v372, %v847
      %v849 = vpop.f32.mrb[0].mxu0
      %v850 = vadd.f32 %v376, %v849
      %v851 = vpop.f32.mrb[0].mxu0
      %v852 = vadd.f32 %v372, %v851
      %v853 = vpop.f32.mrb[0].mxu0
      %v854 = vadd.f32 %v376, %v853
      %855 = vmatprep.mubr.bf16.mxu0 0
      %856 = vmatmul.mubr.bf16.gmra.mrb[0].mxu0 %v582
      %v857 = vpop.f32.mrb[0].mxu0
      %v858 = vadd.f32 %v372, %v857
      %v859 = vpop.f32.mrb[0].mxu0
      %v860 = vadd.f32 %v376, %v859
      %v861 = vpop.f32.mrb[0].mxu0
      %v862 = vadd.f32 %v372, %v861
      %v863 = vpop.f32.mrb[0].mxu0
      %v864 = vadd.f32 %v376, %v863
      %865 = vmatprep.mubr.bf16.mxu0 0
      %866 = vmatmul.mubr.bf16.gmra.mrb[0].mxu0 %v583
      %v867 = vpop.f32.mrb[0].mxu0
      %v868 = vadd.f32 %v372, %v867
      %v869 = vpop.f32.mrb[0].mxu0
      %v870 = vadd.f32 %v376, %v869
      %v871 = vpop.f32.mrb[0].mxu0
      %v872 = vadd.f32 %v372, %v871
      %v873 = vpop.f32.mrb[0].mxu0
      %v874 = vadd.f32 %v376, %v873
      %875 = vmatprep.mubr.bf16.mxu0 0
      %876 = vmatmul.mubr.bf16.gmra.mrb[0].mxu0 %v584
      %v877 = vpop.f32.mrb[0].mxu0
      %v878 = vadd.f32 %v372, %v877
      %v879 = vpop.f32.mrb[0].mxu0
      %v880 = vadd.f32 %v376, %v879
      %v881 = vpop.f32.mrb[0].mxu0
      %v882 = vadd.f32 %v372, %v881
      %v883 = vpop.f32.mrb[0].mxu0
      %v884 = vadd.f32 %v376, %v883
      %885 = vmatprep.mubr.bf16.mxu0 0
      %886 = vmatmul.mubr.bf16.gmra.mrb[0].mxu0 %v585
      %v887 = vpop.f32.mrb[0].mxu0
      %v888 = vadd.f32 %v372, %v887
      %v889 = vpop.f32.mrb[0].mxu0
      %v890 = vadd.f32 %v376, %v889
      %v891 = vpop.f32.mrb[0].mxu0
      %v892 = vadd.f32 %v372, %v891
      %v893 = vpop.f32.mrb[0].mxu0
      %v894 = vadd.f32 %v376, %v893
      %895 = vmatprep.mubr.bf16.mxu0 0
      %896 = vmatmul.mubr.bf16.gmra.mrb[0].mxu0 %v586
      %v897 = vpop.f32.mrb[0].mxu0
      %v898 = vadd.f32 %v372, %v897
      %v899 = vpop.f32.mrb[0].mxu0
      %v900 = vadd.f32 %v376, %v899
      %v901 = vpop.f32.mrb[0].mxu0
      %v902 = vadd.f32 %v372, %v901
      %v903 = vpop.f32.mrb[0].mxu0
      %v904 = vadd.f32 %v376, %v903
      %905 = vmatprep.mubr.bf16.mxu0 0
      %906 = vmatmul.mubr.bf16.gmra.mrb[0].mxu0 %v587
      %v907 = vpop.f32.mrb[0].mxu0
      %v908 = vadd.f32 %v372, %v907
      %v909 = vpop.f32.mrb[0].mxu0
      %v910 = vadd.f32 %v376, %v909
      %v911 = vpop.f32.mrb[0].mxu0
      %v912 = vadd.f32 %v372, %v911
      %v913 = vpop.f32.mrb[0].mxu0
      %v914 = vadd.f32 %v376, %v913
      %915 = vmatprep.mubr.bf16.mxu0 0
      %916 = vmatmul.mubr.bf16.gmra.mrb[0].mxu0 %v588
      %v917 = vpop.f32.mrb[0].mxu0
      %v918 = vadd.f32 %v372, %v917
      %v919 = vpop.f32.mrb[0].mxu0
      %v920 = vadd.f32 %v376, %v919
      %v921 = vpop.f32.mrb[0].mxu0
      %v922 = vadd.f32 %v372, %v921
      %v923 = vpop.f32.mrb[0].mxu0
      %v924 = vadd.f32 %v376, %v923
      %925 = vmatprep.mubr.bf16.mxu0 0
      %926 = vmatmul.mubr.bf16.gmra.mrb[0].mxu0 %v589
      %v927 = vpop.f32.mrb[0].mxu0
      %v928 = vadd.f32 %v372, %v927
      %v929 = vpop.f32.mrb[0].mxu0
      %v930 = vadd.f32 %v376, %v929
      %v931 = vpop.f32.mrb[0].mxu0
      %v932 = vadd.f32 %v372, %v931
      %v933 = vpop.f32.mrb[0].mxu0
      %v934 = vadd.f32 %v376, %v933
      %935 = vmatprep.mubr.bf16.mxu0 0
      %936 = vmatmul.mubr.bf16.gmra.mrb[0].mxu0 %v590
      %v937 = vpop.f32.mrb[0].mxu0
      %v938 = vadd.f32 %v372, %v937
      %v939 = vpop.f32.mrb[0].mxu0
      %v940 = vadd.f32 %v376, %v939
      %v941 = vpop.f32.mrb[0].mxu0
      %v942 = vadd.f32 %v372, %v941
      %v943 = vpop.f32.mrb[0].mxu0
      %v944 = vadd.f32 %v376, %v943
      %945 = vmatprep.mubr.bf16.mxu0 0
      %946 = vmatmul.mubr.bf16.gmra.mrb[0].mxu0 %v591
      %v947 = vpop.f32.mrb[0].mxu0
      %v948 = vadd.f32 %v372, %v947
      %v949 = vpop.f32.mrb[0].mxu0
      %v950 = vadd.f32 %v376, %v949
      %v951 = vpop.f32.mrb[0].mxu0
      %v952 = vadd.f32 %v372, %v951
      %v953 = vpop.f32.mrb[0].mxu0
      %v954 = vadd.f32 %v376, %v953
      %955 = vmatprep.mubr.bf16.mxu0 0
      %956 = vmatmul.mubr.bf16.gmra.mrb[0].mxu0 %v592
      %v957 = vpop.f32.mrb[0].mxu0
      %v958 = vadd.f32 %v372, %v957
      %v959 = vpop.f32.mrb[0].mxu0
      %v960 = vadd.f32 %v376, %v959
      %v961 = vpop.f32.mrb[0].mxu0
      %v962 = vadd.f32 %v372, %v961
      %v963 = vpop.f32.mrb[0].mxu0
      %v964 = vadd.f32 %v376, %v963
      %965 = vmatprep.mubr.bf16.mxu0 0
      %966 = vmatmul.mubr.bf16.gmra.mrb[0].mxu0 %v593
      %v967 = vpop.f32.mrb[0].mxu0
      %v968 = vadd.f32 %v372, %v967
      %v969 = vpop.f32.mrb[0].mxu0
      %v970 = vadd.f32 %v376, %v969
      %v971 = vpop.f32.mrb[0].mxu0
      %v972 = vadd.f32 %v372, %v971
      %v973 = vpop.f32.mrb[0].mxu0
      %v974 = vadd.f32 %v376, %v973
      %975 = vmatprep.mubr.bf16.mxu0 0
      %976 = vmatmul.mubr.bf16.gmra.mrb[0].mxu0 %v594
      %v977 = vpop.f32.mrb[0].mxu0
      %v978 = vadd.f32 %v372, %v977
      %v979 = vpop.f32.mrb[0].mxu0
      %v980 = vadd.f32 %v376, %v979
      %v981 = vpop.f32.mrb[0].mxu0
      %v982 = vadd.f32 %v372, %v981
      %v983 = vpop.f32.mrb[0].mxu0
      %v984 = vadd.f32 %v376, %v983
      %985 = vmatprep.mubr.bf16.mxu0 0
      %986 = vmatmul.mubr.bf16.gmra.mrb[0].mxu0 %v595
      %v987 = vpop.f32.mrb[0].mxu0
      %v988 = vadd.f32 %v372, %v987
      %v989 = vpop.f32.mrb[0].mxu0
      %v990 = vadd.f32 %v376, %v989
      %v991 = vpop.f32.mrb[0].mxu0
      %v992 = vadd.f32 %v372, %v991
      %v993 = vpop.f32.mrb[0].mxu0
      %v994 = vadd.f32 %v376, %v993
      %995 = vmatprep.mubr.bf16.mxu0 0
      %996 = vmatmul.mubr.bf16.gmra.mrb[0].mxu0 %v596
      %v997 = vpop.f32.mrb[0].mxu0
      %v998 = vadd.f32 %v372, %v997
      %v999 = vpop.f32.mrb[0].mxu0
      %v1000 = vadd.f32 %v376, %v999
      %v1001 = vpop.f32.mrb[0].mxu0
      %v1002 = vadd.f32 %v372, %v1001
      %v1003 = vpop.f32.mrb[0].mxu0
      %v1004 = vadd.f32 %v376, %v1003
      %1005 = vmatprep.mubr.bf16.mxu0 0
      %1006 = vmatmul.mubr.bf16.gmra.mrb[0].mxu0 %v597
      %v1007 = vpop.f32.mrb[0].mxu0
      %v1008 = vadd.f32 %v372, %v1007
      %v1009 = vpop.f32.mrb[0].mxu0
      %v1010 = vadd.f32 %v376, %v1009
      %v1011 = vpop.f32.mrb[0].mxu0
      %v1012 = vadd.f32 %v372, %v1011
      %v1013 = vpop.f32.mrb[0].mxu0
      %v1014 = vadd.f32 %v376, %v1013
      %1015 = vmatprep.mubr.bf16.mxu0 0
      %1016 = vmatmul.mubr.bf16.gmra.mrb[0].mxu0 %v598
      %v1017 = vpop.f32.mrb[0].mxu0
      %v1018 = vadd.f32 %v372, %v1017
      %v1019 = vpop.f32.mrb[0].mxu0
      %v1020 = vadd.f32 %v376, %v1019
      %v1021 = vpop.f32.mrb[0].mxu0
      %v1022 = vadd.f32 %v372, %v1021
      %v1023 = vpop.f32.mrb[0].mxu0
      %v1024 = vadd.f32 %v376, %v1023
      %1025 = vmatprep.mubr.bf16.mxu0 0
      %1026 = vmatmul.mubr.bf16.gmra.mrb[0].mxu0 %v599
      %v1027 = vpop.f32.mrb[0].mxu0
      %v1028 = vadd.f32 %v372, %v1027
      %v1029 = vpop.f32.mrb[0].mxu0
      %v1030 = vadd.f32 %v376, %v1029
      %v1031 = vpop.f32.mrb[0].mxu0
      %v1032 = vadd.f32 %v372, %v1031
      %v1033 = vpop.f32.mrb[0].mxu0
      %v1034 = vadd.f32 %v376, %v1033
      %1035 = vmatprep.mubr.bf16.mxu0 0
      %1036 = vmatmul.mubr.bf16.gmra.mrb[0].mxu0 %v600
      %v1037 = vpop.f32.mrb[0].mxu0
      %v1038 = vadd.f32 %v372, %v1037
      %v1039 = vpop.f32.mrb[0].mxu0
      %v1040 = vadd.f32 %v376, %v1039
      %v1041 = vpop.f32.mrb[0].mxu0
      %v1042 = vadd.f32 %v372, %v1041
      %v1043 = vpop.f32.mrb[0].mxu0
      %v1044 = vadd.f32 %v376, %v1043
      %1045 = vmatprep.mubr.bf16.mxu0 0
      %1046 = vmatmul.mubr.bf16.gmra.mrb[0].mxu0 %v601
      %v1047 = vpop.f32.mrb[0].mxu0
      %v1048 = vadd.f32 %v372, %v1047
      %v1049 = vpop.f32.mrb[0].mxu0
      %v1050 = vadd.f32 %v376, %v1049
      %v1051 = vpop.f32.mrb[0].mxu0
      %v1052 = vadd.f32 %v372, %v1051
      %v1053 = vpop.f32.mrb[0].mxu0
      %v1054 = vadd.f32 %v376, %v1053
      %1055 = vmatprep.mubr.bf16.mxu0 0
      %1056 = vmatmul.mubr.bf16.gmra.mrb[0].mxu0 %v602
      %v1057 = vpop.f32.mrb[0].mxu0
      %v1058 = vadd.f32 %v372, %v1057
      %v1059 = vpop.f32.mrb[0].mxu0
      %v1060 = vadd.f32 %v376, %v1059
      %v1061 = vpop.f32.mrb[0].mxu0
      %v1062 = vadd.f32 %v372, %v1061
      %v1063 = vpop.f32.mrb[0].mxu0
      %v1064 = vadd.f32 %v376, %v1063
      %1065 = vmatprep.mubr.bf16.mxu0 0
      %1066 = vmatmul.mubr.bf16.gmra.mrb[0].mxu0 %v603
      %v1067 = vpop.f32.mrb[0].mxu0
      %v1068 = vadd.f32 %v372, %v1067
      %v1069 = vpop.f32.mrb[0].mxu0
      %v1070 = vadd.f32 %v376, %v1069
      %v1071 = vpop.f32.mrb[0].mxu0
      %v1072 = vadd.f32 %v372, %v1071
      %v1073 = vpop.f32.mrb[0].mxu0
      %v1074 = vadd.f32 %v376, %v1073
      %1075 = vmatprep.mubr.bf16.mxu0 0
      %1076 = vmatmul.mubr.bf16.gmra.mrb[0].mxu0 %v604
      %v1077 = vpop.f32.mrb[0].mxu0
      %v1078 = vadd.f32 %v372, %v1077
      %v1079 = vpop.f32.mrb[0].mxu0
      %v1080 = vadd.f32 %v376, %v1079
      %v1081 = vpop.f32.mrb[0].mxu0
      %v1082 = vadd.f32 %v372, %v1081
      %v1083 = vpop.f32.mrb[0].mxu0
      %v1084 = vadd.f32 %v376, %v1083
      %1085 = vmatprep.mubr.bf16.mxu0 0
      %1086 = vmatmul.mubr.bf16.gmra.mrb[0].mxu0 %v605
      %v1087 = vpop.f32.mrb[0].mxu0
      %v1088 = vadd.f32 %v372, %v1087
      %v1089 = vpop.f32.mrb[0].mxu0
      %v1090 = vadd.f32 %v376, %v1089
      %v1091 = vpop.f32.mrb[0].mxu0
      %v1092 = vadd.f32 %v372, %v1091
      %v1093 = vpop.f32.mrb[0].mxu0
      %v1094 = vadd.f32 %v376, %v1093
      %1095 = vmatprep.mubr.bf16.mxu0 0
      %1096 = vmatmul.mubr.bf16.gmra.mrb[0].mxu0 %v606
      %v1097 = vpop.f32.mrb[0].mxu0
      %v1098 = vadd.f32 %v372, %v1097
      %v1099 = vpop.f32.mrb[0].mxu0
      %v1100 = vadd.f32 %v376, %v1099
      %v1101 = vpop.f32.mrb[0].mxu0
      %v1102 = vadd.f32 %v372, %v1101
      %v1103 = vpop.f32.mrb[0].mxu0
      %v1104 = vadd.f32 %v376, %v1103
      %1105 = vmatprep.mubr.bf16.mxu0 0
      %1106 = vmatmul.mubr.bf16.gmra.mrb[0].mxu0 %v607
      %v1107 = vpop.f32.mrb[0].mxu0
      %v1108 = vadd.f32 %v372, %v1107
      %v1109 = vpop.f32.mrb[0].mxu0
      %v1110 = vadd.f32 %v376, %v1109
      %v1111 = vpop.f32.mrb[0].mxu0
      %v1112 = vadd.f32 %v372, %v1111
      %v1113 = vpop.f32.mrb[0].mxu0
      %v1114 = vadd.f32 %v376, %v1113
      %1115 = vmatprep.mubr.bf16.mxu0 0
      %1116 = vmatmul.mubr.bf16.gmra.mrb[0].mxu0 %v608
      %v1117 = vpop.f32.mrb[0].mxu0
      %v1118 = vadd.f32 %v372, %v1117
      %v1119 = vpop.f32.mrb[0].mxu0
      %v1120 = vadd.f32 %v376, %v1119
      %v1121 = vpop.f32.mrb[0].mxu0
      %v1122 = vadd.f32 %v372, %v1121
      %v1123 = vpop.f32.mrb[0].mxu0
      %v1124 = vadd.f32 %v376, %v1123
      %1125 = vmatprep.mubr.bf16.mxu0 0
      %1126 = vmatmul.mubr.bf16.gmra.mrb[0].mxu0 %v609
      %v1127 = vpop.f32.mrb[0].mxu0
      %v1128 = vadd.f32 %v372, %v1127
      %v1129 = vpop.f32.mrb[0].mxu0
      %v1130 = vadd.f32 %v376, %v1129
      %v1131 = vpop.f32.mrb[0].mxu0
      %v1132 = vadd.f32 %v372, %v1131
      %v1133 = vpop.f32.mrb[0].mxu0
      %v1134 = vadd.f32 %v376, %v1133
      %1135 = vmatprep.mubr.bf16.mxu0 0
      %1136 = vmatmul.mubr.bf16.gmra.mrb[0].mxu0 %v610
      %v1137 = vpop.f32.mrb[0].mxu0
      %v1138 = vadd.f32 %v372, %v1137
      %v1139 = vpop.f32.mrb[0].mxu0
      %v1140 = vadd.f32 %v376, %v1139
      %v1141 = vpop.f32.mrb[0].mxu0
      %v1142 = vadd.f32 %v372, %v1141
      %v1143 = vpop.f32.mrb[0].mxu0
      %v1144 = vadd.f32 %v376, %v1143
      %1145 = vmatprep.mubr.bf16.mxu0 0
      %1146 = vmatmul.mubr.bf16.gmra.mrb[0].mxu0 %v611
      %v1147 = vpop.f32.mrb[0].mxu0
      %v1148 = vadd.f32 %v372, %v1147
      %v1149 = vpop.f32.mrb[0].mxu0
      %v1150 = vadd.f32 %v376, %v1149
      %v1151 = vpop.f32.mrb[0].mxu0
      %v1152 = vadd.f32 %v372, %v1151
      %v1153 = vpop.f32.mrb[0].mxu0
      %v1154 = vadd.f32 %v376, %v1153
      %1155 = vmatprep.mubr.bf16.mxu0 0
      %1156 = vmatmul.mubr.bf16.gmra.mrb[0].mxu0 %v612
      %v1157 = vpop.f32.mrb[0].mxu0
      %v1158 = vadd.f32 %v372, %v1157
      %v1159 = vpop.f32.mrb[0].mxu0
      %v1160 = vadd.f32 %v376, %v1159
      %v1161 = vpop.f32.mrb[0].mxu0
      %v1162 = vadd.f32 %v372, %v1161
      %v1163 = vpop.f32.mrb[0].mxu0
      %v1164 = vadd.f32 %v376, %v1163
      %1165 = vmatprep.mubr.bf16.mxu0 0
      %1166 = vmatmul.mubr.bf16.gmra.mrb[0].mxu0 %v613
      %v1167 = vpop.f32.mrb[0].mxu0
      %v1168 = vadd.f32 %v372, %v1167
      %v1169 = vpop.f32.mrb[0].mxu0
      %v1170 = vadd.f32 %v376, %v1169
      %v1171 = vpop.f32.mrb[0].mxu0
      %v1172 = vadd.f32 %v372, %v1171
      %v1173 = vpop.f32.mrb[0].mxu0
      %v1174 = vadd.f32 %v376, %v1173
      %1175 = vmatprep.mubr.bf16.mxu0 0
      %1176 = vmatmul.mubr.bf16.gmra.mrb[0].mxu0 %v614
      %v1177 = vpop.f32.mrb[0].mxu0
      %v1178 = vadd.f32 %v372, %v1177
      %v1179 = vpop.f32.mrb[0].mxu0
      %v1180 = vadd.f32 %v376, %v1179
      %v1181 = vpop.f32.mrb[0].mxu0
      %v1182 = vadd.f32 %v372, %v1181
      %v1183 = vpop.f32.mrb[0].mxu0
      %v1184 = vadd.f32 %v376, %v1183
      %1185 = vmatprep.mubr.bf16.mxu0 0
      %1186 = vmatmul.mubr.bf16.gmra.mrb[0].mxu0 %v615
      %v1187 = vpop.f32.mrb[0].mxu0
      %v1188 = vadd.f32 %v372, %v1187
      %v1189 = vpop.f32.mrb[0].mxu0
      %v1190 = vadd.f32 %v376, %v1189
      %v1191 = vpop.f32.mrb[0].mxu0
      %v1192 = vadd.f32 %v372, %v1191
      %v1193 = vpop.f32.mrb[0].mxu0
      %v1194 = vadd.f32 %v376, %v1193
      %1195 = vmatprep.mubr.bf16.mxu0 0
      %1196 = vmatmul.mubr.bf16.gmra.mrb[0].mxu0 %v616
      %v1197 = vpop.f32.mrb[0].mxu0
      %v1198 = vadd.f32 %v372, %v1197
      %v1199 = vpop.f32.mrb[0].mxu0
      %v1200 = vadd.f32 %v376, %v1199
      %v1201 = vpop.f32.mrb[0].mxu0
      %v1202 = vadd.f32 %v372, %v1201
      %v1203 = vpop.f32.mrb[0].mxu0
      %v1204 = vadd.f32 %v376, %v1203
      %1205 = vmatprep.mubr.bf16.mxu0 0
      %1206 = vmatmul.mubr.bf16.gmra.mrb[0].mxu0 %v617
      %v1207 = vpop.f32.mrb[0].mxu0
      %v1208 = vadd.f32 %v372, %v1207
      %v1209 = vpop.f32.mrb[0].mxu0
      %v1210 = vadd.f32 %v376, %v1209
      %v1211 = vpop.f32.mrb[0].mxu0
      %v1212 = vadd.f32 %v372, %v1211
      %v1213 = vpop.f32.mrb[0].mxu0
      %v1214 = vadd.f32 %v376, %v1213
      %1215 = vmatprep.mubr.bf16.mxu0 0
      %1216 = vmatmul.mubr.bf16.gmra.mrb[0].mxu0 %v618
      %v1217 = vpop.f32.mrb[0].mxu0
      %v1218 = vadd.f32 %v372, %v1217
      %v1219 = vpop.f32.mrb[0].mxu0
      %v1220 = vadd.f32 %v376, %v1219
      %v1221 = vpop.f32.mrb[0].mxu0
      %v1222 = vadd.f32 %v372, %v1221
      %v1223 = vpop.f32.mrb[0].mxu0
      %v1224 = vadd.f32 %v376, %v1223
      %1225 = vmatprep.mubr.bf16.mxu0 0
      %1226 = vmatmul.mubr.bf16.gmra.mrb[0].mxu0 %v619
      %v1227 = vpop.f32.mrb[0].mxu0
      %v1228 = vadd.f32 %v372, %v1227
      %v1229 = vpop.f32.mrb[0].mxu0
      %v1230 = vadd.f32 %v376, %v1229
      %v1231 = vpop.f32.mrb[0].mxu0
      %v1232 = vadd.f32 %v372, %v1231
      %v1233 = vpop.f32.mrb[0].mxu0
      %v1234 = vadd.f32 %v376, %v1233
      %1235 = vmatprep.mubr.bf16.mxu0 0
      %1236 = vmatmul.mubr.bf16.gmra.mrb[0].mxu0 %v620
      %v1237 = vpop.f32.mrb[0].mxu0
      %v1238 = vadd.f32 %v372, %v1237
      %v1239 = vpop.f32.mrb[0].mxu0
      %v1240 = vadd.f32 %v376, %v1239
      %v1241 = vpop.f32.mrb[0].mxu0
      %v1242 = vadd.f32 %v372, %v1241
      %v1243 = vpop.f32.mrb[0].mxu0
      %v1244 = vadd.f32 %v376, %v1243
      %1245 = vmatprep.mubr.bf16.mxu0 0
      %1246 = vmatmul.mubr.bf16.gmra.mrb[0].mxu0 %v621
      %v1247 = vpop.f32.mrb[0].mxu0
      %v1248 = vadd.f32 %v372, %v1247
      %v1249 = vpop.f32.mrb[0].mxu0
      %v1250 = vadd.f32 %v376, %v1249
      %v1251 = vpop.f32.mrb[0].mxu0
      %v1252 = vadd.f32 %v372, %v1251
      %v1253 = vpop.f32.mrb[0].mxu0
      %v1254 = vadd.f32 %v376, %v1253
      %1255 = vmatprep.mubr.bf16.mxu0 0
      %1256 = vmatmul.mubr.bf16.gmra.mrb[0].mxu0 %v622
      %v1257 = vpop.f32.mrb[0].mxu0
      %v1258 = vadd.f32 %v372, %v1257
      %v1259 = vpop.f32.mrb[0].mxu0
      %v1260 = vadd.f32 %v376, %v1259
      %v1261 = vpop.f32.mrb[0].mxu0
      %v1262 = vadd.f32 %v372, %v1261
      %v1263 = vpop.f32.mrb[0].mxu0
      %v1264 = vadd.f32 %v376, %v1263
      %1265 = vmatprep.mubr.bf16.mxu0 0
      %1266 = vmatmul.mubr.bf16.gmra.mrb[0].mxu0 %v623
      %v1267 = vpop.f32.mrb[0].mxu0
      %v1268 = vadd.f32 %v372, %v1267
      %v1269 = vpop.f32.mrb[0].mxu0
      %v1270 = vadd.f32 %v376, %v1269
      %v1271 = vpop.f32.mrb[0].mxu0
      %v1272 = vadd.f32 %v372, %v1271
      %v1273 = vpop.f32.mrb[0].mxu0
      %v1274 = vadd.f32 %v376, %v1273
      %1275 = vdwg.mxu0
      %v1276 = vsub.f32 0.0, %v790
      %v1277 = vsub.f32 0.0, %v794
      %v1278 = vsub.f32 0.0, %v800
      %v1279 = vsub.f32 0.0, %v804
      %v1280 = vsub.f32 0.0, %v810
      %v1281 = vsub.f32 0.0, %v814
      %v1282 = vsub.f32 0.0, %v820
      %v1283 = vsub.f32 0.0, %v824
      %v1284 = vsub.f32 0.0, %v830
      %v1285 = vsub.f32 0.0, %v834
      %v1286 = vsub.f32 0.0, %v840
      %v1287 = vsub.f32 0.0, %v844
      %v1288 = vsub.f32 0.0, %v850
      %v1289 = vsub.f32 0.0, %v854
      %v1290 = vsub.f32 0.0, %v860
      %v1291 = vsub.f32 0.0, %v864
      %v1292 = vsub.f32 0.0, %v870
      %v1293 = vsub.f32 0.0, %v874
      %v1294 = vsub.f32 0.0, %v880
      %v1295 = vsub.f32 0.0, %v884
      %v1296 = vsub.f32 0.0, %v890
      %v1297 = vsub.f32 0.0, %v894
      %v1298 = vsub.f32 0.0, %v900
      %v1299 = vsub.f32 0.0, %v904
      %v1300 = vsub.f32 0.0, %v910
      %v1301 = vsub.f32 0.0, %v914
      %v1302 = vsub.f32 0.0, %v920
      %v1303 = vsub.f32 0.0, %v924
      %v1304 = vsub.f32 0.0, %v930
      %v1305 = vsub.f32 0.0, %v934
      %v1306 = vsub.f32 0.0, %v940
      %v1307 = vsub.f32 0.0, %v944
      %v1308 = vsub.f32 0.0, %v950
      %v1309 = vsub.f32 0.0, %v954
      %v1310 = vsub.f32 0.0, %v960
      %v1311 = vsub.f32 0.0, %v964
      %v1312 = vsub.f32 0.0, %v970
      %v1313 = vsub.f32 0.0, %v974
      %v1314 = vsub.f32 0.0, %v980
      %v1315 = vsub.f32 0.0, %v984
      %v1316 = vsub.f32 0.0, %v990
      %v1317 = vsub.f32 0.0, %v994
      %v1318 = vsub.f32 0.0, %v1000
      %v1319 = vsub.f32 0.0, %v1004
      %v1320 = vsub.f32 0.0, %v1010
      %v1321 = vsub.f32 0.0, %v1014
      %v1322 = vsub.f32 0.0, %v1020
      %v1323 = vsub.f32 0.0, %v1024
      %v1324 = vsub.f32 0.0, %v1030
      %v1325 = vsub.f32 0.0, %v1034
      %v1326 = vsub.f32 0.0, %v1040
      %v1327 = vsub.f32 0.0, %v1044
      %v1328 = vsub.f32 0.0, %v1050
      %v1329 = vsub.f32 0.0, %v1054
      %v1330 = vsub.f32 0.0, %v1060
      %v1331 = vsub.f32 0.0, %v1064
      %v1332 = vsub.f32 0.0, %v1070
      %v1333 = vsub.f32 0.0, %v1074
      %v1334 = vsub.f32 0.0, %v1080
      %v1335 = vsub.f32 0.0, %v1084
      %v1336 = vsub.f32 0.0, %v1090
      %v1337 = vsub.f32 0.0, %v1094
      %v1338 = vsub.f32 0.0, %v1100
      %v1339 = vsub.f32 0.0, %v1104
      %v1340 = vsub.f32 0.0, %v1110
      %v1341 = vsub.f32 0.0, %v1114
      %v1342 = vsub.f32 0.0, %v1120
      %v1343 = vsub.f32 0.0, %v1124
      %v1344 = vsub.f32 0.0, %v1130
      %v1345 = vsub.f32 0.0, %v1134
      %v1346 = vsub.f32 0.0, %v1140
      %v1347 = vsub.f32 0.0, %v1144
      %v1348 = vsub.f32 0.0, %v1150
      %v1349 = vsub.f32 0.0, %v1154
      %v1350 = vsub.f32 0.0, %v1160
      %v1351 = vsub.f32 0.0, %v1164
      %v1352 = vsub.f32 0.0, %v1170
      %v1353 = vsub.f32 0.0, %v1174
      %v1354 = vsub.f32 0.0, %v1180
      %v1355 = vsub.f32 0.0, %v1184
      %v1356 = vsub.f32 0.0, %v1190
      %v1357 = vsub.f32 0.0, %v1194
      %v1358 = vsub.f32 0.0, %v1200
      %v1359 = vsub.f32 0.0, %v1204
      %v1360 = vsub.f32 0.0, %v1210
      %v1361 = vsub.f32 0.0, %v1214
      %v1362 = vsub.f32 0.0, %v1220
      %v1363 = vsub.f32 0.0, %v1224
      %v1364 = vsub.f32 0.0, %v1230
      %v1365 = vsub.f32 0.0, %v1234
      %v1366 = vsub.f32 0.0, %v1240
      %v1367 = vsub.f32 0.0, %v1244
      %v1368 = vsub.f32 0.0, %v1250
      %v1369 = vsub.f32 0.0, %v1254
      %v1370 = vsub.f32 0.0, %v1260
      %v1371 = vsub.f32 0.0, %v1264
      %v1372 = vsub.f32 0.0, %v1270
      %v1373 = vsub.f32 0.0, %v1274
      %v1374 = vmul.f32 %v1276, 1.442695
      %v1375 = vpow.pop %v1374
      %v1376 = vmul.f32 %v1277, 1.442695
      %v1377 = vpow.pop %v1376
      %v1378 = vmul.f32 %v1278, 1.442695
      %v1379 = vpow.pop %v1378
      %v1380 = vmul.f32 %v1279, 1.442695
      %v1381 = vpow.pop %v1380
      %v1382 = vmul.f32 %v1280, 1.442695
      %v1383 = vpow.pop %v1382
      %v1384 = vmul.f32 %v1281, 1.442695
      %v1385 = vpow.pop %v1384
      %v1386 = vmul.f32 %v1282, 1.442695
      %v1387 = vpow.pop %v1386
      %v1388 = vmul.f32 %v1283, 1.442695
      %v1389 = vpow.pop %v1388
      %v1390 = vmul.f32 %v1284, 1.442695
      %v1391 = vpow.pop %v1390
      %v1392 = vmul.f32 %v1285, 1.442695
      %v1393 = vpow.pop %v1392
      %v1394 = vmul.f32 %v1286, 1.442695
      %v1395 = vpow.pop %v1394
      %v1396 = vmul.f32 %v1287, 1.442695
      %v1397 = vpow.pop %v1396
      %v1398 = vmul.f32 %v1288, 1.442695
      %v1399 = vpow.pop %v1398
      %v1400 = vmul.f32 %v1289, 1.442695
      %v1401 = vpow.pop %v1400
      %v1402 = vmul.f32 %v1290, 1.442695
      %v1403 = vpow.pop %v1402
      %v1404 = vmul.f32 %v1291, 1.442695
      %v1405 = vpow.pop %v1404
      %v1406 = vmul.f32 %v1292, 1.442695
      %v1407 = vpow.pop %v1406
      %v1408 = vmul.f32 %v1293, 1.442695
      %v1409 = vpow.pop %v1408
      %v1410 = vmul.f32 %v1294, 1.442695
      %v1411 = vpow.pop %v1410
      %v1412 = vmul.f32 %v1295, 1.442695
      %v1413 = vpow.pop %v1412
      %v1414 = vmul.f32 %v1296, 1.442695
      %v1415 = vpow.pop %v1414
      %v1416 = vmul.f32 %v1297, 1.442695
      %v1417 = vpow.pop %v1416
      %v1418 = vmul.f32 %v1298, 1.442695
      %v1419 = vpow.pop %v1418
      %v1420 = vmul.f32 %v1299, 1.442695
      %v1421 = vpow.pop %v1420
      %v1422 = vmul.f32 %v1300, 1.442695
      %v1423 = vpow.pop %v1422
      %v1424 = vmul.f32 %v1301, 1.442695
      %v1425 = vpow.pop %v1424
      %v1426 = vmul.f32 %v1302, 1.442695
      %v1427 = vpow.pop %v1426
      %v1428 = vmul.f32 %v1303, 1.442695
      %v1429 = vpow.pop %v1428
      %v1430 = vmul.f32 %v1304, 1.442695
      %v1431 = vpow.pop %v1430
      %v1432 = vmul.f32 %v1305, 1.442695
      %v1433 = vpow.pop %v1432
      %v1434 = vmul.f32 %v1306, 1.442695
      %v1435 = vpow.pop %v1434
      %v1436 = vmul.f32 %v1307, 1.442695
      %v1437 = vpow.pop %v1436
      %v1438 = vmul.f32 %v1308, 1.442695
      %v1439 = vpow.pop %v1438
      %v1440 = vmul.f32 %v1309, 1.442695
      %v1441 = vpow.pop %v1440
      %v1442 = vmul.f32 %v1310, 1.442695
      %v1443 = vpow.pop %v1442
      %v1444 = vmul.f32 %v1311, 1.442695
      %v1445 = vpow.pop %v1444
      %v1446 = vmul.f32 %v1312, 1.442695
      %v1447 = vpow.pop %v1446
      %v1448 = vmul.f32 %v1313, 1.442695
      %v1449 = vpow.pop %v1448
      %v1450 = vmul.f32 %v1314, 1.442695
      %v1451 = vpow.pop %v1450
      %v1452 = vmul.f32 %v1315, 1.442695
      %v1453 = vpow.pop %v1452
      %v1454 = vmul.f32 %v1316, 1.442695
      %v1455 = vpow.pop %v1454
      %v1456 = vmul.f32 %v1317, 1.442695
      %v1457 = vpow.pop %v1456
      %v1458 = vmul.f32 %v1318, 1.442695
      %v1459 = vpow.pop %v1458
      %v1460 = vmul.f32 %v1319, 1.442695
      %v1461 = vpow.pop %v1460
      %v1462 = vmul.f32 %v1320, 1.442695
      %v1463 = vpow.pop %v1462
      %v1464 = vmul.f32 %v1321, 1.442695
      %v1465 = vpow.pop %v1464
      %v1466 = vmul.f32 %v1322, 1.442695
      %v1467 = vpow.pop %v1466
      %v1468 = vmul.f32 %v1323, 1.442695
      %v1469 = vpow.pop %v1468
      %v1470 = vmul.f32 %v1324, 1.442695
      %v1471 = vpow.pop %v1470
      %v1472 = vmul.f32 %v1325, 1.442695
      %v1473 = vpow.pop %v1472
      %v1474 = vmul.f32 %v1326, 1.442695
      %v1475 = vpow.pop %v1474
      %v1476 = vmul.f32 %v1327, 1.442695
      %v1477 = vpow.pop %v1476
      %v1478 = vmul.f32 %v1328, 1.442695
      %v1479 = vpow.pop %v1478
      %v1480 = vmul.f32 %v1329, 1.442695
      %v1481 = vpow.pop %v1480
      %v1482 = vmul.f32 %v1330, 1.442695
      %v1483 = vpow.pop %v1482
      %v1484 = vmul.f32 %v1331, 1.442695
      %v1485 = vpow.pop %v1484
      %v1486 = vmul.f32 %v1332, 1.442695
      %v1487 = vpow.pop %v1486
      %v1488 = vmul.f32 %v1333, 1.442695
      %v1489 = vpow.pop %v1488
      %v1490 = vmul.f32 %v1334, 1.442695
      %v1491 = vpow.pop %v1490
      %v1492 = vmul.f32 %v1335, 1.442695
      %v1493 = vpow.pop %v1492
      %v1494 = vmul.f32 %v1336, 1.442695
      %v1495 = vpow.pop %v1494
      %v1496 = vmul.f32 %v1337, 1.442695
      %v1497 = vpow.pop %v1496
      %v1498 = vmul.f32 %v1338, 1.442695
      %v1499 = vpow.pop %v1498
      %v1500 = vmul.f32 %v1339, 1.442695
      %v1501 = vpow.pop %v1500
      %v1502 = vmul.f32 %v1340, 1.442695
      %v1503 = vpow.pop %v1502
      %v1504 = vmul.f32 %v1341, 1.442695
      %v1505 = vpow.pop %v1504
      %v1506 = vmul.f32 %v1342, 1.442695
      %v1507 = vpow.pop %v1506
      %v1508 = vmul.f32 %v1343, 1.442695
      %v1509 = vpow.pop %v1508
      %v1510 = vmul.f32 %v1344, 1.442695
      %v1511 = vpow.pop %v1510
      %v1512 = vmul.f32 %v1345, 1.442695
      %v1513 = vpow.pop %v1512
      %v1514 = vmul.f32 %v1346, 1.442695
      %v1515 = vpow.pop %v1514
      %v1516 = vmul.f32 %v1347, 1.442695
      %v1517 = vpow.pop %v1516
      %v1518 = vmul.f32 %v1348, 1.442695
      %v1519 = vpow.pop %v1518
      %v1520 = vmul.f32 %v1349, 1.442695
      %v1521 = vpow.pop %v1520
      %v1522 = vmul.f32 %v1350, 1.442695
      %v1523 = vpow.pop %v1522
      %v1524 = vmul.f32 %v1351, 1.442695
      %v1525 = vpow.pop %v1524
      %v1526 = vmul.f32 %v1352, 1.442695
      %v1527 = vpow.pop %v1526
      %v1528 = vmul.f32 %v1353, 1.442695
      %v1529 = vpow.pop %v1528
      %v1530 = vmul.f32 %v1354, 1.442695
      %v1531 = vpow.pop %v1530
      %v1532 = vmul.f32 %v1355, 1.442695
      %v1533 = vpow.pop %v1532
      %v1534 = vmul.f32 %v1356, 1.442695
      %v1535 = vpow.pop %v1534
      %v1536 = vmul.f32 %v1357, 1.442695
      %v1537 = vpow.pop %v1536
      %v1538 = vmul.f32 %v1358, 1.442695
      %v1539 = vpow.pop %v1538
      %v1540 = vmul.f32 %v1359, 1.442695
      %v1541 = vpow.pop %v1540
      %v1542 = vmul.f32 %v1360, 1.442695
      %v1543 = vpow.pop %v1542
      %v1544 = vmul.f32 %v1361, 1.442695
      %v1545 = vpow.pop %v1544
      %v1546 = vmul.f32 %v1362, 1.442695
      %v1547 = vpow.pop %v1546
      %v1548 = vmul.f32 %v1363, 1.442695
      %v1549 = vpow.pop %v1548
      %v1550 = vmul.f32 %v1364, 1.442695
      %v1551 = vpow.pop %v1550
      %v1552 = vmul.f32 %v1365, 1.442695
      %v1553 = vpow.pop %v1552
      %v1554 = vmul.f32 %v1366, 1.442695
      %v1555 = vpow.pop %v1554
      %v1556 = vmul.f32 %v1367, 1.442695
      %v1557 = vpow.pop %v1556
      %v1558 = vmul.f32 %v1368, 1.442695
      %v1559 = vpow.pop %v1558
      %v1560 = vmul.f32 %v1369, 1.442695
      %v1561 = vpow.pop %v1560
      %v1562 = vmul.f32 %v1370, 1.442695
      %v1563 = vpow.pop %v1562
      %v1564 = vmul.f32 %v1371, 1.442695
      %v1565 = vpow.pop %v1564
      %v1566 = vmul.f32 %v1372, 1.442695
      %v1567 = vpow.pop %v1566
      %v1568 = vmul.f32 %v1373, 1.442695
      %v1569 = vpow.pop %v1568
      %v1570 = vadd.f32 %v1375, 1.0
      %v1571 = vadd.f32 %v1377, 1.0
      %v1572 = vadd.f32 %v1379, 1.0
      %v1573 = vadd.f32 %v1381, 1.0
      %v1574 = vadd.f32 %v1383, 1.0
      %v1575 = vadd.f32 %v1385, 1.0
      %v1576 = vadd.f32 %v1387, 1.0
      %v1577 = vadd.f32 %v1389, 1.0
      %v1578 = vadd.f32 %v1391, 1.0
      %v1579 = vadd.f32 %v1393, 1.0
      %v1580 = vadd.f32 %v1395, 1.0
      %v1581 = vadd.f32 %v1397, 1.0
      %v1582 = vadd.f32 %v1399, 1.0
      %v1583 = vadd.f32 %v1401, 1.0
      %v1584 = vadd.f32 %v1403, 1.0
      %v1585 = vadd.f32 %v1405, 1.0
      %v1586 = vadd.f32 %v1407, 1.0
      %v1587 = vadd.f32 %v1409, 1.0
      %v1588 = vadd.f32 %v1411, 1.0
      %v1589 = vadd.f32 %v1413, 1.0
      %v1590 = vadd.f32 %v1415, 1.0
      %v1591 = vadd.f32 %v1417, 1.0
      %v1592 = vadd.f32 %v1419, 1.0
      %v1593 = vadd.f32 %v1421, 1.0
      %v1594 = vadd.f32 %v1423, 1.0
      %v1595 = vadd.f32 %v1425, 1.0
      %v1596 = vadd.f32 %v1427, 1.0
      %v1597 = vadd.f32 %v1429, 1.0
      %v1598 = vadd.f32 %v1431, 1.0
      %v1599 = vadd.f32 %v1433, 1.0
      %v1600 = vadd.f32 %v1435, 1.0
      %v1601 = vadd.f32 %v1437, 1.0
      %v1602 = vadd.f32 %v1439, 1.0
      %v1603 = vadd.f32 %v1441, 1.0
      %v1604 = vadd.f32 %v1443, 1.0
      %v1605 = vadd.f32 %v1445, 1.0
      %v1606 = vadd.f32 %v1447, 1.0
      %v1607 = vadd.f32 %v1449, 1.0
      %v1608 = vadd.f32 %v1451, 1.0
      %v1609 = vadd.f32 %v1453, 1.0
      %v1610 = vadd.f32 %v1455, 1.0
      %v1611 = vadd.f32 %v1457, 1.0
      %v1612 = vadd.f32 %v1459, 1.0
      %v1613 = vadd.f32 %v1461, 1.0
      %v1614 = vadd.f32 %v1463, 1.0
      %v1615 = vadd.f32 %v1465, 1.0
      %v1616 = vadd.f32 %v1467, 1.0
      %v1617 = vadd.f32 %v1469, 1.0
      %v1618 = vadd.f32 %v1471, 1.0
      %v1619 = vadd.f32 %v1473, 1.0
      %v1620 = vadd.f32 %v1475, 1.0
      %v1621 = vadd.f32 %v1477, 1.0
      %v1622 = vadd.f32 %v1479, 1.0
      %v1623 = vadd.f32 %v1481, 1.0
      %v1624 = vadd.f32 %v1483, 1.0
      %v1625 = vadd.f32 %v1485, 1.0
      %v1626 = vadd.f32 %v1487, 1.0
      %v1627 = vadd.f32 %v1489, 1.0
      %v1628 = vadd.f32 %v1491, 1.0
      %v1629 = vadd.f32 %v1493, 1.0
      %v1630 = vadd.f32 %v1495, 1.0
      %v1631 = vadd.f32 %v1497, 1.0
      %v1632 = vadd.f32 %v1499, 1.0
      %v1633 = vadd.f32 %v1501, 1.0
      %v1634 = vadd.f32 %v1503, 1.0
      %v1635 = vadd.f32 %v1505, 1.0
      %v1636 = vadd.f32 %v1507, 1.0
      %v1637 = vadd.f32 %v1509, 1.0
      %v1638 = vadd.f32 %v1511, 1.0
      %v1639 = vadd.f32 %v1513, 1.0
      %v1640 = vadd.f32 %v1515, 1.0
      %v1641 = vadd.f32 %v1517, 1.0
      %v1642 = vadd.f32 %v1519, 1.0
      %v1643 = vadd.f32 %v1521, 1.0
      %v1644 = vadd.f32 %v1523, 1.0
      %v1645 = vadd.f32 %v1525, 1.0
      %v1646 = vadd.f32 %v1527, 1.0
      %v1647 = vadd.f32 %v1529, 1.0
      %v1648 = vadd.f32 %v1531, 1.0
      %v1649 = vadd.f32 %v1533, 1.0
      %v1650 = vadd.f32 %v1535, 1.0
      %v1651 = vadd.f32 %v1537, 1.0
      %v1652 = vadd.f32 %v1539, 1.0
      %v1653 = vadd.f32 %v1541, 1.0
      %v1654 = vadd.f32 %v1543, 1.0
      %v1655 = vadd.f32 %v1545, 1.0
      %v1656 = vadd.f32 %v1547, 1.0
      %v1657 = vadd.f32 %v1549, 1.0
      %v1658 = vadd.f32 %v1551, 1.0
      %v1659 = vadd.f32 %v1553, 1.0
      %v1660 = vadd.f32 %v1555, 1.0
      %v1661 = vadd.f32 %v1557, 1.0
      %v1662 = vadd.f32 %v1559, 1.0
      %v1663 = vadd.f32 %v1561, 1.0
      %v1664 = vadd.f32 %v1563, 1.0
      %v1665 = vadd.f32 %v1565, 1.0
      %v1666 = vadd.f32 %v1567, 1.0
      %v1667 = vadd.f32 %v1569, 1.0
      %v1668 = vrcp.pop %v1570
      %v1669 = vmul.f32 1.0, %v1668
      %v1670 = vrcp.pop %v1571
      %v1671 = vmul.f32 1.0, %v1670
      %v1672 = vrcp.pop %v1572
      %v1673 = vmul.f32 1.0, %v1672
      %v1674 = vrcp.pop %v1573
      %v1675 = vmul.f32 1.0, %v1674
      %v1676 = vrcp.pop %v1574
      %v1677 = vmul.f32 1.0, %v1676
      %v1678 = vrcp.pop %v1575
      %v1679 = vmul.f32 1.0, %v1678
      %v1680 = vrcp.pop %v1576
      %v1681 = vmul.f32 1.0, %v1680
      %v1682 = vrcp.pop %v1577
      %v1683 = vmul.f32 1.0, %v1682
      %v1684 = vrcp.pop %v1578
      %v1685 = vmul.f32 1.0, %v1684
      %v1686 = vrcp.pop %v1579
      %v1687 = vmul.f32 1.0, %v1686
      %v1688 = vrcp.pop %v1580
      %v1689 = vmul.f32 1.0, %v1688
      %v1690 = vrcp.pop %v1581
      %v1691 = vmul.f32 1.0, %v1690
      %v1692 = vrcp.pop %v1582
      %v1693 = vmul.f32 1.0, %v1692
      %v1694 = vrcp.pop %v1583
      %v1695 = vmul.f32 1.0, %v1694
      %v1696 = vrcp.pop %v1584
      %v1697 = vmul.f32 1.0, %v1696
      %v1698 = vrcp.pop %v1585
      %v1699 = vmul.f32 1.0, %v1698
      %v1700 = vrcp.pop %v1586
      %v1701 = vmul.f32 1.0, %v1700
      %v1702 = vrcp.pop %v1587
      %v1703 = vmul.f32 1.0, %v1702
      %v1704 = vrcp.pop %v1588
      %v1705 = vmul.f32 1.0, %v1704
      %v1706 = vrcp.pop %v1589
      %v1707 = vmul.f32 1.0, %v1706
      %v1708 = vrcp.pop %v1590
      %v1709 = vmul.f32 1.0, %v1708
      %v1710 = vrcp.pop %v1591
      %v1711 = vmul.f32 1.0, %v1710
      %v1712 = vrcp.pop %v1592
      %v1713 = vmul.f32 1.0, %v1712
      %v1714 = vrcp.pop %v1593
      %v1715 = vmul.f32 1.0, %v1714
      %v1716 = vrcp.pop %v1594
      %v1717 = vmul.f32 1.0, %v1716
      %v1718 = vrcp.pop %v1595
      %v1719 = vmul.f32 1.0, %v1718
      %v1720 = vrcp.pop %v1596
      %v1721 = vmul.f32 1.0, %v1720
      %v1722 = vrcp.pop %v1597
      %v1723 = vmul.f32 1.0, %v1722
      %v1724 = vrcp.pop %v1598
      %v1725 = vmul.f32 1.0, %v1724
      %v1726 = vrcp.pop %v1599
      %v1727 = vmul.f32 1.0, %v1726
      %v1728 = vrcp.pop %v1600
      %v1729 = vmul.f32 1.0, %v1728
      %v1730 = vrcp.pop %v1601
      %v1731 = vmul.f32 1.0, %v1730
      %v1732 = vrcp.pop %v1602
      %v1733 = vmul.f32 1.0, %v1732
      %v1734 = vrcp.pop %v1603
      %v1735 = vmul.f32 1.0, %v1734
      %v1736 = vrcp.pop %v1604
      %v1737 = vmul.f32 1.0, %v1736
      %v1738 = vrcp.pop %v1605
      %v1739 = vmul.f32 1.0, %v1738
      %v1740 = vrcp.pop %v1606
      %v1741 = vmul.f32 1.0, %v1740
      %v1742 = vrcp.pop %v1607
      %v1743 = vmul.f32 1.0, %v1742
      %v1744 = vrcp.pop %v1608
      %v1745 = vmul.f32 1.0, %v1744
      %v1746 = vrcp.pop %v1609
      %v1747 = vmul.f32 1.0, %v1746
      %v1748 = vrcp.pop %v1610
      %v1749 = vmul.f32 1.0, %v1748
      %v1750 = vrcp.pop %v1611
      %v1751 = vmul.f32 1.0, %v1750
      %v1752 = vrcp.pop %v1612
      %v1753 = vmul.f32 1.0, %v1752
      %v1754 = vrcp.pop %v1613
      %v1755 = vmul.f32 1.0, %v1754
      %v1756 = vrcp.pop %v1614
      %v1757 = vmul.f32 1.0, %v1756
      %v1758 = vrcp.pop %v1615
      %v1759 = vmul.f32 1.0, %v1758
      %v1760 = vrcp.pop %v1616
      %v1761 = vmul.f32 1.0, %v1760
      %v1762 = vrcp.pop %v1617
      %v1763 = vmul.f32 1.0, %v1762
      %v1764 = vrcp.pop %v1618
      %v1765 = vmul.f32 1.0, %v1764
      %v1766 = vrcp.pop %v1619
      %v1767 = vmul.f32 1.0, %v1766
      %v1768 = vrcp.pop %v1620
      %v1769 = vmul.f32 1.0, %v1768
      %v1770 = vrcp.pop %v1621
      %v1771 = vmul.f32 1.0, %v1770
      %v1772 = vrcp.pop %v1622
      %v1773 = vmul.f32 1.0, %v1772
      %v1774 = vrcp.pop %v1623
      %v1775 = vmul.f32 1.0, %v1774
      %v1776 = vrcp.pop %v1624
      %v1777 = vmul.f32 1.0, %v1776
      %v1778 = vrcp.pop %v1625
      %v1779 = vmul.f32 1.0, %v1778
      %v1780 = vrcp.pop %v1626
      %v1781 = vmul.f32 1.0, %v1780
      %v1782 = vrcp.pop %v1627
      %v1783 = vmul.f32 1.0, %v1782
      %v1784 = vrcp.pop %v1628
      %v1785 = vmul.f32 1.0, %v1784
      %v1786 = vrcp.pop %v1629
      %v1787 = vmul.f32 1.0, %v1786
      %v1788 = vrcp.pop %v1630
      %v1789 = vmul.f32 1.0, %v1788
      %v1790 = vrcp.pop %v1631
      %v1791 = vmul.f32 1.0, %v1790
      %v1792 = vrcp.pop %v1632
      %v1793 = vmul.f32 1.0, %v1792
      %v1794 = vrcp.pop %v1633
      %v1795 = vmul.f32 1.0, %v1794
      %v1796 = vrcp.pop %v1634
      %v1797 = vmul.f32 1.0, %v1796
      %v1798 = vrcp.pop %v1635
      %v1799 = vmul.f32 1.0, %v1798
      %v1800 = vrcp.pop %v1636
      %v1801 = vmul.f32 1.0, %v1800
      %v1802 = vrcp.pop %v1637
      %v1803 = vmul.f32 1.0, %v1802
      %v1804 = vrcp.pop %v1638
      %v1805 = vmul.f32 1.0, %v1804
      %v1806 = vrcp.pop %v1639
      %v1807 = vmul.f32 1.0, %v1806
      %v1808 = vrcp.pop %v1640
      %v1809 = vmul.f32 1.0, %v1808
      %v1810 = vrcp.pop %v1641
      %v1811 = vmul.f32 1.0, %v1810
      %v1812 = vrcp.pop %v1642
      %v1813 = vmul.f32 1.0, %v1812
      %v1814 = vrcp.pop %v1643
      %v1815 = vmul.f32 1.0, %v1814
      %v1816 = vrcp.pop %v1644
      %v1817 = vmul.f32 1.0, %v1816
      %v1818 = vrcp.pop %v1645
      %v1819 = vmul.f32 1.0, %v1818
      %v1820 = vrcp.pop %v1646
      %v1821 = vmul.f32 1.0, %v1820
      %v1822 = vrcp.pop %v1647
      %v1823 = vmul.f32 1.0, %v1822
      %v1824 = vrcp.pop %v1648
      %v1825 = vmul.f32 1.0, %v1824
      %v1826 = vrcp.pop %v1649
      %v1827 = vmul.f32 1.0, %v1826
      %v1828 = vrcp.pop %v1650
      %v1829 = vmul.f32 1.0, %v1828
      %v1830 = vrcp.pop %v1651
      %v1831 = vmul.f32 1.0, %v1830
      %v1832 = vrcp.pop %v1652
      %v1833 = vmul.f32 1.0, %v1832
      %v1834 = vrcp.pop %v1653
      %v1835 = vmul.f32 1.0, %v1834
      %v1836 = vrcp.pop %v1654
      %v1837 = vmul.f32 1.0, %v1836
      %v1838 = vrcp.pop %v1655
      %v1839 = vmul.f32 1.0, %v1838
      %v1840 = vrcp.pop %v1656
      %v1841 = vmul.f32 1.0, %v1840
      %v1842 = vrcp.pop %v1657
      %v1843 = vmul.f32 1.0, %v1842
      %v1844 = vrcp.pop %v1658
      %v1845 = vmul.f32 1.0, %v1844
      %v1846 = vrcp.pop %v1659
      %v1847 = vmul.f32 1.0, %v1846
      %v1848 = vrcp.pop %v1660
      %v1849 = vmul.f32 1.0, %v1848
      %v1850 = vrcp.pop %v1661
      %v1851 = vmul.f32 1.0, %v1850
      %v1852 = vrcp.pop %v1662
      %v1853 = vmul.f32 1.0, %v1852
      %v1854 = vrcp.pop %v1663
      %v1855 = vmul.f32 1.0, %v1854
      %v1856 = vrcp.pop %v1664
      %v1857 = vmul.f32 1.0, %v1856
      %v1858 = vrcp.pop %v1665
      %v1859 = vmul.f32 1.0, %v1858
      %v1860 = vrcp.pop %v1666
      %v1861 = vmul.f32 1.0, %v1860
      %v1862 = vrcp.pop %v1667
      %v1863 = vmul.f32 1.0, %v1862
      %v1864 = vmul.f32 %v788, %v1669
      %v1865 = vmul.f32 %v792, %v1671
      %v1866 = vmul.f32 %v798, %v1673
      %v1867 = vmul.f32 %v802, %v1675
      %v1868 = vmul.f32 %v808, %v1677
      %v1869 = vmul.f32 %v812, %v1679
      %v1870 = vmul.f32 %v818, %v1681
      %v1871 = vmul.f32 %v822, %v1683
      %v1872 = vmul.f32 %v828, %v1685
      %v1873 = vmul.f32 %v832, %v1687
      %v1874 = vmul.f32 %v838, %v1689
      %v1875 = vmul.f32 %v842, %v1691
      %v1876 = vmul.f32 %v848, %v1693
      %v1877 = vmul.f32 %v852, %v1695
      %v1878 = vmul.f32 %v858, %v1697
      %v1879 = vmul.f32 %v862, %v1699
      %v1880 = vmul.f32 %v868, %v1701
      %v1881 = vmul.f32 %v872, %v1703
      %v1882 = vmul.f32 %v878, %v1705
      %v1883 = vmul.f32 %v882, %v1707
      %v1884 = vmul.f32 %v888, %v1709
      %v1885 = vmul.f32 %v892, %v1711
      %v1886 = vmul.f32 %v898, %v1713
      %v1887 = vmul.f32 %v902, %v1715
      %v1888 = vmul.f32 %v908, %v1717
      %v1889 = vmul.f32 %v912, %v1719
      %v1890 = vmul.f32 %v918, %v1721
      %v1891 = vmul.f32 %v922, %v1723
      %v1892 = vmul.f32 %v928, %v1725
      %v1893 = vmul.f32 %v932, %v1727
      %v1894 = vmul.f32 %v938, %v1729
      %v1895 = vmul.f32 %v942, %v1731
      %v1896 = vmul.f32 %v948, %v1733
      %v1897 = vmul.f32 %v952, %v1735
      %v1898 = vmul.f32 %v958, %v1737
      %v1899 = vmul.f32 %v962, %v1739
      %v1900 = vmul.f32 %v968, %v1741
      %v1901 = vmul.f32 %v972, %v1743
      %v1902 = vmul.f32 %v978, %v1745
      %v1903 = vmul.f32 %v982, %v1747
      %v1904 = vmul.f32 %v988, %v1749
      %v1905 = vmul.f32 %v992, %v1751
      %v1906 = vmul.f32 %v998, %v1753
      %v1907 = vmul.f32 %v1002, %v1755
      %v1908 = vmul.f32 %v1008, %v1757
      %v1909 = vmul.f32 %v1012, %v1759
      %v1910 = vmul.f32 %v1018, %v1761
      %v1911 = vmul.f32 %v1022, %v1763
      %v1912 = vmul.f32 %v1028, %v1765
      %v1913 = vmul.f32 %v1032, %v1767
      %v1914 = vmul.f32 %v1038, %v1769
      %v1915 = vmul.f32 %v1042, %v1771
      %v1916 = vmul.f32 %v1048, %v1773
      %v1917 = vmul.f32 %v1052, %v1775
      %v1918 = vmul.f32 %v1058, %v1777
      %v1919 = vmul.f32 %v1062, %v1779
      %v1920 = vmul.f32 %v1068, %v1781
      %v1921 = vmul.f32 %v1072, %v1783
      %v1922 = vmul.f32 %v1078, %v1785
      %v1923 = vmul.f32 %v1082, %v1787
      %v1924 = vmul.f32 %v1088, %v1789
      %v1925 = vmul.f32 %v1092, %v1791
      %v1926 = vmul.f32 %v1098, %v1793
      %v1927 = vmul.f32 %v1102, %v1795
      %v1928 = vmul.f32 %v1108, %v1797
      %v1929 = vmul.f32 %v1112, %v1799
      %v1930 = vmul.f32 %v1118, %v1801
      %v1931 = vmul.f32 %v1122, %v1803
      %v1932 = vmul.f32 %v1128, %v1805
      %v1933 = vmul.f32 %v1132, %v1807
      %v1934 = vmul.f32 %v1138, %v1809
      %v1935 = vmul.f32 %v1142, %v1811
      %v1936 = vmul.f32 %v1148, %v1813
      %v1937 = vmul.f32 %v1152, %v1815
      %v1938 = vmul.f32 %v1158, %v1817
      %v1939 = vmul.f32 %v1162, %v1819
      %v1940 = vmul.f32 %v1168, %v1821
      %v1941 = vmul.f32 %v1172, %v1823
      %v1942 = vmul.f32 %v1178, %v1825
      %v1943 = vmul.f32 %v1182, %v1827
      %v1944 = vmul.f32 %v1188, %v1829
      %v1945 = vmul.f32 %v1192, %v1831
      %v1946 = vmul.f32 %v1198, %v1833
      %v1947 = vmul.f32 %v1202, %v1835
      %v1948 = vmul.f32 %v1208, %v1837
      %v1949 = vmul.f32 %v1212, %v1839
      %v1950 = vmul.f32 %v1218, %v1841
      %v1951 = vmul.f32 %v1222, %v1843
      %v1952 = vmul.f32 %v1228, %v1845
      %v1953 = vmul.f32 %v1232, %v1847
      %v1954 = vmul.f32 %v1238, %v1849
      %v1955 = vmul.f32 %v1242, %v1851
      %v1956 = vmul.f32 %v1248, %v1853
      %v1957 = vmul.f32 %v1252, %v1855
      %v1958 = vmul.f32 %v1258, %v1857
      %v1959 = vmul.f32 %v1262, %v1859
      %v1960 = vmul.f32 %v1268, %v1861
      %v1961 = vmul.f32 %v1272, %v1863
      %v1962 = vadd.f32 %v1864, %v1865
      %v1963 = vadd.f32 %v1962, %v1866
      %v1964 = vadd.f32 %v1963, %v1867
      %v1965 = vadd.f32 %v1964, %v1868
      %v1966 = vadd.f32 %v1965, %v1869
      %v1967 = vadd.f32 %v1966, %v1870
      %v1968 = vadd.f32 %v1967, %v1871
      %v1969 = vadd.f32 %v1968, %v1872
      %v1970 = vadd.f32 %v1969, %v1873
      %v1971 = vadd.f32 %v1970, %v1874
      %v1972 = vadd.f32 %v1971, %v1875
      %v1973 = vadd.f32 %v1972, %v1876
      %v1974 = vadd.f32 %v1973, %v1877
      %v1975 = vadd.f32 %v1974, %v1878
      %v1976 = vadd.f32 %v1975, %v1879
      %v1977 = vadd.f32 %v1976, %v1880
      %v1978 = vadd.f32 %v1977, %v1881
      %v1979 = vadd.f32 %v1978, %v1882
      %v1980 = vadd.f32 %v1979, %v1883
      %v1981 = vadd.f32 %v1980, %v1884
      %v1982 = vadd.f32 %v1981, %v1885
      %v1983 = vadd.f32 %v1982, %v1886
      %v1984 = vadd.f32 %v1983, %v1887
      %v1985 = vadd.f32 %v1984, %v1888
      %v1986 = vadd.f32 %v1985, %v1889
      %v1987 = vadd.f32 %v1986, %v1890
      %v1988 = vadd.f32 %v1987, %v1891
      %v1989 = vadd.f32 %v1988, %v1892
      %v1990 = vadd.f32 %v1989, %v1893
      %v1991 = vadd.f32 %v1990, %v1894
      %v1992 = vadd.f32 %v1991, %v1895
      %v1993 = vadd.f32 %v1992, %v1896
      %v1994 = vadd.f32 %v1993, %v1897
      %v1995 = vadd.f32 %v1994, %v1898
      %v1996 = vadd.f32 %v1995, %v1899
      %v1997 = vadd.f32 %v1996, %v1900
      %v1998 = vadd.f32 %v1997, %v1901
      %v1999 = vadd.f32 %v1998, %v1902
      %v2000 = vadd.f32 %v1999, %v1903
      %v2001 = vadd.f32 %v2000, %v1904
      %v2002 = vadd.f32 %v2001, %v1905
      %v2003 = vadd.f32 %v2002, %v1906
      %v2004 = vadd.f32 %v2003, %v1907
      %v2005 = vadd.f32 %v2004, %v1908
      %v2006 = vadd.f32 %v2005, %v1909
      %v2007 = vadd.f32 %v2006, %v1910
      %v2008 = vadd.f32 %v2007, %v1911
      %v2009 = vadd.f32 %v2008, %v1912
      %v2010 = vadd.f32 %v2009, %v1913
      %v2011 = vadd.f32 %v2010, %v1914
      %v2012 = vadd.f32 %v2011, %v1915
      %v2013 = vadd.f32 %v2012, %v1916
      %v2014 = vadd.f32 %v2013, %v1917
      %v2015 = vadd.f32 %v2014, %v1918
      %v2016 = vadd.f32 %v2015, %v1919
      %v2017 = vadd.f32 %v2016, %v1920
      %v2018 = vadd.f32 %v2017, %v1921
      %v2019 = vadd.f32 %v2018, %v1922
      %v2020 = vadd.f32 %v2019, %v1923
      %v2021 = vadd.f32 %v2020, %v1924
      %v2022 = vadd.f32 %v2021, %v1925
      %v2023 = vadd.f32 %v2022, %v1926
      %v2024 = vadd.f32 %v2023, %v1927
      %v2025 = vadd.f32 %v2024, %v1928
      %v2026 = vadd.f32 %v2025, %v1929
      %v2027 = vadd.f32 %v2026, %v1930
      %v2028 = vadd.f32 %v2027, %v1931
      %v2029 = vadd.f32 %v2028, %v1932
      %v2030 = vadd.f32 %v2029, %v1933
      %v2031 = vadd.f32 %v2030, %v1934
      %v2032 = vadd.f32 %v2031, %v1935
      %v2033 = vadd.f32 %v2032, %v1936
      %v2034 = vadd.f32 %v2033, %v1937
      %v2035 = vadd.f32 %v2034, %v1938
      %v2036 = vadd.f32 %v2035, %v1939
      %v2037 = vadd.f32 %v2036, %v1940
      %v2038 = vadd.f32 %v2037, %v1941
      %v2039 = vadd.f32 %v2038, %v1942
      %v2040 = vadd.f32 %v2039, %v1943
      %v2041 = vadd.f32 %v2040, %v1944
      %v2042 = vadd.f32 %v2041, %v1945
      %v2043 = vadd.f32 %v2042, %v1946
      %v2044 = vadd.f32 %v2043, %v1947
      %v2045 = vadd.f32 %v2044, %v1948
      %v2046 = vadd.f32 %v2045, %v1949
      %v2047 = vadd.f32 %v2046, %v1950
      %v2048 = vadd.f32 %v2047, %v1951
      %v2049 = vadd.f32 %v2048, %v1952
      %v2050 = vadd.f32 %v2049, %v1953
      %v2051 = vadd.f32 %v2050, %v1954
      %v2052 = vadd.f32 %v2051, %v1955
      %v2053 = vadd.f32 %v2052, %v1956
      %v2054 = vadd.f32 %v2053, %v1957
      %v2055 = vadd.f32 %v2054, %v1958
      %v2056 = vadd.f32 %v2055, %v1959
      %v2057 = vadd.f32 %v2056, %v1960
      %v2058 = vadd.f32 %v2057, %v1961
      %v2059 = vrot.slane %v2058, 4
      %v2060 = vadd.f32 %v2058, %v2059
      %v2061 = vrot.slane %v2060, 2
      %v2062 = vadd.f32 %v2060, %v2061
      %v2063 = vrot.slane %v2062, 1
      %v2064 = vadd.f32 %v2062, %v2063
      %v2065 = vrcp.pop 784.0
      %v2066 = vmul.f32 %v2064, %v2065
      %v2067 = vsub.f32 %v1864, %v2066
      %v2068 = vsub.f32 %v1865, %v2066
      %v2069 = vsub.f32 %v1866, %v2066
      %v2070 = vsub.f32 %v1867, %v2066
      %v2071 = vsub.f32 %v1868, %v2066
      %v2072 = vsub.f32 %v1869, %v2066
      %v2073 = vsub.f32 %v1870, %v2066
      %v2074 = vsub.f32 %v1871, %v2066
      %v2075 = vsub.f32 %v1872, %v2066
      %v2076 = vsub.f32 %v1873, %v2066
      %v2077 = vsub.f32 %v1874, %v2066
      %v2078 = vsub.f32 %v1875, %v2066
      %v2079 = vsub.f32 %v1876, %v2066
      %v2080 = vsub.f32 %v1877, %v2066
      %v2081 = vsub.f32 %v1878, %v2066
      %v2082 = vsub.f32 %v1879, %v2066
      %v2083 = vsub.f32 %v1880, %v2066
      %v2084 = vsub.f32 %v1881, %v2066
      %v2085 = vsub.f32 %v1882, %v2066
      %v2086 = vsub.f32 %v1883, %v2066
      %v2087 = vsub.f32 %v1884, %v2066
      %v2088 = vsub.f32 %v1885, %v2066
      %v2089 = vsub.f32 %v1886, %v2066
      %v2090 = vsub.f32 %v1887, %v2066
      %v2091 = vsub.f32 %v1888, %v2066
      %v2092 = vsub.f32 %v1889, %v2066
      %v2093 = vsub.f32 %v1890, %v2066
      %v2094 = vsub.f32 %v1891, %v2066
      %v2095 = vsub.f32 %v1892, %v2066
      %v2096 = vsub.f32 %v1893, %v2066
      %v2097 = vsub.f32 %v1894, %v2066
      %v2098 = vsub.f32 %v1895, %v2066
      %v2099 = vsub.f32 %v1896, %v2066
      %v2100 = vsub.f32 %v1897, %v2066
      %v2101 = vsub.f32 %v1898, %v2066
      %v2102 = vsub.f32 %v1899, %v2066
      %v2103 = vsub.f32 %v1900, %v2066
      %v2104 = vsub.f32 %v1901, %v2066
      %v2105 = vsub.f32 %v1902, %v2066
      %v2106 = vsub.f32 %v1903, %v2066
      %v2107 = vsub.f32 %v1904, %v2066
      %v2108 = vsub.f32 %v1905, %v2066
      %v2109 = vsub.f32 %v1906, %v2066
      %v2110 = vsub.f32 %v1907, %v2066
      %v2111 = vsub.f32 %v1908, %v2066
      %v2112 = vsub.f32 %v1909, %v2066
      %v2113 = vsub.f32 %v1910, %v2066
      %v2114 = vsub.f32 %v1911, %v2066
      %v2115 = vsub.f32 %v1912, %v2066
      %v2116 = vsub.f32 %v1913, %v2066
      %v2117 = vsub.f32 %v1914, %v2066
      %v2118 = vsub.f32 %v1915, %v2066
      %v2119 = vsub.f32 %v1916, %v2066
      %v2120 = vsub.f32 %v1917, %v2066
      %v2121 = vsub.f32 %v1918, %v2066
      %v2122 = vsub.f32 %v1919, %v2066
      %v2123 = vsub.f32 %v1920, %v2066
      %v2124 = vsub.f32 %v1921, %v2066
      %v2125 = vsub.f32 %v1922, %v2066
      %v2126 = vsub.f32 %v1923, %v2066
      %v2127 = vsub.f32 %v1924, %v2066
      %v2128 = vsub.f32 %v1925, %v2066
      %v2129 = vsub.f32 %v1926, %v2066
      %v2130 = vsub.f32 %v1927, %v2066
      %v2131 = vsub.f32 %v1928, %v2066
      %v2132 = vsub.f32 %v1929, %v2066
      %v2133 = vsub.f32 %v1930, %v2066
      %v2134 = vsub.f32 %v1931, %v2066
      %v2135 = vsub.f32 %v1932, %v2066
      %v2136 = vsub.f32 %v1933, %v2066
      %v2137 = vsub.f32 %v1934, %v2066
      %v2138 = vsub.f32 %v1935, %v2066
      %v2139 = vsub.f32 %v1936, %v2066
      %v2140 = vsub.f32 %v1937, %v2066
      %v2141 = vsub.f32 %v1938, %v2066
      %v2142 = vsub.f32 %v1939, %v2066
      %v2143 = vsub.f32 %v1940, %v2066
      %v2144 = vsub.f32 %v1941, %v2066
      %v2145 = vsub.f32 %v1942, %v2066
      %v2146 = vsub.f32 %v1943, %v2066
      %v2147 = vsub.f32 %v1944, %v2066
      %v2148 = vsub.f32 %v1945, %v2066
      %v2149 = vsub.f32 %v1946, %v2066
      %v2150 = vsub.f32 %v1947, %v2066
      %v2151 = vsub.f32 %v1948, %v2066
      %v2152 = vsub.f32 %v1949, %v2066
      %v2153 = vsub.f32 %v1950, %v2066
      %v2154 = vsub.f32 %v1951, %v2066
      %v2155 = vsub.f32 %v1952, %v2066
      %v2156 = vsub.f32 %v1953, %v2066
      %v2157 = vsub.f32 %v1954, %v2066
      %v2158 = vsub.f32 %v1955, %v2066
      %v2159 = vsub.f32 %v1956, %v2066
      %v2160 = vsub.f32 %v1957, %v2066
      %v2161 = vsub.f32 %v1958, %v2066
      %v2162 = vsub.f32 %v1959, %v2066
      %v2163 = vsub.f32 %v1960, %v2066
      %v2164 = vsub.f32 %v1961, %v2066
      %v2165 = vmul.f32 %v2067, %v2067
      %v2166 = vmul.f32 %v2068, %v2068
      %v2167 = vmul.f32 %v2069, %v2069
      %v2168 = vmul.f32 %v2070, %v2070
      %v2169 = vmul.f32 %v2071, %v2071
      %v2170 = vmul.f32 %v2072, %v2072
      %v2171 = vmul.f32 %v2073, %v2073
      %v2172 = vmul.f32 %v2074, %v2074
      %v2173 = vmul.f32 %v2075, %v2075
      %v2174 = vmul.f32 %v2076, %v2076
      %v2175 = vmul.f32 %v2077, %v2077
      %v2176 = vmul.f32 %v2078, %v2078
      %v2177 = vmul.f32 %v2079, %v2079
      %v2178 = vmul.f32 %v2080, %v2080
      %v2179 = vmul.f32 %v2081, %v2081
      %v2180 = vmul.f32 %v2082, %v2082
      %v2181 = vmul.f32 %v2083, %v2083
      %v2182 = vmul.f32 %v2084, %v2084
      %v2183 = vmul.f32 %v2085, %v2085
      %v2184 = vmul.f32 %v2086, %v2086
      %v2185 = vmul.f32 %v2087, %v2087
      %v2186 = vmul.f32 %v2088, %v2088
      %v2187 = vmul.f32 %v2089, %v2089
      %v2188 = vmul.f32 %v2090, %v2090
      %v2189 = vmul.f32 %v2091, %v2091
      %v2190 = vmul.f32 %v2092, %v2092
      %v2191 = vmul.f32 %v2093, %v2093
      %v2192 = vmul.f32 %v2094, %v2094
      %v2193 = vmul.f32 %v2095, %v2095
      %v2194 = vmul.f32 %v2096, %v2096
      %v2195 = vmul.f32 %v2097, %v2097
      %v2196 = vmul.f32 %v2098, %v2098
      %v2197 = vmul.f32 %v2099, %v2099
      %v2198 = vmul.f32 %v2100, %v2100
      %v2199 = vmul.f32 %v2101, %v2101
      %v2200 = vmul.f32 %v2102, %v2102
      %v2201 = vmul.f32 %v2103, %v2103
      %v2202 = vmul.f32 %v2104, %v2104
      %v2203 = vmul.f32 %v2105, %v2105
      %v2204 = vmul.f32 %v2106, %v2106
      %v2205 = vmul.f32 %v2107, %v2107
      %v2206 = vmul.f32 %v2108, %v2108
      %v2207 = vmul.f32 %v2109, %v2109
      %v2208 = vmul.f32 %v2110, %v2110
      %v2209 = vmul.f32 %v2111, %v2111
      %v2210 = vmul.f32 %v2112, %v2112
      %v2211 = vmul.f32 %v2113, %v2113
      %v2212 = vmul.f32 %v2114, %v2114
      %v2213 = vmul.f32 %v2115, %v2115
      %v2214 = vmul.f32 %v2116, %v2116
      %v2215 = vmul.f32 %v2117, %v2117
      %v2216 = vmul.f32 %v2118, %v2118
      %v2217 = vmul.f32 %v2119, %v2119
      %v2218 = vmul.f32 %v2120, %v2120
      %v2219 = vmul.f32 %v2121, %v2121
      %v2220 = vmul.f32 %v2122, %v2122
      %v2221 = vmul.f32 %v2123, %v2123
      %v2222 = vmul.f32 %v2124, %v2124
      %v2223 = vmul.f32 %v2125, %v2125
      %v2224 = vmul.f32 %v2126, %v2126
      %v2225 = vmul.f32 %v2127, %v2127
      %v2226 = vmul.f32 %v2128, %v2128
      %v2227 = vmul.f32 %v2129, %v2129
      %v2228 = vmul.f32 %v2130, %v2130
      %v2229 = vmul.f32 %v2131, %v2131
      %v2230 = vmul.f32 %v2132, %v2132
      %v2231 = vmul.f32 %v2133, %v2133
      %v2232 = vmul.f32 %v2134, %v2134
      %v2233 = vmul.f32 %v2135, %v2135
      %v2234 = vmul.f32 %v2136, %v2136
      %v2235 = vmul.f32 %v2137, %v2137
      %v2236 = vmul.f32 %v2138, %v2138
      %v2237 = vmul.f32 %v2139, %v2139
      %v2238 = vmul.f32 %v2140, %v2140
      %v2239 = vmul.f32 %v2141, %v2141
      %v2240 = vmul.f32 %v2142, %v2142
      %v2241 = vmul.f32 %v2143, %v2143
      %v2242 = vmul.f32 %v2144, %v2144
      %v2243 = vmul.f32 %v2145, %v2145
      %v2244 = vmul.f32 %v2146, %v2146
      %v2245 = vmul.f32 %v2147, %v2147
      %v2246 = vmul.f32 %v2148, %v2148
      %v2247 = vmul.f32 %v2149, %v2149
      %v2248 = vmul.f32 %v2150, %v2150
      %v2249 = vmul.f32 %v2151, %v2151
      %v2250 = vmul.f32 %v2152, %v2152
      %v2251 = vmul.f32 %v2153, %v2153
      %v2252 = vmul.f32 %v2154, %v2154
      %v2253 = vmul.f32 %v2155, %v2155
      %v2254 = vmul.f32 %v2156, %v2156
      %v2255 = vmul.f32 %v2157, %v2157
      %v2256 = vmul.f32 %v2158, %v2158
      %v2257 = vmul.f32 %v2159, %v2159
      %v2258 = vmul.f32 %v2160, %v2160
      %v2259 = vmul.f32 %v2161, %v2161
      %v2260 = vmul.f32 %v2162, %v2162
      %v2261 = vmul.f32 %v2163, %v2163
      %v2262 = vmul.f32 %v2164, %v2164
      %v2263 = vadd.f32 %v2165, %v2166
      %v2264 = vadd.f32 %v2263, %v2167
      %v2265 = vadd.f32 %v2264, %v2168
      %v2266 = vadd.f32 %v2265, %v2169
      %v2267 = vadd.f32 %v2266, %v2170
      %v2268 = vadd.f32 %v2267, %v2171
      %v2269 = vadd.f32 %v2268, %v2172
      %v2270 = vadd.f32 %v2269, %v2173
      %v2271 = vadd.f32 %v2270, %v2174
      %v2272 = vadd.f32 %v2271, %v2175
      %v2273 = vadd.f32 %v2272, %v2176
      %v2274 = vadd.f32 %v2273, %v2177
      %v2275 = vadd.f32 %v2274, %v2178
      %v2276 = vadd.f32 %v2275, %v2179
      %v2277 = vadd.f32 %v2276, %v2180
      %v2278 = vadd.f32 %v2277, %v2181
      %v2279 = vadd.f32 %v2278, %v2182
      %v2280 = vadd.f32 %v2279, %v2183
      %v2281 = vadd.f32 %v2280, %v2184
      %v2282 = vadd.f32 %v2281, %v2185
      %v2283 = vadd.f32 %v2282, %v2186
      %v2284 = vadd.f32 %v2283, %v2187
      %v2285 = vadd.f32 %v2284, %v2188
      %v2286 = vadd.f32 %v2285, %v2189
      %v2287 = vadd.f32 %v2286, %v2190
      %v2288 = vadd.f32 %v2287, %v2191
      %v2289 = vadd.f32 %v2288, %v2192
      %v2290 = vadd.f32 %v2289, %v2193
      %v2291 = vadd.f32 %v2290, %v2194
      %v2292 = vadd.f32 %v2291, %v2195
      %v2293 = vadd.f32 %v2292, %v2196
      %v2294 = vadd.f32 %v2293, %v2197
      %v2295 = vadd.f32 %v2294, %v2198
      %v2296 = vadd.f32 %v2295, %v2199
      %v2297 = vadd.f32 %v2296, %v2200
      %v2298 = vadd.f32 %v2297, %v2201
      %v2299 = vadd.f32 %v2298, %v2202
      %v2300 = vadd.f32 %v2299, %v2203
      %v2301 = vadd.f32 %v2300, %v2204
      %v2302 = vadd.f32 %v2301, %v2205
      %v2303 = vadd.f32 %v2302, %v2206
      %v2304 = vadd.f32 %v2303, %v2207
      %v2305 = vadd.f32 %v2304, %v2208
      %v2306 = vadd.f32 %v2305, %v2209
      %v2307 = vadd.f32 %v2306, %v2210
      %v2308 = vadd.f32 %v2307, %v2211
      %v2309 = vadd.f32 %v2308, %v2212
      %v2310 = vadd.f32 %v2309, %v2213
      %v2311 = vadd.f32 %v2310, %v2214
      %v2312 = vadd.f32 %v2311, %v2215
      %v2313 = vadd.f32 %v2312, %v2216
      %v2314 = vadd.f32 %v2313, %v2217
      %v2315 = vadd.f32 %v2314, %v2218
      %v2316 = vadd.f32 %v2315, %v2219
      %v2317 = vadd.f32 %v2316, %v2220
      %v2318 = vadd.f32 %v2317, %v2221
      %v2319 = vadd.f32 %v2318, %v2222
      %v2320 = vadd.f32 %v2319, %v2223
      %v2321 = vadd.f32 %v2320, %v2224
      %v2322 = vadd.f32 %v2321, %v2225
      %v2323 = vadd.f32 %v2322, %v2226
      %v2324 = vadd.f32 %v2323, %v2227
      %v2325 = vadd.f32 %v2324, %v2228
      %v2326 = vadd.f32 %v2325, %v2229
      %v2327 = vadd.f32 %v2326, %v2230
      %v2328 = vadd.f32 %v2327, %v2231
      %v2329 = vadd.f32 %v2328, %v2232
      %v2330 = vadd.f32 %v2329, %v2233
      %v2331 = vadd.f32 %v2330, %v2234
      %v2332 = vadd.f32 %v2331, %v2235
      %v2333 = vadd.f32 %v2332, %v2236
      %v2334 = vadd.f32 %v2333, %v2237
      %v2335 = vadd.f32 %v2334, %v2238
      %v2336 = vadd.f32 %v2335, %v2239
      %v2337 = vadd.f32 %v2336, %v2240
      %v2338 = vadd.f32 %v2337, %v2241
      %v2339 = vadd.f32 %v2338, %v2242
      %v2340 = vadd.f32 %v2339, %v2243
      %v2341 = vadd.f32 %v2340, %v2244
      %v2342 = vadd.f32 %v2341, %v2245
      %v2343 = vadd.f32 %v2342, %v2246
      %v2344 = vadd.f32 %v2343, %v2247
      %v2345 = vadd.f32 %v2344, %v2248
      %v2346 = vadd.f32 %v2345, %v2249
      %v2347 = vadd.f32 %v2346, %v2250
      %v2348 = vadd.f32 %v2347, %v2251
      %v2349 = vadd.f32 %v2348, %v2252
      %v2350 = vadd.f32 %v2349, %v2253
      %v2351 = vadd.f32 %v2350, %v2254
      %v2352 = vadd.f32 %v2351, %v2255
      %v2353 = vadd.f32 %v2352, %v2256
      %v2354 = vadd.f32 %v2353, %v2257
      %v2355 = vadd.f32 %v2354, %v2258
      %v2356 = vadd.f32 %v2355, %v2259
      %v2357 = vadd.f32 %v2356, %v2260
      %v2358 = vadd.f32 %v2357, %v2261
      %v2359 = vadd.f32 %v2358, %v2262
      %v2360 = vrot.slane %v2359, 4
      %v2361 = vadd.f32 %v2359, %v2360
      %v2362 = vrot.slane %v2361, 2
      %v2363 = vadd.f32 %v2361, %v2362
      %v2364 = vrot.slane %v2363, 1
      %v2365 = vadd.f32 %v2363, %v2364
      %v2366 = vmul.f32 %v2365, %v2065
      %v2367 = vadd.f32 %v2366, 1e-05
      %v2368 = vrsqrt.pop %v2367
      %v2369 = vmul.f32 %v2067, %v2368
      %v2370 = vmul.f32 %v2068, %v2368
      %v2371 = vmul.f32 %v2069, %v2368
      %v2372 = vmul.f32 %v2070, %v2368
      %v2373 = vmul.f32 %v2071, %v2368
      %v2374 = vmul.f32 %v2072, %v2368
      %v2375 = vmul.f32 %v2073, %v2368
      %v2376 = vmul.f32 %v2074, %v2368
      %v2377 = vmul.f32 %v2075, %v2368
      %v2378 = vmul.f32 %v2076, %v2368
      %v2379 = vmul.f32 %v2077, %v2368
      %v2380 = vmul.f32 %v2078, %v2368
      %v2381 = vmul.f32 %v2079, %v2368
      %v2382 = vmul.f32 %v2080, %v2368
      %v2383 = vmul.f32 %v2081, %v2368
      %v2384 = vmul.f32 %v2082, %v2368
      %v2385 = vmul.f32 %v2083, %v2368
      %v2386 = vmul.f32 %v2084, %v2368
      %v2387 = vmul.f32 %v2085, %v2368
      %v2388 = vmul.f32 %v2086, %v2368
      %v2389 = vmul.f32 %v2087, %v2368
      %v2390 = vmul.f32 %v2088, %v2368
      %v2391 = vmul.f32 %v2089, %v2368
      %v2392 = vmul.f32 %v2090, %v2368
      %v2393 = vmul.f32 %v2091, %v2368
      %v2394 = vmul.f32 %v2092, %v2368
      %v2395 = vmul.f32 %v2093, %v2368
      %v2396 = vmul.f32 %v2094, %v2368
      %v2397 = vmul.f32 %v2095, %v2368
      %v2398 = vmul.f32 %v2096, %v2368
      %v2399 = vmul.f32 %v2097, %v2368
      %v2400 = vmul.f32 %v2098, %v2368
      %v2401 = vmul.f32 %v2099, %v2368
      %v2402 = vmul.f32 %v2100, %v2368
      %v2403 = vmul.f32 %v2101, %v2368
      %v2404 = vmul.f32 %v2102, %v2368
      %v2405 = vmul.f32 %v2103, %v2368
      %v2406 = vmul.f32 %v2104, %v2368
      %v2407 = vmul.f32 %v2105, %v2368
      %v2408 = vmul.f32 %v2106, %v2368
      %v2409 = vmul.f32 %v2107, %v2368
      %v2410 = vmul.f32 %v2108, %v2368
      %v2411 = vmul.f32 %v2109, %v2368
      %v2412 = vmul.f32 %v2110, %v2368
      %v2413 = vmul.f32 %v2111, %v2368
      %v2414 = vmul.f32 %v2112, %v2368
      %v2415 = vmul.f32 %v2113, %v2368
      %v2416 = vmul.f32 %v2114, %v2368
      %v2417 = vmul.f32 %v2115, %v2368
      %v2418 = vmul.f32 %v2116, %v2368
      %v2419 = vmul.f32 %v2117, %v2368
      %v2420 = vmul.f32 %v2118, %v2368
      %v2421 = vmul.f32 %v2119, %v2368
      %v2422 = vmul.f32 %v2120, %v2368
      %v2423 = vmul.f32 %v2121, %v2368
      %v2424 = vmul.f32 %v2122, %v2368
      %v2425 = vmul.f32 %v2123, %v2368
      %v2426 = vmul.f32 %v2124, %v2368
      %v2427 = vmul.f32 %v2125, %v2368
      %v2428 = vmul.f32 %v2126, %v2368
      %v2429 = vmul.f32 %v2127, %v2368
      %v2430 = vmul.f32 %v2128, %v2368
      %v2431 = vmul.f32 %v2129, %v2368
      %v2432 = vmul.f32 %v2130, %v2368
      %v2433 = vmul.f32 %v2131, %v2368
      %v2434 = vmul.f32 %v2132, %v2368
      %v2435 = vmul.f32 %v2133, %v2368
      %v2436 = vmul.f32 %v2134, %v2368
      %v2437 = vmul.f32 %v2135, %v2368
      %v2438 = vmul.f32 %v2136, %v2368
      %v2439 = vmul.f32 %v2137, %v2368
      %v2440 = vmul.f32 %v2138, %v2368
      %v2441 = vmul.f32 %v2139, %v2368
      %v2442 = vmul.f32 %v2140, %v2368
      %v2443 = vmul.f32 %v2141, %v2368
      %v2444 = vmul.f32 %v2142, %v2368
      %v2445 = vmul.f32 %v2143, %v2368
      %v2446 = vmul.f32 %v2144, %v2368
      %v2447 = vmul.f32 %v2145, %v2368
      %v2448 = vmul.f32 %v2146, %v2368
      %v2449 = vmul.f32 %v2147, %v2368
      %v2450 = vmul.f32 %v2148, %v2368
      %v2451 = vmul.f32 %v2149, %v2368
      %v2452 = vmul.f32 %v2150, %v2368
      %v2453 = vmul.f32 %v2151, %v2368
      %v2454 = vmul.f32 %v2152, %v2368
      %v2455 = vmul.f32 %v2153, %v2368
      %v2456 = vmul.f32 %v2154, %v2368
      %v2457 = vmul.f32 %v2155, %v2368
      %v2458 = vmul.f32 %v2156, %v2368
      %v2459 = vmul.f32 %v2157, %v2368
      %v2460 = vmul.f32 %v2158, %v2368
      %v2461 = vmul.f32 %v2159, %v2368
      %v2462 = vmul.f32 %v2160, %v2368
      %v2463 = vmul.f32 %v2161, %v2368
      %v2464 = vmul.f32 %v2162, %v2368
      %v2465 = vmul.f32 %v2163, %v2368
      %v2466 = vmul.f32 %v2164, %v2368
      %v2467 = vld [vmem:[%s3] sm:$0x1]
      %v2469 = vlaneseq
      %v2470 = vshrl.u32 %v2469, 7
      %v2471 = vsub.s32 0, %v2470
      %v2472 = vrot.slane %v2467, %v2471
      %v2474 = vmul.f32 %v2369, %v2472
      %v2475 = vmul.f32 %v2370, %v2472
      %v2476 = vmul.f32 %v2371, %v2472
      %v2477 = vmul.f32 %v2372, %v2472
      %v2478 = vmul.f32 %v2373, %v2472
      %v2479 = vmul.f32 %v2374, %v2472
      %v2480 = vmul.f32 %v2375, %v2472
      %v2481 = vmul.f32 %v2376, %v2472
      %v2482 = vmul.f32 %v2377, %v2472
      %v2483 = vmul.f32 %v2378, %v2472
      %v2484 = vmul.f32 %v2379, %v2472
      %v2485 = vmul.f32 %v2380, %v2472
      %v2486 = vmul.f32 %v2381, %v2472
      %v2487 = vmul.f32 %v2382, %v2472
      %v2488 = vmul.f32 %v2383, %v2472
      %v2489 = vmul.f32 %v2384, %v2472
      %v2490 = vmul.f32 %v2385, %v2472
      %v2491 = vmul.f32 %v2386, %v2472
      %v2492 = vmul.f32 %v2387, %v2472
      %v2493 = vmul.f32 %v2388, %v2472
      %v2494 = vmul.f32 %v2389, %v2472
      %v2495 = vmul.f32 %v2390, %v2472
      %v2496 = vmul.f32 %v2391, %v2472
      %v2497 = vmul.f32 %v2392, %v2472
      %v2498 = vmul.f32 %v2393, %v2472
      %v2499 = vmul.f32 %v2394, %v2472
      %v2500 = vmul.f32 %v2395, %v2472
      %v2501 = vmul.f32 %v2396, %v2472
      %v2502 = vmul.f32 %v2397, %v2472
      %v2503 = vmul.f32 %v2398, %v2472
      %v2504 = vmul.f32 %v2399, %v2472
      %v2505 = vmul.f32 %v2400, %v2472
      %v2506 = vmul.f32 %v2401, %v2472
      %v2507 = vmul.f32 %v2402, %v2472
      %v2508 = vmul.f32 %v2403, %v2472
      %v2509 = vmul.f32 %v2404, %v2472
      %v2510 = vmul.f32 %v2405, %v2472
      %v2511 = vmul.f32 %v2406, %v2472
      %v2512 = vmul.f32 %v2407, %v2472
      %v2513 = vmul.f32 %v2408, %v2472
      %v2514 = vmul.f32 %v2409, %v2472
      %v2515 = vmul.f32 %v2410, %v2472
      %v2516 = vmul.f32 %v2411, %v2472
      %v2517 = vmul.f32 %v2412, %v2472
      %v2518 = vmul.f32 %v2413, %v2472
      %v2519 = vmul.f32 %v2414, %v2472
      %v2520 = vmul.f32 %v2415, %v2472
      %v2521 = vmul.f32 %v2416, %v2472
      %v2522 = vmul.f32 %v2417, %v2472
      %v2523 = vmul.f32 %v2418, %v2472
      %v2524 = vmul.f32 %v2419, %v2472
      %v2525 = vmul.f32 %v2420, %v2472
      %v2526 = vmul.f32 %v2421, %v2472
      %v2527 = vmul.f32 %v2422, %v2472
      %v2528 = vmul.f32 %v2423, %v2472
      %v2529 = vmul.f32 %v2424, %v2472
      %v2530 = vmul.f32 %v2425, %v2472
      %v2531 = vmul.f32 %v2426, %v2472
      %v2532 = vmul.f32 %v2427, %v2472
      %v2533 = vmul.f32 %v2428, %v2472
      %v2534 = vmul.f32 %v2429, %v2472
      %v2535 = vmul.f32 %v2430, %v2472
      %v2536 = vmul.f32 %v2431, %v2472
      %v2537 = vmul.f32 %v2432, %v2472
      %v2538 = vmul.f32 %v2433, %v2472
      %v2539 = vmul.f32 %v2434, %v2472
      %v2540 = vmul.f32 %v2435, %v2472
      %v2541 = vmul.f32 %v2436, %v2472
      %v2542 = vmul.f32 %v2437, %v2472
      %v2543 = vmul.f32 %v2438, %v2472
      %v2544 = vmul.f32 %v2439, %v2472
      %v2545 = vmul.f32 %v2440, %v2472
      %v2546 = vmul.f32 %v2441, %v2472
      %v2547 = vmul.f32 %v2442, %v2472
      %v2548 = vmul.f32 %v2443, %v2472
      %v2549 = vmul.f32 %v2444, %v2472
      %v2550 = vmul.f32 %v2445, %v2472
      %v2551 = vmul.f32 %v2446, %v2472
      %v2552 = vmul.f32 %v2447, %v2472
      %v2553 = vmul.f32 %v2448, %v2472
      %v2554 = vmul.f32 %v2449, %v2472
      %v2555 = vmul.f32 %v2450, %v2472
      %v2556 = vmul.f32 %v2451, %v2472
      %v2557 = vmul.f32 %v2452, %v2472
      %v2558 = vmul.f32 %v2453, %v2472
      %v2559 = vmul.f32 %v2454, %v2472
      %v2560 = vmul.f32 %v2455, %v2472
      %v2561 = vmul.f32 %v2456, %v2472
      %v2562 = vmul.f32 %v2457, %v2472
      %v2563 = vmul.f32 %v2458, %v2472
      %v2564 = vmul.f32 %v2459, %v2472
      %v2565 = vmul.f32 %v2460, %v2472
      %v2566 = vmul.f32 %v2461, %v2472
      %v2567 = vmul.f32 %v2462, %v2472
      %v2568 = vmul.f32 %v2463, %v2472
      %v2569 = vmul.f32 %v2464, %v2472
      %v2570 = vmul.f32 %v2465, %v2472
      %v2571 = vmul.f32 %v2466, %v2472
      %v2572 = vld [vmem:[%s4] sm:$0x1]
      %v2574 = vlaneseq
      %v2575 = vshrl.u32 %v2574, 7
      %v2576 = vsub.s32 0, %v2575
      %v2577 = vrot.slane %v2572, %v2576
      %v2579 = vadd.f32 %v2474, %v2577
      %v2580 = vadd.f32 %v2475, %v2577
      %v2581 = vadd.f32 %v2476, %v2577
      %v2582 = vadd.f32 %v2477, %v2577
      %v2583 = vadd.f32 %v2478, %v2577
      %v2584 = vadd.f32 %v2479, %v2577
      %v2585 = vadd.f32 %v2480, %v2577
      %v2586 = vadd.f32 %v2481, %v2577
      %v2587 = vadd.f32 %v2482, %v2577
      %v2588 = vadd.f32 %v2483, %v2577
      %v2589 = vadd.f32 %v2484, %v2577
      %v2590 = vadd.f32 %v2485, %v2577
      %v2591 = vadd.f32 %v2486, %v2577
      %v2592 = vadd.f32 %v2487, %v2577
      %v2593 = vadd.f32 %v2488, %v2577
      %v2594 = vadd.f32 %v2489, %v2577
      %v2595 = vadd.f32 %v2490, %v2577
      %v2596 = vadd.f32 %v2491, %v2577
      %v2597 = vadd.f32 %v2492, %v2577
      %v2598 = vadd.f32 %v2493, %v2577
      %v2599 = vadd.f32 %v2494, %v2577
      %v2600 = vadd.f32 %v2495, %v2577
      %v2601 = vadd.f32 %v2496, %v2577
      %v2602 = vadd.f32 %v2497, %v2577
      %v2603 = vadd.f32 %v2498, %v2577
      %v2604 = vadd.f32 %v2499, %v2577
      %v2605 = vadd.f32 %v2500, %v2577
      %v2606 = vadd.f32 %v2501, %v2577
      %v2607 = vadd.f32 %v2502, %v2577
      %v2608 = vadd.f32 %v2503, %v2577
      %v2609 = vadd.f32 %v2504, %v2577
      %v2610 = vadd.f32 %v2505, %v2577
      %v2611 = vadd.f32 %v2506, %v2577
      %v2612 = vadd.f32 %v2507, %v2577
      %v2613 = vadd.f32 %v2508, %v2577
      %v2614 = vadd.f32 %v2509, %v2577
      %v2615 = vadd.f32 %v2510, %v2577
      %v2616 = vadd.f32 %v2511, %v2577
      %v2617 = vadd.f32 %v2512, %v2577
      %v2618 = vadd.f32 %v2513, %v2577
      %v2619 = vadd.f32 %v2514, %v2577
      %v2620 = vadd.f32 %v2515, %v2577
      %v2621 = vadd.f32 %v2516, %v2577
      %v2622 = vadd.f32 %v2517, %v2577
      %v2623 = vadd.f32 %v2518, %v2577
      %v2624 = vadd.f32 %v2519, %v2577
      %v2625 = vadd.f32 %v2520, %v2577
      %v2626 = vadd.f32 %v2521, %v2577
      %v2627 = vadd.f32 %v2522, %v2577
      %v2628 = vadd.f32 %v2523, %v2577
      %v2629 = vadd.f32 %v2524, %v2577
      %v2630 = vadd.f32 %v2525, %v2577
      %v2631 = vadd.f32 %v2526, %v2577
      %v2632 = vadd.f32 %v2527, %v2577
      %v2633 = vadd.f32 %v2528, %v2577
      %v2634 = vadd.f32 %v2529, %v2577
      %v2635 = vadd.f32 %v2530, %v2577
      %v2636 = vadd.f32 %v2531, %v2577
      %v2637 = vadd.f32 %v2532, %v2577
      %v2638 = vadd.f32 %v2533, %v2577
      %v2639 = vadd.f32 %v2534, %v2577
      %v2640 = vadd.f32 %v2535, %v2577
      %v2641 = vadd.f32 %v2536, %v2577
      %v2642 = vadd.f32 %v2537, %v2577
      %v2643 = vadd.f32 %v2538, %v2577
      %v2644 = vadd.f32 %v2539, %v2577
      %v2645 = vadd.f32 %v2540, %v2577
      %v2646 = vadd.f32 %v2541, %v2577
      %v2647 = vadd.f32 %v2542, %v2577
      %v2648 = vadd.f32 %v2543, %v2577
      %v2649 = vadd.f32 %v2544, %v2577
      %v2650 = vadd.f32 %v2545, %v2577
      %v2651 = vadd.f32 %v2546, %v2577
      %v2652 = vadd.f32 %v2547, %v2577
      %v2653 = vadd.f32 %v2548, %v2577
      %v2654 = vadd.f32 %v2549, %v2577
      %v2655 = vadd.f32 %v2550, %v2577
      %v2656 = vadd.f32 %v2551, %v2577
      %v2657 = vadd.f32 %v2552, %v2577
      %v2658 = vadd.f32 %v2553, %v2577
      %v2659 = vadd.f32 %v2554, %v2577
      %v2660 = vadd.f32 %v2555, %v2577
      %v2661 = vadd.f32 %v2556, %v2577
      %v2662 = vadd.f32 %v2557, %v2577
      %v2663 = vadd.f32 %v2558, %v2577
      %v2664 = vadd.f32 %v2559, %v2577
      %v2665 = vadd.f32 %v2560, %v2577
      %v2666 = vadd.f32 %v2561, %v2577
      %v2667 = vadd.f32 %v2562, %v2577
      %v2668 = vadd.f32 %v2563, %v2577
      %v2669 = vadd.f32 %v2564, %v2577
      %v2670 = vadd.f32 %v2565, %v2577
      %v2671 = vadd.f32 %v2566, %v2577
      %v2672 = vadd.f32 %v2567, %v2577
      %v2673 = vadd.f32 %v2568, %v2577
      %v2674 = vadd.f32 %v2569, %v2577
      %v2675 = vadd.f32 %v2570, %v2577
      %v2676 = vadd.f32 %v2571, %v2577
      %vm2677 = vcmp.ge.f32.partialorder %v2579, 0.0
      %vm2678 = vcmp.ge.f32.partialorder %v2580, 0.0
      %vm2679 = vcmp.ge.f32.partialorder %v2581, 0.0
      %vm2680 = vcmp.ge.f32.partialorder %v2582, 0.0
      %vm2681 = vcmp.ge.f32.partialorder %v2583, 0.0
      %vm2682 = vcmp.ge.f32.partialorder %v2584, 0.0
      %vm2683 = vcmp.ge.f32.partialorder %v2585, 0.0
      %vm2684 = vcmp.ge.f32.partialorder %v2586, 0.0
      %vm2685 = vcmp.ge.f32.partialorder %v2587, 0.0
      %vm2686 = vcmp.ge.f32.partialorder %v2588, 0.0
      %vm2687 = vcmp.ge.f32.partialorder %v2589, 0.0
      %vm2688 = vcmp.ge.f32.partialorder %v2590, 0.0
      %vm2689 = vcmp.ge.f32.partialorder %v2591, 0.0
      %vm2690 = vcmp.ge.f32.partialorder %v2592, 0.0
      %vm2691 = vcmp.ge.f32.partialorder %v2593, 0.0
      %vm2692 = vcmp.ge.f32.partialorder %v2594, 0.0
      %vm2693 = vcmp.ge.f32.partialorder %v2595, 0.0
      %vm2694 = vcmp.ge.f32.partialorder %v2596, 0.0
      %vm2695 = vcmp.ge.f32.partialorder %v2597, 0.0
      %vm2696 = vcmp.ge.f32.partialorder %v2598, 0.0
      %vm2697 = vcmp.ge.f32.partialorder %v2599, 0.0
      %vm2698 = vcmp.ge.f32.partialorder %v2600, 0.0
      %vm2699 = vcmp.ge.f32.partialorder %v2601, 0.0
      %vm2700 = vcmp.ge.f32.partialorder %v2602, 0.0
      %vm2701 = vcmp.ge.f32.partialorder %v2603, 0.0
      %vm2702 = vcmp.ge.f32.partialorder %v2604, 0.0
      %vm2703 = vcmp.ge.f32.partialorder %v2605, 0.0
      %vm2704 = vcmp.ge.f32.partialorder %v2606, 0.0
      %vm2705 = vcmp.ge.f32.partialorder %v2607, 0.0
      %vm2706 = vcmp.ge.f32.partialorder %v2608, 0.0
      %vm2707 = vcmp.ge.f32.partialorder %v2609, 0.0
      %vm2708 = vcmp.ge.f32.partialorder %v2610, 0.0
      %vm2709 = vcmp.ge.f32.partialorder %v2611, 0.0
      %vm2710 = vcmp.ge.f32.partialorder %v2612, 0.0
      %vm2711 = vcmp.ge.f32.partialorder %v2613, 0.0
      %vm2712 = vcmp.ge.f32.partialorder %v2614, 0.0
      %vm2713 = vcmp.ge.f32.partialorder %v2615, 0.0
      %vm2714 = vcmp.ge.f32.partialorder %v2616, 0.0
      %vm2715 = vcmp.ge.f32.partialorder %v2617, 0.0
      %vm2716 = vcmp.ge.f32.partialorder %v2618, 0.0
      %vm2717 = vcmp.ge.f32.partialorder %v2619, 0.0
      %vm2718 = vcmp.ge.f32.partialorder %v2620, 0.0
      %vm2719 = vcmp.ge.f32.partialorder %v2621, 0.0
      %vm2720 = vcmp.ge.f32.partialorder %v2622, 0.0
      %vm2721 = vcmp.ge.f32.partialorder %v2623, 0.0
      %vm2722 = vcmp.ge.f32.partialorder %v2624, 0.0
      %vm2723 = vcmp.ge.f32.partialorder %v2625, 0.0
      %vm2724 = vcmp.ge.f32.partialorder %v2626, 0.0
      %vm2725 = vcmp.ge.f32.partialorder %v2627, 0.0
      %vm2726 = vcmp.ge.f32.partialorder %v2628, 0.0
      %vm2727 = vcmp.ge.f32.partialorder %v2629, 0.0
      %vm2728 = vcmp.ge.f32.partialorder %v2630, 0.0
      %vm2729 = vcmp.ge.f32.partialorder %v2631, 0.0
      %vm2730 = vcmp.ge.f32.partialorder %v2632, 0.0
      %vm2731 = vcmp.ge.f32.partialorder %v2633, 0.0
      %vm2732 = vcmp.ge.f32.partialorder %v2634, 0.0
      %vm2733 = vcmp.ge.f32.partialorder %v2635, 0.0
      %vm2734 = vcmp.ge.f32.partialorder %v2636, 0.0
      %vm2735 = vcmp.ge.f32.partialorder %v2637, 0.0
      %vm2736 = vcmp.ge.f32.partialorder %v2638, 0.0
      %vm2737 = vcmp.ge.f32.partialorder %v2639, 0.0
      %vm2738 = vcmp.ge.f32.partialorder %v2640, 0.0
      %vm2739 = vcmp.ge.f32.partialorder %v2641, 0.0
      %vm2740 = vcmp.ge.f32.partialorder %v2642, 0.0
      %vm2741 = vcmp.ge.f32.partialorder %v2643, 0.0
      %vm2742 = vcmp.ge.f32.partialorder %v2644, 0.0
      %vm2743 = vcmp.ge.f32.partialorder %v2645, 0.0
      %vm2744 = vcmp.ge.f32.partialorder %v2646, 0.0
      %vm2745 = vcmp.ge.f32.partialorder %v2647, 0.0
      %vm2746 = vcmp.ge.f32.partialorder %v2648, 0.0
      %vm2747 = vcmp.ge.f32.partialorder %v2649, 0.0
      %vm2748 = vcmp.ge.f32.partialorder %v2650, 0.0
      %vm2749 = vcmp.ge.f32.partialorder %v2651, 0.0
      %vm2750 = vcmp.ge.f32.partialorder %v2652, 0.0
      %vm2751 = vcmp.ge.f32.partialorder %v2653, 0.0
      %vm2752 = vcmp.ge.f32.partialorder %v2654, 0.0
      %vm2753 = vcmp.ge.f32.partialorder %v2655, 0.0
      %vm2754 = vcmp.ge.f32.partialorder %v2656, 0.0
      %vm2755 = vcmp.ge.f32.partialorder %v2657, 0.0
      %vm2756 = vcmp.ge.f32.partialorder %v2658, 0.0
      %vm2757 = vcmp.ge.f32.partialorder %v2659, 0.0
      %vm2758 = vcmp.ge.f32.partialorder %v2660, 0.0
      %vm2759 = vcmp.ge.f32.partialorder %v2661, 0.0
      %vm2760 = vcmp.ge.f32.partialorder %v2662, 0.0
      %vm2761 = vcmp.ge.f32.partialorder %v2663, 0.0
      %vm2762 = vcmp.ge.f32.partialorder %v2664, 0.0
      %vm2763 = vcmp.ge.f32.partialorder %v2665, 0.0
      %vm2764 = vcmp.ge.f32.partialorder %v2666, 0.0
      %vm2765 = vcmp.ge.f32.partialorder %v2667, 0.0
      %vm2766 = vcmp.ge.f32.partialorder %v2668, 0.0
      %vm2767 = vcmp.ge.f32.partialorder %v2669, 0.0
      %vm2768 = vcmp.ge.f32.partialorder %v2670, 0.0
      %vm2769 = vcmp.ge.f32.partialorder %v2671, 0.0
      %vm2770 = vcmp.ge.f32.partialorder %v2672, 0.0
      %vm2771 = vcmp.ge.f32.partialorder %v2673, 0.0
      %vm2772 = vcmp.ge.f32.partialorder %v2674, 0.0
      %vm2773 = vcmp.ge.f32.partialorder %v2675, 0.0
      %vm2774 = vcmp.ge.f32.partialorder %v2676, 0.0
      %v2775 = vld [vmem:[%s5] sm:$0x1]
      %v2777 = vlaneseq
      %v2778 = vshrl.u32 %v2777, 7
      %v2779 = vsub.s32 0, %v2778
      %v2780 = vrot.slane %v2775, %v2779
      %v2782 = vmul.f32 %v2780, %v2579
      %v2783 = vmul.f32 %v2780, %v2580
      %v2784 = vmul.f32 %v2780, %v2581
      %v2785 = vmul.f32 %v2780, %v2582
      %v2786 = vmul.f32 %v2780, %v2583
      %v2787 = vmul.f32 %v2780, %v2584
      %v2788 = vmul.f32 %v2780, %v2585
      %v2789 = vmul.f32 %v2780, %v2586
      %v2790 = vmul.f32 %v2780, %v2587
      %v2791 = vmul.f32 %v2780, %v2588
      %v2792 = vmul.f32 %v2780, %v2589
      %v2793 = vmul.f32 %v2780, %v2590
      %v2794 = vmul.f32 %v2780, %v2591
      %v2795 = vmul.f32 %v2780, %v2592
      %v2796 = vmul.f32 %v2780, %v2593
      %v2797 = vmul.f32 %v2780, %v2594
      %v2798 = vmul.f32 %v2780, %v2595
      %v2799 = vmul.f32 %v2780, %v2596
      %v2800 = vmul.f32 %v2780, %v2597
      %v2801 = vmul.f32 %v2780, %v2598
      %v2802 = vmul.f32 %v2780, %v2599
      %v2803 = vmul.f32 %v2780, %v2600
      %v2804 = vmul.f32 %v2780, %v2601
      %v2805 = vmul.f32 %v2780, %v2602
      %v2806 = vmul.f32 %v2780, %v2603
      %v2807 = vmul.f32 %v2780, %v2604
      %v2808 = vmul.f32 %v2780, %v2605
      %v2809 = vmul.f32 %v2780, %v2606
      %v2810 = vmul.f32 %v2780, %v2607
      %v2811 = vmul.f32 %v2780, %v2608
      %v2812 = vmul.f32 %v2780, %v2609
      %v2813 = vmul.f32 %v2780, %v2610
      %v2814 = vmul.f32 %v2780, %v2611
      %v2815 = vmul.f32 %v2780, %v2612
      %v2816 = vmul.f32 %v2780, %v2613
      %v2817 = vmul.f32 %v2780, %v2614
      %v2818 = vmul.f32 %v2780, %v2615
      %v2819 = vmul.f32 %v2780, %v2616
      %v2820 = vmul.f32 %v2780, %v2617
      %v2821 = vmul.f32 %v2780, %v2618
      %v2822 = vmul.f32 %v2780, %v2619
      %v2823 = vmul.f32 %v2780, %v2620
      %v2824 = vmul.f32 %v2780, %v2621
      %v2825 = vmul.f32 %v2780, %v2622
      %v2826 = vmul.f32 %v2780, %v2623
      %v2827 = vmul.f32 %v2780, %v2624
      %v2828 = vmul.f32 %v2780, %v2625
      %v2829 = vmul.f32 %v2780, %v2626
      %v2830 = vmul.f32 %v2780, %v2627
      %v2831 = vmul.f32 %v2780, %v2628
      %v2832 = vmul.f32 %v2780, %v2629
      %v2833 = vmul.f32 %v2780, %v2630
      %v2834 = vmul.f32 %v2780, %v2631
      %v2835 = vmul.f32 %v2780, %v2632
      %v2836 = vmul.f32 %v2780, %v2633
      %v2837 = vmul.f32 %v2780, %v2634
      %v2838 = vmul.f32 %v2780, %v2635
      %v2839 = vmul.f32 %v2780, %v2636
      %v2840 = vmul.f32 %v2780, %v2637
      %v2841 = vmul.f32 %v2780, %v2638
      %v2842 = vmul.f32 %v2780, %v2639
      %v2843 = vmul.f32 %v2780, %v2640
      %v2844 = vmul.f32 %v2780, %v2641
      %v2845 = vmul.f32 %v2780, %v2642
      %v2846 = vmul.f32 %v2780, %v2643
      %v2847 = vmul.f32 %v2780, %v2644
      %v2848 = vmul.f32 %v2780, %v2645
      %v2849 = vmul.f32 %v2780, %v2646
      %v2850 = vmul.f32 %v2780, %v2647
      %v2851 = vmul.f32 %v2780, %v2648
      %v2852 = vmul.f32 %v2780, %v2649
      %v2853 = vmul.f32 %v2780, %v2650
      %v2854 = vmul.f32 %v2780, %v2651
      %v2855 = vmul.f32 %v2780, %v2652
      %v2856 = vmul.f32 %v2780, %v2653
      %v2857 = vmul.f32 %v2780, %v2654
      %v2858 = vmul.f32 %v2780, %v2655
      %v2859 = vmul.f32 %v2780, %v2656
      %v2860 = vmul.f32 %v2780, %v2657
      %v2861 = vmul.f32 %v2780, %v2658
      %v2862 = vmul.f32 %v2780, %v2659
      %v2863 = vmul.f32 %v2780, %v2660
      %v2864 = vmul.f32 %v2780, %v2661
      %v2865 = vmul.f32 %v2780, %v2662
      %v2866 = vmul.f32 %v2780, %v2663
      %v2867 = vmul.f32 %v2780, %v2664
      %v2868 = vmul.f32 %v2780, %v2665
      %v2869 = vmul.f32 %v2780, %v2666
      %v2870 = vmul.f32 %v2780, %v2667
      %v2871 = vmul.f32 %v2780, %v2668
      %v2872 = vmul.f32 %v2780, %v2669
      %v2873 = vmul.f32 %v2780, %v2670
      %v2874 = vmul.f32 %v2780, %v2671
      %v2875 = vmul.f32 %v2780, %v2672
      %v2876 = vmul.f32 %v2780, %v2673
      %v2877 = vmul.f32 %v2780, %v2674
      %v2878 = vmul.f32 %v2780, %v2675
      %v2879 = vmul.f32 %v2780, %v2676
      %v2880 = vsel %vm2677, %v2579, %v2782
      %v2881 = vsel %vm2678, %v2580, %v2783
      %v2882 = vsel %vm2679, %v2581, %v2784
      %v2883 = vsel %vm2680, %v2582, %v2785
      %v2884 = vsel %vm2681, %v2583, %v2786
      %v2885 = vsel %vm2682, %v2584, %v2787
      %v2886 = vsel %vm2683, %v2585, %v2788
      %v2887 = vsel %vm2684, %v2586, %v2789
      %v2888 = vsel %vm2685, %v2587, %v2790
      %v2889 = vsel %vm2686, %v2588, %v2791
      %v2890 = vsel %vm2687, %v2589, %v2792
      %v2891 = vsel %vm2688, %v2590, %v2793
      %v2892 = vsel %vm2689, %v2591, %v2794
      %v2893 = vsel %vm2690, %v2592, %v2795
      %v2894 = vsel %vm2691, %v2593, %v2796
      %v2895 = vsel %vm2692, %v2594, %v2797
      %v2896 = vsel %vm2693, %v2595, %v2798
      %v2897 = vsel %vm2694, %v2596, %v2799
      %v2898 = vsel %vm2695, %v2597, %v2800
      %v2899 = vsel %vm2696, %v2598, %v2801
      %v2900 = vsel %vm2697, %v2599, %v2802
      %v2901 = vsel %vm2698, %v2600, %v2803
      %v2902 = vsel %vm2699, %v2601, %v2804
      %v2903 = vsel %vm2700, %v2602, %v2805
      %v2904 = vsel %vm2701, %v2603, %v2806
      %v2905 = vsel %vm2702, %v2604, %v2807
      %v2906 = vsel %vm2703, %v2605, %v2808
      %v2907 = vsel %vm2704, %v2606, %v2809
      %v2908 = vsel %vm2705, %v2607, %v2810
      %v2909 = vsel %vm2706, %v2608, %v2811
      %v2910 = vsel %vm2707, %v2609, %v2812
      %v2911 = vsel %vm2708, %v2610, %v2813
      %v2912 = vsel %vm2709, %v2611, %v2814
      %v2913 = vsel %vm2710, %v2612, %v2815
      %v2914 = vsel %vm2711, %v2613, %v2816
      %v2915 = vsel %vm2712, %v2614, %v2817
      %v2916 = vsel %vm2713, %v2615, %v2818
      %v2917 = vsel %vm2714, %v2616, %v2819
      %v2918 = vsel %vm2715, %v2617, %v2820
      %v2919 = vsel %vm2716, %v2618, %v2821
      %v2920 = vsel %vm2717, %v2619, %v2822
      %v2921 = vsel %vm2718, %v2620, %v2823
      %v2922 = vsel %vm2719, %v2621, %v2824
      %v2923 = vsel %vm2720, %v2622, %v2825
      %v2924 = vsel %vm2721, %v2623, %v2826
      %v2925 = vsel %vm2722, %v2624, %v2827
      %v2926 = vsel %vm2723, %v2625, %v2828
      %v2927 = vsel %vm2724, %v2626, %v2829
      %v2928 = vsel %vm2725, %v2627, %v2830
      %v2929 = vsel %vm2726, %v2628, %v2831
      %v2930 = vsel %vm2727, %v2629, %v2832
      %v2931 = vsel %vm2728, %v2630, %v2833
      %v2932 = vsel %vm2729, %v2631, %v2834
      %v2933 = vsel %vm2730, %v2632, %v2835
      %v2934 = vsel %vm2731, %v2633, %v2836
      %v2935 = vsel %vm2732, %v2634, %v2837
      %v2936 = vsel %vm2733, %v2635, %v2838
      %v2937 = vsel %vm2734, %v2636, %v2839
      %v2938 = vsel %vm2735, %v2637, %v2840
      %v2939 = vsel %vm2736, %v2638, %v2841
      %v2940 = vsel %vm2737, %v2639, %v2842
      %v2941 = vsel %vm2738, %v2640, %v2843
      %v2942 = vsel %vm2739, %v2641, %v2844
      %v2943 = vsel %vm2740, %v2642, %v2845
      %v2944 = vsel %vm2741, %v2643, %v2846
      %v2945 = vsel %vm2742, %v2644, %v2847
      %v2946 = vsel %vm2743, %v2645, %v2848
      %v2947 = vsel %vm2744, %v2646, %v2849
      %v2948 = vsel %vm2745, %v2647, %v2850
      %v2949 = vsel %vm2746, %v2648, %v2851
      %v2950 = vsel %vm2747, %v2649, %v2852
      %v2951 = vsel %vm2748, %v2650, %v2853
      %v2952 = vsel %vm2749, %v2651, %v2854
      %v2953 = vsel %vm2750, %v2652, %v2855
      %v2954 = vsel %vm2751, %v2653, %v2856
      %v2955 = vsel %vm2752, %v2654, %v2857
      %v2956 = vsel %vm2753, %v2655, %v2858
      %v2957 = vsel %vm2754, %v2656, %v2859
      %v2958 = vsel %vm2755, %v2657, %v2860
      %v2959 = vsel %vm2756, %v2658, %v2861
      %v2960 = vsel %vm2757, %v2659, %v2862
      %v2961 = vsel %vm2758, %v2660, %v2863
      %v2962 = vsel %vm2759, %v2661, %v2864
      %v2963 = vsel %vm2760, %v2662, %v2865
      %v2964 = vsel %vm2761, %v2663, %v2866
      %v2965 = vsel %vm2762, %v2664, %v2867
      %v2966 = vsel %vm2763, %v2665, %v2868
      %v2967 = vsel %vm2764, %v2666, %v2869
      %v2968 = vsel %vm2765, %v2667, %v2870
      %v2969 = vsel %vm2766, %v2668, %v2871
      %v2970 = vsel %vm2767, %v2669, %v2872
      %v2971 = vsel %vm2768, %v2670, %v2873
      %v2972 = vsel %vm2769, %v2671, %v2874
      %v2973 = vsel %vm2770, %v2672, %v2875
      %v2974 = vsel %vm2771, %v2673, %v2876
      %v2975 = vsel %vm2772, %v2674, %v2877
      %v2976 = vsel %vm2773, %v2675, %v2878
      %v2977 = vsel %vm2774, %v2676, %v2879
      %2978 = vst [vmem:[%s251] sm:$0xff] %v2880
      %2979 = vst [vmem:[%s251 + $0x8] sm:$0xff] %v2881
      %2980 = vst [vmem:[%s251 + $0x10] sm:$0xff] %v2882
      %2981 = vst [vmem:[%s251 + $0x18] sm:$0xff] %v2883
      %2982 = vst [vmem:[%s251 + $0x20] sm:$0xff] %v2884
      %2983 = vst [vmem:[%s251 + $0x28] sm:$0xff] %v2885
      %2984 = vst [vmem:[%s251 + $0x30] sm:$0xff] %v2886
      %2985 = vst [vmem:[%s251 + $0x38] sm:$0xff] %v2887
      %2986 = vst [vmem:[%s251 + $0x40] sm:$0xff] %v2888
      %2987 = vst [vmem:[%s251 + $0x48] sm:$0xff] %v2889
      %2988 = vst [vmem:[%s251 + $0x50] sm:$0xff] %v2890
      %2989 = vst [vmem:[%s251 + $0x58] sm:$0xff] %v2891
      %2990 = vst [vmem:[%s251 + $0x60] sm:$0xff] %v2892
      %2991 = vst [vmem:[%s251 + $0x68] sm:$0xff] %v2893
      %2992 = vst [vmem:[%s251 + $0x70] sm:$0xff] %v2894
      %2993 = vst [vmem:[%s251 + $0x78] sm:$0xff] %v2895
      %2994 = vst [vmem:[%s251 + $0x80] sm:$0xff] %v2896
      %2995 = vst [vmem:[%s251 + $0x88] sm:$0xff] %v2897
      %2996 = vst [vmem:[%s251 + $0x90] sm:$0xff] %v2898
      %2997 = vst [vmem:[%s251 + $0x98] sm:$0xff] %v2899
      %2998 = vst [vmem:[%s251 + $0xa0] sm:$0xff] %v2900
      %2999 = vst [vmem:[%s251 + $0xa8] sm:$0xff] %v2901
      %3000 = vst [vmem:[%s251 + $0xb0] sm:$0xff] %v2902
      %3001 = vst [vmem:[%s251 + $0xb8] sm:$0xff] %v2903
      %3002 = vst [vmem:[%s251 + $0xc0] sm:$0xff] %v2904
      %3003 = vst [vmem:[%s251 + $0xc8] sm:$0xff] %v2905
      %3004 = vst [vmem:[%s251 + $0xd0] sm:$0xff] %v2906
      %3005 = vst [vmem:[%s251 + $0xd8] sm:$0xff] %v2907
      %3006 = vst [vmem:[%s251 + $0xe0] sm:$0xff] %v2908
      %3007 = vst [vmem:[%s251 + $0xe8] sm:$0xff] %v2909
      %3008 = vst [vmem:[%s251 + $0xf0] sm:$0xff] %v2910
      %3009 = vst [vmem:[%s251 + $0xf8] sm:$0xff] %v2911
      %3010 = vst [vmem:[%s251 + $0x100] sm:$0xff] %v2912
      %3011 = vst [vmem:[%s251 + $0x108] sm:$0xff] %v2913
      %3012 = vst [vmem:[%s251 + $0x110] sm:$0xff] %v2914
      %3013 = vst [vmem:[%s251 + $0x118] sm:$0xff] %v2915
      %3014 = vst [vmem:[%s251 + $0x120] sm:$0xff] %v2916
      %3015 = vst [vmem:[%s251 + $0x128] sm:$0xff] %v2917
      %3016 = vst [vmem:[%s251 + $0x130] sm:$0xff] %v2918
      %3017 = vst [vmem:[%s251 + $0x138] sm:$0xff] %v2919
      %3018 = vst [vmem:[%s251 + $0x140] sm:$0xff] %v2920
      %3019 = vst [vmem:[%s251 + $0x148] sm:$0xff] %v2921
      %3020 = vst [vmem:[%s251 + $0x150] sm:$0xff] %v2922
      %3021 = vst [vmem:[%s251 + $0x158] sm:$0xff] %v2923
      %3022 = vst [vmem:[%s251 + $0x160] sm:$0xff] %v2924
      %3023 = vst [vmem:[%s251 + $0x168] sm:$0xff] %v2925
      %3024 = vst [vmem:[%s251 + $0x170] sm:$0xff] %v2926
      %3025 = vst [vmem:[%s251 + $0x178] sm:$0xff] %v2927
      %3026 = vst [vmem:[%s251 + $0x180] sm:$0xff] %v2928
      %3027 = vst [vmem:[%s251 + $0x188] sm:$0xff] %v2929
      %3028 = vst [vmem:[%s251 + $0x190] sm:$0xff] %v2930
      %3029 = vst [vmem:[%s251 + $0x198] sm:$0xff] %v2931
      %3030 = vst [vmem:[%s251 + $0x1a0] sm:$0xff] %v2932
      %3031 = vst [vmem:[%s251 + $0x1a8] sm:$0xff] %v2933
      %3032 = vst [vmem:[%s251 + $0x1b0] sm:$0xff] %v2934
      %3033 = vst [vmem:[%s251 + $0x1b8] sm:$0xff] %v2935
      %3034 = vst [vmem:[%s251 + $0x1c0] sm:$0xff] %v2936
      %3035 = vst [vmem:[%s251 + $0x1c8] sm:$0xff] %v2937
      %3036 = vst [vmem:[%s251 + $0x1d0] sm:$0xff] %v2938
      %3037 = vst [vmem:[%s251 + $0x1d8] sm:$0xff] %v2939
      %3038 = vst [vmem:[%s251 + $0x1e0] sm:$0xff] %v2940
      %3039 = vst [vmem:[%s251 + $0x1e8] sm:$0xff] %v2941
      %3040 = vst [vmem:[%s251 + $0x1f0] sm:$0xff] %v2942
      %3041 = vst [vmem:[%s251 + $0x1f8] sm:$0xff] %v2943
      %3042 = vst [vmem:[%s251 + $0x200] sm:$0xff] %v2944
      %3043 = vst [vmem:[%s251 + $0x208] sm:$0xff] %v2945
      %3044 = vst [vmem:[%s251 + $0x210] sm:$0xff] %v2946
      %3045 = vst [vmem:[%s251 + $0x218] sm:$0xff] %v2947
      %3046 = vst [vmem:[%s251 + $0x220] sm:$0xff] %v2948
      %3047 = vst [vmem:[%s251 + $0x228] sm:$0xff] %v2949
      %3048 = vst [vmem:[%s251 + $0x230] sm:$0xff] %v2950
      %3049 = vst [vmem:[%s251 + $0x238] sm:$0xff] %v2951
      %3050 = vst [vmem:[%s251 + $0x240] sm:$0xff] %v2952
      %3051 = vst [vmem:[%s251 + $0x248] sm:$0xff] %v2953
      %3052 = vst [vmem:[%s251 + $0x250] sm:$0xff] %v2954
      %3053 = vst [vmem:[%s251 + $0x258] sm:$0xff] %v2955
      %3054 = vst [vmem:[%s251 + $0x260] sm:$0xff] %v2956
      %3055 = vst [vmem:[%s251 + $0x268] sm:$0xff] %v2957
      %3056 = vst [vmem:[%s251 + $0x270] sm:$0xff] %v2958
      %3057 = vst [vmem:[%s251 + $0x278] sm:$0xff] %v2959
      %3058 = vst [vmem:[%s251 + $0x280] sm:$0xff] %v2960
      %3059 = vst [vmem:[%s251 + $0x288] sm:$0xff] %v2961
      %3060 = vst [vmem:[%s251 + $0x290] sm:$0xff] %v2962
      %3061 = vst [vmem:[%s251 + $0x298] sm:$0xff] %v2963
      %3062 = vst [vmem:[%s251 + $0x2a0] sm:$0xff] %v2964
      %3063 = vst [vmem:[%s251 + $0x2a8] sm:$0xff] %v2965
      %3064 = vst [vmem:[%s251 + $0x2b0] sm:$0xff] %v2966
      %3065 = vst [vmem:[%s251 + $0x2b8] sm:$0xff] %v2967
      %3066 = vst [vmem:[%s251 + $0x2c0] sm:$0xff] %v2968
      %3067 = vst [vmem:[%s251 + $0x2c8] sm:$0xff] %v2969
      %3068 = vst [vmem:[%s251 + $0x2d0] sm:$0xff] %v2970
      %3069 = vst [vmem:[%s251 + $0x2d8] sm:$0xff] %v2971
      %3070 = vst [vmem:[%s251 + $0x2e0] sm:$0xff] %v2972
      %3071 = vst [vmem:[%s251 + $0x2e8] sm:$0xff] %v2973
      %3072 = vst [vmem:[%s251 + $0x2f0] sm:$0xff] %v2974
      %3073 = vst [vmem:[%s251 + $0x2f8] sm:$0xff] %v2975
      %3074 = vst [vmem:[%s251 + $0x300] sm:$0xff] %v2976
      %3075 = vst [vmem:[%s251 + $0x308] sm:$0xff] %v2977
      %p3076 = scmp.lt.s32.totalorder %s17, 1
      %s3077 = scalar_select %p3076, %s17, 1
      %s3078 = smul.addr %s3077, 98
      %s3079 = smul.addr %s3078, 8
      %s3080 = scalar_lea.vmem %s6, %s3079
      // Predicated region
      $region45: #{encoder_forward.5} parent=43 // pred_check
        %p3081 = pneg %p166
      $region46: #{encoder_forward.5} parent=43 // pred_check_branch
        %3083 = sbr.rel (%p3081) target = $region48
      $region47: #{encoder_forward.5} parent=43 // pred_region
        _
      $region48: #{encoder_forward.5} parent=43 // pred_fallthru
        _
    $region44: #{encoder_forward.5} parent=5 // pred_fallthru
      _
    %p3084 = scmp.le.s32.totalorder 2, %s12
    // Predicated region
    $region49: #{encoder_forward.5} parent=5 // pred_check
      %p3085 = pneg %p3084
    $region50: #{encoder_forward.5} parent=5 // pred_check_branch
      %3087 = sbr.rel (%p3085) target = $region52
    $region51: #{encoder_forward.5} parent=5 // pred_region
      %s3088 = ssub.s32 %s12, 2
      // Predicated region
      $region53: #{encoder_forward.5} parent=51 // pred_check
        %p3089 = pneg %p172
      $region54: #{encoder_forward.5} parent=51 // pred_check_branch
        %3091 = sbr.rel (%p3089) target = $region56
      $region55: #{encoder_forward.5} parent=51 // pred_region
        %p3092 = scmp.lt.s32.totalorder %s18, 1
        %s3093 = scalar_select %p3092, %s18, 1
        %s3094 = smul.addr %s3093, 98
        %s3095 = smul.addr %s3094, 8
        %s3096 = scalar_lea.vmem %s6, %s3095
      $region56: #{encoder_forward.5} parent=51 // pred_fallthru
        _
    $region52: #{encoder_forward.5} parent=5 // pred_fallthru
      _
  $region6: #{encoder_forward.5} parent=0 // loop_footer
    %s16 = sadd.s32 1, %s12
  $region7: #{encoder_forward.5} parent=0 // loop_footer_branch
    %11 = sbr.rel target = $region3
  $region8: #{encoder_forward.5} parent=0 // loop_exit
    _

// kernel: encoder_forward.6
$region0: #{encoder_forward.6}
  #allocation0 [shape = 'u32[]', space=smem, size = 0x4, offset = 0x4, fixed_abs, tag = 'smem constant byte address 0x4 - core index']
  #allocation1 [shape = 'u32[144,128]{1,0:T(1,128)}', space=vmem, size = 0x12000, scoped, tag = 'internal scratch']
  %s0 = inlined_call_operand.vmem [shape: bf16[2,384,768], index: 0, kind: input, shape index: {}]
  %s1 = inlined_call_operand.vmem [shape: bf16[768,256], index: 1, kind: input, shape index: {}]
  %s2 = inlined_call_operand.vmem [shape: f32[1,256], index: 2, kind: input, shape index: {}]
  %s3 = inlined_call_operand.vmem [shape: f32[1,128], index: 3, kind: input, shape index: {}]
  %s4 = inlined_call_operand.vmem [shape: f32[1,128], index: 4, kind: input, shape index: {}]
  %s5 = inlined_call_operand.vmem [shape: f32[1,128], index: 5, kind: input, shape index: {}]
  %s6 = inlined_call_operand.vmem [shape: f32[2,384,128], index: 6, kind: output, shape index: {}]
  %s7 = sld [smem:[#allocation0]]
  $region57: #{encoder_forward.6} parent=0
    _
  %s9 = ssub.s32 1, %s7
  %s10 = scalar_select 0, %s9, %s7
  loop: start=0, step=1, limit=4
  $region2: #{encoder_forward.6} parent=0 // loop_pre_header
    _
  $region3: #{encoder_forward.6} parent=0 // loop_header
    %s12 = sphi 0, %s16
    %p13 = scmp.ge.s32.totalorder %s12, 4
    %s22 = sphi 0, %s24
    %s25 = sphi 0, %s22
    %s26 = sphi 0, %s25
    %s42 = sphi 0, %s26
    %s46 = sphi 0, %s46
    %s48 = sphi 0, %s46
    %s49 = sphi 0, %s48
    %s63 = sphi 0, %s49
    %s67 = sphi 0, %s67
    %s69 = sphi 0, %s67
    %s70 = sphi 0, %s69
    %s84 = sphi 0, %s70
    %s88 = sphi 0, %s88
    %s90 = sphi 0, %s88
    %s91 = sphi 0, %s90
    %s105 = sphi 0, %s91
    %s109 = sphi 0, %s109
    %s111 = sphi 0, %s109
    %s112 = sphi 0, %s111
    %s126 = sphi 0, %s112
    %s130 = sphi 0, %s130
    %s132 = sphi 0, %s130
    %s133 = sphi 0, %s132
    %s147 = sphi 0, %s133
    %s153 = sphi 0, %s155
    %s156 = sphi 0, %s153
    %s157 = sphi 0, %s156
    %s173 = sphi 0, %s157
  $region4: #{encoder_forward.6} parent=0 // loop_header_branch
    %15 = sbr.rel (%p13) target = $region8
  $region5: #{encoder_forward.6} parent=0 // loop_body
    %s17 = ssub.s32 %s12, 1
    %s18 = ssub.s32 %s12, 2
    %s19 = sadd.s32 %s12, 1
    %s20 = ssub.s32 %s12, %s19
    %p21 = scmp.eq.s32.totalorder %s20, 0
    %s23 = sadd.s32 %s22, 1
    %s24 = scalar_select %p21, %s22, %s23
    %p27 = pneg %p21
    %p28 = scmp.eq.s32.totalorder %s12, 1
    %p29 = por %p27, %p28
    %p30 = scmp.ne.s32.totalorder %s22, %s25
    %p31 = scmp.eq.s32.totalorder %s12, 0
    %p32 = por %p30, %p31
    %p33 = scmp.ne.s32.totalorder %s22, %s25
    %p34 = scmp.eq.s32.totalorder %s17, 1
    %p35 = por %p33, %p34
    %p36 = scmp.ne.s32.totalorder %s25, %s26
    %p37 = scmp.eq.s32.totalorder %s17, 0
    %p38 = por %p36, %p37
    %p39 = scmp.ne.s32.totalorder %s25, %s26
    %p40 = scmp.eq.s32.totalorder %s18, 1
    %p41 = por %p39, %p40
    %p43 = scmp.ne.s32.totalorder %s26, %s42
    %p44 = scmp.eq.s32.totalorder %s18, 0
    %p45 = por %p43, %p44
    %s47 = sadd.s32 %s46, 1
    %p50 = scmp.eq.s32.totalorder %s12, 1
    %p51 = scmp.ne.s32.totalorder %s46, %s48
    %p52 = scmp.eq.s32.totalorder %s12, 0
    %p53 = por %p51, %p52
    %p54 = scmp.ne.s32.totalorder %s46, %s48
    %p55 = scmp.eq.s32.totalorder %s17, 1
    %p56 = por %p54, %p55
    %p57 = scmp.ne.s32.totalorder %s48, %s49
    %p58 = scmp.eq.s32.totalorder %s17, 0
    %p59 = por %p57, %p58
    %p60 = scmp.ne.s32.totalorder %s48, %s49
    %p61 = scmp.eq.s32.totalorder %s18, 1
    %p62 = por %p60, %p61
    %p64 = scmp.ne.s32.totalorder %s49, %s63
    %p65 = scmp.eq.s32.totalorder %s18, 0
    %p66 = por %p64, %p65
    %s68 = sadd.s32 %s67, 1
    %p71 = scmp.eq.s32.totalorder %s12, 1
    %p72 = scmp.ne.s32.totalorder %s67, %s69
    %p73 = scmp.eq.s32.totalorder %s12, 0
    %p74 = por %p72, %p73
    %p75 = scmp.ne.s32.totalorder %s67, %s69
    %p76 = scmp.eq.s32.totalorder %s17, 1
    %p77 = por %p75, %p76
    %p78 = scmp.ne.s32.totalorder %s69, %s70
    %p79 = scmp.eq.s32.totalorder %s17, 0
    %p80 = por %p78, %p79
    %p81 = scmp.ne.s32.totalorder %s69, %s70
    %p82 = scmp.eq.s32.totalorder %s18, 1
    %p83 = por %p81, %p82
    %p85 = scmp.ne.s32.totalorder %s70, %s84
    %p86 = scmp.eq.s32.totalorder %s18, 0
    %p87 = por %p85, %p86
    %s89 = sadd.s32 %s88, 1
    %p92 = scmp.eq.s32.totalorder %s12, 1
    %p93 = scmp.ne.s32.totalorder %s88, %s90
    %p94 = scmp.eq.s32.totalorder %s12, 0
    %p95 = por %p93, %p94
    %p96 = scmp.ne.s32.totalorder %s88, %s90
    %p97 = scmp.eq.s32.totalorder %s17, 1
    %p98 = por %p96, %p97
    %p99 = scmp.ne.s32.totalorder %s90, %s91
    %p100 = scmp.eq.s32.totalorder %s17, 0
    %p101 = por %p99, %p100
    %p102 = scmp.ne.s32.totalorder %s90, %s91
    %p103 = scmp.eq.s32.totalorder %s18, 1
    %p104 = por %p102, %p103
    %p106 = scmp.ne.s32.totalorder %s91, %s105
    %p107 = scmp.eq.s32.totalorder %s18, 0
    %p108 = por %p106, %p107
    %s110 = sadd.s32 %s109, 1
    %p113 = scmp.eq.s32.totalorder %s12, 1
    %p114 = scmp.ne.s32.totalorder %s109, %s111
    %p115 = scmp.eq.s32.totalorder %s12, 0
    %p116 = por %p114, %p115
    %p117 = scmp.ne.s32.totalorder %s109, %s111
    %p118 = scmp.eq.s32.totalorder %s17, 1
    %p119 = por %p117, %p118
    %p120 = scmp.ne.s32.totalorder %s111, %s112
    %p121 = scmp.eq.s32.totalorder %s17, 0
    %p122 = por %p120, %p121
    %p123 = scmp.ne.s32.totalorder %s111, %s112
    %p124 = scmp.eq.s32.totalorder %s18, 1
    %p125 = por %p123, %p124
    %p127 = scmp.ne.s32.totalorder %s112, %s126
    %p128 = scmp.eq.s32.totalorder %s18, 0
    %p129 = por %p127, %p128
    %s131 = sadd.s32 %s130, 1
    %p134 = scmp.eq.s32.totalorder %s12, 1
    %p135 = scmp.ne.s32.totalorder %s130, %s132
    %p136 = scmp.eq.s32.totalorder %s12, 0
    %p137 = por %p135, %p136
    %p138 = scmp.ne.s32.totalorder %s130, %s132
    %p139 = scmp.eq.s32.totalorder %s17, 1
    %p140 = por %p138, %p139
    %p141 = scmp.ne.s32.totalorder %s132, %s133
    %p142 = scmp.eq.s32.totalorder %s17, 0
    %p143 = por %p141, %p142
    %p144 = scmp.ne.s32.totalorder %s132, %s133
    %p145 = scmp.eq.s32.totalorder %s18, 1
    %p146 = por %p144, %p145
    %p148 = scmp.ne.s32.totalorder %s133, %s147
    %p149 = scmp.eq.s32.totalorder %s18, 0
    %p150 = por %p148, %p149
    %s151 = ssub.s32 %s12, %s19
    %p152 = scmp.eq.s32.totalorder %s151, 0
    %s154 = sadd.s32 %s153, 1
    %s155 = scalar_select %p152, %s153, %s154
    %p158 = pneg %p152
    %p159 = scmp.eq.s32.totalorder %s12, 1
    %p160 = por %p158, %p159
    %p161 = scmp.ne.s32.totalorder %s153, %s156
    %p162 = scmp.eq.s32.totalorder %s12, 0
    %p163 = por %p161, %p162
    %p164 = scmp.ne.s32.totalorder %s153, %s156
    %p165 = scmp.eq.s32.totalorder %s17, 1
    %p166 = por %p164, %p165
    %p167 = scmp.ne.s32.totalorder %s156, %s157
    %p168 = scmp.eq.s32.totalorder %s17, 0
    %p169 = por %p167, %p168
    %p170 = scmp.ne.s32.totalorder %s156, %s157
    %p171 = scmp.eq.s32.totalorder %s18, 1
    %p172 = por %p170, %p171
    %p174 = scmp.ne.s32.totalorder %s157, %s173
    %p175 = scmp.eq.s32.totalorder %s18, 0
    %p176 = por %p174, %p175
    %p177 = scmp.le.s32.totalorder 1, %s12
    %p178 = scmp.lt.s32.totalorder %s12, 3
    %p179 = pnand %p177, %p178
    %p180 = pneg %p179
    // Predicated region
    $region9: #{encoder_forward.6} parent=5 // pred_check
      _
    $region10: #{encoder_forward.6} parent=5 // pred_check_branch
      %182 = sbr.rel (%p179) target = $region12
    $region11: #{encoder_forward.6} parent=5 // pred_region
      %s183 = ssub.s32 %s12, 1
      // Predicated region
      $region13: #{encoder_forward.6} parent=11 // pred_check
        %p184 = pneg %p59
      $region14: #{encoder_forward.6} parent=11 // pred_check_branch
        %186 = sbr.rel (%p184) target = $region16
      $region15: #{encoder_forward.6} parent=11 // pred_region
        _
      $region16: #{encoder_forward.6} parent=11 // pred_fallthru
        _
      // Predicated region
      $region17: #{encoder_forward.6} parent=11 // pred_check
        %p187 = pneg %p80
      $region18: #{encoder_forward.6} parent=11 // pred_check_branch
        %189 = sbr.rel (%p187) target = $region20
      $region19: #{encoder_forward.6} parent=11 // pred_region
        _
      $region20: #{encoder_forward.6} parent=11 // pred_fallthru
        _
      // Predicated region
      $region21: #{encoder_forward.6} parent=11 // pred_check
        %p190 = pneg %p101
      $region22: #{encoder_forward.6} parent=11 // pred_check_branch
        %192 = sbr.rel (%p190) target = $region24
      $region23: #{encoder_forward.6} parent=11 // pred_region
        _
      $region24: #{encoder_forward.6} parent=11 // pred_fallthru
        _
      // Predicated region
      $region25: #{encoder_forward.6} parent=11 // pred_check
        %p193 = pneg %p122
      $region26: #{encoder_forward.6} parent=11 // pred_check_branch
        %195 = sbr.rel (%p193) target = $region28
      $region27: #{encoder_forward.6} parent=11 // pred_region
        _
      $region28: #{encoder_forward.6} parent=11 // pred_fallthru
        _
      // Predicated region
      $region29: #{encoder_forward.6} parent=11 // pred_check
        %p196 = pneg %p143
      $region30: #{encoder_forward.6} parent=11 // pred_check_branch
        %198 = sbr.rel (%p196) target = $region32
      $region31: #{encoder_forward.6} parent=11 // pred_region
        _
      $region32: #{encoder_forward.6} parent=11 // pred_fallthru
        _
    $region12: #{encoder_forward.6} parent=5 // pred_fallthru
      _
    %p199 = scmp.lt.s32.totalorder %s12, 2
    // Predicated region
    $region33: #{encoder_forward.6} parent=5 // pred_check
      %p200 = pneg %p199
    $region34: #{encoder_forward.6} parent=5 // pred_check_branch
      %202 = sbr.rel (%p200) target = $region36
    $region35: #{encoder_forward.6} parent=5 // pred_region
      // Predicated region
      $region37: #{encoder_forward.6} parent=35 // pred_check
        %p203 = pneg %p32
      $region38: #{encoder_forward.6} parent=35 // pred_check_branch
        %205 = sbr.rel (%p203) target = $region40
      $region39: #{encoder_forward.6} parent=35 // pred_region
        %p206 = scmp.lt.s32.totalorder %s12, 1
        %s207 = scalar_select %p206, %s12, 1
        %s208 = smul.addr %s207, 288
        %s209 = smul.addr %s208, 4
        %s210 = scalar_lea.vmem %s0, %s209
      $region40: #{encoder_forward.6} parent=35 // pred_fallthru
        _
    $region36: #{encoder_forward.6} parent=5 // pred_fallthru
      _
    %p211 = scmp.le.s32.totalorder 1, %s12
    %p212 = scmp.lt.s32.totalorder %s12, 3
    %p213 = pnand %p211, %p212
    %p214 = pneg %p213
    // Predicated region
    $region41: #{encoder_forward.6} parent=5 // pred_check
      _
    $region42: #{encoder_forward.6} parent=5 // pred_check_branch
      %216 = sbr.rel (%p213) target = $region44
    $region43: #{encoder_forward.6} parent=5 // pred_region
      %s217 = ssub.s32 %s12, 1
      %p218 = scmp.lt.s32.totalorder %s17, 1
      %s219 = scalar_select %p218, %s17, 1
      %s220 = smul.addr %s219, 288
      %s221 = smul.addr %s220, 4
      %s222 = scalar_lea.vmem %s0, %s221
      %p223 = pneg %p38
      %p224 = pneg %p35
      %p225 = pneg %p59
      %p226 = pneg %p56
      %p227 = pneg %p80
      %p228 = pneg %p77
      %p229 = pneg %p101
      %p230 = pneg %p98
      %p231 = pneg %p122
      %p232 = pneg %p119
      %p233 = pneg %p143
      %p234 = pneg %p140
      %p235 = pneg %p169
      %p236 = pneg %p166
      %p237 = scmp.lt.s32.totalorder %s17, 1
      %s238 = scalar_select %p237, %s17, 1
      %s239 = smul.addr %s238, 48
      %s240 = smul.addr %s239, 8
      %s241 = scalar_lea.vmem %s6, %s240
      %p242 = scmp.lt.s32.totalorder %s17, 1
      %s243 = scalar_select %p242, %s17, 1
      %s244 = smul.addr %s243, 288
      %s245 = smul.addr %s244, 4
      %s246 = scalar_lea.vmem %s0, %s245
      %p247 = scmp.lt.s32.totalorder %s17, 1
      %s248 = scalar_select %p247, %s17, 1
      %s249 = smul.addr %s248, 48
      %s250 = smul.addr %s249, 8
      %s251 = scalar_lea.vmem %s6, %s250
      %v252 = vld [vmem:[%s246] sm:$0xff]
      %v253 = vld [vmem:[%s246 + $0x8] sm:$0xff]
      %v254 = vld [vmem:[%s246 + $0x10] sm:$0xff]
      %v255 = vld [vmem:[%s246 + $0x18] sm:$0xff]
      %v256 = vld [vmem:[%s246 + $0x20] sm:$0xff]
      %v257 = vld [vmem:[%s246 + $0x28] sm:$0xff]
      %v258 = vld [vmem:[%s246 + $0x30] sm:$0xff]
      %v259 = vld [vmem:[%s246 + $0x38] sm:$0xff]
      %v260 = vld [vmem:[%s246 + $0x40] sm:$0xff]
      %v261 = vld [vmem:[%s246 + $0x48] sm:$0xff]
      %v262 = vld [vmem:[%s246 + $0x50] sm:$0xff]
      %v263 = vld [vmem:[%s246 + $0x58] sm:$0xff]
      %v264 = vld [vmem:[%s246 + $0x60] sm:$0xff]
      %v265 = vld [vmem:[%s246 + $0x68] sm:$0xff]
      %v266 = vld [vmem:[%s246 + $0x70] sm:$0xff]
      %v267 = vld [vmem:[%s246 + $0x78] sm:$0xff]
      %v268 = vld [vmem:[%s246 + $0x80] sm:$0xff]
      %v269 = vld [vmem:[%s246 + $0x88] sm:$0xff]
      %v270 = vld [vmem:[%s246 + $0x90] sm:$0xff]
      %v271 = vld [vmem:[%s246 + $0x98] sm:$0xff]
      %v272 = vld [vmem:[%s246 + $0xa0] sm:$0xff]
      %v273 = vld [vmem:[%s246 + $0xa8] sm:$0xff]
      %v274 = vld [vmem:[%s246 + $0xb0] sm:$0xff]
      %v275 = vld [vmem:[%s246 + $0xb8] sm:$0xff]
      %v276 = vld [vmem:[%s246 + $0xc0] sm:$0xff]
      %v277 = vld [vmem:[%s246 + $0xc8] sm:$0xff]
      %v278 = vld [vmem:[%s246 + $0xd0] sm:$0xff]
      %v279 = vld [vmem:[%s246 + $0xd8] sm:$0xff]
      %v280 = vld [vmem:[%s246 + $0xe0] sm:$0xff]
      %v281 = vld [vmem:[%s246 + $0xe8] sm:$0xff]
      %v282 = vld [vmem:[%s246 + $0xf0] sm:$0xff]
      %v283 = vld [vmem:[%s246 + $0xf8] sm:$0xff]
      %v284 = vld [vmem:[%s246 + $0x100] sm:$0xff]
      %v285 = vld [vmem:[%s246 + $0x108] sm:$0xff]
      %v286 = vld [vmem:[%s246 + $0x110] sm:$0xff]
      %v287 = vld [vmem:[%s246 + $0x118] sm:$0xff]
      %v288 = vld [vmem:[%s246 + $0x120] sm:$0xff]
      %v289 = vld [vmem:[%s246 + $0x128] sm:$0xff]
      %v290 = vld [vmem:[%s246 + $0x130] sm:$0xff]
      %v291 = vld [vmem:[%s246 + $0x138] sm:$0xff]
      %v292 = vld [vmem:[%s246 + $0x140] sm:$0xff]
      %v293 = vld [vmem:[%s246 + $0x148] sm:$0xff]
      %v294 = vld [vmem:[%s246 + $0x150] sm:$0xff]
      %v295 = vld [vmem:[%s246 + $0x158] sm:$0xff]
      %v296 = vld [vmem:[%s246 + $0x160] sm:$0xff]
      %v297 = vld [vmem:[%s246 + $0x168] sm:$0xff]
      %v298 = vld [vmem:[%s246 + $0x170] sm:$0xff]
      %v299 = vld [vmem:[%s246 + $0x178] sm:$0xff]
      %v300 = vld [vmem:[%s246 + $0x180] sm:$0xff]
      %v301 = vld [vmem:[%s246 + $0x188] sm:$0xff]
      %v302 = vld [vmem:[%s246 + $0x190] sm:$0xff]
      %v303 = vld [vmem:[%s246 + $0x198] sm:$0xff]
      %v304 = vld [vmem:[%s246 + $0x1a0] sm:$0xff]
      %v305 = vld [vmem:[%s246 + $0x1a8] sm:$0xff]
      %v306 = vld [vmem:[%s246 + $0x1b0] sm:$0xff]
      %v307 = vld [vmem:[%s246 + $0x1b8] sm:$0xff]
      %v308 = vld [vmem:[%s246 + $0x1c0] sm:$0xff]
      %v309 = vld [vmem:[%s246 + $0x1c8] sm:$0xff]
      %v310 = vld [vmem:[%s246 + $0x1d0] sm:$0xff]
      %v311 = vld [vmem:[%s246 + $0x1d8] sm:$0xff]
      %v312 = vld [vmem:[%s246 + $0x1e0] sm:$0xff]
      %v313 = vld [vmem:[%s246 + $0x1e8] sm:$0xff]
      %v314 = vld [vmem:[%s246 + $0x1f0] sm:$0xff]
      %v315 = vld [vmem:[%s246 + $0x1f8] sm:$0xff]
      %v316 = vld [vmem:[%s246 + $0x200] sm:$0xff]
      %v317 = vld [vmem:[%s246 + $0x208] sm:$0xff]
      %v318 = vld [vmem:[%s246 + $0x210] sm:$0xff]
      %v319 = vld [vmem:[%s246 + $0x218] sm:$0xff]
      %v320 = vld [vmem:[%s246 + $0x220] sm:$0xff]
      %v321 = vld [vmem:[%s246 + $0x228] sm:$0xff]
      %v322 = vld [vmem:[%s246 + $0x230] sm:$0xff]
      %v323 = vld [vmem:[%s246 + $0x238] sm:$0xff]
      %v324 = vld [vmem:[%s246 + $0x240] sm:$0xff]
      %v325 = vld [vmem:[%s246 + $0x248] sm:$0xff]
      %v326 = vld [vmem:[%s246 + $0x250] sm:$0xff]
      %v327 = vld [vmem:[%s246 + $0x258] sm:$0xff]
      %v328 = vld [vmem:[%s246 + $0x260] sm:$0xff]
      %v329 = vld [vmem:[%s246 + $0x268] sm:$0xff]
      %v330 = vld [vmem:[%s246 + $0x270] sm:$0xff]
      %v331 = vld [vmem:[%s246 + $0x278] sm:$0xff]
      %v332 = vld [vmem:[%s246 + $0x280] sm:$0xff]
      %v333 = vld [vmem:[%s246 + $0x288] sm:$0xff]
      %v334 = vld [vmem:[%s246 + $0x290] sm:$0xff]
      %v335 = vld [vmem:[%s246 + $0x298] sm:$0xff]
      %v336 = vld [vmem:[%s246 + $0x2a0] sm:$0xff]
      %v337 = vld [vmem:[%s246 + $0x2a8] sm:$0xff]
      %v338 = vld [vmem:[%s246 + $0x2b0] sm:$0xff]
      %v339 = vld [vmem:[%s246 + $0x2b8] sm:$0xff]
      %v340 = vld [vmem:[%s246 + $0x2c0] sm:$0xff]
      %v341 = vld [vmem:[%s246 + $0x2c8] sm:$0xff]
      %v342 = vld [vmem:[%s246 + $0x2d0] sm:$0xff]
      %v343 = vld [vmem:[%s246 + $0x2d8] sm:$0xff]
      %v344 = vld [vmem:[%s246 + $0x2e0] sm:$0xff]
      %v345 = vld [vmem:[%s246 + $0x2e8] sm:$0xff]
      %v346 = vld [vmem:[%s246 + $0x2f0] sm:$0xff]
      %v347 = vld [vmem:[%s246 + $0x2f8] sm:$0xff]
      %v348 = vld [vmem:[%s246 + $0x300] sm:$0xff]
      %v349 = vld [vmem:[%s246 + $0x308] sm:$0xff]
      %v350 = vld [vmem:[%s246 + $0x310] sm:$0xff]
      %v351 = vld [vmem:[%s246 + $0x318] sm:$0xff]
      %v352 = vld [vmem:[%s246 + $0x320] sm:$0xff]
      %v353 = vld [vmem:[%s246 + $0x328] sm:$0xff]
      %v354 = vld [vmem:[%s246 + $0x330] sm:$0xff]
      %v355 = vld [vmem:[%s246 + $0x338] sm:$0xff]
      %v356 = vld [vmem:[%s246 + $0x340] sm:$0xff]
      %v357 = vld [vmem:[%s246 + $0x348] sm:$0xff]
      %v358 = vld [vmem:[%s246 + $0x350] sm:$0xff]
      %v359 = vld [vmem:[%s246 + $0x358] sm:$0xff]
      %v360 = vld [vmem:[%s246 + $0x360] sm:$0xff]
      %v361 = vld [vmem:[%s246 + $0x368] sm:$0xff]
      %v362 = vld [vmem:[%s246 + $0x370] sm:$0xff]
      %v363 = vld [vmem:[%s246 + $0x378] sm:$0xff]
      %v364 = vld [vmem:[%s246 + $0x380] sm:$0xff]
      %v365 = vld [vmem:[%s246 + $0x388] sm:$0xff]
      %v366 = vld [vmem:[%s246 + $0x390] sm:$0xff]
      %v367 = vld [vmem:[%s246 + $0x398] sm:$0xff]
      %v368 = vld [vmem:[%s246 + $0x3a0] sm:$0xff]
      %v369 = vld [vmem:[%s246 + $0x3a8] sm:$0xff]
      %v370 = vld [vmem:[%s246 + $0x3b0] sm:$0xff]
      %v371 = vld [vmem:[%s246 + $0x3b8] sm:$0xff]
      %v372 = vld [vmem:[%s246 + $0x3c0] sm:$0xff]
      %v373 = vld [vmem:[%s246 + $0x3c8] sm:$0xff]
      %v374 = vld [vmem:[%s246 + $0x3d0] sm:$0xff]
      %v375 = vld [vmem:[%s246 + $0x3d8] sm:$0xff]
      %v376 = vld [vmem:[%s246 + $0x3e0] sm:$0xff]
      %v377 = vld [vmem:[%s246 + $0x3e8] sm:$0xff]
      %v378 = vld [vmem:[%s246 + $0x3f0] sm:$0xff]
      %v379 = vld [vmem:[%s246 + $0x3f8] sm:$0xff]
      %v380 = vld [vmem:[%s246 + $0x400] sm:$0xff]
      %v381 = vld [vmem:[%s246 + $0x408] sm:$0xff]
      %v382 = vld [vmem:[%s246 + $0x410] sm:$0xff]
      %v383 = vld [vmem:[%s246 + $0x418] sm:$0xff]
      %v384 = vld [vmem:[%s246 + $0x420] sm:$0xff]
      %v385 = vld [vmem:[%s246 + $0x428] sm:$0xff]
      %v386 = vld [vmem:[%s246 + $0x430] sm:$0xff]
      %v387 = vld [vmem:[%s246 + $0x438] sm:$0xff]
      %v388 = vld [vmem:[%s246 + $0x440] sm:$0xff]
      %v389 = vld [vmem:[%s246 + $0x448] sm:$0xff]
      %v390 = vld [vmem:[%s246 + $0x450] sm:$0xff]
      %v391 = vld [vmem:[%s246 + $0x458] sm:$0xff]
      %v392 = vld [vmem:[%s246 + $0x460] sm:$0xff]
      %v393 = vld [vmem:[%s246 + $0x468] sm:$0xff]
      %v394 = vld [vmem:[%s246 + $0x470] sm:$0xff]
      %v395 = vld [vmem:[%s246 + $0x478] sm:$0xff]
      %v396 = vld [vmem:[%s1] sm:$0xff]
      %v397 = vld [vmem:[%s1 + $0x8] sm:$0xff]
      %v398 = vld [vmem:[%s1 + $0x10] sm:$0xff]
      %v399 = vld [vmem:[%s1 + $0x18] sm:$0xff]
      %v400 = vld [vmem:[%s1 + $0x20] sm:$0xff]
      %v401 = vld [vmem:[%s1 + $0x28] sm:$0xff]
      %v402 = vld [vmem:[%s1 + $0x30] sm:$0xff]
      %v403 = vld [vmem:[%s1 + $0x38] sm:$0xff]
      %v404 = vld [vmem:[%s1 + $0x40] sm:$0xff]
      %v405 = vld [vmem:[%s1 + $0x48] sm:$0xff]
      %v406 = vld [vmem:[%s1 + $0x50] sm:$0xff]
      %v407 = vld [vmem:[%s1 + $0x58] sm:$0xff]
      %v408 = vld [vmem:[%s1 + $0x60] sm:$0xff]
      %v409 = vld [vmem:[%s1 + $0x68] sm:$0xff]
      %v410 = vld [vmem:[%s1 + $0x70] sm:$0xff]
      %v411 = vld [vmem:[%s1 + $0x78] sm:$0xff]
      %v412 = vld [vmem:[%s1 + $0x80] sm:$0xff]
      %v413 = vld [vmem:[%s1 + $0x88] sm:$0xff]
      %v414 = vld [vmem:[%s1 + $0x90] sm:$0xff]
      %v415 = vld [vmem:[%s1 + $0x98] sm:$0xff]
      %v416 = vld [vmem:[%s1 + $0xa0] sm:$0xff]
      %v417 = vld [vmem:[%s1 + $0xa8] sm:$0xff]
      %v418 = vld [vmem:[%s1 + $0xb0] sm:$0xff]
      %v419 = vld [vmem:[%s1 + $0xb8] sm:$0xff]
      %v420 = vld [vmem:[%s1 + $0xc0] sm:$0xff]
      %v421 = vld [vmem:[%s1 + $0xc8] sm:$0xff]
      %v422 = vld [vmem:[%s1 + $0xd0] sm:$0xff]
      %v423 = vld [vmem:[%s1 + $0xd8] sm:$0xff]
      %v424 = vld [vmem:[%s1 + $0xe0] sm:$0xff]
      %v425 = vld [vmem:[%s1 + $0xe8] sm:$0xff]
      %v426 = vld [vmem:[%s1 + $0xf0] sm:$0xff]
      %v427 = vld [vmem:[%s1 + $0xf8] sm:$0xff]
      %v428 = vld [vmem:[%s1 + $0x100] sm:$0xff]
      %v429 = vld [vmem:[%s1 + $0x108] sm:$0xff]
      %v430 = vld [vmem:[%s1 + $0x110] sm:$0xff]
      %v431 = vld [vmem:[%s1 + $0x118] sm:$0xff]
      %v432 = vld [vmem:[%s1 + $0x120] sm:$0xff]
      %v433 = vld [vmem:[%s1 + $0x128] sm:$0xff]
      %v434 = vld [vmem:[%s1 + $0x130] sm:$0xff]
      %v435 = vld [vmem:[%s1 + $0x138] sm:$0xff]
      %v436 = vld [vmem:[%s1 + $0x140] sm:$0xff]
      %v437 = vld [vmem:[%s1 + $0x148] sm:$0xff]
      %v438 = vld [vmem:[%s1 + $0x150] sm:$0xff]
      %v439 = vld [vmem:[%s1 + $0x158] sm:$0xff]
      %v440 = vld [vmem:[%s1 + $0x160] sm:$0xff]
      %v441 = vld [vmem:[%s1 + $0x168] sm:$0xff]
      %v442 = vld [vmem:[%s1 + $0x170] sm:$0xff]
      %v443 = vld [vmem:[%s1 + $0x178] sm:$0xff]
      %v444 = vld [vmem:[%s1 + $0x180] sm:$0xff]
      %v445 = vld [vmem:[%s1 + $0x188] sm:$0xff]
      %v446 = vld [vmem:[%s1 + $0x190] sm:$0xff]
      %v447 = vld [vmem:[%s1 + $0x198] sm:$0xff]
      %v448 = vld [vmem:[%s1 + $0x1a0] sm:$0xff]
      %v449 = vld [vmem:[%s1 + $0x1a8] sm:$0xff]
      %v450 = vld [vmem:[%s1 + $0x1b0] sm:$0xff]
      %v451 = vld [vmem:[%s1 + $0x1b8] sm:$0xff]
      %v452 = vld [vmem:[%s1 + $0x1c0] sm:$0xff]
      %v453 = vld [vmem:[%s1 + $0x1c8] sm:$0xff]
      %v454 = vld [vmem:[%s1 + $0x1d0] sm:$0xff]
      %v455 = vld [vmem:[%s1 + $0x1d8] sm:$0xff]
      %v456 = vld [vmem:[%s1 + $0x1e0] sm:$0xff]
      %v457 = vld [vmem:[%s1 + $0x1e8] sm:$0xff]
      %v458 = vld [vmem:[%s1 + $0x1f0] sm:$0xff]
      %v459 = vld [vmem:[%s1 + $0x1f8] sm:$0xff]
      %v460 = vld [vmem:[%s1 + $0x200] sm:$0xff]
      %v461 = vld [vmem:[%s1 + $0x208] sm:$0xff]
      %v462 = vld [vmem:[%s1 + $0x210] sm:$0xff]
      %v463 = vld [vmem:[%s1 + $0x218] sm:$0xff]
      %v464 = vld [vmem:[%s1 + $0x220] sm:$0xff]
      %v465 = vld [vmem:[%s1 + $0x228] sm:$0xff]
      %v466 = vld [vmem:[%s1 + $0x230] sm:$0xff]
      %v467 = vld [vmem:[%s1 + $0x238] sm:$0xff]
      %v468 = vld [vmem:[%s1 + $0x240] sm:$0xff]
      %v469 = vld [vmem:[%s1 + $0x248] sm:$0xff]
      %v470 = vld [vmem:[%s1 + $0x250] sm:$0xff]
      %v471 = vld [vmem:[%s1 + $0x258] sm:$0xff]
      %v472 = vld [vmem:[%s1 + $0x260] sm:$0xff]
      %v473 = vld [vmem:[%s1 + $0x268] sm:$0xff]
      %v474 = vld [vmem:[%s1 + $0x270] sm:$0xff]
      %v475 = vld [vmem:[%s1 + $0x278] sm:$0xff]
      %v476 = vld [vmem:[%s1 + $0x280] sm:$0xff]
      %v477 = vld [vmem:[%s1 + $0x288] sm:$0xff]
      %v478 = vld [vmem:[%s1 + $0x290] sm:$0xff]
      %v479 = vld [vmem:[%s1 + $0x298] sm:$0xff]
      %v480 = vld [vmem:[%s1 + $0x2a0] sm:$0xff]
      %v481 = vld [vmem:[%s1 + $0x2a8] sm:$0xff]
      %v482 = vld [vmem:[%s1 + $0x2b0] sm:$0xff]
      %v483 = vld [vmem:[%s1 + $0x2b8] sm:$0xff]
      %v484 = vld [vmem:[%s1 + $0x2c0] sm:$0xff]
      %v485 = vld [vmem:[%s1 + $0x2c8] sm:$0xff]
      %v486 = vld [vmem:[%s1 + $0x2d0] sm:$0xff]
      %v487 = vld [vmem:[%s1 + $0x2d8] sm:$0xff]
      %v488 = vld [vmem:[%s1 + $0x2e0] sm:$0xff]
      %v489 = vld [vmem:[%s1 + $0x2e8] sm:$0xff]
      %v490 = vld [vmem:[%s1 + $0x2f0] sm:$0xff]
      %v491 = vld [vmem:[%s1 + $0x2f8] sm:$0xff]
      %v492 = vld [vmem:[%s2] sm:$0x3]
      %v494 = vlaneseq
      %v495 = vshrl.u32 %v494, 7
      %v496 = vsub.s32 0, %v495
      %v497 = vrot.slane %v492, %v496
      %v498 = vlaneseq
      %v499 = vshrl.u32 %v498, 7
      %v500 = vsub.s32 1, %v499
      %v501 = vrot.slane %v492, %v500
      %v648 = vunpack.c.l.b16 %v252
      %v649 = vunpack.c.h.b16 %v252
      %v650 = vunpack.c.l.b16 %v253
      %v651 = vunpack.c.h.b16 %v253
      %v652 = vunpack.c.l.b16 %v254
      %v653 = vunpack.c.h.b16 %v254
      %v654 = vunpack.c.l.b16 %v255
      %v655 = vunpack.c.h.b16 %v255
      %v656 = vunpack.c.l.b16 %v256
      %v657 = vunpack.c.h.b16 %v256
      %v658 = vunpack.c.l.b16 %v257
      %v659 = vunpack.c.h.b16 %v257
      %v660 = vunpack.c.l.b16 %v258
      %v661 = vunpack.c.h.b16 %v258
      %v662 = vunpack.c.l.b16 %v259
      %v663 = vunpack.c.h.b16 %v259
      %v664 = vunpack.c.l.b16 %v260
      %v665 = vunpack.c.h.b16 %v260
      %v666 = vunpack.c.l.b16 %v261
      %v667 = vunpack.c.h.b16 %v261
      %v668 = vunpack.c.l.b16 %v262
      %v669 = vunpack.c.h.b16 %v262
      %v670 = vunpack.c.l.b16 %v263
      %v671 = vunpack.c.h.b16 %v263
      %v672 = vunpack.c.l.b16 %v264
      %v673 = vunpack.c.h.b16 %v264
      %v674 = vunpack.c.l.b16 %v265
      %v675 = vunpack.c.h.b16 %v265
      %v676 = vunpack.c.l.b16 %v266
      %v677 = vunpack.c.h.b16 %v266
      %v678 = vunpack.c.l.b16 %v267
      %v679 = vunpack.c.h.b16 %v267
      %v680 = vunpack.c.l.b16 %v268
      %v681 = vunpack.c.h.b16 %v268
      %v682 = vunpack.c.l.b16 %v269
      %v683 = vunpack.c.h.b16 %v269
      %v684 = vunpack.c.l.b16 %v270
      %v685 = vunpack.c.h.b16 %v270
      %v686 = vunpack.c.l.b16 %v271
      %v687 = vunpack.c.h.b16 %v271
      %v688 = vunpack.c.l.b16 %v272
      %v689 = vunpack.c.h.b16 %v272
      %v690 = vunpack.c.l.b16 %v273
      %v691 = vunpack.c.h.b16 %v273
      %v692 = vunpack.c.l.b16 %v274
      %v693 = vunpack.c.h.b16 %v274
      %v694 = vunpack.c.l.b16 %v275
      %v695 = vunpack.c.h.b16 %v275
      %v696 = vunpack.c.l.b16 %v276
      %v697 = vunpack.c.h.b16 %v276
      %v698 = vunpack.c.l.b16 %v277
      %v699 = vunpack.c.h.b16 %v277
      %v700 = vunpack.c.l.b16 %v278
      %v701 = vunpack.c.h.b16 %v278
      %v702 = vunpack.c.l.b16 %v279
      %v703 = vunpack.c.h.b16 %v279
      %v704 = vunpack.c.l.b16 %v280
      %v705 = vunpack.c.h.b16 %v280
      %v706 = vunpack.c.l.b16 %v281
      %v707 = vunpack.c.h.b16 %v281
      %v708 = vunpack.c.l.b16 %v282
      %v709 = vunpack.c.h.b16 %v282
      %v710 = vunpack.c.l.b16 %v283
      %v711 = vunpack.c.h.b16 %v283
      %v712 = vunpack.c.l.b16 %v284
      %v713 = vunpack.c.h.b16 %v284
      %v714 = vunpack.c.l.b16 %v285
      %v715 = vunpack.c.h.b16 %v285
      %v716 = vunpack.c.l.b16 %v286
      %v717 = vunpack.c.h.b16 %v286
      %v718 = vunpack.c.l.b16 %v287
      %v719 = vunpack.c.h.b16 %v287
      %v720 = vunpack.c.l.b16 %v288
      %v721 = vunpack.c.h.b16 %v288
      %v722 = vunpack.c.l.b16 %v289
      %v723 = vunpack.c.h.b16 %v289
      %v724 = vunpack.c.l.b16 %v290
      %v725 = vunpack.c.h.b16 %v290
      %v726 = vunpack.c.l.b16 %v291
      %v727 = vunpack.c.h.b16 %v291
      %v728 = vunpack.c.l.b16 %v292
      %v729 = vunpack.c.h.b16 %v292
      %v730 = vunpack.c.l.b16 %v293
      %v731 = vunpack.c.h.b16 %v293
      %v732 = vunpack.c.l.b16 %v294
      %v733 = vunpack.c.h.b16 %v294
      %v734 = vunpack.c.l.b16 %v295
      %v735 = vunpack.c.h.b16 %v295
      %v736 = vunpack.c.l.b16 %v296
      %v737 = vunpack.c.h.b16 %v296
      %v738 = vunpack.c.l.b16 %v297
      %v739 = vunpack.c.h.b16 %v297
      %v740 = vunpack.c.l.b16 %v298
      %v741 = vunpack.c.h.b16 %v298
      %v742 = vunpack.c.l.b16 %v299
      %v743 = vunpack.c.h.b16 %v299
      %v744 = vunpack.c.l.b16 %v300
      %v745 = vunpack.c.h.b16 %v300
      %v746 = vunpack.c.l.b16 %v301
      %v747 = vunpack.c.h.b16 %v301
      %v748 = vunpack.c.l.b16 %v302
      %v749 = vunpack.c.h.b16 %v302
      %v750 = vunpack.c.l.b16 %v303
      %v751 = vunpack.c.h.b16 %v303
      %v752 = vunpack.c.l.b16 %v304
      %v753 = vunpack.c.h.b16 %v304
      %v754 = vunpack.c.l.b16 %v305
      %v755 = vunpack.c.h.b16 %v305
      %v756 = vunpack.c.l.b16 %v306
      %v757 = vunpack.c.h.b16 %v306
      %v758 = vunpack.c.l.b16 %v307
      %v759 = vunpack.c.h.b16 %v307
      %v760 = vunpack.c.l.b16 %v308
      %v761 = vunpack.c.h.b16 %v308
      %v762 = vunpack.c.l.b16 %v309
      %v763 = vunpack.c.h.b16 %v309
      %v764 = vunpack.c.l.b16 %v310
      %v765 = vunpack.c.h.b16 %v310
      %v766 = vunpack.c.l.b16 %v311
      %v767 = vunpack.c.h.b16 %v311
      %v768 = vunpack.c.l.b16 %v312
      %v769 = vunpack.c.h.b16 %v312
      %v770 = vunpack.c.l.b16 %v313
      %v771 = vunpack.c.h.b16 %v313
      %v772 = vunpack.c.l.b16 %v314
      %v773 = vunpack.c.h.b16 %v314
      %v774 = vunpack.c.l.b16 %v315
      %v775 = vunpack.c.h.b16 %v315
      %v776 = vunpack.c.l.b16 %v316
      %v777 = vunpack.c.h.b16 %v316
      %v778 = vunpack.c.l.b16 %v317
      %v779 = vunpack.c.h.b16 %v317
      %v780 = vunpack.c.l.b16 %v318
      %v781 = vunpack.c.h.b16 %v318
      %v782 = vunpack.c.l.b16 %v319
      %v783 = vunpack.c.h.b16 %v319
      %v784 = vunpack.c.l.b16 %v320
      %v785 = vunpack.c.h.b16 %v320
      %v786 = vunpack.c.l.b16 %v321
      %v787 = vunpack.c.h.b16 %v321
      %v788 = vunpack.c.l.b16 %v322
      %v789 = vunpack.c.h.b16 %v322
      %v790 = vunpack.c.l.b16 %v323
      %v791 = vunpack.c.h.b16 %v323
      %v792 = vunpack.c.l.b16 %v324
      %v793 = vunpack.c.h.b16 %v324
      %v794 = vunpack.c.l.b16 %v325
      %v795 = vunpack.c.h.b16 %v325
      %v796 = vunpack.c.l.b16 %v326
      %v797 = vunpack.c.h.b16 %v326
      %v798 = vunpack.c.l.b16 %v327
      %v799 = vunpack.c.h.b16 %v327
      %v800 = vunpack.c.l.b16 %v328
      %v801 = vunpack.c.h.b16 %v328
      %v802 = vunpack.c.l.b16 %v329
      %v803 = vunpack.c.h.b16 %v329
      %v804 = vunpack.c.l.b16 %v330
      %v805 = vunpack.c.h.b16 %v330
      %v806 = vunpack.c.l.b16 %v331
      %v807 = vunpack.c.h.b16 %v331
      %v808 = vunpack.c.l.b16 %v332
      %v809 = vunpack.c.h.b16 %v332
      %v810 = vunpack.c.l.b16 %v333
      %v811 = vunpack.c.h.b16 %v333
      %v812 = vunpack.c.l.b16 %v334
      %v813 = vunpack.c.h.b16 %v334
      %v814 = vunpack.c.l.b16 %v335
      %v815 = vunpack.c.h.b16 %v335
      %v816 = vunpack.c.l.b16 %v336
      %v817 = vunpack.c.h.b16 %v336
      %v818 = vunpack.c.l.b16 %v337
      %v819 = vunpack.c.h.b16 %v337
      %v820 = vunpack.c.l.b16 %v338
      %v821 = vunpack.c.h.b16 %v338
      %v822 = vunpack.c.l.b16 %v339
      %v823 = vunpack.c.h.b16 %v339
      %v824 = vunpack.c.l.b16 %v340
      %v825 = vunpack.c.h.b16 %v340
      %v826 = vunpack.c.l.b16 %v341
      %v827 = vunpack.c.h.b16 %v341
      %v828 = vunpack.c.l.b16 %v342
      %v829 = vunpack.c.h.b16 %v342
      %v830 = vunpack.c.l.b16 %v343
      %v831 = vunpack.c.h.b16 %v343
      %v832 = vunpack.c.l.b16 %v344
      %v833 = vunpack.c.h.b16 %v344
      %v834 = vunpack.c.l.b16 %v345
      %v835 = vunpack.c.h.b16 %v345
      %v836 = vunpack.c.l.b16 %v346
      %v837 = vunpack.c.h.b16 %v346
      %v838 = vunpack.c.l.b16 %v347
      %v839 = vunpack.c.h.b16 %v347
      %v840 = vunpack.c.l.b16 %v348
      %v841 = vunpack.c.h.b16 %v348
      %v842 = vunpack.c.l.b16 %v349
      %v843 = vunpack.c.h.b16 %v349
      %v844 = vunpack.c.l.b16 %v350
      %v845 = vunpack.c.h.b16 %v350
      %v846 = vunpack.c.l.b16 %v351
      %v847 = vunpack.c.h.b16 %v351
      %v848 = vunpack.c.l.b16 %v352
      %v849 = vunpack.c.h.b16 %v352
      %v850 = vunpack.c.l.b16 %v353
      %v851 = vunpack.c.h.b16 %v353
      %v852 = vunpack.c.l.b16 %v354
      %v853 = vunpack.c.h.b16 %v354
      %v854 = vunpack.c.l.b16 %v355
      %v855 = vunpack.c.h.b16 %v355
      %v856 = vunpack.c.l.b16 %v356
      %v857 = vunpack.c.h.b16 %v356
      %v858 = vunpack.c.l.b16 %v357
      %v859 = vunpack.c.h.b16 %v357
      %v860 = vunpack.c.l.b16 %v358
      %v861 = vunpack.c.h.b16 %v358
      %v862 = vunpack.c.l.b16 %v359
      %v863 = vunpack.c.h.b16 %v359
      %v864 = vunpack.c.l.b16 %v360
      %v865 = vunpack.c.h.b16 %v360
      %v866 = vunpack.c.l.b16 %v361
      %v867 = vunpack.c.h.b16 %v361
      %v868 = vunpack.c.l.b16 %v362
      %v869 = vunpack.c.h.b16 %v362
      %v870 = vunpack.c.l.b16 %v363
      %v871 = vunpack.c.h.b16 %v363
      %v872 = vunpack.c.l.b16 %v364
      %v873 = vunpack.c.h.b16 %v364
      %v874 = vunpack.c.l.b16 %v365
      %v875 = vunpack.c.h.b16 %v365
      %v876 = vunpack.c.l.b16 %v366
      %v877 = vunpack.c.h.b16 %v366
      %v878 = vunpack.c.l.b16 %v367
      %v879 = vunpack.c.h.b16 %v367
      %v880 = vunpack.c.l.b16 %v368
      %v881 = vunpack.c.h.b16 %v368
      %v882 = vunpack.c.l.b16 %v369
      %v883 = vunpack.c.h.b16 %v369
      %v884 = vunpack.c.l.b16 %v370
      %v885 = vunpack.c.h.b16 %v370
      %v886 = vunpack.c.l.b16 %v371
      %v887 = vunpack.c.h.b16 %v371
      %v888 = vunpack.c.l.b16 %v372
      %v889 = vunpack.c.h.b16 %v372
      %v890 = vunpack.c.l.b16 %v373
      %v891 = vunpack.c.h.b16 %v373
      %v892 = vunpack.c.l.b16 %v374
      %v893 = vunpack.c.h.b16 %v374
      %v894 = vunpack.c.l.b16 %v375
      %v895 = vunpack.c.h.b16 %v375
      %v896 = vunpack.c.l.b16 %v376
      %v897 = vunpack.c.h.b16 %v376
      %v898 = vunpack.c.l.b16 %v377
      %v899 = vunpack.c.h.b16 %v377
      %v900 = vunpack.c.l.b16 %v378
      %v901 = vunpack.c.h.b16 %v378
      %v902 = vunpack.c.l.b16 %v379
      %v903 = vunpack.c.h.b16 %v379
      %v904 = vunpack.c.l.b16 %v380
      %v905 = vunpack.c.h.b16 %v380
      %v906 = vunpack.c.l.b16 %v381
      %v907 = vunpack.c.h.b16 %v381
      %v908 = vunpack.c.l.b16 %v382
      %v909 = vunpack.c.h.b16 %v382
      %v910 = vunpack.c.l.b16 %v383
      %v911 = vunpack.c.h.b16 %v383
      %v912 = vunpack.c.l.b16 %v384
      %v913 = vunpack.c.h.b16 %v384
      %v914 = vunpack.c.l.b16 %v385
      %v915 = vunpack.c.h.b16 %v385
      %v916 = vunpack.c.l.b16 %v386
      %v917 = vunpack.c.h.b16 %v386
      %v918 = vunpack.c.l.b16 %v387
      %v919 = vunpack.c.h.b16 %v387
      %v920 = vunpack.c.l.b16 %v388
      %v921 = vunpack.c.h.b16 %v388
      %v922 = vunpack.c.l.b16 %v389
      %v923 = vunpack.c.h.b16 %v389
      %v924 = vunpack.c.l.b16 %v390
      %v925 = vunpack.c.h.b16 %v390
      %v926 = vunpack.c.l.b16 %v391
      %v927 = vunpack.c.h.b16 %v391
      %v928 = vunpack.c.l.b16 %v392
      %v929 = vunpack.c.h.b16 %v392
      %v930 = vunpack.c.l.b16 %v393
      %v931 = vunpack.c.h.b16 %v393
      %v932 = vunpack.c.l.b16 %v394
      %v933 = vunpack.c.h.b16 %v394
      %v934 = vunpack.c.l.b16 %v395
      %v935 = vunpack.c.h.b16 %v395
      %v936 = vpack.c.b16 %v654, %v648
      %v937 = vpack.c.b16 %v655, %v649
      %v938 = vpack.c.b16 %v656, %v650
      %v939 = vpack.c.b16 %v657, %v651
      %v940 = vpack.c.b16 %v658, %v652
      %v941 = vpack.c.b16 %v659, %v653
      %v942 = vpack.c.b16 %v666, %v660
      %v943 = vpack.c.b16 %v667, %v661
      %v944 = vpack.c.b16 %v668, %v662
      %v945 = vpack.c.b16 %v669, %v663
      %v946 = vpack.c.b16 %v670, %v664
      %v947 = vpack.c.b16 %v671, %v665
      %v948 = vpack.c.b16 %v678, %v672
      %v949 = vpack.c.b16 %v679, %v673
      %v950 = vpack.c.b16 %v680, %v674
      %v951 = vpack.c.b16 %v681, %v675
      %v952 = vpack.c.b16 %v682, %v676
      %v953 = vpack.c.b16 %v683, %v677
      %v954 = vpack.c.b16 %v690, %v684
      %v955 = vpack.c.b16 %v691, %v685
      %v956 = vpack.c.b16 %v692, %v686
      %v957 = vpack.c.b16 %v693, %v687
      %v958 = vpack.c.b16 %v694, %v688
      %v959 = vpack.c.b16 %v695, %v689
      %v960 = vpack.c.b16 %v702, %v696
      %v961 = vpack.c.b16 %v703, %v697
      %v962 = vpack.c.b16 %v704, %v698
      %v963 = vpack.c.b16 %v705, %v699
      %v964 = vpack.c.b16 %v706, %v700
      %v965 = vpack.c.b16 %v707, %v701
      %v966 = vpack.c.b16 %v714, %v708
      %v967 = vpack.c.b16 %v715, %v709
      %v968 = vpack.c.b16 %v716, %v710
      %v969 = vpack.c.b16 %v717, %v711
      %v970 = vpack.c.b16 %v718, %v712
      %v971 = vpack.c.b16 %v719, %v713
      %v972 = vpack.c.b16 %v726, %v720
      %v973 = vpack.c.b16 %v727, %v721
      %v974 = vpack.c.b16 %v728, %v722
      %v975 = vpack.c.b16 %v729, %v723
      %v976 = vpack.c.b16 %v730, %v724
      %v977 = vpack.c.b16 %v731, %v725
      %v978 = vpack.c.b16 %v738, %v732
      %v979 = vpack.c.b16 %v739, %v733
      %v980 = vpack.c.b16 %v740, %v734
      %v981 = vpack.c.b16 %v741, %v735
      %v982 = vpack.c.b16 %v742, %v736
      %v983 = vpack.c.b16 %v743, %v737
      %v984 = vpack.c.b16 %v750, %v744
      %v985 = vpack.c.b16 %v751, %v745
      %v986 = vpack.c.b16 %v752, %v746
      %v987 = vpack.c.b16 %v753, %v747
      %v988 = vpack.c.b16 %v754, %v748
      %v989 = vpack.c.b16 %v755, %v749
      %v990 = vpack.c.b16 %v762, %v756
      %v991 = vpack.c.b16 %v763, %v757
      %v992 = vpack.c.b16 %v764, %v758
      %v993 = vpack.c.b16 %v765, %v759
      %v994 = vpack.c.b16 %v766, %v760
      %v995 = vpack.c.b16 %v767, %v761
      %v996 = vpack.c.b16 %v774, %v768
      %v997 = vpack.c.b16 %v775, %v769
      %v998 = vpack.c.b16 %v776, %v770
      %v999 = vpack.c.b16 %v777, %v771
      %v1000 = vpack.c.b16 %v778, %v772
      %v1001 = vpack.c.b16 %v779, %v773
      %v1002 = vpack.c.b16 %v786, %v780
      %v1003 = vpack.c.b16 %v787, %v781
      %v1004 = vpack.c.b16 %v788, %v782
      %v1005 = vpack.c.b16 %v789, %v783
      %v1006 = vpack.c.b16 %v790, %v784
      %v1007 = vpack.c.b16 %v791, %v785
      %v1008 = vpack.c.b16 %v798, %v792
      %v1009 = vpack.c.b16 %v799, %v793
      %v1010 = vpack.c.b16 %v800, %v794
      %v1011 = vpack.c.b16 %v801, %v795
      %v1012 = vpack.c.b16 %v802, %v796
      %v1013 = vpack.c.b16 %v803, %v797
      %v1014 = vpack.c.b16 %v810, %v804
      %v1015 = vpack.c.b16 %v811, %v805
      %v1016 = vpack.c.b16 %v812, %v806
      %v1017 = vpack.c.b16 %v813, %v807
      %v1018 = vpack.c.b16 %v814, %v808
      %v1019 = vpack.c.b16 %v815, %v809
      %v1020 = vpack.c.b16 %v822, %v816
      %v1021 = vpack.c.b16 %v823, %v817
      %v1022 = vpack.c.b16 %v824, %v818
      %v1023 = vpack.c.b16 %v825, %v819
      %v1024 = vpack.c.b16 %v826, %v820
      %v1025 = vpack.c.b16 %v827, %v821
      %v1026 = vpack.c.b16 %v834, %v828
      %v1027 = vpack.c.b16 %v835, %v829
      %v1028 = vpack.c.b16 %v836, %v830
      %v1029 = vpack.c.b16 %v837, %v831
      %v1030 = vpack.c.b16 %v838, %v832
      %v1031 = vpack.c.b16 %v839, %v833
      %v1032 = vpack.c.b16 %v846, %v840
      %v1033 = vpack.c.b16 %v847, %v841
      %v1034 = vpack.c.b16 %v848, %v842
      %v1035 = vpack.c.b16 %v849, %v843
      %v1036 = vpack.c.b16 %v850, %v844
      %v1037 = vpack.c.b16 %v851, %v845
      %v1038 = vpack.c.b16 %v858, %v852
      %v1039 = vpack.c.b16 %v859, %v853
      %v1040 = vpack.c.b16 %v860, %v854
      %v1041 = vpack.c.b16 %v861, %v855
      %v1042 = vpack.c.b16 %v862, %v856
      %v1043 = vpack.c.b16 %v863, %v857
      %v1044 = vpack.c.b16 %v870, %v864
      %v1045 = vpack.c.b16 %v871, %v865
      %v1046 = vpack.c.b16 %v872, %v866
      %v1047 = vpack.c.b16 %v873, %v867
      %v1048 = vpack.c.b16 %v874, %v868
      %v1049 = vpack.c.b16 %v875, %v869
      %v1050 = vpack.c.b16 %v882, %v876
      %v1051 = vpack.c.b16 %v883, %v877
      %v1052 = vpack.c.b16 %v884, %v878
      %v1053 = vpack.c.b16 %v885, %v879
      %v1054 = vpack.c.b16 %v886, %v880
      %v1055 = vpack.c.b16 %v887, %v881
      %v1056 = vpack.c.b16 %v894, %v888
      %v1057 = vpack.c.b16 %v895, %v889
      %v1058 = vpack.c.b16 %v896, %v890
      %v1059 = vpack.c.b16 %v897, %v891
      %v1060 = vpack.c.b16 %v898, %v892
      %v1061 = vpack.c.b16 %v899, %v893
      %v1062 = vpack.c.b16 %v906, %v900
      %v1063 = vpack.c.b16 %v907, %v901
      %v1064 = vpack.c.b16 %v908, %v902
      %v1065 = vpack.c.b16 %v909, %v903
      %v1066 = vpack.c.b16 %v910, %v904
      %v1067 = vpack.c.b16 %v911, %v905
      %v1068 = vpack.c.b16 %v918, %v912
      %v1069 = vpack.c.b16 %v919, %v913
      %v1070 = vpack.c.b16 %v920, %v914
      %v1071 = vpack.c.b16 %v921, %v915
      %v1072 = vpack.c.b16 %v922, %v916
      %v1073 = vpack.c.b16 %v923, %v917
      %v1074 = vpack.c.b16 %v930, %v924
      %v1075 = vpack.c.b16 %v931, %v925
      %v1076 = vpack.c.b16 %v932, %v926
      %v1077 = vpack.c.b16 %v933, %v927
      %v1078 = vpack.c.b16 %v934, %v928
      %v1079 = vpack.c.b16 %v935, %v929
      %v1320 = vunpack.c.l.b16 %v396
      %v1321 = vunpack.c.h.b16 %v396
      %v1322 = vunpack.c.l.b16 %v397
      %v1323 = vunpack.c.h.b16 %v397
      %v1324 = vunpack.c.l.b16 %v398
      %v1325 = vunpack.c.h.b16 %v398
      %v1326 = vunpack.c.l.b16 %v399
      %v1327 = vunpack.c.h.b16 %v399
      %v1328 = vunpack.c.l.b16 %v400
      %v1329 = vunpack.c.h.b16 %v400
      %v1330 = vunpack.c.l.b16 %v401
      %v1331 = vunpack.c.h.b16 %v401
      %v1332 = vunpack.c.l.b16 %v402
      %v1333 = vunpack.c.h.b16 %v402
      %v1334 = vunpack.c.l.b16 %v403
      %v1335 = vunpack.c.h.b16 %v403
      %v1336 = vunpack.c.l.b16 %v404
      %v1337 = vunpack.c.h.b16 %v404
      %v1338 = vunpack.c.l.b16 %v405
      %v1339 = vunpack.c.h.b16 %v405
      %v1340 = vunpack.c.l.b16 %v406
      %v1341 = vunpack.c.h.b16 %v406
      %v1342 = vunpack.c.l.b16 %v407
      %v1343 = vunpack.c.h.b16 %v407
      %v1344 = vunpack.c.l.b16 %v408
      %v1345 = vunpack.c.h.b16 %v408
      %v1346 = vunpack.c.l.b16 %v409
      %v1347 = vunpack.c.h.b16 %v409
      %v1348 = vunpack.c.l.b16 %v410
      %v1349 = vunpack.c.h.b16 %v410
      %v1350 = vunpack.c.l.b16 %v411
      %v1351 = vunpack.c.h.b16 %v411
      %v1352 = vunpack.c.l.b16 %v412
      %v1353 = vunpack.c.h.b16 %v412
      %v1354 = vunpack.c.l.b16 %v413
      %v1355 = vunpack.c.h.b16 %v413
      %v1356 = vunpack.c.l.b16 %v414
      %v1357 = vunpack.c.h.b16 %v414
      %v1358 = vunpack.c.l.b16 %v415
      %v1359 = vunpack.c.h.b16 %v415
      %v1360 = vunpack.c.l.b16 %v416
      %v1361 = vunpack.c.h.b16 %v416
      %v1362 = vunpack.c.l.b16 %v417
      %v1363 = vunpack.c.h.b16 %v417
      %v1364 = vunpack.c.l.b16 %v418
      %v1365 = vunpack.c.h.b16 %v418
      %v1366 = vunpack.c.l.b16 %v419
      %v1367 = vunpack.c.h.b16 %v419
      %v1368 = vunpack.c.l.b16 %v420
      %v1369 = vunpack.c.h.b16 %v420
      %v1370 = vunpack.c.l.b16 %v421
      %v1371 = vunpack.c.h.b16 %v421
      %v1372 = vunpack.c.l.b16 %v422
      %v1373 = vunpack.c.h.b16 %v422
      %v1374 = vunpack.c.l.b16 %v423
      %v1375 = vunpack.c.h.b16 %v423
      %v1376 = vunpack.c.l.b16 %v424
      %v1377 = vunpack.c.h.b16 %v424
      %v1378 = vunpack.c.l.b16 %v425
      %v1379 = vunpack.c.h.b16 %v425
      %v1380 = vunpack.c.l.b16 %v426
      %v1381 = vunpack.c.h.b16 %v426
      %v1382 = vunpack.c.l.b16 %v427
      %v1383 = vunpack.c.h.b16 %v427
      %v1384 = vunpack.c.l.b16 %v428
      %v1385 = vunpack.c.h.b16 %v428
      %v1386 = vunpack.c.l.b16 %v429
      %v1387 = vunpack.c.h.b16 %v429
      %v1388 = vunpack.c.l.b16 %v430
      %v1389 = vunpack.c.h.b16 %v430
      %v1390 = vunpack.c.l.b16 %v431
      %v1391 = vunpack.c.h.b16 %v431
      %v1392 = vunpack.c.l.b16 %v432
      %v1393 = vunpack.c.h.b16 %v432
      %v1394 = vunpack.c.l.b16 %v433
      %v1395 = vunpack.c.h.b16 %v433
      %v1396 = vunpack.c.l.b16 %v434
      %v1397 = vunpack.c.h.b16 %v434
      %v1398 = vunpack.c.l.b16 %v435
      %v1399 = vunpack.c.h.b16 %v435
      %v1400 = vunpack.c.l.b16 %v436
      %v1401 = vunpack.c.h.b16 %v436
      %v1402 = vunpack.c.l.b16 %v437
      %v1403 = vunpack.c.h.b16 %v437
      %v1404 = vunpack.c.l.b16 %v438
      %v1405 = vunpack.c.h.b16 %v438
      %v1406 = vunpack.c.l.b16 %v439
      %v1407 = vunpack.c.h.b16 %v439
      %v1408 = vunpack.c.l.b16 %v440
      %v1409 = vunpack.c.h.b16 %v440
      %v1410 = vunpack.c.l.b16 %v441
      %v1411 = vunpack.c.h.b16 %v441
      %v1412 = vunpack.c.l.b16 %v442
      %v1413 = vunpack.c.h.b16 %v442
      %v1414 = vunpack.c.l.b16 %v443
      %v1415 = vunpack.c.h.b16 %v443
      %v1416 = vunpack.c.l.b16 %v444
      %v1417 = vunpack.c.h.b16 %v444
      %v1418 = vunpack.c.l.b16 %v445
      %v1419 = vunpack.c.h.b16 %v445
      %v1420 = vunpack.c.l.b16 %v446
      %v1421 = vunpack.c.h.b16 %v446
      %v1422 = vunpack.c.l.b16 %v447
      %v1423 = vunpack.c.h.b16 %v447
      %v1424 = vunpack.c.l.b16 %v448
      %v1425 = vunpack.c.h.b16 %v448
      %v1426 = vunpack.c.l.b16 %v449
      %v1427 = vunpack.c.h.b16 %v449
      %v1428 = vunpack.c.l.b16 %v450
      %v1429 = vunpack.c.h.b16 %v450
      %v1430 = vunpack.c.l.b16 %v451
      %v1431 = vunpack.c.h.b16 %v451
      %v1432 = vunpack.c.l.b16 %v452
      %v1433 = vunpack.c.h.b16 %v452
      %v1434 = vunpack.c.l.b16 %v453
      %v1435 = vunpack.c.h.b16 %v453
      %v1436 = vunpack.c.l.b16 %v454
      %v1437 = vunpack.c.h.b16 %v454
      %v1438 = vunpack.c.l.b16 %v455
      %v1439 = vunpack.c.h.b16 %v455
      %v1440 = vunpack.c.l.b16 %v456
      %v1441 = vunpack.c.h.b16 %v456
      %v1442 = vunpack.c.l.b16 %v457
      %v1443 = vunpack.c.h.b16 %v457
      %v1444 = vunpack.c.l.b16 %v458
      %v1445 = vunpack.c.h.b16 %v458
      %v1446 = vunpack.c.l.b16 %v459
      %v1447 = vunpack.c.h.b16 %v459
      %v1448 = vunpack.c.l.b16 %v460
      %v1449 = vunpack.c.h.b16 %v460
      %v1450 = vunpack.c.l.b16 %v461
      %v1451 = vunpack.c.h.b16 %v461
      %v1452 = vunpack.c.l.b16 %v462
      %v1453 = vunpack.c.h.b16 %v462
      %v1454 = vunpack.c.l.b16 %v463
      %v1455 = vunpack.c.h.b16 %v463
      %v1456 = vunpack.c.l.b16 %v464
      %v1457 = vunpack.c.h.b16 %v464
      %v1458 = vunpack.c.l.b16 %v465
      %v1459 = vunpack.c.h.b16 %v465
      %v1460 = vunpack.c.l.b16 %v466
      %v1461 = vunpack.c.h.b16 %v466
      %v1462 = vunpack.c.l.b16 %v467
      %v1463 = vunpack.c.h.b16 %v467
      %v1464 = vunpack.c.l.b16 %v468
      %v1465 = vunpack.c.h.b16 %v468
      %v1466 = vunpack.c.l.b16 %v469
      %v1467 = vunpack.c.h.b16 %v469
      %v1468 = vunpack.c.l.b16 %v470
      %v1469 = vunpack.c.h.b16 %v470
      %v1470 = vunpack.c.l.b16 %v471
      %v1471 = vunpack.c.h.b16 %v471
      %v1472 = vunpack.c.l.b16 %v472
      %v1473 = vunpack.c.h.b16 %v472
      %v1474 = vunpack.c.l.b16 %v473
      %v1475 = vunpack.c.h.b16 %v473
      %v1476 = vunpack.c.l.b16 %v474
      %v1477 = vunpack.c.h.b16 %v474
      %v1478 = vunpack.c.l.b16 %v475
      %v1479 = vunpack.c.h.b16 %v475
      %v1480 = vunpack.c.l.b16 %v476
      %v1481 = vunpack.c.h.b16 %v476
      %v1482 = vunpack.c.l.b16 %v477
      %v1483 = vunpack.c.h.b16 %v477
      %v1484 = vunpack.c.l.b16 %v478
      %v1485 = vunpack.c.h.b16 %v478
      %v1486 = vunpack.c.l.b16 %v479
      %v1487 = vunpack.c.h.b16 %v479
      %v1488 = vunpack.c.l.b16 %v480
      %v1489 = vunpack.c.h.b16 %v480
      %v1490 = vunpack.c.l.b16 %v481
      %v1491 = vunpack.c.h.b16 %v481
      %v1492 = vunpack.c.l.b16 %v482
      %v1493 = vunpack.c.h.b16 %v482
      %v1494 = vunpack.c.l.b16 %v483
      %v1495 = vunpack.c.h.b16 %v483
      %v1496 = vunpack.c.l.b16 %v484
      %v1497 = vunpack.c.h.b16 %v484
      %v1498 = vunpack.c.l.b16 %v485
      %v1499 = vunpack.c.h.b16 %v485
      %v1500 = vunpack.c.l.b16 %v486
      %v1501 = vunpack.c.h.b16 %v486
      %v1502 = vunpack.c.l.b16 %v487
      %v1503 = vunpack.c.h.b16 %v487
      %v1504 = vunpack.c.l.b16 %v488
      %v1505 = vunpack.c.h.b16 %v488
      %v1506 = vunpack.c.l.b16 %v489
      %v1507 = vunpack.c.h.b16 %v489
      %v1508 = vunpack.c.l.b16 %v490
      %v1509 = vunpack.c.h.b16 %v490
      %v1510 = vunpack.c.l.b16 %v491
      %v1511 = vunpack.c.h.b16 %v491
      %v1512 = vpack.c.b16 %v1322, %v1320
      %v1513 = vpack.c.b16 %v1323, %v1321
      %v1514 = vpack.c.b16 %v1326, %v1324
      %v1515 = vpack.c.b16 %v1327, %v1325
      %v1516 = vpack.c.b16 %v1330, %v1328
      %v1517 = vpack.c.b16 %v1331, %v1329
      %v1518 = vpack.c.b16 %v1334, %v1332
      %v1519 = vpack.c.b16 %v1335, %v1333
      %v1520 = vpack.c.b16 %v1338, %v1336
      %v1521 = vpack.c.b16 %v1339, %v1337
      %v1522 = vpack.c.b16 %v1342, %v1340
      %v1523 = vpack.c.b16 %v1343, %v1341
      %v1524 = vpack.c.b16 %v1346, %v1344
      %v1525 = vpack.c.b16 %v1347, %v1345
      %v1526 = vpack.c.b16 %v1350, %v1348
      %v1527 = vpack.c.b16 %v1351, %v1349
      %v1528 = vpack.c.b16 %v1354, %v1352
      %v1529 = vpack.c.b16 %v1355, %v1353
      %v1530 = vpack.c.b16 %v1358, %v1356
      %v1531 = vpack.c.b16 %v1359, %v1357
      %v1532 = vpack.c.b16 %v1362, %v1360
      %v1533 = vpack.c.b16 %v1363, %v1361
      %v1534 = vpack.c.b16 %v1366, %v1364
      %v1535 = vpack.c.b16 %v1367, %v1365
      %v1536 = vpack.c.b16 %v1370, %v1368
      %v1537 = vpack.c.b16 %v1371, %v1369
      %v1538 = vpack.c.b16 %v1374, %v1372
      %v1539 = vpack.c.b16 %v1375, %v1373
      %v1540 = vpack.c.b16 %v1378, %v1376
      %v1541 = vpack.c.b16 %v1379, %v1377
      %v1542 = vpack.c.b16 %v1382, %v1380
      %v1543 = vpack.c.b16 %v1383, %v1381
      %v1544 = vpack.c.b16 %v1386, %v1384
      %v1545 = vpack.c.b16 %v1387, %v1385
      %v1546 = vpack.c.b16 %v1390, %v1388
      %v1547 = vpack.c.b16 %v1391, %v1389
      %v1548 = vpack.c.b16 %v1394, %v1392
      %v1549 = vpack.c.b16 %v1395, %v1393
      %v1550 = vpack.c.b16 %v1398, %v1396
      %v1551 = vpack.c.b16 %v1399, %v1397
      %v1552 = vpack.c.b16 %v1402, %v1400
      %v1553 = vpack.c.b16 %v1403, %v1401
      %v1554 = vpack.c.b16 %v1406, %v1404
      %v1555 = vpack.c.b16 %v1407, %v1405
      %v1556 = vpack.c.b16 %v1410, %v1408
      %v1557 = vpack.c.b16 %v1411, %v1409
      %v1558 = vpack.c.b16 %v1414, %v1412
      %v1559 = vpack.c.b16 %v1415, %v1413
      %v1560 = vpack.c.b16 %v1418, %v1416
      %v1561 = vpack.c.b16 %v1419, %v1417
      %v1562 = vpack.c.b16 %v1422, %v1420
      %v1563 = vpack.c.b16 %v1423, %v1421
      %v1564 = vpack.c.b16 %v1426, %v1424
      %v1565 = vpack.c.b16 %v1427, %v1425
      %v1566 = vpack.c.b16 %v1430, %v1428
      %v1567 = vpack.c.b16 %v1431, %v1429
      %v1568 = vpack.c.b16 %v1434, %v1432
      %v1569 = vpack.c.b16 %v1435, %v1433
      %v1570 = vpack.c.b16 %v1438, %v1436
      %v1571 = vpack.c.b16 %v1439, %v1437
      %v1572 = vpack.c.b16 %v1442, %v1440
      %v1573 = vpack.c.b16 %v1443, %v1441
      %v1574 = vpack.c.b16 %v1446, %v1444
      %v1575 = vpack.c.b16 %v1447, %v1445
      %v1576 = vpack.c.b16 %v1450, %v1448
      %v1577 = vpack.c.b16 %v1451, %v1449
      %v1578 = vpack.c.b16 %v1454, %v1452
      %v1579 = vpack.c.b16 %v1455, %v1453
      %v1580 = vpack.c.b16 %v1458, %v1456
      %v1581 = vpack.c.b16 %v1459, %v1457
      %v1582 = vpack.c.b16 %v1462, %v1460
      %v1583 = vpack.c.b16 %v1463, %v1461
      %v1584 = vpack.c.b16 %v1466, %v1464
      %v1585 = vpack.c.b16 %v1467, %v1465
      %v1586 = vpack.c.b16 %v1470, %v1468
      %v1587 = vpack.c.b16 %v1471, %v1469
      %v1588 = vpack.c.b16 %v1474, %v1472
      %v1589 = vpack.c.b16 %v1475, %v1473
      %v1590 = vpack.c.b16 %v1478, %v1476
      %v1591 = vpack.c.b16 %v1479, %v1477
      %v1592 = vpack.c.b16 %v1482, %v1480
      %v1593 = vpack.c.b16 %v1483, %v1481
      %v1594 = vpack.c.b16 %v1486, %v1484
      %v1595 = vpack.c.b16 %v1487, %v1485
      %v1596 = vpack.c.b16 %v1490, %v1488
      %v1597 = vpack.c.b16 %v1491, %v1489
      %v1598 = vpack.c.b16 %v1494, %v1492
      %v1599 = vpack.c.b16 %v1495, %v1493
      %v1600 = vpack.c.b16 %v1498, %v1496
      %v1601 = vpack.c.b16 %v1499, %v1497
      %v1602 = vpack.c.b16 %v1502, %v1500
      %v1603 = vpack.c.b16 %v1503, %v1501
      %v1604 = vpack.c.b16 %v1506, %v1504
      %v1605 = vpack.c.b16 %v1507, %v1505
      %v1606 = vpack.c.b16 %v1510, %v1508
      %v1607 = vpack.c.b16 %v1511, %v1509
      %1704 = vmatprep.subr.bf16.mxu0 %v1513
      %1705 = vmatpush1.bf16.msra.mxu0 %v1512
      %1706 = vmatprep.subr.bf16.mxu0 %v1515
      %1707 = vmatpush1.bf16.msra.mxu0 %v1514
      %1708 = vmatprep.subr.bf16.mxu0 %v1517
      %1709 = vmatpush1.bf16.msra.mxu0 %v1516
      %1710 = vmatprep.subr.bf16.mxu0 %v1519
      %1711 = vmatpush1.bf16.msra.mxu0 %v1518
      %1712 = vmatprep.subr.bf16.mxu0 %v1521
      %1713 = vmatpush1.bf16.msra.mxu0 %v1520
      %1714 = vmatprep.subr.bf16.mxu0 %v1523
      %1715 = vmatpush1.bf16.msra.mxu0 %v1522
      %1716 = vmatprep.subr.bf16.mxu0 %v1525
      %1717 = vmatpush1.bf16.msra.mxu0 %v1524
      %1718 = vmatprep.subr.bf16.mxu0 %v1527
      %1719 = vmatpush1.bf16.msra.mxu0 %v1526
      %1720 = vmatprep.subr.bf16.mxu0 %v1529
      %1721 = vmatpush1.bf16.msra.mxu0 %v1528
      %1722 = vmatprep.subr.bf16.mxu0 %v1531
      %1723 = vmatpush1.bf16.msra.mxu0 %v1530
      %1724 = vmatprep.subr.bf16.mxu0 %v1533
      %1725 = vmatpush1.bf16.msra.mxu0 %v1532
      %1726 = vmatprep.subr.bf16.mxu0 %v1535
      %1727 = vmatpush1.bf16.msra.mxu0 %v1534
      %1728 = vmatprep.subr.bf16.mxu0 %v1537
      %1729 = vmatpush1.bf16.msra.mxu0 %v1536
      %1730 = vmatprep.subr.bf16.mxu0 %v1539
      %1731 = vmatpush1.bf16.msra.mxu0 %v1538
      %1732 = vmatprep.subr.bf16.mxu0 %v1541
      %1733 = vmatpush1.bf16.msra.mxu0 %v1540
      %1734 = vmatprep.subr.bf16.mxu0 %v1543
      %1735 = vmatpush1.bf16.msra.mxu0 %v1542
      %1736 = vmatprep.mubr.bf16.mxu0 %v937
      %1737 = vmatmul.mubr.bf16.gmra.mrb[0].mxu0 %v936
      %v1738 = vpop.f32.mrb[0].mxu0
      %v1739 = vadd.f32 %v497, %v1738
      %v1740 = vpop.f32.mrb[0].mxu0
      %v1741 = vadd.f32 %v501, %v1740
      %v1742 = vpop.f32.mrb[0].mxu0
      %v1743 = vadd.f32 %v497, %v1742
      %v1744 = vpop.f32.mrb[0].mxu0
      %v1745 = vadd.f32 %v501, %v1744
      %1746 = vmatprep.mubr.bf16.mxu0 %v943
      %1747 = vmatmul.mubr.bf16.gmra.mrb[0].mxu0 %v942
      %v1748 = vpop.f32.mrb[0].mxu0
      %v1749 = vadd.f32 %v497, %v1748
      %v1750 = vpop.f32.mrb[0].mxu0
      %v1751 = vadd.f32 %v501, %v1750
      %v1752 = vpop.f32.mrb[0].mxu0
      %v1753 = vadd.f32 %v497, %v1752
      %v1754 = vpop.f32.mrb[0].mxu0
      %v1755 = vadd.f32 %v501, %v1754
      %1756 = vmatprep.mubr.bf16.mxu0 %v949
      %1757 = vmatmul.mubr.bf16.gmra.mrb[0].mxu0 %v948
      %v1758 = vpop.f32.mrb[0].mxu0
      %v1759 = vadd.f32 %v497, %v1758
      %v1760 = vpop.f32.mrb[0].mxu0
      %v1761 = vadd.f32 %v501, %v1760
      %v1762 = vpop.f32.mrb[0].mxu0
      %v1763 = vadd.f32 %v497, %v1762
      %v1764 = vpop.f32.mrb[0].mxu0
      %v1765 = vadd.f32 %v501, %v1764
      %1766 = vmatprep.mubr.bf16.mxu0 %v955
      %1767 = vmatmul.mubr.bf16.gmra.mrb[0].mxu0 %v954
      %v1768 = vpop.f32.mrb[0].mxu0
      %v1769 = vadd.f32 %v497, %v1768
      %v1770 = vpop.f32.mrb[0].mxu0
      %v1771 = vadd.f32 %v501, %v1770
      %v1772 = vpop.f32.mrb[0].mxu0
      %v1773 = vadd.f32 %v497, %v1772
      %v1774 = vpop.f32.mrb[0].mxu0
      %v1775 = vadd.f32 %v501, %v1774
      %1776 = vmatprep.mubr.bf16.mxu0 %v961
      %1777 = vmatmul.mubr.bf16.gmra.mrb[0].mxu0 %v960
      %v1778 = vpop.f32.mrb[0].mxu0
      %v1779 = vadd.f32 %v497, %v1778
      %v1780 = vpop.f32.mrb[0].mxu0
      %v1781 = vadd.f32 %v501, %v1780
      %v1782 = vpop.f32.mrb[0].mxu0
      %v1783 = vadd.f32 %v497, %v1782
      %v1784 = vpop.f32.mrb[0].mxu0
      %v1785 = vadd.f32 %v501, %v1784
      %1786 = vmatprep.mubr.bf16.mxu0 %v967
      %1787 = vmatmul.mubr.bf16.gmra.mrb[0].mxu0 %v966
      %v1788 = vpop.f32.mrb[0].mxu0
      %v1789 = vadd.f32 %v497, %v1788
      %v1790 = vpop.f32.mrb[0].mxu0
      %v1791 = vadd.f32 %v501, %v1790
      %v1792 = vpop.f32.mrb[0].mxu0
      %v1793 = vadd.f32 %v497, %v1792
      %v1794 = vpop.f32.mrb[0].mxu0
      %v1795 = vadd.f32 %v501, %v1794
      %1796 = vmatprep.mubr.bf16.mxu0 %v973
      %1797 = vmatmul.mubr.bf16.gmra.mrb[0].mxu0 %v972
      %v1798 = vpop.f32.mrb[0].mxu0
      %v1799 = vadd.f32 %v497, %v1798
      %v1800 = vpop.f32.mrb[0].mxu0
      %v1801 = vadd.f32 %v501, %v1800
      %v1802 = vpop.f32.mrb[0].mxu0
      %v1803 = vadd.f32 %v497, %v1802
      %v1804 = vpop.f32.mrb[0].mxu0
      %v1805 = vadd.f32 %v501, %v1804
      %1806 = vmatprep.mubr.bf16.mxu0 %v979
      %1807 = vmatmul.mubr.bf16.gmra.mrb[0].mxu0 %v978
      %v1808 = vpop.f32.mrb[0].mxu0
      %v1809 = vadd.f32 %v497, %v1808
      %v1810 = vpop.f32.mrb[0].mxu0
      %v1811 = vadd.f32 %v501, %v1810
      %v1812 = vpop.f32.mrb[0].mxu0
      %v1813 = vadd.f32 %v497, %v1812
      %v1814 = vpop.f32.mrb[0].mxu0
      %v1815 = vadd.f32 %v501, %v1814
      %1816 = vmatprep.mubr.bf16.mxu0 %v985
      %1817 = vmatmul.mubr.bf16.gmra.mrb[0].mxu0 %v984
      %v1818 = vpop.f32.mrb[0].mxu0
      %v1819 = vadd.f32 %v497, %v1818
      %v1820 = vpop.f32.mrb[0].mxu0
      %v1821 = vadd.f32 %v501, %v1820
      %v1822 = vpop.f32.mrb[0].mxu0
      %v1823 = vadd.f32 %v497, %v1822
      %v1824 = vpop.f32.mrb[0].mxu0
      %v1825 = vadd.f32 %v501, %v1824
      %1826 = vmatprep.mubr.bf16.mxu0 %v991
      %1827 = vmatmul.mubr.bf16.gmra.mrb[0].mxu0 %v990
      %v1828 = vpop.f32.mrb[0].mxu0
      %v1829 = vadd.f32 %v497, %v1828
      %v1830 = vpop.f32.mrb[0].mxu0
      %v1831 = vadd.f32 %v501, %v1830
      %v1832 = vpop.f32.mrb[0].mxu0
      %v1833 = vadd.f32 %v497, %v1832
      %v1834 = vpop.f32.mrb[0].mxu0
      %v1835 = vadd.f32 %v501, %v1834
      %1836 = vmatprep.mubr.bf16.mxu0 %v997
      %1837 = vmatmul.mubr.bf16.gmra.mrb[0].mxu0 %v996
      %v1838 = vpop.f32.mrb[0].mxu0
      %v1839 = vadd.f32 %v497, %v1838
      %v1840 = vpop.f32.mrb[0].mxu0
      %v1841 = vadd.f32 %v501, %v1840
      %v1842 = vpop.f32.mrb[0].mxu0
      %v1843 = vadd.f32 %v497, %v1842
      %v1844 = vpop.f32.mrb[0].mxu0
      %v1845 = vadd.f32 %v501, %v1844
      %1846 = vmatprep.mubr.bf16.mxu0 %v1003
      %1847 = vmatmul.mubr.bf16.gmra.mrb[0].mxu0 %v1002
      %v1848 = vpop.f32.mrb[0].mxu0
      %v1849 = vadd.f32 %v497, %v1848
      %v1850 = vpop.f32.mrb[0].mxu0
      %v1851 = vadd.f32 %v501, %v1850
      %v1852 = vpop.f32.mrb[0].mxu0
      %v1853 = vadd.f32 %v497, %v1852
      %v1854 = vpop.f32.mrb[0].mxu0
      %v1855 = vadd.f32 %v501, %v1854
      %1856 = vmatprep.mubr.bf16.mxu0 %v1009
      %1857 = vmatmul.mubr.bf16.gmra.mrb[0].mxu0 %v1008
      %v1858 = vpop.f32.mrb[0].mxu0
      %v1859 = vadd.f32 %v497, %v1858
      %v1860 = vpop.f32.mrb[0].mxu0
      %v1861 = vadd.f32 %v501, %v1860
      %v1862 = vpop.f32.mrb[0].mxu0
      %v1863 = vadd.f32 %v497, %v1862
      %v1864 = vpop.f32.mrb[0].mxu0
      %v1865 = vadd.f32 %v501, %v1864
      %1866 = vmatprep.mubr.bf16.mxu0 %v1015
      %1867 = vmatmul.mubr.bf16.gmra.mrb[0].mxu0 %v1014
      %v1868 = vpop.f32.mrb[0].mxu0
      %v1869 = vadd.f32 %v497, %v1868
      %v1870 = vpop.f32.mrb[0].mxu0
      %v1871 = vadd.f32 %v501, %v1870
      %v1872 = vpop.f32.mrb[0].mxu0
      %v1873 = vadd.f32 %v497, %v1872
      %v1874 = vpop.f32.mrb[0].mxu0
      %v1875 = vadd.f32 %v501, %v1874
      %1876 = vmatprep.mubr.bf16.mxu0 %v1021
      %1877 = vmatmul.mubr.bf16.gmra.mrb[0].mxu0 %v1020
      %v1878 = vpop.f32.mrb[0].mxu0
      %v1879 = vadd.f32 %v497, %v1878
      %v1880 = vpop.f32.mrb[0].mxu0
      %v1881 = vadd.f32 %v501, %v1880
      %v1882 = vpop.f32.mrb[0].mxu0
      %v1883 = vadd.f32 %v497, %v1882
      %v1884 = vpop.f32.mrb[0].mxu0
      %v1885 = vadd.f32 %v501, %v1884
      %1886 = vmatprep.mubr.bf16.mxu0 %v1027
      %1887 = vmatmul.mubr.bf16.gmra.mrb[0].mxu0 %v1026
      %v1888 = vpop.f32.mrb[0].mxu0
      %v1889 = vadd.f32 %v497, %v1888
      %v1890 = vpop.f32.mrb[0].mxu0
      %v1891 = vadd.f32 %v501, %v1890
      %v1892 = vpop.f32.mrb[0].mxu0
      %v1893 = vadd.f32 %v497, %v1892
      %v1894 = vpop.f32.mrb[0].mxu0
      %v1895 = vadd.f32 %v501, %v1894
      %1896 = vmatprep.mubr.bf16.mxu0 %v1033
      %1897 = vmatmul.mubr.bf16.gmra.mrb[0].mxu0 %v1032
      %v1898 = vpop.f32.mrb[0].mxu0
      %v1899 = vadd.f32 %v497, %v1898
      %v1900 = vpop.f32.mrb[0].mxu0
      %v1901 = vadd.f32 %v501, %v1900
      %v1902 = vpop.f32.mrb[0].mxu0
      %v1903 = vadd.f32 %v497, %v1902
      %v1904 = vpop.f32.mrb[0].mxu0
      %v1905 = vadd.f32 %v501, %v1904
      %1906 = vmatprep.mubr.bf16.mxu0 %v1039
      %1907 = vmatmul.mubr.bf16.gmra.mrb[0].mxu0 %v1038
      %v1908 = vpop.f32.mrb[0].mxu0
      %v1909 = vadd.f32 %v497, %v1908
      %v1910 = vpop.f32.mrb[0].mxu0
      %v1911 = vadd.f32 %v501, %v1910
      %v1912 = vpop.f32.mrb[0].mxu0
      %v1913 = vadd.f32 %v497, %v1912
      %v1914 = vpop.f32.mrb[0].mxu0
      %v1915 = vadd.f32 %v501, %v1914
      %1916 = vmatprep.mubr.bf16.mxu0 %v1045
      %1917 = vmatmul.mubr.bf16.gmra.mrb[0].mxu0 %v1044
      %v1918 = vpop.f32.mrb[0].mxu0
      %v1919 = vadd.f32 %v497, %v1918
      %v1920 = vpop.f32.mrb[0].mxu0
      %v1921 = vadd.f32 %v501, %v1920
      %v1922 = vpop.f32.mrb[0].mxu0
      %v1923 = vadd.f32 %v497, %v1922
      %v1924 = vpop.f32.mrb[0].mxu0
      %v1925 = vadd.f32 %v501, %v1924
      %1926 = vmatprep.mubr.bf16.mxu0 %v1051
      %1927 = vmatmul.mubr.bf16.gmra.mrb[0].mxu0 %v1050
      %v1928 = vpop.f32.mrb[0].mxu0
      %v1929 = vadd.f32 %v497, %v1928
      %v1930 = vpop.f32.mrb[0].mxu0
      %v1931 = vadd.f32 %v501, %v1930
      %v1932 = vpop.f32.mrb[0].mxu0
      %v1933 = vadd.f32 %v497, %v1932
      %v1934 = vpop.f32.mrb[0].mxu0
      %v1935 = vadd.f32 %v501, %v1934
      %1936 = vmatprep.mubr.bf16.mxu0 %v1057
      %1937 = vmatmul.mubr.bf16.gmra.mrb[0].mxu0 %v1056
      %v1938 = vpop.f32.mrb[0].mxu0
      %v1939 = vadd.f32 %v497, %v1938
      %v1940 = vpop.f32.mrb[0].mxu0
      %v1941 = vadd.f32 %v501, %v1940
      %v1942 = vpop.f32.mrb[0].mxu0
      %v1943 = vadd.f32 %v497, %v1942
      %v1944 = vpop.f32.mrb[0].mxu0
      %v1945 = vadd.f32 %v501, %v1944
      %1946 = vmatprep.mubr.bf16.mxu0 %v1063
      %1947 = vmatmul.mubr.bf16.gmra.mrb[0].mxu0 %v1062
      %v1948 = vpop.f32.mrb[0].mxu0
      %v1949 = vadd.f32 %v497, %v1948
      %v1950 = vpop.f32.mrb[0].mxu0
      %v1951 = vadd.f32 %v501, %v1950
      %v1952 = vpop.f32.mrb[0].mxu0
      %v1953 = vadd.f32 %v497, %v1952
      %v1954 = vpop.f32.mrb[0].mxu0
      %v1955 = vadd.f32 %v501, %v1954
      %1956 = vmatprep.mubr.bf16.mxu0 %v1069
      %1957 = vmatmul.mubr.bf16.gmra.mrb[0].mxu0 %v1068
      %v1958 = vpop.f32.mrb[0].mxu0
      %v1959 = vadd.f32 %v497, %v1958
      %v1960 = vpop.f32.mrb[0].mxu0
      %v1961 = vadd.f32 %v501, %v1960
      %v1962 = vpop.f32.mrb[0].mxu0
      %v1963 = vadd.f32 %v497, %v1962
      %v1964 = vpop.f32.mrb[0].mxu0
      %v1965 = vadd.f32 %v501, %v1964
      %1966 = vmatprep.mubr.bf16.mxu0 %v1075
      %1967 = vmatmul.mubr.bf16.gmra.mrb[0].mxu0 %v1074
      %v1968 = vpop.f32.mrb[0].mxu0
      %v1969 = vadd.f32 %v497, %v1968
      %v1970 = vpop.f32.mrb[0].mxu0
      %v1971 = vadd.f32 %v501, %v1970
      %v1972 = vpop.f32.mrb[0].mxu0
      %v1973 = vadd.f32 %v497, %v1972
      %v1974 = vpop.f32.mrb[0].mxu0
      %v1975 = vadd.f32 %v501, %v1974
      %1976 = vdwg.mxu0
      %1977 = vmatprep.subr.bf16.mxu0 %v1545
      %1978 = vmatpush1.bf16.msra.mxu0 %v1544
      %1979 = vmatprep.subr.bf16.mxu0 %v1547
      %1980 = vmatpush1.bf16.msra.mxu0 %v1546
      %1981 = vmatprep.subr.bf16.mxu0 %v1549
      %1982 = vmatpush1.bf16.msra.mxu0 %v1548
      %1983 = vmatprep.subr.bf16.mxu0 %v1551
      %1984 = vmatpush1.bf16.msra.mxu0 %v1550
      %1985 = vmatprep.subr.bf16.mxu0 %v1553
      %1986 = vmatpush1.bf16.msra.mxu0 %v1552
      %1987 = vmatprep.subr.bf16.mxu0 %v1555
      %1988 = vmatpush1.bf16.msra.mxu0 %v1554
      %1989 = vmatprep.subr.bf16.mxu0 %v1557
      %1990 = vmatpush1.bf16.msra.mxu0 %v1556
      %1991 = vmatprep.subr.bf16.mxu0 %v1559
      %1992 = vmatpush1.bf16.msra.mxu0 %v1558
      %1993 = vmatprep.subr.bf16.mxu0 %v1561
      %1994 = vmatpush1.bf16.msra.mxu0 %v1560
      %1995 = vmatprep.subr.bf16.mxu0 %v1563
      %1996 = vmatpush1.bf16.msra.mxu0 %v1562
      %1997 = vmatprep.subr.bf16.mxu0 %v1565
      %1998 = vmatpush1.bf16.msra.mxu0 %v1564
      %1999 = vmatprep.subr.bf16.mxu0 %v1567
      %2000 = vmatpush1.bf16.msra.mxu0 %v1566
      %2001 = vmatprep.subr.bf16.mxu0 %v1569
      %2002 = vmatpush1.bf16.msra.mxu0 %v1568
      %2003 = vmatprep.subr.bf16.mxu0 %v1571
      %2004 = vmatpush1.bf16.msra.mxu0 %v1570
      %2005 = vmatprep.subr.bf16.mxu0 %v1573
      %2006 = vmatpush1.bf16.msra.mxu0 %v1572
      %2007 = vmatprep.subr.bf16.mxu0 %v1575
      %2008 = vmatpush1.bf16.msra.mxu0 %v1574
      %2009 = vmatprep.mubr.bf16.mxu0 %v939
      %2010 = vmatmul.mubr.bf16.gmra.mrb[0].mxu0 %v938
      %v2011 = vpop.f32.mrb[0].mxu0
      %v2012 = vadd.f32 %v1739, %v2011
      %v2013 = vpop.f32.mrb[0].mxu0
      %v2014 = vadd.f32 %v1741, %v2013
      %v2015 = vpop.f32.mrb[0].mxu0
      %v2016 = vadd.f32 %v1743, %v2015
      %v2017 = vpop.f32.mrb[0].mxu0
      %v2018 = vadd.f32 %v1745, %v2017
      %2019 = vmatprep.mubr.bf16.mxu0 %v945
      %2020 = vmatmul.mubr.bf16.gmra.mrb[0].mxu0 %v944
      %v2021 = vpop.f32.mrb[0].mxu0
      %v2022 = vadd.f32 %v1749, %v2021
      %v2023 = vpop.f32.mrb[0].mxu0
      %v2024 = vadd.f32 %v1751, %v2023
      %v2025 = vpop.f32.mrb[0].mxu0
      %v2026 = vadd.f32 %v1753, %v2025
      %v2027 = vpop.f32.mrb[0].mxu0
      %v2028 = vadd.f32 %v1755, %v2027
      %2029 = vmatprep.mubr.bf16.mxu0 %v951
      %2030 = vmatmul.mubr.bf16.gmra.mrb[0].mxu0 %v950
      %v2031 = vpop.f32.mrb[0].mxu0
      %v2032 = vadd.f32 %v1759, %v2031
      %v2033 = vpop.f32.mrb[0].mxu0
      %v2034 = vadd.f32 %v1761, %v2033
      %v2035 = vpop.f32.mrb[0].mxu0
      %v2036 = vadd.f32 %v1763, %v2035
      %v2037 = vpop.f32.mrb[0].mxu0
      %v2038 = vadd.f32 %v1765, %v2037
      %2039 = vmatprep.mubr.bf16.mxu0 %v957
      %2040 = vmatmul.mubr.bf16.gmra.mrb[0].mxu0 %v956
      %v2041 = vpop.f32.mrb[0].mxu0
      %v2042 = vadd.f32 %v1769, %v2041
      %v2043 = vpop.f32.mrb[0].mxu0
      %v2044 = vadd.f32 %v1771, %v2043
      %v2045 = vpop.f32.mrb[0].mxu0
      %v2046 = vadd.f32 %v1773, %v2045
      %v2047 = vpop.f32.mrb[0].mxu0
      %v2048 = vadd.f32 %v1775, %v2047
      %2049 = vmatprep.mubr.bf16.mxu0 %v963
      %2050 = vmatmul.mubr.bf16.gmra.mrb[0].mxu0 %v962
      %v2051 = vpop.f32.mrb[0].mxu0
      %v2052 = vadd.f32 %v1779, %v2051
      %v2053 = vpop.f32.mrb[0].mxu0
      %v2054 = vadd.f32 %v1781, %v2053
      %v2055 = vpop.f32.mrb[0].mxu0
      %v2056 = vadd.f32 %v1783, %v2055
      %v2057 = vpop.f32.mrb[0].mxu0
      %v2058 = vadd.f32 %v1785, %v2057
      %2059 = vmatprep.mubr.bf16.mxu0 %v969
      %2060 = vmatmul.mubr.bf16.gmra.mrb[0].mxu0 %v968
      %v2061 = vpop.f32.mrb[0].mxu0
      %v2062 = vadd.f32 %v1789, %v2061
      %v2063 = vpop.f32.mrb[0].mxu0
      %v2064 = vadd.f32 %v1791, %v2063
      %v2065 = vpop.f32.mrb[0].mxu0
      %v2066 = vadd.f32 %v1793, %v2065
      %v2067 = vpop.f32.mrb[0].mxu0
      %v2068 = vadd.f32 %v1795, %v2067
      %2069 = vmatprep.mubr.bf16.mxu0 %v975
      %2070 = vmatmul.mubr.bf16.gmra.mrb[0].mxu0 %v974
      %v2071 = vpop.f32.mrb[0].mxu0
      %v2072 = vadd.f32 %v1799, %v2071
      %v2073 = vpop.f32.mrb[0].mxu0
      %v2074 = vadd.f32 %v1801, %v2073
      %v2075 = vpop.f32.mrb[0].mxu0
      %v2076 = vadd.f32 %v1803, %v2075
      %v2077 = vpop.f32.mrb[0].mxu0
      %v2078 = vadd.f32 %v1805, %v2077
      %2079 = vmatprep.mubr.bf16.mxu0 %v981
      %2080 = vmatmul.mubr.bf16.gmra.mrb[0].mxu0 %v980
      %v2081 = vpop.f32.mrb[0].mxu0
      %v2082 = vadd.f32 %v1809, %v2081
      %v2083 = vpop.f32.mrb[0].mxu0
      %v2084 = vadd.f32 %v1811, %v2083
      %v2085 = vpop.f32.mrb[0].mxu0
      %v2086 = vadd.f32 %v1813, %v2085
      %v2087 = vpop.f32.mrb[0].mxu0
      %v2088 = vadd.f32 %v1815, %v2087
      %2089 = vmatprep.mubr.bf16.mxu0 %v987
      %2090 = vmatmul.mubr.bf16.gmra.mrb[0].mxu0 %v986
      %v2091 = vpop.f32.mrb[0].mxu0
      %v2092 = vadd.f32 %v1819, %v2091
      %v2093 = vpop.f32.mrb[0].mxu0
      %v2094 = vadd.f32 %v1821, %v2093
      %v2095 = vpop.f32.mrb[0].mxu0
      %v2096 = vadd.f32 %v1823, %v2095
      %v2097 = vpop.f32.mrb[0].mxu0
      %v2098 = vadd.f32 %v1825, %v2097
      %2099 = vmatprep.mubr.bf16.mxu0 %v993
      %2100 = vmatmul.mubr.bf16.gmra.mrb[0].mxu0 %v992
      %v2101 = vpop.f32.mrb[0].mxu0
      %v2102 = vadd.f32 %v1829, %v2101
      %v2103 = vpop.f32.mrb[0].mxu0
      %v2104 = vadd.f32 %v1831, %v2103
      %v2105 = vpop.f32.mrb[0].mxu0
      %v2106 = vadd.f32 %v1833, %v2105
      %v2107 = vpop.f32.mrb[0].mxu0
      %v2108 = vadd.f32 %v1835, %v2107
      %2109 = vmatprep.mubr.bf16.mxu0 %v999
      %2110 = vmatmul.mubr.bf16.gmra.mrb[0].mxu0 %v998
      %v2111 = vpop.f32.mrb[0].mxu0
      %v2112 = vadd.f32 %v1839, %v2111
      %v2113 = vpop.f32.mrb[0].mxu0
      %v2114 = vadd.f32 %v1841, %v2113
      %v2115 = vpop.f32.mrb[0].mxu0
      %v2116 = vadd.f32 %v1843, %v2115
      %v2117 = vpop.f32.mrb[0].mxu0
      %v2118 = vadd.f32 %v1845, %v2117
      %2119 = vmatprep.mubr.bf16.mxu0 %v1005
      %2120 = vmatmul.mubr.bf16.gmra.mrb[0].mxu0 %v1004
      %v2121 = vpop.f32.mrb[0].mxu0
      %v2122 = vadd.f32 %v1849, %v2121
      %v2123 = vpop.f32.mrb[0].mxu0
      %v2124 = vadd.f32 %v1851, %v2123
      %v2125 = vpop.f32.mrb[0].mxu0
      %v2126 = vadd.f32 %v1853, %v2125
      %v2127 = vpop.f32.mrb[0].mxu0
      %v2128 = vadd.f32 %v1855, %v2127
      %2129 = vmatprep.mubr.bf16.mxu0 %v1011
      %2130 = vmatmul.mubr.bf16.gmra.mrb[0].mxu0 %v1010
      %v2131 = vpop.f32.mrb[0].mxu0
      %v2132 = vadd.f32 %v1859, %v2131
      %v2133 = vpop.f32.mrb[0].mxu0
      %v2134 = vadd.f32 %v1861, %v2133
      %v2135 = vpop.f32.mrb[0].mxu0
      %v2136 = vadd.f32 %v1863, %v2135
      %v2137 = vpop.f32.mrb[0].mxu0
      %v2138 = vadd.f32 %v1865, %v2137
      %2139 = vmatprep.mubr.bf16.mxu0 %v1017
      %2140 = vmatmul.mubr.bf16.gmra.mrb[0].mxu0 %v1016
      %v2141 = vpop.f32.mrb[0].mxu0
      %v2142 = vadd.f32 %v1869, %v2141
      %v2143 = vpop.f32.mrb[0].mxu0
      %v2144 = vadd.f32 %v1871, %v2143
      %v2145 = vpop.f32.mrb[0].mxu0
      %v2146 = vadd.f32 %v1873, %v2145
      %v2147 = vpop.f32.mrb[0].mxu0
      %v2148 = vadd.f32 %v1875, %v2147
      %2149 = vmatprep.mubr.bf16.mxu0 %v1023
      %2150 = vmatmul.mubr.bf16.gmra.mrb[0].mxu0 %v1022
      %v2151 = vpop.f32.mrb[0].mxu0
      %v2152 = vadd.f32 %v1879, %v2151
      %v2153 = vpop.f32.mrb[0].mxu0
      %v2154 = vadd.f32 %v1881, %v2153
      %v2155 = vpop.f32.mrb[0].mxu0
      %v2156 = vadd.f32 %v1883, %v2155
      %v2157 = vpop.f32.mrb[0].mxu0
      %v2158 = vadd.f32 %v1885, %v2157
      %2159 = vmatprep.mubr.bf16.mxu0 %v1029
      %2160 = vmatmul.mubr.bf16.gmra.mrb[0].mxu0 %v1028
      %v2161 = vpop.f32.mrb[0].mxu0
      %v2162 = vadd.f32 %v1889, %v2161
      %v2163 = vpop.f32.mrb[0].mxu0
      %v2164 = vadd.f32 %v1891, %v2163
      %v2165 = vpop.f32.mrb[0].mxu0
      %v2166 = vadd.f32 %v1893, %v2165
      %v2167 = vpop.f32.mrb[0].mxu0
      %v2168 = vadd.f32 %v1895, %v2167
      %2169 = vmatprep.mubr.bf16.mxu0 %v1035
      %2170 = vmatmul.mubr.bf16.gmra.mrb[0].mxu0 %v1034
      %v2171 = vpop.f32.mrb[0].mxu0
      %v2172 = vadd.f32 %v1899, %v2171
      %v2173 = vpop.f32.mrb[0].mxu0
      %v2174 = vadd.f32 %v1901, %v2173
      %v2175 = vpop.f32.mrb[0].mxu0
      %v2176 = vadd.f32 %v1903, %v2175
      %v2177 = vpop.f32.mrb[0].mxu0
      %v2178 = vadd.f32 %v1905, %v2177
      %2179 = vmatprep.mubr.bf16.mxu0 %v1041
      %2180 = vmatmul.mubr.bf16.gmra.mrb[0].mxu0 %v1040
      %v2181 = vpop.f32.mrb[0].mxu0
      %v2182 = vadd.f32 %v1909, %v2181
      %v2183 = vpop.f32.mrb[0].mxu0
      %v2184 = vadd.f32 %v1911, %v2183
      %v2185 = vpop.f32.mrb[0].mxu0
      %v2186 = vadd.f32 %v1913, %v2185
      %v2187 = vpop.f32.mrb[0].mxu0
      %v2188 = vadd.f32 %v1915, %v2187
      %2189 = vmatprep.mubr.bf16.mxu0 %v1047
      %2190 = vmatmul.mubr.bf16.gmra.mrb[0].mxu0 %v1046
      %v2191 = vpop.f32.mrb[0].mxu0
      %v2192 = vadd.f32 %v1919, %v2191
      %v2193 = vpop.f32.mrb[0].mxu0
      %v2194 = vadd.f32 %v1921, %v2193
      %v2195 = vpop.f32.mrb[0].mxu0
      %v2196 = vadd.f32 %v1923, %v2195
      %v2197 = vpop.f32.mrb[0].mxu0
      %v2198 = vadd.f32 %v1925, %v2197
      %2199 = vmatprep.mubr.bf16.mxu0 %v1053
      %2200 = vmatmul.mubr.bf16.gmra.mrb[0].mxu0 %v1052
      %v2201 = vpop.f32.mrb[0].mxu0
      %v2202 = vadd.f32 %v1929, %v2201
      %v2203 = vpop.f32.mrb[0].mxu0
      %v2204 = vadd.f32 %v1931, %v2203
      %v2205 = vpop.f32.mrb[0].mxu0
      %v2206 = vadd.f32 %v1933, %v2205
      %v2207 = vpop.f32.mrb[0].mxu0
      %v2208 = vadd.f32 %v1935, %v2207
      %2209 = vmatprep.mubr.bf16.mxu0 %v1059
      %2210 = vmatmul.mubr.bf16.gmra.mrb[0].mxu0 %v1058
      %v2211 = vpop.f32.mrb[0].mxu0
      %v2212 = vadd.f32 %v1939, %v2211
      %v2213 = vpop.f32.mrb[0].mxu0
      %v2214 = vadd.f32 %v1941, %v2213
      %v2215 = vpop.f32.mrb[0].mxu0
      %v2216 = vadd.f32 %v1943, %v2215
      %v2217 = vpop.f32.mrb[0].mxu0
      %v2218 = vadd.f32 %v1945, %v2217
      %2219 = vmatprep.mubr.bf16.mxu0 %v1065
      %2220 = vmatmul.mubr.bf16.gmra.mrb[0].mxu0 %v1064
      %v2221 = vpop.f32.mrb[0].mxu0
      %v2222 = vadd.f32 %v1949, %v2221
      %v2223 = vpop.f32.mrb[0].mxu0
      %v2224 = vadd.f32 %v1951, %v2223
      %v2225 = vpop.f32.mrb[0].mxu0
      %v2226 = vadd.f32 %v1953, %v2225
      %v2227 = vpop.f32.mrb[0].mxu0
      %v2228 = vadd.f32 %v1955, %v2227
      %2229 = vmatprep.mubr.bf16.mxu0 %v1071
      %2230 = vmatmul.mubr.bf16.gmra.mrb[0].mxu0 %v1070
      %v2231 = vpop.f32.mrb[0].mxu0
      %v2232 = vadd.f32 %v1959, %v2231
      %v2233 = vpop.f32.mrb[0].mxu0
      %v2234 = vadd.f32 %v1961, %v2233
      %v2235 = vpop.f32.mrb[0].mxu0
      %v2236 = vadd.f32 %v1963, %v2235
      %v2237 = vpop.f32.mrb[0].mxu0
      %v2238 = vadd.f32 %v1965, %v2237
      %2239 = vmatprep.mubr.bf16.mxu0 %v1077
      %2240 = vmatmul.mubr.bf16.gmra.mrb[0].mxu0 %v1076
      %v2241 = vpop.f32.mrb[0].mxu0
      %v2242 = vadd.f32 %v1969, %v2241
      %v2243 = vpop.f32.mrb[0].mxu0
      %v2244 = vadd.f32 %v1971, %v2243
      %v2245 = vpop.f32.mrb[0].mxu0
      %v2246 = vadd.f32 %v1973, %v2245
      %v2247 = vpop.f32.mrb[0].mxu0
      %v2248 = vadd.f32 %v1975, %v2247
      %2249 = vdwg.mxu0
      %2250 = vmatprep.subr.bf16.mxu0 %v1577
      %2251 = vmatpush1.bf16.msra.mxu0 %v1576
      %2252 = vmatprep.subr.bf16.mxu0 %v1579
      %2253 = vmatpush1.bf16.msra.mxu0 %v1578
      %2254 = vmatprep.subr.bf16.mxu0 %v1581
      %2255 = vmatpush1.bf16.msra.mxu0 %v1580
      %2256 = vmatprep.subr.bf16.mxu0 %v1583
      %2257 = vmatpush1.bf16.msra.mxu0 %v1582
      %2258 = vmatprep.subr.bf16.mxu0 %v1585
      %2259 = vmatpush1.bf16.msra.mxu0 %v1584
      %2260 = vmatprep.subr.bf16.mxu0 %v1587
      %2261 = vmatpush1.bf16.msra.mxu0 %v1586
      %2262 = vmatprep.subr.bf16.mxu0 %v1589
      %2263 = vmatpush1.bf16.msra.mxu0 %v1588
      %2264 = vmatprep.subr.bf16.mxu0 %v1591
      %2265 = vmatpush1.bf16.msra.mxu0 %v1590
      %2266 = vmatprep.subr.bf16.mxu0 %v1593
      %2267 = vmatpush1.bf16.msra.mxu0 %v1592
      %2268 = vmatprep.subr.bf16.mxu0 %v1595
      %2269 = vmatpush1.bf16.msra.mxu0 %v1594
      %2270 = vmatprep.subr.bf16.mxu0 %v1597
      %2271 = vmatpush1.bf16.msra.mxu0 %v1596
      %2272 = vmatprep.subr.bf16.mxu0 %v1599
      %2273 = vmatpush1.bf16.msra.mxu0 %v1598
      %2274 = vmatprep.subr.bf16.mxu0 %v1601
      %2275 = vmatpush1.bf16.msra.mxu0 %v1600
      %2276 = vmatprep.subr.bf16.mxu0 %v1603
      %2277 = vmatpush1.bf16.msra.mxu0 %v1602
      %2278 = vmatprep.subr.bf16.mxu0 %v1605
      %2279 = vmatpush1.bf16.msra.mxu0 %v1604
      %2280 = vmatprep.subr.bf16.mxu0 %v1607
      %2281 = vmatpush1.bf16.msra.mxu0 %v1606
      %2282 = vmatprep.mubr.bf16.mxu0 %v941
      %2283 = vmatmul.mubr.bf16.gmra.mrb[0].mxu0 %v940
      %v2284 = vpop.f32.mrb[0].mxu0
      %v2285 = vadd.f32 %v2012, %v2284
      %v2286 = vpop.f32.mrb[0].mxu0
      %v2287 = vadd.f32 %v2014, %v2286
      %v2288 = vpop.f32.mrb[0].mxu0
      %v2289 = vadd.f32 %v2016, %v2288
      %v2290 = vpop.f32.mrb[0].mxu0
      %v2291 = vadd.f32 %v2018, %v2290
      %2292 = vmatprep.mubr.bf16.mxu0 %v947
      %2293 = vmatmul.mubr.bf16.gmra.mrb[0].mxu0 %v946
      %v2294 = vpop.f32.mrb[0].mxu0
      %v2295 = vadd.f32 %v2022, %v2294
      %v2296 = vpop.f32.mrb[0].mxu0
      %v2297 = vadd.f32 %v2024, %v2296
      %v2298 = vpop.f32.mrb[0].mxu0
      %v2299 = vadd.f32 %v2026, %v2298
      %v2300 = vpop.f32.mrb[0].mxu0
      %v2301 = vadd.f32 %v2028, %v2300
      %2302 = vmatprep.mubr.bf16.mxu0 %v953
      %2303 = vmatmul.mubr.bf16.gmra.mrb[0].mxu0 %v952
      %v2304 = vpop.f32.mrb[0].mxu0
      %v2305 = vadd.f32 %v2032, %v2304
      %v2306 = vpop.f32.mrb[0].mxu0
      %v2307 = vadd.f32 %v2034, %v2306
      %v2308 = vpop.f32.mrb[0].mxu0
      %v2309 = vadd.f32 %v2036, %v2308
      %v2310 = vpop.f32.mrb[0].mxu0
      %v2311 = vadd.f32 %v2038, %v2310
      %2312 = vmatprep.mubr.bf16.mxu0 %v959
      %2313 = vmatmul.mubr.bf16.gmra.mrb[0].mxu0 %v958
      %v2314 = vpop.f32.mrb[0].mxu0
      %v2315 = vadd.f32 %v2042, %v2314
      %v2316 = vpop.f32.mrb[0].mxu0
      %v2317 = vadd.f32 %v2044, %v2316
      %v2318 = vpop.f32.mrb[0].mxu0
      %v2319 = vadd.f32 %v2046, %v2318
      %v2320 = vpop.f32.mrb[0].mxu0
      %v2321 = vadd.f32 %v2048, %v2320
      %2322 = vmatprep.mubr.bf16.mxu0 %v965
      %2323 = vmatmul.mubr.bf16.gmra.mrb[0].mxu0 %v964
      %v2324 = vpop.f32.mrb[0].mxu0
      %v2325 = vadd.f32 %v2052, %v2324
      %v2326 = vpop.f32.mrb[0].mxu0
      %v2327 = vadd.f32 %v2054, %v2326
      %v2328 = vpop.f32.mrb[0].mxu0
      %v2329 = vadd.f32 %v2056, %v2328
      %v2330 = vpop.f32.mrb[0].mxu0
      %v2331 = vadd.f32 %v2058, %v2330
      %2332 = vmatprep.mubr.bf16.mxu0 %v971
      %2333 = vmatmul.mubr.bf16.gmra.mrb[0].mxu0 %v970
      %v2334 = vpop.f32.mrb[0].mxu0
      %v2335 = vadd.f32 %v2062, %v2334
      %v2336 = vpop.f32.mrb[0].mxu0
      %v2337 = vadd.f32 %v2064, %v2336
      %v2338 = vpop.f32.mrb[0].mxu0
      %v2339 = vadd.f32 %v2066, %v2338
      %v2340 = vpop.f32.mrb[0].mxu0
      %v2341 = vadd.f32 %v2068, %v2340
      %2342 = vmatprep.mubr.bf16.mxu0 %v977
      %2343 = vmatmul.mubr.bf16.gmra.mrb[0].mxu0 %v976
      %v2344 = vpop.f32.mrb[0].mxu0
      %v2345 = vadd.f32 %v2072, %v2344
      %v2346 = vpop.f32.mrb[0].mxu0
      %v2347 = vadd.f32 %v2074, %v2346
      %v2348 = vpop.f32.mrb[0].mxu0
      %v2349 = vadd.f32 %v2076, %v2348
      %v2350 = vpop.f32.mrb[0].mxu0
      %v2351 = vadd.f32 %v2078, %v2350
      %2352 = vmatprep.mubr.bf16.mxu0 %v983
      %2353 = vmatmul.mubr.bf16.gmra.mrb[0].mxu0 %v982
      %v2354 = vpop.f32.mrb[0].mxu0
      %v2355 = vadd.f32 %v2082, %v2354
      %v2356 = vpop.f32.mrb[0].mxu0
      %v2357 = vadd.f32 %v2084, %v2356
      %v2358 = vpop.f32.mrb[0].mxu0
      %v2359 = vadd.f32 %v2086, %v2358
      %v2360 = vpop.f32.mrb[0].mxu0
      %v2361 = vadd.f32 %v2088, %v2360
      %2362 = vmatprep.mubr.bf16.mxu0 %v989
      %2363 = vmatmul.mubr.bf16.gmra.mrb[0].mxu0 %v988
      %v2364 = vpop.f32.mrb[0].mxu0
      %v2365 = vadd.f32 %v2092, %v2364
      %v2366 = vpop.f32.mrb[0].mxu0
      %v2367 = vadd.f32 %v2094, %v2366
      %v2368 = vpop.f32.mrb[0].mxu0
      %v2369 = vadd.f32 %v2096, %v2368
      %v2370 = vpop.f32.mrb[0].mxu0
      %v2371 = vadd.f32 %v2098, %v2370
      %2372 = vmatprep.mubr.bf16.mxu0 %v995
      %2373 = vmatmul.mubr.bf16.gmra.mrb[0].mxu0 %v994
      %v2374 = vpop.f32.mrb[0].mxu0
      %v2375 = vadd.f32 %v2102, %v2374
      %v2376 = vpop.f32.mrb[0].mxu0
      %v2377 = vadd.f32 %v2104, %v2376
      %v2378 = vpop.f32.mrb[0].mxu0
      %v2379 = vadd.f32 %v2106, %v2378
      %v2380 = vpop.f32.mrb[0].mxu0
      %v2381 = vadd.f32 %v2108, %v2380
      %2382 = vmatprep.mubr.bf16.mxu0 %v1001
      %2383 = vmatmul.mubr.bf16.gmra.mrb[0].mxu0 %v1000
      %v2384 = vpop.f32.mrb[0].mxu0
      %v2385 = vadd.f32 %v2112, %v2384
      %v2386 = vpop.f32.mrb[0].mxu0
      %v2387 = vadd.f32 %v2114, %v2386
      %v2388 = vpop.f32.mrb[0].mxu0
      %v2389 = vadd.f32 %v2116, %v2388
      %v2390 = vpop.f32.mrb[0].mxu0
      %v2391 = vadd.f32 %v2118, %v2390
      %2392 = vmatprep.mubr.bf16.mxu0 %v1007
      %2393 = vmatmul.mubr.bf16.gmra.mrb[0].mxu0 %v1006
      %v2394 = vpop.f32.mrb[0].mxu0
      %v2395 = vadd.f32 %v2122, %v2394
      %v2396 = vpop.f32.mrb[0].mxu0
      %v2397 = vadd.f32 %v2124, %v2396
      %v2398 = vpop.f32.mrb[0].mxu0
      %v2399 = vadd.f32 %v2126, %v2398
      %v2400 = vpop.f32.mrb[0].mxu0
      %v2401 = vadd.f32 %v2128, %v2400
      %2402 = vmatprep.mubr.bf16.mxu0 %v1013
      %2403 = vmatmul.mubr.bf16.gmra.mrb[0].mxu0 %v1012
      %v2404 = vpop.f32.mrb[0].mxu0
      %v2405 = vadd.f32 %v2132, %v2404
      %v2406 = vpop.f32.mrb[0].mxu0
      %v2407 = vadd.f32 %v2134, %v2406
      %v2408 = vpop.f32.mrb[0].mxu0
      %v2409 = vadd.f32 %v2136, %v2408
      %v2410 = vpop.f32.mrb[0].mxu0
      %v2411 = vadd.f32 %v2138, %v2410
      %2412 = vmatprep.mubr.bf16.mxu0 %v1019
      %2413 = vmatmul.mubr.bf16.gmra.mrb[0].mxu0 %v1018
      %v2414 = vpop.f32.mrb[0].mxu0
      %v2415 = vadd.f32 %v2142, %v2414
      %v2416 = vpop.f32.mrb[0].mxu0
      %v2417 = vadd.f32 %v2144, %v2416
      %v2418 = vpop.f32.mrb[0].mxu0
      %v2419 = vadd.f32 %v2146, %v2418
      %v2420 = vpop.f32.mrb[0].mxu0
      %v2421 = vadd.f32 %v2148, %v2420
      %2422 = vmatprep.mubr.bf16.mxu0 %v1025
      %2423 = vmatmul.mubr.bf16.gmra.mrb[0].mxu0 %v1024
      %v2424 = vpop.f32.mrb[0].mxu0
      %v2425 = vadd.f32 %v2152, %v2424
      %v2426 = vpop.f32.mrb[0].mxu0
      %v2427 = vadd.f32 %v2154, %v2426
      %v2428 = vpop.f32.mrb[0].mxu0
      %v2429 = vadd.f32 %v2156, %v2428
      %v2430 = vpop.f32.mrb[0].mxu0
      %v2431 = vadd.f32 %v2158, %v2430
      %2432 = vmatprep.mubr.bf16.mxu0 %v1031
      %2433 = vmatmul.mubr.bf16.gmra.mrb[0].mxu0 %v1030
      %v2434 = vpop.f32.mrb[0].mxu0
      %v2435 = vadd.f32 %v2162, %v2434
      %v2436 = vpop.f32.mrb[0].mxu0
      %v2437 = vadd.f32 %v2164, %v2436
      %v2438 = vpop.f32.mrb[0].mxu0
      %v2439 = vadd.f32 %v2166, %v2438
      %v2440 = vpop.f32.mrb[0].mxu0
      %v2441 = vadd.f32 %v2168, %v2440
      %2442 = vmatprep.mubr.bf16.mxu0 %v1037
      %2443 = vmatmul.mubr.bf16.gmra.mrb[0].mxu0 %v1036
      %v2444 = vpop.f32.mrb[0].mxu0
      %v2445 = vadd.f32 %v2172, %v2444
      %v2446 = vpop.f32.mrb[0].mxu0
      %v2447 = vadd.f32 %v2174, %v2446
      %v2448 = vpop.f32.mrb[0].mxu0
      %v2449 = vadd.f32 %v2176, %v2448
      %v2450 = vpop.f32.mrb[0].mxu0
      %v2451 = vadd.f32 %v2178, %v2450
      %2452 = vmatprep.mubr.bf16.mxu0 %v1043
      %2453 = vmatmul.mubr.bf16.gmra.mrb[0].mxu0 %v1042
      %v2454 = vpop.f32.mrb[0].mxu0
      %v2455 = vadd.f32 %v2182, %v2454
      %v2456 = vpop.f32.mrb[0].mxu0
      %v2457 = vadd.f32 %v2184, %v2456
      %v2458 = vpop.f32.mrb[0].mxu0
      %v2459 = vadd.f32 %v2186, %v2458
      %v2460 = vpop.f32.mrb[0].mxu0
      %v2461 = vadd.f32 %v2188, %v2460
      %2462 = vmatprep.mubr.bf16.mxu0 %v1049
      %2463 = vmatmul.mubr.bf16.gmra.mrb[0].mxu0 %v1048
      %v2464 = vpop.f32.mrb[0].mxu0
      %v2465 = vadd.f32 %v2192, %v2464
      %v2466 = vpop.f32.mrb[0].mxu0
      %v2467 = vadd.f32 %v2194, %v2466
      %v2468 = vpop.f32.mrb[0].mxu0
      %v2469 = vadd.f32 %v2196, %v2468
      %v2470 = vpop.f32.mrb[0].mxu0
      %v2471 = vadd.f32 %v2198, %v2470
      %2472 = vmatprep.mubr.bf16.mxu0 %v1055
      %2473 = vmatmul.mubr.bf16.gmra.mrb[0].mxu0 %v1054
      %v2474 = vpop.f32.mrb[0].mxu0
      %v2475 = vadd.f32 %v2202, %v2474
      %v2476 = vpop.f32.mrb[0].mxu0
      %v2477 = vadd.f32 %v2204, %v2476
      %v2478 = vpop.f32.mrb[0].mxu0
      %v2479 = vadd.f32 %v2206, %v2478
      %v2480 = vpop.f32.mrb[0].mxu0
      %v2481 = vadd.f32 %v2208, %v2480
      %2482 = vmatprep.mubr.bf16.mxu0 %v1061
      %2483 = vmatmul.mubr.bf16.gmra.mrb[0].mxu0 %v1060
      %v2484 = vpop.f32.mrb[0].mxu0
      %v2485 = vadd.f32 %v2212, %v2484
      %v2486 = vpop.f32.mrb[0].mxu0
      %v2487 = vadd.f32 %v2214, %v2486
      %v2488 = vpop.f32.mrb[0].mxu0
      %v2489 = vadd.f32 %v2216, %v2488
      %v2490 = vpop.f32.mrb[0].mxu0
      %v2491 = vadd.f32 %v2218, %v2490
      %2492 = vmatprep.mubr.bf16.mxu0 %v1067
      %2493 = vmatmul.mubr.bf16.gmra.mrb[0].mxu0 %v1066
      %v2494 = vpop.f32.mrb[0].mxu0
      %v2495 = vadd.f32 %v2222, %v2494
      %v2496 = vpop.f32.mrb[0].mxu0
      %v2497 = vadd.f32 %v2224, %v2496
      %v2498 = vpop.f32.mrb[0].mxu0
      %v2499 = vadd.f32 %v2226, %v2498
      %v2500 = vpop.f32.mrb[0].mxu0
      %v2501 = vadd.f32 %v2228, %v2500
      %2502 = vmatprep.mubr.bf16.mxu0 %v1073
      %2503 = vmatmul.mubr.bf16.gmra.mrb[0].mxu0 %v1072
      %v2504 = vpop.f32.mrb[0].mxu0
      %v2505 = vadd.f32 %v2232, %v2504
      %v2506 = vpop.f32.mrb[0].mxu0
      %v2507 = vadd.f32 %v2234, %v2506
      %v2508 = vpop.f32.mrb[0].mxu0
      %v2509 = vadd.f32 %v2236, %v2508
      %v2510 = vpop.f32.mrb[0].mxu0
      %v2511 = vadd.f32 %v2238, %v2510
      %2512 = vmatprep.mubr.bf16.mxu0 %v1079
      %2513 = vmatmul.mubr.bf16.gmra.mrb[0].mxu0 %v1078
      %v2514 = vpop.f32.mrb[0].mxu0
      %v2515 = vadd.f32 %v2242, %v2514
      %v2516 = vpop.f32.mrb[0].mxu0
      %v2517 = vadd.f32 %v2244, %v2516
      %v2518 = vpop.f32.mrb[0].mxu0
      %v2519 = vadd.f32 %v2246, %v2518
      %v2520 = vpop.f32.mrb[0].mxu0
      %v2521 = vadd.f32 %v2248, %v2520
      %2522 = vdwg.mxu0
      %v2523 = vsub.f32 0.0, %v2287
      %v2524 = vsub.f32 0.0, %v2291
      %v2525 = vsub.f32 0.0, %v2297
      %v2526 = vsub.f32 0.0, %v2301
      %v2527 = vsub.f32 0.0, %v2307
      %v2528 = vsub.f32 0.0, %v2311
      %v2529 = vsub.f32 0.0, %v2317
      %v2530 = vsub.f32 0.0, %v2321
      %v2531 = vsub.f32 0.0, %v2327
      %v2532 = vsub.f32 0.0, %v2331
      %v2533 = vsub.f32 0.0, %v2337
      %v2534 = vsub.f32 0.0, %v2341
      %v2535 = vsub.f32 0.0, %v2347
      %v2536 = vsub.f32 0.0, %v2351
      %v2537 = vsub.f32 0.0, %v2357
      %v2538 = vsub.f32 0.0, %v2361
      %v2539 = vsub.f32 0.0, %v2367
      %v2540 = vsub.f32 0.0, %v2371
      %v2541 = vsub.f32 0.0, %v2377
      %v2542 = vsub.f32 0.0, %v2381
      %v2543 = vsub.f32 0.0, %v2387
      %v2544 = vsub.f32 0.0, %v2391
      %v2545 = vsub.f32 0.0, %v2397
      %v2546 = vsub.f32 0.0, %v2401
      %v2547 = vsub.f32 0.0, %v2407
      %v2548 = vsub.f32 0.0, %v2411
      %v2549 = vsub.f32 0.0, %v2417
      %v2550 = vsub.f32 0.0, %v2421
      %v2551 = vsub.f32 0.0, %v2427
      %v2552 = vsub.f32 0.0, %v2431
      %v2553 = vsub.f32 0.0, %v2437
      %v2554 = vsub.f32 0.0, %v2441
      %v2555 = vsub.f32 0.0, %v2447
      %v2556 = vsub.f32 0.0, %v2451
      %v2557 = vsub.f32 0.0, %v2457
      %v2558 = vsub.f32 0.0, %v2461
      %v2559 = vsub.f32 0.0, %v2467
      %v2560 = vsub.f32 0.0, %v2471
      %v2561 = vsub.f32 0.0, %v2477
      %v2562 = vsub.f32 0.0, %v2481
      %v2563 = vsub.f32 0.0, %v2487
      %v2564 = vsub.f32 0.0, %v2491
      %v2565 = vsub.f32 0.0, %v2497
      %v2566 = vsub.f32 0.0, %v2501
      %v2567 = vsub.f32 0.0, %v2507
      %v2568 = vsub.f32 0.0, %v2511
      %v2569 = vsub.f32 0.0, %v2517
      %v2570 = vsub.f32 0.0, %v2521
      %v2571 = vmul.f32 %v2523, 1.442695
      %v2572 = vpow.pop %v2571
      %v2573 = vmul.f32 %v2524, 1.442695
      %v2574 = vpow.pop %v2573
      %v2575 = vmul.f32 %v2525, 1.442695
      %v2576 = vpow.pop %v2575
      %v2577 = vmul.f32 %v2526, 1.442695
      %v2578 = vpow.pop %v2577
      %v2579 = vmul.f32 %v2527, 1.442695
      %v2580 = vpow.pop %v2579
      %v2581 = vmul.f32 %v2528, 1.442695
      %v2582 = vpow.pop %v2581
      %v2583 = vmul.f32 %v2529, 1.442695
      %v2584 = vpow.pop %v2583
      %v2585 = vmul.f32 %v2530, 1.442695
      %v2586 = vpow.pop %v2585
      %v2587 = vmul.f32 %v2531, 1.442695
      %v2588 = vpow.pop %v2587
      %v2589 = vmul.f32 %v2532, 1.442695
      %v2590 = vpow.pop %v2589
      %v2591 = vmul.f32 %v2533, 1.442695
      %v2592 = vpow.pop %v2591
      %v2593 = vmul.f32 %v2534, 1.442695
      %v2594 = vpow.pop %v2593
      %v2595 = vmul.f32 %v2535, 1.442695
      %v2596 = vpow.pop %v2595
      %v2597 = vmul.f32 %v2536, 1.442695
      %v2598 = vpow.pop %v2597
      %v2599 = vmul.f32 %v2537, 1.442695
      %v2600 = vpow.pop %v2599
      %v2601 = vmul.f32 %v2538, 1.442695
      %v2602 = vpow.pop %v2601
      %v2603 = vmul.f32 %v2539, 1.442695
      %v2604 = vpow.pop %v2603
      %v2605 = vmul.f32 %v2540, 1.442695
      %v2606 = vpow.pop %v2605
      %v2607 = vmul.f32 %v2541, 1.442695
      %v2608 = vpow.pop %v2607
      %v2609 = vmul.f32 %v2542, 1.442695
      %v2610 = vpow.pop %v2609
      %v2611 = vmul.f32 %v2543, 1.442695
      %v2612 = vpow.pop %v2611
      %v2613 = vmul.f32 %v2544, 1.442695
      %v2614 = vpow.pop %v2613
      %v2615 = vmul.f32 %v2545, 1.442695
      %v2616 = vpow.pop %v2615
      %v2617 = vmul.f32 %v2546, 1.442695
      %v2618 = vpow.pop %v2617
      %v2619 = vmul.f32 %v2547, 1.442695
      %v2620 = vpow.pop %v2619
      %v2621 = vmul.f32 %v2548, 1.442695
      %v2622 = vpow.pop %v2621
      %v2623 = vmul.f32 %v2549, 1.442695
      %v2624 = vpow.pop %v2623
      %v2625 = vmul.f32 %v2550, 1.442695
      %v2626 = vpow.pop %v2625
      %v2627 = vmul.f32 %v2551, 1.442695
      %v2628 = vpow.pop %v2627
      %v2629 = vmul.f32 %v2552, 1.442695
      %v2630 = vpow.pop %v2629
      %v2631 = vmul.f32 %v2553, 1.442695
      %v2632 = vpow.pop %v2631
      %v2633 = vmul.f32 %v2554, 1.442695
      %v2634 = vpow.pop %v2633
      %v2635 = vmul.f32 %v2555, 1.442695
      %v2636 = vpow.pop %v2635
      %v2637 = vmul.f32 %v2556, 1.442695
      %v2638 = vpow.pop %v2637
      %v2639 = vmul.f32 %v2557, 1.442695
      %v2640 = vpow.pop %v2639
      %v2641 = vmul.f32 %v2558, 1.442695
      %v2642 = vpow.pop %v2641
      %v2643 = vmul.f32 %v2559, 1.442695
      %v2644 = vpow.pop %v2643
      %v2645 = vmul.f32 %v2560, 1.442695
      %v2646 = vpow.pop %v2645
      %v2647 = vmul.f32 %v2561, 1.442695
      %v2648 = vpow.pop %v2647
      %v2649 = vmul.f32 %v2562, 1.442695
      %v2650 = vpow.pop %v2649
      %v2651 = vmul.f32 %v2563, 1.442695
      %v2652 = vpow.pop %v2651
      %v2653 = vmul.f32 %v2564, 1.442695
      %v2654 = vpow.pop %v2653
      %v2655 = vmul.f32 %v2565, 1.442695
      %v2656 = vpow.pop %v2655
      %v2657 = vmul.f32 %v2566, 1.442695
      %v2658 = vpow.pop %v2657
      %v2659 = vmul.f32 %v2567, 1.442695
      %v2660 = vpow.pop %v2659
      %v2661 = vmul.f32 %v2568, 1.442695
      %v2662 = vpow.pop %v2661
      %v2663 = vmul.f32 %v2569, 1.442695
      %v2664 = vpow.pop %v2663
      %v2665 = vmul.f32 %v2570, 1.442695
      %v2666 = vpow.pop %v2665
      %v2667 = vadd.f32 %v2572, 1.0
      %v2668 = vadd.f32 %v2574, 1.0
      %v2669 = vadd.f32 %v2576, 1.0
      %v2670 = vadd.f32 %v2578, 1.0
      %v2671 = vadd.f32 %v2580, 1.0
      %v2672 = vadd.f32 %v2582, 1.0
      %v2673 = vadd.f32 %v2584, 1.0
      %v2674 = vadd.f32 %v2586, 1.0
      %v2675 = vadd.f32 %v2588, 1.0
      %v2676 = vadd.f32 %v2590, 1.0
      %v2677 = vadd.f32 %v2592, 1.0
      %v2678 = vadd.f32 %v2594, 1.0
      %v2679 = vadd.f32 %v2596, 1.0
      %v2680 = vadd.f32 %v2598, 1.0
      %v2681 = vadd.f32 %v2600, 1.0
      %v2682 = vadd.f32 %v2602, 1.0
      %v2683 = vadd.f32 %v2604, 1.0
      %v2684 = vadd.f32 %v2606, 1.0
      %v2685 = vadd.f32 %v2608, 1.0
      %v2686 = vadd.f32 %v2610, 1.0
      %v2687 = vadd.f32 %v2612, 1.0
      %v2688 = vadd.f32 %v2614, 1.0
      %v2689 = vadd.f32 %v2616, 1.0
      %v2690 = vadd.f32 %v2618, 1.0
      %v2691 = vadd.f32 %v2620, 1.0
      %v2692 = vadd.f32 %v2622, 1.0
      %v2693 = vadd.f32 %v2624, 1.0
      %v2694 = vadd.f32 %v2626, 1.0
      %v2695 = vadd.f32 %v2628, 1.0
      %v2696 = vadd.f32 %v2630, 1.0
      %v2697 = vadd.f32 %v2632, 1.0
      %v2698 = vadd.f32 %v2634, 1.0
      %v2699 = vadd.f32 %v2636, 1.0
      %v2700 = vadd.f32 %v2638, 1.0
      %v2701 = vadd.f32 %v2640, 1.0
      %v2702 = vadd.f32 %v2642, 1.0
      %v2703 = vadd.f32 %v2644, 1.0
      %v2704 = vadd.f32 %v2646, 1.0
      %v2705 = vadd.f32 %v2648, 1.0
      %v2706 = vadd.f32 %v2650, 1.0
      %v2707 = vadd.f32 %v2652, 1.0
      %v2708 = vadd.f32 %v2654, 1.0
      %v2709 = vadd.f32 %v2656, 1.0
      %v2710 = vadd.f32 %v2658, 1.0
      %v2711 = vadd.f32 %v2660, 1.0
      %v2712 = vadd.f32 %v2662, 1.0
      %v2713 = vadd.f32 %v2664, 1.0
      %v2714 = vadd.f32 %v2666, 1.0
      %v2715 = vrcp.pop %v2667
      %v2716 = vmul.f32 1.0, %v2715
      %v2717 = vrcp.pop %v2668
      %v2718 = vmul.f32 1.0, %v2717
      %v2719 = vrcp.pop %v2669
      %v2720 = vmul.f32 1.0, %v2719
      %v2721 = vrcp.pop %v2670
      %v2722 = vmul.f32 1.0, %v2721
      %v2723 = vrcp.pop %v2671
      %v2724 = vmul.f32 1.0, %v2723
      %v2725 = vrcp.pop %v2672
      %v2726 = vmul.f32 1.0, %v2725
      %v2727 = vrcp.pop %v2673
      %v2728 = vmul.f32 1.0, %v2727
      %v2729 = vrcp.pop %v2674
      %v2730 = vmul.f32 1.0, %v2729
      %v2731 = vrcp.pop %v2675
      %v2732 = vmul.f32 1.0, %v2731
      %v2733 = vrcp.pop %v2676
      %v2734 = vmul.f32 1.0, %v2733
      %v2735 = vrcp.pop %v2677
      %v2736 = vmul.f32 1.0, %v2735
      %v2737 = vrcp.pop %v2678
      %v2738 = vmul.f32 1.0, %v2737
      %v2739 = vrcp.pop %v2679
      %v2740 = vmul.f32 1.0, %v2739
      %v2741 = vrcp.pop %v2680
      %v2742 = vmul.f32 1.0, %v2741
      %v2743 = vrcp.pop %v2681
      %v2744 = vmul.f32 1.0, %v2743
      %v2745 = vrcp.pop %v2682
      %v2746 = vmul.f32 1.0, %v2745
      %v2747 = vrcp.pop %v2683
      %v2748 = vmul.f32 1.0, %v2747
      %v2749 = vrcp.pop %v2684
      %v2750 = vmul.f32 1.0, %v2749
      %v2751 = vrcp.pop %v2685
      %v2752 = vmul.f32 1.0, %v2751
      %v2753 = vrcp.pop %v2686
      %v2754 = vmul.f32 1.0, %v2753
      %v2755 = vrcp.pop %v2687
      %v2756 = vmul.f32 1.0, %v2755
      %v2757 = vrcp.pop %v2688
      %v2758 = vmul.f32 1.0, %v2757
      %v2759 = vrcp.pop %v2689
      %v2760 = vmul.f32 1.0, %v2759
      %v2761 = vrcp.pop %v2690
      %v2762 = vmul.f32 1.0, %v2761
      %v2763 = vrcp.pop %v2691
      %v2764 = vmul.f32 1.0, %v2763
      %v2765 = vrcp.pop %v2692
      %v2766 = vmul.f32 1.0, %v2765
      %v2767 = vrcp.pop %v2693
      %v2768 = vmul.f32 1.0, %v2767
      %v2769 = vrcp.pop %v2694
      %v2770 = vmul.f32 1.0, %v2769
      %v2771 = vrcp.pop %v2695
      %v2772 = vmul.f32 1.0, %v2771
      %v2773 = vrcp.pop %v2696
      %v2774 = vmul.f32 1.0, %v2773
      %v2775 = vrcp.pop %v2697
      %v2776 = vmul.f32 1.0, %v2775
      %v2777 = vrcp.pop %v2698
      %v2778 = vmul.f32 1.0, %v2777
      %v2779 = vrcp.pop %v2699
      %v2780 = vmul.f32 1.0, %v2779
      %v2781 = vrcp.pop %v2700
      %v2782 = vmul.f32 1.0, %v2781
      %v2783 = vrcp.pop %v2701
      %v2784 = vmul.f32 1.0, %v2783
      %v2785 = vrcp.pop %v2702
      %v2786 = vmul.f32 1.0, %v2785
      %v2787 = vrcp.pop %v2703
      %v2788 = vmul.f32 1.0, %v2787
      %v2789 = vrcp.pop %v2704
      %v2790 = vmul.f32 1.0, %v2789
      %v2791 = vrcp.pop %v2705
      %v2792 = vmul.f32 1.0, %v2791
      %v2793 = vrcp.pop %v2706
      %v2794 = vmul.f32 1.0, %v2793
      %v2795 = vrcp.pop %v2707
      %v2796 = vmul.f32 1.0, %v2795
      %v2797 = vrcp.pop %v2708
      %v2798 = vmul.f32 1.0, %v2797
      %v2799 = vrcp.pop %v2709
      %v2800 = vmul.f32 1.0, %v2799
      %v2801 = vrcp.pop %v2710
      %v2802 = vmul.f32 1.0, %v2801
      %v2803 = vrcp.pop %v2711
      %v2804 = vmul.f32 1.0, %v2803
      %v2805 = vrcp.pop %v2712
      %v2806 = vmul.f32 1.0, %v2805
      %v2807 = vrcp.pop %v2713
      %v2808 = vmul.f32 1.0, %v2807
      %v2809 = vrcp.pop %v2714
      %v2810 = vmul.f32 1.0, %v2809
      %v2811 = vmul.f32 %v2285, %v2716
      %v2812 = vmul.f32 %v2289, %v2718
      %v2813 = vmul.f32 %v2295, %v2720
      %v2814 = vmul.f32 %v2299, %v2722
      %v2815 = vmul.f32 %v2305, %v2724
      %v2816 = vmul.f32 %v2309, %v2726
      %v2817 = vmul.f32 %v2315, %v2728
      %v2818 = vmul.f32 %v2319, %v2730
      %v2819 = vmul.f32 %v2325, %v2732
      %v2820 = vmul.f32 %v2329, %v2734
      %v2821 = vmul.f32 %v2335, %v2736
      %v2822 = vmul.f32 %v2339, %v2738
      %v2823 = vmul.f32 %v2345, %v2740
      %v2824 = vmul.f32 %v2349, %v2742
      %v2825 = vmul.f32 %v2355, %v2744
      %v2826 = vmul.f32 %v2359, %v2746
      %v2827 = vmul.f32 %v2365, %v2748
      %v2828 = vmul.f32 %v2369, %v2750
      %v2829 = vmul.f32 %v2375, %v2752
      %v2830 = vmul.f32 %v2379, %v2754
      %v2831 = vmul.f32 %v2385, %v2756
      %v2832 = vmul.f32 %v2389, %v2758
      %v2833 = vmul.f32 %v2395, %v2760
      %v2834 = vmul.f32 %v2399, %v2762
      %v2835 = vmul.f32 %v2405, %v2764
      %v2836 = vmul.f32 %v2409, %v2766
      %v2837 = vmul.f32 %v2415, %v2768
      %v2838 = vmul.f32 %v2419, %v2770
      %v2839 = vmul.f32 %v2425, %v2772
      %v2840 = vmul.f32 %v2429, %v2774
      %v2841 = vmul.f32 %v2435, %v2776
      %v2842 = vmul.f32 %v2439, %v2778
      %v2843 = vmul.f32 %v2445, %v2780
      %v2844 = vmul.f32 %v2449, %v2782
      %v2845 = vmul.f32 %v2455, %v2784
      %v2846 = vmul.f32 %v2459, %v2786
      %v2847 = vmul.f32 %v2465, %v2788
      %v2848 = vmul.f32 %v2469, %v2790
      %v2849 = vmul.f32 %v2475, %v2792
      %v2850 = vmul.f32 %v2479, %v2794
      %v2851 = vmul.f32 %v2485, %v2796
      %v2852 = vmul.f32 %v2489, %v2798
      %v2853 = vmul.f32 %v2495, %v2800
      %v2854 = vmul.f32 %v2499, %v2802
      %v2855 = vmul.f32 %v2505, %v2804
      %v2856 = vmul.f32 %v2509, %v2806
      %v2857 = vmul.f32 %v2515, %v2808
      %v2858 = vmul.f32 %v2519, %v2810
      %v2859 = vadd.f32 %v2811, %v2812
      %v2860 = vadd.f32 %v2859, %v2813
      %v2861 = vadd.f32 %v2860, %v2814
      %v2862 = vadd.f32 %v2861, %v2815
      %v2863 = vadd.f32 %v2862, %v2816
      %v2864 = vadd.f32 %v2863, %v2817
      %v2865 = vadd.f32 %v2864, %v2818
      %v2866 = vadd.f32 %v2865, %v2819
      %v2867 = vadd.f32 %v2866, %v2820
      %v2868 = vadd.f32 %v2867, %v2821
      %v2869 = vadd.f32 %v2868, %v2822
      %v2870 = vadd.f32 %v2869, %v2823
      %v2871 = vadd.f32 %v2870, %v2824
      %v2872 = vadd.f32 %v2871, %v2825
      %v2873 = vadd.f32 %v2872, %v2826
      %v2874 = vadd.f32 %v2873, %v2827
      %v2875 = vadd.f32 %v2874, %v2828
      %v2876 = vadd.f32 %v2875, %v2829
      %v2877 = vadd.f32 %v2876, %v2830
      %v2878 = vadd.f32 %v2877, %v2831
      %v2879 = vadd.f32 %v2878, %v2832
      %v2880 = vadd.f32 %v2879, %v2833
      %v2881 = vadd.f32 %v2880, %v2834
      %v2882 = vadd.f32 %v2881, %v2835
      %v2883 = vadd.f32 %v2882, %v2836
      %v2884 = vadd.f32 %v2883, %v2837
      %v2885 = vadd.f32 %v2884, %v2838
      %v2886 = vadd.f32 %v2885, %v2839
      %v2887 = vadd.f32 %v2886, %v2840
      %v2888 = vadd.f32 %v2887, %v2841
      %v2889 = vadd.f32 %v2888, %v2842
      %v2890 = vadd.f32 %v2889, %v2843
      %v2891 = vadd.f32 %v2890, %v2844
      %v2892 = vadd.f32 %v2891, %v2845
      %v2893 = vadd.f32 %v2892, %v2846
      %v2894 = vadd.f32 %v2893, %v2847
      %v2895 = vadd.f32 %v2894, %v2848
      %v2896 = vadd.f32 %v2895, %v2849
      %v2897 = vadd.f32 %v2896, %v2850
      %v2898 = vadd.f32 %v2897, %v2851
      %v2899 = vadd.f32 %v2898, %v2852
      %v2900 = vadd.f32 %v2899, %v2853
      %v2901 = vadd.f32 %v2900, %v2854
      %v2902 = vadd.f32 %v2901, %v2855
      %v2903 = vadd.f32 %v2902, %v2856
      %v2904 = vadd.f32 %v2903, %v2857
      %v2905 = vadd.f32 %v2904, %v2858
      %v2906 = vrot.slane %v2905, 4
      %v2907 = vadd.f32 %v2905, %v2906
      %v2908 = vrot.slane %v2907, 2
      %v2909 = vadd.f32 %v2907, %v2908
      %v2910 = vrot.slane %v2909, 1
      %v2911 = vadd.f32 %v2909, %v2910
      %v2912 = vrcp.pop 384.0
      %v2913 = vmul.f32 %v2911, %v2912
      %v2914 = vsub.f32 %v2811, %v2913
      %v2915 = vsub.f32 %v2812, %v2913
      %v2916 = vsub.f32 %v2813, %v2913
      %v2917 = vsub.f32 %v2814, %v2913
      %v2918 = vsub.f32 %v2815, %v2913
      %v2919 = vsub.f32 %v2816, %v2913
      %v2920 = vsub.f32 %v2817, %v2913
      %v2921 = vsub.f32 %v2818, %v2913
      %v2922 = vsub.f32 %v2819, %v2913
      %v2923 = vsub.f32 %v2820, %v2913
      %v2924 = vsub.f32 %v2821, %v2913
      %v2925 = vsub.f32 %v2822, %v2913
      %v2926 = vsub.f32 %v2823, %v2913
      %v2927 = vsub.f32 %v2824, %v2913
      %v2928 = vsub.f32 %v2825, %v2913
      %v2929 = vsub.f32 %v2826, %v2913
      %v2930 = vsub.f32 %v2827, %v2913
      %v2931 = vsub.f32 %v2828, %v2913
      %v2932 = vsub.f32 %v2829, %v2913
      %v2933 = vsub.f32 %v2830, %v2913
      %v2934 = vsub.f32 %v2831, %v2913
      %v2935 = vsub.f32 %v2832, %v2913
      %v2936 = vsub.f32 %v2833, %v2913
      %v2937 = vsub.f32 %v2834, %v2913
      %v2938 = vsub.f32 %v2835, %v2913
      %v2939 = vsub.f32 %v2836, %v2913
      %v2940 = vsub.f32 %v2837, %v2913
      %v2941 = vsub.f32 %v2838, %v2913
      %v2942 = vsub.f32 %v2839, %v2913
      %v2943 = vsub.f32 %v2840, %v2913
      %v2944 = vsub.f32 %v2841, %v2913
      %v2945 = vsub.f32 %v2842, %v2913
      %v2946 = vsub.f32 %v2843, %v2913
      %v2947 = vsub.f32 %v2844, %v2913
      %v2948 = vsub.f32 %v2845, %v2913
      %v2949 = vsub.f32 %v2846, %v2913
      %v2950 = vsub.f32 %v2847, %v2913
      %v2951 = vsub.f32 %v2848, %v2913
      %v2952 = vsub.f32 %v2849, %v2913
      %v2953 = vsub.f32 %v2850, %v2913
      %v2954 = vsub.f32 %v2851, %v2913
      %v2955 = vsub.f32 %v2852, %v2913
      %v2956 = vsub.f32 %v2853, %v2913
      %v2957 = vsub.f32 %v2854, %v2913
      %v2958 = vsub.f32 %v2855, %v2913
      %v2959 = vsub.f32 %v2856, %v2913
      %v2960 = vsub.f32 %v2857, %v2913
      %v2961 = vsub.f32 %v2858, %v2913
      %v2962 = vmul.f32 %v2914, %v2914
      %v2963 = vmul.f32 %v2915, %v2915
      %v2964 = vmul.f32 %v2916, %v2916
      %v2965 = vmul.f32 %v2917, %v2917
      %v2966 = vmul.f32 %v2918, %v2918
      %v2967 = vmul.f32 %v2919, %v2919
      %v2968 = vmul.f32 %v2920, %v2920
      %v2969 = vmul.f32 %v2921, %v2921
      %v2970 = vmul.f32 %v2922, %v2922
      %v2971 = vmul.f32 %v2923, %v2923
      %v2972 = vmul.f32 %v2924, %v2924
      %v2973 = vmul.f32 %v2925, %v2925
      %v2974 = vmul.f32 %v2926, %v2926
      %v2975 = vmul.f32 %v2927, %v2927
      %v2976 = vmul.f32 %v2928, %v2928
      %v2977 = vmul.f32 %v2929, %v2929
      %v2978 = vmul.f32 %v2930, %v2930
      %v2979 = vmul.f32 %v2931, %v2931
      %v2980 = vmul.f32 %v2932, %v2932
      %v2981 = vmul.f32 %v2933, %v2933
      %v2982 = vmul.f32 %v2934, %v2934
      %v2983 = vmul.f32 %v2935, %v2935
      %v2984 = vmul.f32 %v2936, %v2936
      %v2985 = vmul.f32 %v2937, %v2937
      %v2986 = vmul.f32 %v2938, %v2938
      %v2987 = vmul.f32 %v2939, %v2939
      %v2988 = vmul.f32 %v2940, %v2940
      %v2989 = vmul.f32 %v2941, %v2941
      %v2990 = vmul.f32 %v2942, %v2942
      %v2991 = vmul.f32 %v2943, %v2943
      %v2992 = vmul.f32 %v2944, %v2944
      %v2993 = vmul.f32 %v2945, %v2945
      %v2994 = vmul.f32 %v2946, %v2946
      %v2995 = vmul.f32 %v2947, %v2947
      %v2996 = vmul.f32 %v2948, %v2948
      %v2997 = vmul.f32 %v2949, %v2949
      %v2998 = vmul.f32 %v2950, %v2950
      %v2999 = vmul.f32 %v2951, %v2951
      %v3000 = vmul.f32 %v2952, %v2952
      %v3001 = vmul.f32 %v2953, %v2953
      %v3002 = vmul.f32 %v2954, %v2954
      %v3003 = vmul.f32 %v2955, %v2955
      %v3004 = vmul.f32 %v2956, %v2956
      %v3005 = vmul.f32 %v2957, %v2957
      %v3006 = vmul.f32 %v2958, %v2958
      %v3007 = vmul.f32 %v2959, %v2959
      %v3008 = vmul.f32 %v2960, %v2960
      %v3009 = vmul.f32 %v2961, %v2961
      %v3010 = vadd.f32 %v2962, %v2963
      %v3011 = vadd.f32 %v3010, %v2964
      %v3012 = vadd.f32 %v3011, %v2965
      %v3013 = vadd.f32 %v3012, %v2966
      %v3014 = vadd.f32 %v3013, %v2967
      %v3015 = vadd.f32 %v3014, %v2968
      %v3016 = vadd.f32 %v3015, %v2969
      %v3017 = vadd.f32 %v3016, %v2970
      %v3018 = vadd.f32 %v3017, %v2971
      %v3019 = vadd.f32 %v3018, %v2972
      %v3020 = vadd.f32 %v3019, %v2973
      %v3021 = vadd.f32 %v3020, %v2974
      %v3022 = vadd.f32 %v3021, %v2975
      %v3023 = vadd.f32 %v3022, %v2976
      %v3024 = vadd.f32 %v3023, %v2977
      %v3025 = vadd.f32 %v3024, %v2978
      %v3026 = vadd.f32 %v3025, %v2979
      %v3027 = vadd.f32 %v3026, %v2980
      %v3028 = vadd.f32 %v3027, %v2981
      %v3029 = vadd.f32 %v3028, %v2982
      %v3030 = vadd.f32 %v3029, %v2983
      %v3031 = vadd.f32 %v3030, %v2984
      %v3032 = vadd.f32 %v3031, %v2985
      %v3033 = vadd.f32 %v3032, %v2986
      %v3034 = vadd.f32 %v3033, %v2987
      %v3035 = vadd.f32 %v3034, %v2988
      %v3036 = vadd.f32 %v3035, %v2989
      %v3037 = vadd.f32 %v3036, %v2990
      %v3038 = vadd.f32 %v3037, %v2991
      %v3039 = vadd.f32 %v3038, %v2992
      %v3040 = vadd.f32 %v3039, %v2993
      %v3041 = vadd.f32 %v3040, %v2994
      %v3042 = vadd.f32 %v3041, %v2995
      %v3043 = vadd.f32 %v3042, %v2996
      %v3044 = vadd.f32 %v3043, %v2997
      %v3045 = vadd.f32 %v3044, %v2998
      %v3046 = vadd.f32 %v3045, %v2999
      %v3047 = vadd.f32 %v3046, %v3000
      %v3048 = vadd.f32 %v3047, %v3001
      %v3049 = vadd.f32 %v3048, %v3002
      %v3050 = vadd.f32 %v3049, %v3003
      %v3051 = vadd.f32 %v3050, %v3004
      %v3052 = vadd.f32 %v3051, %v3005
      %v3053 = vadd.f32 %v3052, %v3006
      %v3054 = vadd.f32 %v3053, %v3007
      %v3055 = vadd.f32 %v3054, %v3008
      %v3056 = vadd.f32 %v3055, %v3009
      %v3057 = vrot.slane %v3056, 4
      %v3058 = vadd.f32 %v3056, %v3057
      %v3059 = vrot.slane %v3058, 2
      %v3060 = vadd.f32 %v3058, %v3059
      %v3061 = vrot.slane %v3060, 1
      %v3062 = vadd.f32 %v3060, %v3061
      %v3063 = vmul.f32 %v3062, %v2912
      %v3064 = vadd.f32 %v3063, 1e-05
      %v3065 = vrsqrt.pop %v3064
      %v3066 = vmul.f32 %v2914, %v3065
      %v3067 = vmul.f32 %v2915, %v3065
      %v3068 = vmul.f32 %v2916, %v3065
      %v3069 = vmul.f32 %v2917, %v3065
      %v3070 = vmul.f32 %v2918, %v3065
      %v3071 = vmul.f32 %v2919, %v3065
      %v3072 = vmul.f32 %v2920, %v3065
      %v3073 = vmul.f32 %v2921, %v3065
      %v3074 = vmul.f32 %v2922, %v3065
      %v3075 = vmul.f32 %v2923, %v3065
      %v3076 = vmul.f32 %v2924, %v3065
      %v3077 = vmul.f32 %v2925, %v3065
      %v3078 = vmul.f32 %v2926, %v3065
      %v3079 = vmul.f32 %v2927, %v3065
      %v3080 = vmul.f32 %v2928, %v3065
      %v3081 = vmul.f32 %v2929, %v3065
      %v3082 = vmul.f32 %v2930, %v3065
      %v3083 = vmul.f32 %v2931, %v3065
      %v3084 = vmul.f32 %v2932, %v3065
      %v3085 = vmul.f32 %v2933, %v3065
      %v3086 = vmul.f32 %v2934, %v3065
      %v3087 = vmul.f32 %v2935, %v3065
      %v3088 = vmul.f32 %v2936, %v3065
      %v3089 = vmul.f32 %v2937, %v3065
      %v3090 = vmul.f32 %v2938, %v3065
      %v3091 = vmul.f32 %v2939, %v3065
      %v3092 = vmul.f32 %v2940, %v3065
      %v3093 = vmul.f32 %v2941, %v3065
      %v3094 = vmul.f32 %v2942, %v3065
      %v3095 = vmul.f32 %v2943, %v3065
      %v3096 = vmul.f32 %v2944, %v3065
      %v3097 = vmul.f32 %v2945, %v3065
      %v3098 = vmul.f32 %v2946, %v3065
      %v3099 = vmul.f32 %v2947, %v3065
      %v3100 = vmul.f32 %v2948, %v3065
      %v3101 = vmul.f32 %v2949, %v3065
      %v3102 = vmul.f32 %v2950, %v3065
      %v3103 = vmul.f32 %v2951, %v3065
      %v3104 = vmul.f32 %v2952, %v3065
      %v3105 = vmul.f32 %v2953, %v3065
      %v3106 = vmul.f32 %v2954, %v3065
      %v3107 = vmul.f32 %v2955, %v3065
      %v3108 = vmul.f32 %v2956, %v3065
      %v3109 = vmul.f32 %v2957, %v3065
      %v3110 = vmul.f32 %v2958, %v3065
      %v3111 = vmul.f32 %v2959, %v3065
      %v3112 = vmul.f32 %v2960, %v3065
      %v3113 = vmul.f32 %v2961, %v3065
      %v3114 = vld [vmem:[%s3] sm:$0x1]
      %v3116 = vlaneseq
      %v3117 = vshrl.u32 %v3116, 7
      %v3118 = vsub.s32 0, %v3117
      %v3119 = vrot.slane %v3114, %v3118
      %v3121 = vmul.f32 %v3066, %v3119
      %v3122 = vmul.f32 %v3067, %v3119
      %v3123 = vmul.f32 %v3068, %v3119
      %v3124 = vmul.f32 %v3069, %v3119
      %v3125 = vmul.f32 %v3070, %v3119
      %v3126 = vmul.f32 %v3071, %v3119
      %v3127 = vmul.f32 %v3072, %v3119
      %v3128 = vmul.f32 %v3073, %v3119
      %v3129 = vmul.f32 %v3074, %v3119
      %v3130 = vmul.f32 %v3075, %v3119
      %v3131 = vmul.f32 %v3076, %v3119
      %v3132 = vmul.f32 %v3077, %v3119
      %v3133 = vmul.f32 %v3078, %v3119
      %v3134 = vmul.f32 %v3079, %v3119
      %v3135 = vmul.f32 %v3080, %v3119
      %v3136 = vmul.f32 %v3081, %v3119
      %v3137 = vmul.f32 %v3082, %v3119
      %v3138 = vmul.f32 %v3083, %v3119
      %v3139 = vmul.f32 %v3084, %v3119
      %v3140 = vmul.f32 %v3085, %v3119
      %v3141 = vmul.f32 %v3086, %v3119
      %v3142 = vmul.f32 %v3087, %v3119
      %v3143 = vmul.f32 %v3088, %v3119
      %v3144 = vmul.f32 %v3089, %v3119
      %v3145 = vmul.f32 %v3090, %v3119
      %v3146 = vmul.f32 %v3091, %v3119
      %v3147 = vmul.f32 %v3092, %v3119
      %v3148 = vmul.f32 %v3093, %v3119
      %v3149 = vmul.f32 %v3094, %v3119
      %v3150 = vmul.f32 %v3095, %v3119
      %v3151 = vmul.f32 %v3096, %v3119
      %v3152 = vmul.f32 %v3097, %v3119
      %v3153 = vmul.f32 %v3098, %v3119
      %v3154 = vmul.f32 %v3099, %v3119
      %v3155 = vmul.f32 %v3100, %v3119
      %v3156 = vmul.f32 %v3101, %v3119
      %v3157 = vmul.f32 %v3102, %v3119
      %v3158 = vmul.f32 %v3103, %v3119
      %v3159 = vmul.f32 %v3104, %v3119
      %v3160 = vmul.f32 %v3105, %v3119
      %v3161 = vmul.f32 %v3106, %v3119
      %v3162 = vmul.f32 %v3107, %v3119
      %v3163 = vmul.f32 %v3108, %v3119
      %v3164 = vmul.f32 %v3109, %v3119
      %v3165 = vmul.f32 %v3110, %v3119
      %v3166 = vmul.f32 %v3111, %v3119
      %v3167 = vmul.f32 %v3112, %v3119
      %v3168 = vmul.f32 %v3113, %v3119
      %v3169 = vld [vmem:[%s4] sm:$0x1]
      %v3171 = vlaneseq
      %v3172 = vshrl.u32 %v3171, 7
      %v3173 = vsub.s32 0, %v3172
      %v3174 = vrot.slane %v3169, %v3173
      %v3176 = vadd.f32 %v3121, %v3174
      %v3177 = vadd.f32 %v3122, %v3174
      %v3178 = vadd.f32 %v3123, %v3174
      %v3179 = vadd.f32 %v3124, %v3174
      %v3180 = vadd.f32 %v3125, %v3174
      %v3181 = vadd.f32 %v3126, %v3174
      %v3182 = vadd.f32 %v3127, %v3174
      %v3183 = vadd.f32 %v3128, %v3174
      %v3184 = vadd.f32 %v3129, %v3174
      %v3185 = vadd.f32 %v3130, %v3174
      %v3186 = vadd.f32 %v3131, %v3174
      %v3187 = vadd.f32 %v3132, %v3174
      %v3188 = vadd.f32 %v3133, %v3174
      %v3189 = vadd.f32 %v3134, %v3174
      %v3190 = vadd.f32 %v3135, %v3174
      %v3191 = vadd.f32 %v3136, %v3174
      %v3192 = vadd.f32 %v3137, %v3174
      %v3193 = vadd.f32 %v3138, %v3174
      %v3194 = vadd.f32 %v3139, %v3174
      %v3195 = vadd.f32 %v3140, %v3174
      %v3196 = vadd.f32 %v3141, %v3174
      %v3197 = vadd.f32 %v3142, %v3174
      %v3198 = vadd.f32 %v3143, %v3174
      %v3199 = vadd.f32 %v3144, %v3174
      %v3200 = vadd.f32 %v3145, %v3174
      %v3201 = vadd.f32 %v3146, %v3174
      %v3202 = vadd.f32 %v3147, %v3174
      %v3203 = vadd.f32 %v3148, %v3174
      %v3204 = vadd.f32 %v3149, %v3174
      %v3205 = vadd.f32 %v3150, %v3174
      %v3206 = vadd.f32 %v3151, %v3174
      %v3207 = vadd.f32 %v3152, %v3174
      %v3208 = vadd.f32 %v3153, %v3174
      %v3209 = vadd.f32 %v3154, %v3174
      %v3210 = vadd.f32 %v3155, %v3174
      %v3211 = vadd.f32 %v3156, %v3174
      %v3212 = vadd.f32 %v3157, %v3174
      %v3213 = vadd.f32 %v3158, %v3174
      %v3214 = vadd.f32 %v3159, %v3174
      %v3215 = vadd.f32 %v3160, %v3174
      %v3216 = vadd.f32 %v3161, %v3174
      %v3217 = vadd.f32 %v3162, %v3174
      %v3218 = vadd.f32 %v3163, %v3174
      %v3219 = vadd.f32 %v3164, %v3174
      %v3220 = vadd.f32 %v3165, %v3174
      %v3221 = vadd.f32 %v3166, %v3174
      %v3222 = vadd.f32 %v3167, %v3174
      %v3223 = vadd.f32 %v3168, %v3174
      %vm3224 = vcmp.ge.f32.partialorder %v3176, 0.0
      %vm3225 = vcmp.ge.f32.partialorder %v3177, 0.0
      %vm3226 = vcmp.ge.f32.partialorder %v3178, 0.0
      %vm3227 = vcmp.ge.f32.partialorder %v3179, 0.0
      %vm3228 = vcmp.ge.f32.partialorder %v3180, 0.0
      %vm3229 = vcmp.ge.f32.partialorder %v3181, 0.0
      %vm3230 = vcmp.ge.f32.partialorder %v3182, 0.0
      %vm3231 = vcmp.ge.f32.partialorder %v3183, 0.0
      %vm3232 = vcmp.ge.f32.partialorder %v3184, 0.0
      %vm3233 = vcmp.ge.f32.partialorder %v3185, 0.0
      %vm3234 = vcmp.ge.f32.partialorder %v3186, 0.0
      %vm3235 = vcmp.ge.f32.partialorder %v3187, 0.0
      %vm3236 = vcmp.ge.f32.partialorder %v3188, 0.0
      %vm3237 = vcmp.ge.f32.partialorder %v3189, 0.0
      %vm3238 = vcmp.ge.f32.partialorder %v3190, 0.0
      %vm3239 = vcmp.ge.f32.partialorder %v3191, 0.0
      %vm3240 = vcmp.ge.f32.partialorder %v3192, 0.0
      %vm3241 = vcmp.ge.f32.partialorder %v3193, 0.0
      %vm3242 = vcmp.ge.f32.partialorder %v3194, 0.0
      %vm3243 = vcmp.ge.f32.partialorder %v3195, 0.0
      %vm3244 = vcmp.ge.f32.partialorder %v3196, 0.0
      %vm3245 = vcmp.ge.f32.partialorder %v3197, 0.0
      %vm3246 = vcmp.ge.f32.partialorder %v3198, 0.0
      %vm3247 = vcmp.ge.f32.partialorder %v3199, 0.0
      %vm3248 = vcmp.ge.f32.partialorder %v3200, 0.0
      %vm3249 = vcmp.ge.f32.partialorder %v3201, 0.0
      %vm3250 = vcmp.ge.f32.partialorder %v3202, 0.0
      %vm3251 = vcmp.ge.f32.partialorder %v3203, 0.0
      %vm3252 = vcmp.ge.f32.partialorder %v3204, 0.0
      %vm3253 = vcmp.ge.f32.partialorder %v3205, 0.0
      %vm3254 = vcmp.ge.f32.partialorder %v3206, 0.0
      %vm3255 = vcmp.ge.f32.partialorder %v3207, 0.0
      %vm3256 = vcmp.ge.f32.partialorder %v3208, 0.0
      %vm3257 = vcmp.ge.f32.partialorder %v3209, 0.0
      %vm3258 = vcmp.ge.f32.partialorder %v3210, 0.0
      %vm3259 = vcmp.ge.f32.partialorder %v3211, 0.0
      %vm3260 = vcmp.ge.f32.partialorder %v3212, 0.0
      %vm3261 = vcmp.ge.f32.partialorder %v3213, 0.0
      %vm3262 = vcmp.ge.f32.partialorder %v3214, 0.0
      %vm3263 = vcmp.ge.f32.partialorder %v3215, 0.0
      %vm3264 = vcmp.ge.f32.partialorder %v3216, 0.0
      %vm3265 = vcmp.ge.f32.partialorder %v3217, 0.0
      %vm3266 = vcmp.ge.f32.partialorder %v3218, 0.0
      %vm3267 = vcmp.ge.f32.partialorder %v3219, 0.0
      %vm3268 = vcmp.ge.f32.partialorder %v3220, 0.0
      %vm3269 = vcmp.ge.f32.partialorder %v3221, 0.0
      %vm3270 = vcmp.ge.f32.partialorder %v3222, 0.0
      %vm3271 = vcmp.ge.f32.partialorder %v3223, 0.0
      %v3272 = vld [vmem:[%s5] sm:$0x1]
      %v3274 = vlaneseq
      %v3275 = vshrl.u32 %v3274, 7
      %v3276 = vsub.s32 0, %v3275
      %v3277 = vrot.slane %v3272, %v3276
      %v3279 = vmul.f32 %v3277, %v3176
      %v3280 = vmul.f32 %v3277, %v3177
      %v3281 = vmul.f32 %v3277, %v3178
      %v3282 = vmul.f32 %v3277, %v3179
      %v3283 = vmul.f32 %v3277, %v3180
      %v3284 = vmul.f32 %v3277, %v3181
      %v3285 = vmul.f32 %v3277, %v3182
      %v3286 = vmul.f32 %v3277, %v3183
      %v3287 = vmul.f32 %v3277, %v3184
      %v3288 = vmul.f32 %v3277, %v3185
      %v3289 = vmul.f32 %v3277, %v3186
      %v3290 = vmul.f32 %v3277, %v3187
      %v3291 = vmul.f32 %v3277, %v3188
      %v3292 = vmul.f32 %v3277, %v3189
      %v3293 = vmul.f32 %v3277, %v3190
      %v3294 = vmul.f32 %v3277, %v3191
      %v3295 = vmul.f32 %v3277, %v3192
      %v3296 = vmul.f32 %v3277, %v3193
      %v3297 = vmul.f32 %v3277, %v3194
      %v3298 = vmul.f32 %v3277, %v3195
      %v3299 = vmul.f32 %v3277, %v3196
      %v3300 = vmul.f32 %v3277, %v3197
      %v3301 = vmul.f32 %v3277, %v3198
      %v3302 = vmul.f32 %v3277, %v3199
      %v3303 = vmul.f32 %v3277, %v3200
      %v3304 = vmul.f32 %v3277, %v3201
      %v3305 = vmul.f32 %v3277, %v3202
      %v3306 = vmul.f32 %v3277, %v3203
      %v3307 = vmul.f32 %v3277, %v3204
      %v3308 = vmul.f32 %v3277, %v3205
      %v3309 = vmul.f32 %v3277, %v3206
      %v3310 = vmul.f32 %v3277, %v3207
      %v3311 = vmul.f32 %v3277, %v3208
      %v3312 = vmul.f32 %v3277, %v3209
      %v3313 = vmul.f32 %v3277, %v3210
      %v3314 = vmul.f32 %v3277, %v3211
      %v3315 = vmul.f32 %v3277, %v3212
      %v3316 = vmul.f32 %v3277, %v3213
      %v3317 = vmul.f32 %v3277, %v3214
      %v3318 = vmul.f32 %v3277, %v3215
      %v3319 = vmul.f32 %v3277, %v3216
      %v3320 = vmul.f32 %v3277, %v3217
      %v3321 = vmul.f32 %v3277, %v3218
      %v3322 = vmul.f32 %v3277, %v3219
      %v3323 = vmul.f32 %v3277, %v3220
      %v3324 = vmul.f32 %v3277, %v3221
      %v3325 = vmul.f32 %v3277, %v3222
      %v3326 = vmul.f32 %v3277, %v3223
      %v3327 = vsel %vm3224, %v3176, %v3279
      %v3328 = vsel %vm3225, %v3177, %v3280
      %v3329 = vsel %vm3226, %v3178, %v3281
      %v3330 = vsel %vm3227, %v3179, %v3282
      %v3331 = vsel %vm3228, %v3180, %v3283
      %v3332 = vsel %vm3229, %v3181, %v3284
      %v3333 = vsel %vm3230, %v3182, %v3285
      %v3334 = vsel %vm3231, %v3183, %v3286
      %v3335 = vsel %vm3232, %v3184, %v3287
      %v3336 = vsel %vm3233, %v3185, %v3288
      %v3337 = vsel %vm3234, %v3186, %v3289
      %v3338 = vsel %vm3235, %v3187, %v3290
      %v3339 = vsel %vm3236, %v3188, %v3291
      %v3340 = vsel %vm3237, %v3189, %v3292
      %v3341 = vsel %vm3238, %v3190, %v3293
      %v3342 = vsel %vm3239, %v3191, %v3294
      %v3343 = vsel %vm3240, %v3192, %v3295
      %v3344 = vsel %vm3241, %v3193, %v3296
      %v3345 = vsel %vm3242, %v3194, %v3297
      %v3346 = vsel %vm3243, %v3195, %v3298
      %v3347 = vsel %vm3244, %v3196, %v3299
      %v3348 = vsel %vm3245, %v3197, %v3300
      %v3349 = vsel %vm3246, %v3198, %v3301
      %v3350 = vsel %vm3247, %v3199, %v3302
      %v3351 = vsel %vm3248, %v3200, %v3303
      %v3352 = vsel %vm3249, %v3201, %v3304
      %v3353 = vsel %vm3250, %v3202, %v3305
      %v3354 = vsel %vm3251, %v3203, %v3306
      %v3355 = vsel %vm3252, %v3204, %v3307
      %v3356 = vsel %vm3253, %v3205, %v3308
      %v3357 = vsel %vm3254, %v3206, %v3309
      %v3358 = vsel %vm3255, %v3207, %v3310
      %v3359 = vsel %vm3256, %v3208, %v3311
      %v3360 = vsel %vm3257, %v3209, %v3312
      %v3361 = vsel %vm3258, %v3210, %v3313
      %v3362 = vsel %vm3259, %v3211, %v3314
      %v3363 = vsel %vm3260, %v3212, %v3315
      %v3364 = vsel %vm3261, %v3213, %v3316
      %v3365 = vsel %vm3262, %v3214, %v3317
      %v3366 = vsel %vm3263, %v3215, %v3318
      %v3367 = vsel %vm3264, %v3216, %v3319
      %v3368 = vsel %vm3265, %v3217, %v3320
      %v3369 = vsel %vm3266, %v3218, %v3321
      %v3370 = vsel %vm3267, %v3219, %v3322
      %v3371 = vsel %vm3268, %v3220, %v3323
      %v3372 = vsel %vm3269, %v3221, %v3324
      %v3373 = vsel %vm3270, %v3222, %v3325
      %v3374 = vsel %vm3271, %v3223, %v3326
      %3375 = vst [vmem:[%s251] sm:$0xff] %v3327
      %3376 = vst [vmem:[%s251 + $0x8] sm:$0xff] %v3328
      %3377 = vst [vmem:[%s251 + $0x10] sm:$0xff] %v3329
      %3378 = vst [vmem:[%s251 + $0x18] sm:$0xff] %v3330
      %3379 = vst [vmem:[%s251 + $0x20] sm:$0xff] %v3331
      %3380 = vst [vmem:[%s251 + $0x28] sm:$0xff] %v3332
      %3381 = vst [vmem:[%s251 + $0x30] sm:$0xff] %v3333
      %3382 = vst [vmem:[%s251 + $0x38] sm:$0xff] %v3334
      %3383 = vst [vmem:[%s251 + $0x40] sm:$0xff] %v3335
      %3384 = vst [vmem:[%s251 + $0x48] sm:$0xff] %v3336
      %3385 = vst [vmem:[%s251 + $0x50] sm:$0xff] %v3337
      %3386 = vst [vmem:[%s251 + $0x58] sm:$0xff] %v3338
      %3387 = vst [vmem:[%s251 + $0x60] sm:$0xff] %v3339
      %3388 = vst [vmem:[%s251 + $0x68] sm:$0xff] %v3340
      %3389 = vst [vmem:[%s251 + $0x70] sm:$0xff] %v3341
      %3390 = vst [vmem:[%s251 + $0x78] sm:$0xff] %v3342
      %3391 = vst [vmem:[%s251 + $0x80] sm:$0xff] %v3343
      %3392 = vst [vmem:[%s251 + $0x88] sm:$0xff] %v3344
      %3393 = vst [vmem:[%s251 + $0x90] sm:$0xff] %v3345
      %3394 = vst [vmem:[%s251 + $0x98] sm:$0xff] %v3346
      %3395 = vst [vmem:[%s251 + $0xa0] sm:$0xff] %v3347
      %3396 = vst [vmem:[%s251 + $0xa8] sm:$0xff] %v3348
      %3397 = vst [vmem:[%s251 + $0xb0] sm:$0xff] %v3349
      %3398 = vst [vmem:[%s251 + $0xb8] sm:$0xff] %v3350
      %3399 = vst [vmem:[%s251 + $0xc0] sm:$0xff] %v3351
      %3400 = vst [vmem:[%s251 + $0xc8] sm:$0xff] %v3352
      %3401 = vst [vmem:[%s251 + $0xd0] sm:$0xff] %v3353
      %3402 = vst [vmem:[%s251 + $0xd8] sm:$0xff] %v3354
      %3403 = vst [vmem:[%s251 + $0xe0] sm:$0xff] %v3355
      %3404 = vst [vmem:[%s251 + $0xe8] sm:$0xff] %v3356
      %3405 = vst [vmem:[%s251 + $0xf0] sm:$0xff] %v3357
      %3406 = vst [vmem:[%s251 + $0xf8] sm:$0xff] %v3358
      %3407 = vst [vmem:[%s251 + $0x100] sm:$0xff] %v3359
      %3408 = vst [vmem:[%s251 + $0x108] sm:$0xff] %v3360
      %3409 = vst [vmem:[%s251 + $0x110] sm:$0xff] %v3361
      %3410 = vst [vmem:[%s251 + $0x118] sm:$0xff] %v3362
      %3411 = vst [vmem:[%s251 + $0x120] sm:$0xff] %v3363
      %3412 = vst [vmem:[%s251 + $0x128] sm:$0xff] %v3364
      %3413 = vst [vmem:[%s251 + $0x130] sm:$0xff] %v3365
      %3414 = vst [vmem:[%s251 + $0x138] sm:$0xff] %v3366
      %3415 = vst [vmem:[%s251 + $0x140] sm:$0xff] %v3367
      %3416 = vst [vmem:[%s251 + $0x148] sm:$0xff] %v3368
      %3417 = vst [vmem:[%s251 + $0x150] sm:$0xff] %v3369
      %3418 = vst [vmem:[%s251 + $0x158] sm:$0xff] %v3370
      %3419 = vst [vmem:[%s251 + $0x160] sm:$0xff] %v3371
      %3420 = vst [vmem:[%s251 + $0x168] sm:$0xff] %v3372
      %3421 = vst [vmem:[%s251 + $0x170] sm:$0xff] %v3373
      %3422 = vst [vmem:[%s251 + $0x178] sm:$0xff] %v3374
      %p3423 = scmp.lt.s32.totalorder %s17, 1
      %s3424 = scalar_select %p3423, %s17, 1
      %s3425 = smul.addr %s3424, 48
      %s3426 = smul.addr %s3425, 8
      %s3427 = scalar_lea.vmem %s6, %s3426
      // Predicated region
      $region45: #{encoder_forward.6} parent=43 // pred_check
        %p3428 = pneg %p166
      $region46: #{encoder_forward.6} parent=43 // pred_check_branch
        %3430 = sbr.rel (%p3428) target = $region48
      $region47: #{encoder_forward.6} parent=43 // pred_region
        _
      $region48: #{encoder_forward.6} parent=43 // pred_fallthru
        _
    $region44: #{encoder_forward.6} parent=5 // pred_fallthru
      _
    %p3431 = scmp.le.s32.totalorder 2, %s12
    // Predicated region
    $region49: #{encoder_forward.6} parent=5 // pred_check
      %p3432 = pneg %p3431
    $region50: #{encoder_forward.6} parent=5 // pred_check_branch
      %3434 = sbr.rel (%p3432) target = $region52
    $region51: #{encoder_forward.6} parent=5 // pred_region
      %s3435 = ssub.s32 %s12, 2
      // Predicated region
      $region53: #{encoder_forward.6} parent=51 // pred_check
        %p3436 = pneg %p172
      $region54: #{encoder_forward.6} parent=51 // pred_check_branch
        %3438 = sbr.rel (%p3436) target = $region56
      $region55: #{encoder_forward.6} parent=51 // pred_region
        %p3439 = scmp.lt.s32.totalorder %s18, 1
        %s3440 = scalar_select %p3439, %s18, 1
        %s3441 = smul.addr %s3440, 48
        %s3442 = smul.addr %s3441, 8
        %s3443 = scalar_lea.vmem %s6, %s3442
      $region56: #{encoder_forward.6} parent=51 // pred_fallthru
        _
    $region52: #{encoder_forward.6} parent=5 // pred_fallthru
      _
  $region6: #{encoder_forward.6} parent=0 // loop_footer
    %s16 = sadd.s32 1, %s12
  $region7: #{encoder_forward.6} parent=0 // loop_footer_branch
    %11 = sbr.rel target = $region3
  $region8: #{encoder_forward.6} parent=0 // loop_exit
    _

// kernel: encoder_forward.7
$region0: #{encoder_forward.7}
  #allocation0 [shape = 'u32[]', space=smem, size = 0x4, offset = 0x4, fixed_abs, tag = 'smem constant byte address 0x4 - core index']
  #allocation1 [shape = 'u32[144,128]{1,0:T(1,128)}', space=vmem, size = 0x12000, scoped, tag = 'internal scratch']
  %s0 = inlined_call_operand.vmem [shape: bf16[2,176,768], index: 0, kind: input, shape index: {}]
  %s1 = inlined_call_operand.vmem [shape: bf16[768,256], index: 1, kind: input, shape index: {}]
  %s2 = inlined_call_operand.vmem [shape: f32[1,256], index: 2, kind: input, shape index: {}]
  %s3 = inlined_call_operand.vmem [shape: f32[1,128], index: 3, kind: input, shape index: {}]
  %s4 = inlined_call_operand.vmem [shape: f32[1,128], index: 4, kind: input, shape index: {}]
  %s5 = inlined_call_operand.vmem [shape: f32[1,128], index: 5, kind: input, shape index: {}]
  %s6 = inlined_call_operand.vmem [shape: f32[2,176,128], index: 6, kind: output, shape index: {}]
  %s7 = sld [smem:[#allocation0]]
  $region57: #{encoder_forward.7} parent=0
    _
  %s9 = ssub.s32 1, %s7
  %s10 = scalar_select 0, %s9, %s7
  loop: start=0, step=1, limit=4
  $region2: #{encoder_forward.7} parent=0 // loop_pre_header
    _
  $region3: #{encoder_forward.7} parent=0 // loop_header
    %s12 = sphi 0, %s16
    %p13 = scmp.ge.s32.totalorder %s12, 4
    %s22 = sphi 0, %s24
    %s25 = sphi 0, %s22
    %s26 = sphi 0, %s25
    %s42 = sphi 0, %s26
    %s46 = sphi 0, %s46
    %s48 = sphi 0, %s46
    %s49 = sphi 0, %s48
    %s63 = sphi 0, %s49
    %s67 = sphi 0, %s67
    %s69 = sphi 0, %s67
    %s70 = sphi 0, %s69
    %s84 = sphi 0, %s70
    %s88 = sphi 0, %s88
    %s90 = sphi 0, %s88
    %s91 = sphi 0, %s90
    %s105 = sphi 0, %s91
    %s109 = sphi 0, %s109
    %s111 = sphi 0, %s109
    %s112 = sphi 0, %s111
    %s126 = sphi 0, %s112
    %s130 = sphi 0, %s130
    %s132 = sphi 0, %s130
    %s133 = sphi 0, %s132
    %s147 = sphi 0, %s133
    %s153 = sphi 0, %s155
    %s156 = sphi 0, %s153
    %s157 = sphi 0, %s156
    %s173 = sphi 0, %s157
  $region4: #{encoder_forward.7} parent=0 // loop_header_branch
    %15 = sbr.rel (%p13) target = $region8
  $region5: #{encoder_forward.7} parent=0 // loop_body
    %s17 = ssub.s32 %s12, 1
    %s18 = ssub.s32 %s12, 2
    %s19 = sadd.s32 %s12, 1
    %s20 = ssub.s32 %s12, %s19
    %p21 = scmp.eq.s32.totalorder %s20, 0
    %s23 = sadd.s32 %s22, 1
    %s24 = scalar_select %p21, %s22, %s23
    %p27 = pneg %p21
    %p28 = scmp.eq.s32.totalorder %s12, 1
    %p29 = por %p27, %p28
    %p30 = scmp.ne.s32.totalorder %s22, %s25
    %p31 = scmp.eq.s32.totalorder %s12, 0
    %p32 = por %p30, %p31
    %p33 = scmp.ne.s32.totalorder %s22, %s25
    %p34 = scmp.eq.s32.totalorder %s17, 1
    %p35 = por %p33, %p34
    %p36 = scmp.ne.s32.totalorder %s25, %s26
    %p37 = scmp.eq.s32.totalorder %s17, 0
    %p38 = por %p36, %p37
    %p39 = scmp.ne.s32.totalorder %s25, %s26
    %p40 = scmp.eq.s32.totalorder %s18, 1
    %p41 = por %p39, %p40
    %p43 = scmp.ne.s32.totalorder %s26, %s42
    %p44 = scmp.eq.s32.totalorder %s18, 0
    %p45 = por %p43, %p44
    %s47 = sadd.s32 %s46, 1
    %p50 = scmp.eq.s32.totalorder %s12, 1
    %p51 = scmp.ne.s32.totalorder %s46, %s48
    %p52 = scmp.eq.s32.totalorder %s12, 0
    %p53 = por %p51, %p52
    %p54 = scmp.ne.s32.totalorder %s46, %s48
    %p55 = scmp.eq.s32.totalorder %s17, 1
    %p56 = por %p54, %p55
    %p57 = scmp.ne.s32.totalorder %s48, %s49
    %p58 = scmp.eq.s32.totalorder %s17, 0
    %p59 = por %p57, %p58
    %p60 = scmp.ne.s32.totalorder %s48, %s49
    %p61 = scmp.eq.s32.totalorder %s18, 1
    %p62 = por %p60, %p61
    %p64 = scmp.ne.s32.totalorder %s49, %s63
    %p65 = scmp.eq.s32.totalorder %s18, 0
    %p66 = por %p64, %p65
    %s68 = sadd.s32 %s67, 1
    %p71 = scmp.eq.s32.totalorder %s12, 1
    %p72 = scmp.ne.s32.totalorder %s67, %s69
    %p73 = scmp.eq.s32.totalorder %s12, 0
    %p74 = por %p72, %p73
    %p75 = scmp.ne.s32.totalorder %s67, %s69
    %p76 = scmp.eq.s32.totalorder %s17, 1
    %p77 = por %p75, %p76
    %p78 = scmp.ne.s32.totalorder %s69, %s70
    %p79 = scmp.eq.s32.totalorder %s17, 0
    %p80 = por %p78, %p79
    %p81 = scmp.ne.s32.totalorder %s69, %s70
    %p82 = scmp.eq.s32.totalorder %s18, 1
    %p83 = por %p81, %p82
    %p85 = scmp.ne.s32.totalorder %s70, %s84
    %p86 = scmp.eq.s32.totalorder %s18, 0
    %p87 = por %p85, %p86
    %s89 = sadd.s32 %s88, 1
    %p92 = scmp.eq.s32.totalorder %s12, 1
    %p93 = scmp.ne.s32.totalorder %s88, %s90
    %p94 = scmp.eq.s32.totalorder %s12, 0
    %p95 = por %p93, %p94
    %p96 = scmp.ne.s32.totalorder %s88, %s90
    %p97 = scmp.eq.s32.totalorder %s17, 1
    %p98 = por %p96, %p97
    %p99 = scmp.ne.s32.totalorder %s90, %s91
    %p100 = scmp.eq.s32.totalorder %s17, 0
    %p101 = por %p99, %p100
    %p102 = scmp.ne.s32.totalorder %s90, %s91
    %p103 = scmp.eq.s32.totalorder %s18, 1
    %p104 = por %p102, %p103
    %p106 = scmp.ne.s32.totalorder %s91, %s105
    %p107 = scmp.eq.s32.totalorder %s18, 0
    %p108 = por %p106, %p107
    %s110 = sadd.s32 %s109, 1
    %p113 = scmp.eq.s32.totalorder %s12, 1
    %p114 = scmp.ne.s32.totalorder %s109, %s111
    %p115 = scmp.eq.s32.totalorder %s12, 0
    %p116 = por %p114, %p115
    %p117 = scmp.ne.s32.totalorder %s109, %s111
    %p118 = scmp.eq.s32.totalorder %s17, 1
    %p119 = por %p117, %p118
    %p120 = scmp.ne.s32.totalorder %s111, %s112
    %p121 = scmp.eq.s32.totalorder %s17, 0
    %p122 = por %p120, %p121
    %p123 = scmp.ne.s32.totalorder %s111, %s112
    %p124 = scmp.eq.s32.totalorder %s18, 1
    %p125 = por %p123, %p124
    %p127 = scmp.ne.s32.totalorder %s112, %s126
    %p128 = scmp.eq.s32.totalorder %s18, 0
    %p129 = por %p127, %p128
    %s131 = sadd.s32 %s130, 1
    %p134 = scmp.eq.s32.totalorder %s12, 1
    %p135 = scmp.ne.s32.totalorder %s130, %s132
    %p136 = scmp.eq.s32.totalorder %s12, 0
    %p137 = por %p135, %p136
    %p138 = scmp.ne.s32.totalorder %s130, %s132
    %p139 = scmp.eq.s32.totalorder %s17, 1
    %p140 = por %p138, %p139
    %p141 = scmp.ne.s32.totalorder %s132, %s133
    %p142 = scmp.eq.s32.totalorder %s17, 0
    %p143 = por %p141, %p142
    %p144 = scmp.ne.s32.totalorder %s132, %s133
    %p145 = scmp.eq.s32.totalorder %s18, 1
    %p146 = por %p144, %p145
    %p148 = scmp.ne.s32.totalorder %s133, %s147
    %p149 = scmp.eq.s32.totalorder %s18, 0
    %p150 = por %p148, %p149
    %s151 = ssub.s32 %s12, %s19
    %p152 = scmp.eq.s32.totalorder %s151, 0
    %s154 = sadd.s32 %s153, 1
    %s155 = scalar_select %p152, %s153, %s154
    %p158 = pneg %p152
    %p159 = scmp.eq.s32.totalorder %s12, 1
    %p160 = por %p158, %p159
    %p161 = scmp.ne.s32.totalorder %s153, %s156
    %p162 = scmp.eq.s32.totalorder %s12, 0
    %p163 = por %p161, %p162
    %p164 = scmp.ne.s32.totalorder %s153, %s156
    %p165 = scmp.eq.s32.totalorder %s17, 1
    %p166 = por %p164, %p165
    %p167 = scmp.ne.s32.totalorder %s156, %s157
    %p168 = scmp.eq.s32.totalorder %s17, 0
    %p169 = por %p167, %p168
    %p170 = scmp.ne.s32.totalorder %s156, %s157
    %p171 = scmp.eq.s32.totalorder %s18, 1
    %p172 = por %p170, %p171
    %p174 = scmp.ne.s32.totalorder %s157, %s173
    %p175 = scmp.eq.s32.totalorder %s18, 0
    %p176 = por %p174, %p175
    %p177 = scmp.le.s32.totalorder 1, %s12
    %p178 = scmp.lt.s32.totalorder %s12, 3
    %p179 = pnand %p177, %p178
    %p180 = pneg %p179
    // Predicated region
    $region9: #{encoder_forward.7} parent=5 // pred_check
      _
    $region10: #{encoder_forward.7} parent=5 // pred_check_branch
      %182 = sbr.rel (%p179) target = $region12
    $region11: #{encoder_forward.7} parent=5 // pred_region
      %s183 = ssub.s32 %s12, 1
      // Predicated region
      $region13: #{encoder_forward.7} parent=11 // pred_check
        %p184 = pneg %p59
      $region14: #{encoder_forward.7} parent=11 // pred_check_branch
        %186 = sbr.rel (%p184) target = $region16
      $region15: #{encoder_forward.7} parent=11 // pred_region
        _
      $region16: #{encoder_forward.7} parent=11 // pred_fallthru
        _
      // Predicated region
      $region17: #{encoder_forward.7} parent=11 // pred_check
        %p187 = pneg %p80
      $region18: #{encoder_forward.7} parent=11 // pred_check_branch
        %189 = sbr.rel (%p187) target = $region20
      $region19: #{encoder_forward.7} parent=11 // pred_region
        _
      $region20: #{encoder_forward.7} parent=11 // pred_fallthru
        _
      // Predicated region
      $region21: #{encoder_forward.7} parent=11 // pred_check
        %p190 = pneg %p101
      $region22: #{encoder_forward.7} parent=11 // pred_check_branch
        %192 = sbr.rel (%p190) target = $region24
      $region23: #{encoder_forward.7} parent=11 // pred_region
        _
      $region24: #{encoder_forward.7} parent=11 // pred_fallthru
        _
      // Predicated region
      $region25: #{encoder_forward.7} parent=11 // pred_check
        %p193 = pneg %p122
      $region26: #{encoder_forward.7} parent=11 // pred_check_branch
        %195 = sbr.rel (%p193) target = $region28
      $region27: #{encoder_forward.7} parent=11 // pred_region
        _
      $region28: #{encoder_forward.7} parent=11 // pred_fallthru
        _
      // Predicated region
      $region29: #{encoder_forward.7} parent=11 // pred_check
        %p196 = pneg %p143
      $region30: #{encoder_forward.7} parent=11 // pred_check_branch
        %198 = sbr.rel (%p196) target = $region32
      $region31: #{encoder_forward.7} parent=11 // pred_region
        _
      $region32: #{encoder_forward.7} parent=11 // pred_fallthru
        _
    $region12: #{encoder_forward.7} parent=5 // pred_fallthru
      _
    %p199 = scmp.lt.s32.totalorder %s12, 2
    // Predicated region
    $region33: #{encoder_forward.7} parent=5 // pred_check
      %p200 = pneg %p199
    $region34: #{encoder_forward.7} parent=5 // pred_check_branch
      %202 = sbr.rel (%p200) target = $region36
    $region35: #{encoder_forward.7} parent=5 // pred_region
      // Predicated region
      $region37: #{encoder_forward.7} parent=35 // pred_check
        %p203 = pneg %p32
      $region38: #{encoder_forward.7} parent=35 // pred_check_branch
        %205 = sbr.rel (%p203) target = $region40
      $region39: #{encoder_forward.7} parent=35 // pred_region
        %p206 = scmp.lt.s32.totalorder %s12, 1
        %s207 = scalar_select %p206, %s12, 1
        %s208 = smul.addr %s207, 132
        %s209 = smul.addr %s208, 4
        %s210 = scalar_lea.vmem %s0, %s209
      $region40: #{encoder_forward.7} parent=35 // pred_fallthru
        _
    $region36: #{encoder_forward.7} parent=5 // pred_fallthru
      _
    %p211 = scmp.le.s32.totalorder 1, %s12
    %p212 = scmp.lt.s32.totalorder %s12, 3
    %p213 = pnand %p211, %p212
    %p214 = pneg %p213
    // Predicated region
    $region41: #{encoder_forward.7} parent=5 // pred_check
      _
    $region42: #{encoder_forward.7} parent=5 // pred_check_branch
      %216 = sbr.rel (%p213) target = $region44
    $region43: #{encoder_forward.7} parent=5 // pred_region
      %s217 = ssub.s32 %s12, 1
      %p218 = scmp.lt.s32.totalorder %s17, 1
      %s219 = scalar_select %p218, %s17, 1
      %s220 = smul.addr %s219, 132
      %s221 = smul.addr %s220, 4
      %s222 = scalar_lea.vmem %s0, %s221
      %p223 = pneg %p38
      %p224 = pneg %p35
      %p225 = pneg %p59
      %p226 = pneg %p56
      %p227 = pneg %p80
      %p228 = pneg %p77
      %p229 = pneg %p101
      %p230 = pneg %p98
      %p231 = pneg %p122
      %p232 = pneg %p119
      %p233 = pneg %p143
      %p234 = pneg %p140
      %p235 = pneg %p169
      %p236 = pneg %p166
      %p237 = scmp.lt.s32.totalorder %s17, 1
      %s238 = scalar_select %p237, %s17, 1
      %s239 = smul.addr %s238, 22
      %s240 = smul.addr %s239, 8
      %s241 = scalar_lea.vmem %s6, %s240
      %p242 = scmp.lt.s32.totalorder %s17, 1
      %s243 = scalar_select %p242, %s17, 1
      %s244 = smul.addr %s243, 132
      %s245 = smul.addr %s244, 4
      %s246 = scalar_lea.vmem %s0, %s245
      %p247 = scmp.lt.s32.totalorder %s17, 1
      %s248 = scalar_select %p247, %s17, 1
      %s249 = smul.addr %s248, 22
      %s250 = smul.addr %s249, 8
      %s251 = scalar_lea.vmem %s6, %s250
      %v252 = vld [vmem:[%s246] sm:$0xff]
      %v253 = vld [vmem:[%s246 + $0x8] sm:$0xff]
      %v254 = vld [vmem:[%s246 + $0x10] sm:$0xff]
      %v255 = vld [vmem:[%s246 + $0x18] sm:$0xff]
      %v256 = vld [vmem:[%s246 + $0x20] sm:$0xff]
      %v257 = vld [vmem:[%s246 + $0x28] sm:$0xff]
      %v258 = vld [vmem:[%s246 + $0x30] sm:$0xff]
      %v259 = vld [vmem:[%s246 + $0x38] sm:$0xff]
      %v260 = vld [vmem:[%s246 + $0x40] sm:$0xff]
      %v261 = vld [vmem:[%s246 + $0x48] sm:$0xff]
      %v262 = vld [vmem:[%s246 + $0x50] sm:$0xff]
      %v263 = vld [vmem:[%s246 + $0x58] sm:$0xff]
      %v264 = vld [vmem:[%s246 + $0x60] sm:$0xff]
      %v265 = vld [vmem:[%s246 + $0x68] sm:$0xff]
      %v266 = vld [vmem:[%s246 + $0x70] sm:$0xff]
      %v267 = vld [vmem:[%s246 + $0x78] sm:$0xff]
      %v268 = vld [vmem:[%s246 + $0x80] sm:$0xff]
      %v269 = vld [vmem:[%s246 + $0x88] sm:$0xff]
      %v270 = vld [vmem:[%s246 + $0x90] sm:$0xff]
      %v271 = vld [vmem:[%s246 + $0x98] sm:$0xff]
      %v272 = vld [vmem:[%s246 + $0xa0] sm:$0xff]
      %v273 = vld [vmem:[%s246 + $0xa8] sm:$0xff]
      %v274 = vld [vmem:[%s246 + $0xb0] sm:$0xff]
      %v275 = vld [vmem:[%s246 + $0xb8] sm:$0xff]
      %v276 = vld [vmem:[%s246 + $0xc0] sm:$0xff]
      %v277 = vld [vmem:[%s246 + $0xc8] sm:$0xff]
      %v278 = vld [vmem:[%s246 + $0xd0] sm:$0xff]
      %v279 = vld [vmem:[%s246 + $0xd8] sm:$0xff]
      %v280 = vld [vmem:[%s246 + $0xe0] sm:$0xff]
      %v281 = vld [vmem:[%s246 + $0xe8] sm:$0xff]
      %v282 = vld [vmem:[%s246 + $0xf0] sm:$0xff]
      %v283 = vld [vmem:[%s246 + $0xf8] sm:$0xff]
      %v284 = vld [vmem:[%s246 + $0x100] sm:$0xff]
      %v285 = vld [vmem:[%s246 + $0x108] sm:$0xff]
      %v286 = vld [vmem:[%s246 + $0x110] sm:$0xff]
      %v287 = vld [vmem:[%s246 + $0x118] sm:$0xff]
      %v288 = vld [vmem:[%s246 + $0x120] sm:$0xff]
      %v289 = vld [vmem:[%s246 + $0x128] sm:$0xff]
      %v290 = vld [vmem:[%s246 + $0x130] sm:$0xff]
      %v291 = vld [vmem:[%s246 + $0x138] sm:$0xff]
      %v292 = vld [vmem:[%s246 + $0x140] sm:$0xff]
      %v293 = vld [vmem:[%s246 + $0x148] sm:$0xff]
      %v294 = vld [vmem:[%s246 + $0x150] sm:$0xff]
      %v295 = vld [vmem:[%s246 + $0x158] sm:$0xff]
      %v296 = vld [vmem:[%s246 + $0x160] sm:$0xff]
      %v297 = vld [vmem:[%s246 + $0x168] sm:$0xff]
      %v298 = vld [vmem:[%s246 + $0x170] sm:$0xff]
      %v299 = vld [vmem:[%s246 + $0x178] sm:$0xff]
      %v300 = vld [vmem:[%s246 + $0x180] sm:$0xff]
      %v301 = vld [vmem:[%s246 + $0x188] sm:$0xff]
      %v302 = vld [vmem:[%s246 + $0x190] sm:$0xff]
      %v303 = vld [vmem:[%s246 + $0x198] sm:$0xff]
      %v304 = vld [vmem:[%s246 + $0x1a0] sm:$0xff]
      %v305 = vld [vmem:[%s246 + $0x1a8] sm:$0xff]
      %v306 = vld [vmem:[%s246 + $0x1b0] sm:$0xff]
      %v307 = vld [vmem:[%s246 + $0x1b8] sm:$0xff]
      %v308 = vld [vmem:[%s246 + $0x1c0] sm:$0xff]
      %v309 = vld [vmem:[%s246 + $0x1c8] sm:$0xff]
      %v310 = vld [vmem:[%s246 + $0x1d0] sm:$0xff]
      %v311 = vld [vmem:[%s246 + $0x1d8] sm:$0xff]
      %v312 = vld [vmem:[%s246 + $0x1e0] sm:$0xff]
      %v313 = vld [vmem:[%s246 + $0x1e8] sm:$0xff]
      %v314 = vld [vmem:[%s246 + $0x1f0] sm:$0xff]
      %v315 = vld [vmem:[%s246 + $0x1f8] sm:$0xff]
      %v316 = vld [vmem:[%s246 + $0x200] sm:$0xff]
      %v317 = vld [vmem:[%s246 + $0x208] sm:$0xff]
      %v318 = vld [vmem:[%s1] sm:$0xff]
      %v319 = vld [vmem:[%s1 + $0x8] sm:$0xff]
      %v320 = vld [vmem:[%s1 + $0x10] sm:$0xff]
      %v321 = vld [vmem:[%s1 + $0x18] sm:$0xff]
      %v322 = vld [vmem:[%s1 + $0x20] sm:$0xff]
      %v323 = vld [vmem:[%s1 + $0x28] sm:$0xff]
      %v324 = vld [vmem:[%s1 + $0x30] sm:$0xff]
      %v325 = vld [vmem:[%s1 + $0x38] sm:$0xff]
      %v326 = vld [vmem:[%s1 + $0x40] sm:$0xff]
      %v327 = vld [vmem:[%s1 + $0x48] sm:$0xff]
      %v328 = vld [vmem:[%s1 + $0x50] sm:$0xff]
      %v329 = vld [vmem:[%s1 + $0x58] sm:$0xff]
      %v330 = vld [vmem:[%s1 + $0x60] sm:$0xff]
      %v331 = vld [vmem:[%s1 + $0x68] sm:$0xff]
      %v332 = vld [vmem:[%s1 + $0x70] sm:$0xff]
      %v333 = vld [vmem:[%s1 + $0x78] sm:$0xff]
      %v334 = vld [vmem:[%s1 + $0x80] sm:$0xff]
      %v335 = vld [vmem:[%s1 + $0x88] sm:$0xff]
      %v336 = vld [vmem:[%s1 + $0x90] sm:$0xff]
      %v337 = vld [vmem:[%s1 + $0x98] sm:$0xff]
      %v338 = vld [vmem:[%s1 + $0xa0] sm:$0xff]
      %v339 = vld [vmem:[%s1 + $0xa8] sm:$0xff]
      %v340 = vld [vmem:[%s1 + $0xb0] sm:$0xff]
      %v341 = vld [vmem:[%s1 + $0xb8] sm:$0xff]
      %v342 = vld [vmem:[%s1 + $0xc0] sm:$0xff]
      %v343 = vld [vmem:[%s1 + $0xc8] sm:$0xff]
      %v344 = vld [vmem:[%s1 + $0xd0] sm:$0xff]
      %v345 = vld [vmem:[%s1 + $0xd8] sm:$0xff]
      %v346 = vld [vmem:[%s1 + $0xe0] sm:$0xff]
      %v347 = vld [vmem:[%s1 + $0xe8] sm:$0xff]
      %v348 = vld [vmem:[%s1 + $0xf0] sm:$0xff]
      %v349 = vld [vmem:[%s1 + $0xf8] sm:$0xff]
      %v350 = vld [vmem:[%s1 + $0x100] sm:$0xff]
      %v351 = vld [vmem:[%s1 + $0x108] sm:$0xff]
      %v352 = vld [vmem:[%s1 + $0x110] sm:$0xff]
      %v353 = vld [vmem:[%s1 + $0x118] sm:$0xff]
      %v354 = vld [vmem:[%s1 + $0x120] sm:$0xff]
      %v355 = vld [vmem:[%s1 + $0x128] sm:$0xff]
      %v356 = vld [vmem:[%s1 + $0x130] sm:$0xff]
      %v357 = vld [vmem:[%s1 + $0x138] sm:$0xff]
      %v358 = vld [vmem:[%s1 + $0x140] sm:$0xff]
      %v359 = vld [vmem:[%s1 + $0x148] sm:$0xff]
      %v360 = vld [vmem:[%s1 + $0x150] sm:$0xff]
      %v361 = vld [vmem:[%s1 + $0x158] sm:$0xff]
      %v362 = vld [vmem:[%s1 + $0x160] sm:$0xff]
      %v363 = vld [vmem:[%s1 + $0x168] sm:$0xff]
      %v364 = vld [vmem:[%s1 + $0x170] sm:$0xff]
      %v365 = vld [vmem:[%s1 + $0x178] sm:$0xff]
      %v366 = vld [vmem:[%s1 + $0x180] sm:$0xff]
      %v367 = vld [vmem:[%s1 + $0x188] sm:$0xff]
      %v368 = vld [vmem:[%s1 + $0x190] sm:$0xff]
      %v369 = vld [vmem:[%s1 + $0x198] sm:$0xff]
      %v370 = vld [vmem:[%s1 + $0x1a0] sm:$0xff]
      %v371 = vld [vmem:[%s1 + $0x1a8] sm:$0xff]
      %v372 = vld [vmem:[%s1 + $0x1b0] sm:$0xff]
      %v373 = vld [vmem:[%s1 + $0x1b8] sm:$0xff]
      %v374 = vld [vmem:[%s1 + $0x1c0] sm:$0xff]
      %v375 = vld [vmem:[%s1 + $0x1c8] sm:$0xff]
      %v376 = vld [vmem:[%s1 + $0x1d0] sm:$0xff]
      %v377 = vld [vmem:[%s1 + $0x1d8] sm:$0xff]
      %v378 = vld [vmem:[%s1 + $0x1e0] sm:$0xff]
      %v379 = vld [vmem:[%s1 + $0x1e8] sm:$0xff]
      %v380 = vld [vmem:[%s1 + $0x1f0] sm:$0xff]
      %v381 = vld [vmem:[%s1 + $0x1f8] sm:$0xff]
      %v382 = vld [vmem:[%s1 + $0x200] sm:$0xff]
      %v383 = vld [vmem:[%s1 + $0x208] sm:$0xff]
      %v384 = vld [vmem:[%s1 + $0x210] sm:$0xff]
      %v385 = vld [vmem:[%s1 + $0x218] sm:$0xff]
      %v386 = vld [vmem:[%s1 + $0x220] sm:$0xff]
      %v387 = vld [vmem:[%s1 + $0x228] sm:$0xff]
      %v388 = vld [vmem:[%s1 + $0x230] sm:$0xff]
      %v389 = vld [vmem:[%s1 + $0x238] sm:$0xff]
      %v390 = vld [vmem:[%s1 + $0x240] sm:$0xff]
      %v391 = vld [vmem:[%s1 + $0x248] sm:$0xff]
      %v392 = vld [vmem:[%s1 + $0x250] sm:$0xff]
      %v393 = vld [vmem:[%s1 + $0x258] sm:$0xff]
      %v394 = vld [vmem:[%s1 + $0x260] sm:$0xff]
      %v395 = vld [vmem:[%s1 + $0x268] sm:$0xff]
      %v396 = vld [vmem:[%s1 + $0x270] sm:$0xff]
      %v397 = vld [vmem:[%s1 + $0x278] sm:$0xff]
      %v398 = vld [vmem:[%s1 + $0x280] sm:$0xff]
      %v399 = vld [vmem:[%s1 + $0x288] sm:$0xff]
      %v400 = vld [vmem:[%s1 + $0x290] sm:$0xff]
      %v401 = vld [vmem:[%s1 + $0x298] sm:$0xff]
      %v402 = vld [vmem:[%s1 + $0x2a0] sm:$0xff]
      %v403 = vld [vmem:[%s1 + $0x2a8] sm:$0xff]
      %v404 = vld [vmem:[%s1 + $0x2b0] sm:$0xff]
      %v405 = vld [vmem:[%s1 + $0x2b8] sm:$0xff]
      %v406 = vld [vmem:[%s1 + $0x2c0] sm:$0xff]
      %v407 = vld [vmem:[%s1 + $0x2c8] sm:$0xff]
      %v408 = vld [vmem:[%s1 + $0x2d0] sm:$0xff]
      %v409 = vld [vmem:[%s1 + $0x2d8] sm:$0xff]
      %v410 = vld [vmem:[%s1 + $0x2e0] sm:$0xff]
      %v411 = vld [vmem:[%s1 + $0x2e8] sm:$0xff]
      %v412 = vld [vmem:[%s1 + $0x2f0] sm:$0xff]
      %v413 = vld [vmem:[%s1 + $0x2f8] sm:$0xff]
      %v414 = vld [vmem:[%s2] sm:$0x3]
      %v416 = vlaneseq
      %v417 = vshrl.u32 %v416, 7
      %v418 = vsub.s32 0, %v417
      %v419 = vrot.slane %v414, %v418
      %v420 = vlaneseq
      %v421 = vshrl.u32 %v420, 7
      %v422 = vsub.s32 1, %v421
      %v423 = vrot.slane %v414, %v422
      %v492 = vunpack.c.l.b16 %v252
      %v493 = vunpack.c.h.b16 %v252
      %v494 = vunpack.c.l.b16 %v253
      %v495 = vunpack.c.h.b16 %v253
      %v496 = vunpack.c.l.b16 %v254
      %v497 = vunpack.c.h.b16 %v254
      %v498 = vunpack.c.l.b16 %v255
      %v499 = vunpack.c.h.b16 %v255
      %v500 = vunpack.c.l.b16 %v256
      %v501 = vunpack.c.h.b16 %v256
      %v502 = vunpack.c.l.b16 %v257
      %v503 = vunpack.c.h.b16 %v257
      %v504 = vunpack.c.l.b16 %v258
      %v505 = vunpack.c.h.b16 %v258
      %v506 = vunpack.c.l.b16 %v259
      %v507 = vunpack.c.h.b16 %v259
      %v508 = vunpack.c.l.b16 %v260
      %v509 = vunpack.c.h.b16 %v260
      %v510 = vunpack.c.l.b16 %v261
      %v511 = vunpack.c.h.b16 %v261
      %v512 = vunpack.c.l.b16 %v262
      %v513 = vunpack.c.h.b16 %v262
      %v514 = vunpack.c.l.b16 %v263
      %v515 = vunpack.c.h.b16 %v263
      %v516 = vunpack.c.l.b16 %v264
      %v517 = vunpack.c.h.b16 %v264
      %v518 = vunpack.c.l.b16 %v265
      %v519 = vunpack.c.h.b16 %v265
      %v520 = vunpack.c.l.b16 %v266
      %v521 = vunpack.c.h.b16 %v266
      %v522 = vunpack.c.l.b16 %v267
      %v523 = vunpack.c.h.b16 %v267
      %v524 = vunpack.c.l.b16 %v268
      %v525 = vunpack.c.h.b16 %v268
      %v526 = vunpack.c.l.b16 %v269
      %v527 = vunpack.c.h.b16 %v269
      %v528 = vunpack.c.l.b16 %v270
      %v529 = vunpack.c.h.b16 %v270
      %v530 = vunpack.c.l.b16 %v271
      %v531 = vunpack.c.h.b16 %v271
      %v532 = vunpack.c.l.b16 %v272
      %v533 = vunpack.c.h.b16 %v272
      %v534 = vunpack.c.l.b16 %v273
      %v535 = vunpack.c.h.b16 %v273
      %v536 = vunpack.c.l.b16 %v274
      %v537 = vunpack.c.h.b16 %v274
      %v538 = vunpack.c.l.b16 %v275
      %v539 = vunpack.c.h.b16 %v275
      %v540 = vunpack.c.l.b16 %v276
      %v541 = vunpack.c.h.b16 %v276
      %v542 = vunpack.c.l.b16 %v277
      %v543 = vunpack.c.h.b16 %v277
      %v544 = vunpack.c.l.b16 %v278
      %v545 = vunpack.c.h.b16 %v278
      %v546 = vunpack.c.l.b16 %v279
      %v547 = vunpack.c.h.b16 %v279
      %v548 = vunpack.c.l.b16 %v280
      %v549 = vunpack.c.h.b16 %v280
      %v550 = vunpack.c.l.b16 %v281
      %v551 = vunpack.c.h.b16 %v281
      %v552 = vunpack.c.l.b16 %v282
      %v553 = vunpack.c.h.b16 %v282
      %v554 = vunpack.c.l.b16 %v283
      %v555 = vunpack.c.h.b16 %v283
      %v556 = vunpack.c.l.b16 %v284
      %v557 = vunpack.c.h.b16 %v284
      %v558 = vunpack.c.l.b16 %v285
      %v559 = vunpack.c.h.b16 %v285
      %v560 = vunpack.c.l.b16 %v286
      %v561 = vunpack.c.h.b16 %v286
      %v562 = vunpack.c.l.b16 %v287
      %v563 = vunpack.c.h.b16 %v287
      %v564 = vunpack.c.l.b16 %v288
      %v565 = vunpack.c.h.b16 %v288
      %v566 = vunpack.c.l.b16 %v289
      %v567 = vunpack.c.h.b16 %v289
      %v568 = vunpack.c.l.b16 %v290
      %v569 = vunpack.c.h.b16 %v290
      %v570 = vunpack.c.l.b16 %v291
      %v571 = vunpack.c.h.b16 %v291
      %v572 = vunpack.c.l.b16 %v292
      %v573 = vunpack.c.h.b16 %v292
      %v574 = vunpack.c.l.b16 %v293
      %v575 = vunpack.c.h.b16 %v293
      %v576 = vunpack.c.l.b16 %v294
      %v577 = vunpack.c.h.b16 %v294
      %v578 = vunpack.c.l.b16 %v295
      %v579 = vunpack.c.h.b16 %v295
      %v580 = vunpack.c.l.b16 %v296
      %v581 = vunpack.c.h.b16 %v296
      %v582 = vunpack.c.l.b16 %v297
      %v583 = vunpack.c.h.b16 %v297
      %v584 = vunpack.c.l.b16 %v298
      %v585 = vunpack.c.h.b16 %v298
      %v586 = vunpack.c.l.b16 %v299
      %v587 = vunpack.c.h.b16 %v299
      %v588 = vunpack.c.l.b16 %v300
      %v589 = vunpack.c.h.b16 %v300
      %v590 = vunpack.c.l.b16 %v301
      %v591 = vunpack.c.h.b16 %v301
      %v592 = vunpack.c.l.b16 %v302
      %v593 = vunpack.c.h.b16 %v302
      %v594 = vunpack.c.l.b16 %v303
      %v595 = vunpack.c.h.b16 %v303
      %v596 = vunpack.c.l.b16 %v304
      %v597 = vunpack.c.h.b16 %v304
      %v598 = vunpack.c.l.b16 %v305
      %v599 = vunpack.c.h.b16 %v305
      %v600 = vunpack.c.l.b16 %v306
      %v601 = vunpack.c.h.b16 %v306
      %v602 = vunpack.c.l.b16 %v307
      %v603 = vunpack.c.h.b16 %v307
      %v604 = vunpack.c.l.b16 %v308
      %v605 = vunpack.c.h.b16 %v308
      %v606 = vunpack.c.l.b16 %v309
      %v607 = vunpack.c.h.b16 %v309
      %v608 = vunpack.c.l.b16 %v310
      %v609 = vunpack.c.h.b16 %v310
      %v610 = vunpack.c.l.b16 %v311
      %v611 = vunpack.c.h.b16 %v311
      %v612 = vunpack.c.l.b16 %v312
      %v613 = vunpack.c.h.b16 %v312
      %v614 = vunpack.c.l.b16 %v313
      %v615 = vunpack.c.h.b16 %v313
      %v616 = vunpack.c.l.b16 %v314
      %v617 = vunpack.c.h.b16 %v314
      %v618 = vunpack.c.l.b16 %v315
      %v619 = vunpack.c.h.b16 %v315
      %v620 = vunpack.c.l.b16 %v316
      %v621 = vunpack.c.h.b16 %v316
      %v622 = vunpack.c.l.b16 %v317
      %v623 = vunpack.c.h.b16 %v317
      %v624 = vpack.c.b16 %v498, %v492
      %v625 = vpack.c.b16 %v499, %v493
      %v626 = vpack.c.b16 %v500, %v494
      %v627 = vpack.c.b16 %v501, %v495
      %v628 = vpack.c.b16 %v502, %v496
      %v629 = vpack.c.b16 %v503, %v497
      %v630 = vpack.c.b16 %v510, %v504
      %v631 = vpack.c.b16 %v511, %v505
      %v632 = vpack.c.b16 %v512, %v506
      %v633 = vpack.c.b16 %v513, %v507
      %v634 = vpack.c.b16 %v514, %v508
      %v635 = vpack.c.b16 %v515, %v509
      %v636 = vpack.c.b16 %v522, %v516
      %v637 = vpack.c.b16 %v523, %v517
      %v638 = vpack.c.b16 %v524, %v518
      %v639 = vpack.c.b16 %v525, %v519
      %v640 = vpack.c.b16 %v526, %v520
      %v641 = vpack.c.b16 %v527, %v521
      %v642 = vpack.c.b16 %v534, %v528
      %v643 = vpack.c.b16 %v535, %v529
      %v644 = vpack.c.b16 %v536, %v530
      %v645 = vpack.c.b16 %v537, %v531
      %v646 = vpack.c.b16 %v538, %v532
      %v647 = vpack.c.b16 %v539, %v533
      %v648 = vpack.c.b16 %v546, %v540
      %v649 = vpack.c.b16 %v547, %v541
      %v650 = vpack.c.b16 %v548, %v542
      %v651 = vpack.c.b16 %v549, %v543
      %v652 = vpack.c.b16 %v550, %v544
      %v653 = vpack.c.b16 %v551, %v545
      %v654 = vpack.c.b16 %v558, %v552
      %v655 = vpack.c.b16 %v559, %v553
      %v656 = vpack.c.b16 %v560, %v554
      %v657 = vpack.c.b16 %v561, %v555
      %v658 = vpack.c.b16 %v562, %v556
      %v659 = vpack.c.b16 %v563, %v557
      %v660 = vpack.c.b16 %v570, %v564
      %v661 = vpack.c.b16 %v571, %v565
      %v662 = vpack.c.b16 %v572, %v566
      %v663 = vpack.c.b16 %v573, %v567
      %v664 = vpack.c.b16 %v574, %v568
      %v665 = vpack.c.b16 %v575, %v569
      %v666 = vpack.c.b16 %v582, %v576
      %v667 = vpack.c.b16 %v583, %v577
      %v668 = vpack.c.b16 %v584, %v578
      %v669 = vpack.c.b16 %v585, %v579
      %v670 = vpack.c.b16 %v586, %v580
      %v671 = vpack.c.b16 %v587, %v581
      %v672 = vpack.c.b16 %v594, %v588
      %v673 = vpack.c.b16 %v595, %v589
      %v674 = vpack.c.b16 %v596, %v590
      %v675 = vpack.c.b16 %v597, %v591
      %v676 = vpack.c.b16 %v598, %v592
      %v677 = vpack.c.b16 %v599, %v593
      %v678 = vpack.c.b16 %v606, %v600
      %v679 = vpack.c.b16 %v607, %v601
      %v680 = vpack.c.b16 %v608, %v602
      %v681 = vpack.c.b16 %v609, %v603
      %v682 = vpack.c.b16 %v610, %v604
      %v683 = vpack.c.b16 %v611, %v605
      %v684 = vpack.c.b16 %v618, %v612
      %v685 = vpack.c.b16 %v619, %v613
      %v686 = vpack.c.b16 %v620, %v614
      %v687 = vpack.c.b16 %v621, %v615
      %v688 = vpack.c.b16 %v622, %v616
      %v689 = vpack.c.b16 %v623, %v617
      %v852 = vunpack.c.l.b16 %v318
      %v853 = vunpack.c.h.b16 %v318
      %v854 = vunpack.c.l.b16 %v319
      %v855 = vunpack.c.h.b16 %v319
      %v856 = vunpack.c.l.b16 %v320
      %v857 = vunpack.c.h.b16 %v320
      %v858 = vunpack.c.l.b16 %v321
      %v859 = vunpack.c.h.b16 %v321
      %v860 = vunpack.c.l.b16 %v322
      %v861 = vunpack.c.h.b16 %v322
      %v862 = vunpack.c.l.b16 %v323
      %v863 = vunpack.c.h.b16 %v323
      %v864 = vunpack.c.l.b16 %v324
      %v865 = vunpack.c.h.b16 %v324
      %v866 = vunpack.c.l.b16 %v325
      %v867 = vunpack.c.h.b16 %v325
      %v868 = vunpack.c.l.b16 %v326
      %v869 = vunpack.c.h.b16 %v326
      %v870 = vunpack.c.l.b16 %v327
      %v871 = vunpack.c.h.b16 %v327
      %v872 = vunpack.c.l.b16 %v328
      %v873 = vunpack.c.h.b16 %v328
      %v874 = vunpack.c.l.b16 %v329
      %v875 = vunpack.c.h.b16 %v329
      %v876 = vunpack.c.l.b16 %v330
      %v877 = vunpack.c.h.b16 %v330
      %v878 = vunpack.c.l.b16 %v331
      %v879 = vunpack.c.h.b16 %v331
      %v880 = vunpack.c.l.b16 %v332
      %v881 = vunpack.c.h.b16 %v332
      %v882 = vunpack.c.l.b16 %v333
      %v883 = vunpack.c.h.b16 %v333
      %v884 = vunpack.c.l.b16 %v334
      %v885 = vunpack.c.h.b16 %v334
      %v886 = vunpack.c.l.b16 %v335
      %v887 = vunpack.c.h.b16 %v335
      %v888 = vunpack.c.l.b16 %v336
      %v889 = vunpack.c.h.b16 %v336
      %v890 = vunpack.c.l.b16 %v337
      %v891 = vunpack.c.h.b16 %v337
      %v892 = vunpack.c.l.b16 %v338
      %v893 = vunpack.c.h.b16 %v338
      %v894 = vunpack.c.l.b16 %v339
      %v895 = vunpack.c.h.b16 %v339
      %v896 = vunpack.c.l.b16 %v340
      %v897 = vunpack.c.h.b16 %v340
      %v898 = vunpack.c.l.b16 %v341
      %v899 = vunpack.c.h.b16 %v341
      %v900 = vunpack.c.l.b16 %v342
      %v901 = vunpack.c.h.b16 %v342
      %v902 = vunpack.c.l.b16 %v343
      %v903 = vunpack.c.h.b16 %v343
      %v904 = vunpack.c.l.b16 %v344
      %v905 = vunpack.c.h.b16 %v344
      %v906 = vunpack.c.l.b16 %v345
      %v907 = vunpack.c.h.b16 %v345
      %v908 = vunpack.c.l.b16 %v346
      %v909 = vunpack.c.h.b16 %v346
      %v910 = vunpack.c.l.b16 %v347
      %v911 = vunpack.c.h.b16 %v347
      %v912 = vunpack.c.l.b16 %v348
      %v913 = vunpack.c.h.b16 %v348
      %v914 = vunpack.c.l.b16 %v349
      %v915 = vunpack.c.h.b16 %v349
      %v916 = vunpack.c.l.b16 %v350
      %v917 = vunpack.c.h.b16 %v350
      %v918 = vunpack.c.l.b16 %v351
      %v919 = vunpack.c.h.b16 %v351
      %v920 = vunpack.c.l.b16 %v352
      %v921 = vunpack.c.h.b16 %v352
      %v922 = vunpack.c.l.b16 %v353
      %v923 = vunpack.c.h.b16 %v353
      %v924 = vunpack.c.l.b16 %v354
      %v925 = vunpack.c.h.b16 %v354
      %v926 = vunpack.c.l.b16 %v355
      %v927 = vunpack.c.h.b16 %v355
      %v928 = vunpack.c.l.b16 %v356
      %v929 = vunpack.c.h.b16 %v356
      %v930 = vunpack.c.l.b16 %v357
      %v931 = vunpack.c.h.b16 %v357
      %v932 = vunpack.c.l.b16 %v358
      %v933 = vunpack.c.h.b16 %v358
      %v934 = vunpack.c.l.b16 %v359
      %v935 = vunpack.c.h.b16 %v359
      %v936 = vunpack.c.l.b16 %v360
      %v937 = vunpack.c.h.b16 %v360
      %v938 = vunpack.c.l.b16 %v361
      %v939 = vunpack.c.h.b16 %v361
      %v940 = vunpack.c.l.b16 %v362
      %v941 = vunpack.c.h.b16 %v362
      %v942 = vunpack.c.l.b16 %v363
      %v943 = vunpack.c.h.b16 %v363
      %v944 = vunpack.c.l.b16 %v364
      %v945 = vunpack.c.h.b16 %v364
      %v946 = vunpack.c.l.b16 %v365
      %v947 = vunpack.c.h.b16 %v365
      %v948 = vunpack.c.l.b16 %v366
      %v949 = vunpack.c.h.b16 %v366
      %v950 = vunpack.c.l.b16 %v367
      %v951 = vunpack.c.h.b16 %v367
      %v952 = vunpack.c.l.b16 %v368
      %v953 = vunpack.c.h.b16 %v368
      %v954 = vunpack.c.l.b16 %v369
      %v955 = vunpack.c.h.b16 %v369
      %v956 = vunpack.c.l.b16 %v370
      %v957 = vunpack.c.h.b16 %v370
      %v958 = vunpack.c.l.b16 %v371
      %v959 = vunpack.c.h.b16 %v371
      %v960 = vunpack.c.l.b16 %v372
      %v961 = vunpack.c.h.b16 %v372
      %v962 = vunpack.c.l.b16 %v373
      %v963 = vunpack.c.h.b16 %v373
      %v964 = vunpack.c.l.b16 %v374
      %v965 = vunpack.c.h.b16 %v374
      %v966 = vunpack.c.l.b16 %v375
      %v967 = vunpack.c.h.b16 %v375
      %v968 = vunpack.c.l.b16 %v376
      %v969 = vunpack.c.h.b16 %v376
      %v970 = vunpack.c.l.b16 %v377
      %v971 = vunpack.c.h.b16 %v377
      %v972 = vunpack.c.l.b16 %v378
      %v973 = vunpack.c.h.b16 %v378
      %v974 = vunpack.c.l.b16 %v379
      %v975 = vunpack.c.h.b16 %v379
      %v976 = vunpack.c.l.b16 %v380
      %v977 = vunpack.c.h.b16 %v380
      %v978 = vunpack.c.l.b16 %v381
      %v979 = vunpack.c.h.b16 %v381
      %v980 = vunpack.c.l.b16 %v382
      %v981 = vunpack.c.h.b16 %v382
      %v982 = vunpack.c.l.b16 %v383
      %v983 = vunpack.c.h.b16 %v383
      %v984 = vunpack.c.l.b16 %v384
      %v985 = vunpack.c.h.b16 %v384
      %v986 = vunpack.c.l.b16 %v385
      %v987 = vunpack.c.h.b16 %v385
      %v988 = vunpack.c.l.b16 %v386
      %v989 = vunpack.c.h.b16 %v386
      %v990 = vunpack.c.l.b16 %v387
      %v991 = vunpack.c.h.b16 %v387
      %v992 = vunpack.c.l.b16 %v388
      %v993 = vunpack.c.h.b16 %v388
      %v994 = vunpack.c.l.b16 %v389
      %v995 = vunpack.c.h.b16 %v389
      %v996 = vunpack.c.l.b16 %v390
      %v997 = vunpack.c.h.b16 %v390
      %v998 = vunpack.c.l.b16 %v391
      %v999 = vunpack.c.h.b16 %v391
      %v1000 = vunpack.c.l.b16 %v392
      %v1001 = vunpack.c.h.b16 %v392
      %v1002 = vunpack.c.l.b16 %v393
      %v1003 = vunpack.c.h.b16 %v393
      %v1004 = vunpack.c.l.b16 %v394
      %v1005 = vunpack.c.h.b16 %v394
      %v1006 = vunpack.c.l.b16 %v395
      %v1007 = vunpack.c.h.b16 %v395
      %v1008 = vunpack.c.l.b16 %v396
      %v1009 = vunpack.c.h.b16 %v396
      %v1010 = vunpack.c.l.b16 %v397
      %v1011 = vunpack.c.h.b16 %v397
      %v1012 = vunpack.c.l.b16 %v398
      %v1013 = vunpack.c.h.b16 %v398
      %v1014 = vunpack.c.l.b16 %v399
      %v1015 = vunpack.c.h.b16 %v399
      %v1016 = vunpack.c.l.b16 %v400
      %v1017 = vunpack.c.h.b16 %v400
      %v1018 = vunpack.c.l.b16 %v401
      %v1019 = vunpack.c.h.b16 %v401
      %v1020 = vunpack.c.l.b16 %v402
      %v1021 = vunpack.c.h.b16 %v402
      %v1022 = vunpack.c.l.b16 %v403
      %v1023 = vunpack.c.h.b16 %v403
      %v1024 = vunpack.c.l.b16 %v404
      %v1025 = vunpack.c.h.b16 %v404
      %v1026 = vunpack.c.l.b16 %v405
      %v1027 = vunpack.c.h.b16 %v405
      %v1028 = vunpack.c.l.b16 %v406
      %v1029 = vunpack.c.h.b16 %v406
      %v1030 = vunpack.c.l.b16 %v407
      %v1031 = vunpack.c.h.b16 %v407
      %v1032 = vunpack.c.l.b16 %v408
      %v1033 = vunpack.c.h.b16 %v408
      %v1034 = vunpack.c.l.b16 %v409
      %v1035 = vunpack.c.h.b16 %v409
      %v1036 = vunpack.c.l.b16 %v410
      %v1037 = vunpack.c.h.b16 %v410
      %v1038 = vunpack.c.l.b16 %v411
      %v1039 = vunpack.c.h.b16 %v411
      %v1040 = vunpack.c.l.b16 %v412
      %v1041 = vunpack.c.h.b16 %v412
      %v1042 = vunpack.c.l.b16 %v413
      %v1043 = vunpack.c.h.b16 %v413
      %v1044 = vpack.c.b16 %v854, %v852
      %v1045 = vpack.c.b16 %v855, %v853
      %v1046 = vpack.c.b16 %v858, %v856
      %v1047 = vpack.c.b16 %v859, %v857
      %v1048 = vpack.c.b16 %v862, %v860
      %v1049 = vpack.c.b16 %v863, %v861
      %v1050 = vpack.c.b16 %v866, %v864
      %v1051 = vpack.c.b16 %v867, %v865
      %v1052 = vpack.c.b16 %v870, %v868
      %v1053 = vpack.c.b16 %v871, %v869
      %v1054 = vpack.c.b16 %v874, %v872
      %v1055 = vpack.c.b16 %v875, %v873
      %v1056 = vpack.c.b16 %v878, %v876
      %v1057 = vpack.c.b16 %v879, %v877
      %v1058 = vpack.c.b16 %v882, %v880
      %v1059 = vpack.c.b16 %v883, %v881
      %v1060 = vpack.c.b16 %v886, %v884
      %v1061 = vpack.c.b16 %v887, %v885
      %v1062 = vpack.c.b16 %v890, %v888
      %v1063 = vpack.c.b16 %v891, %v889
      %v1064 = vpack.c.b16 %v894, %v892
      %v1065 = vpack.c.b16 %v895, %v893
      %v1066 = vpack.c.b16 %v898, %v896
      %v1067 = vpack.c.b16 %v899, %v897
      %v1068 = vpack.c.b16 %v902, %v900
      %v1069 = vpack.c.b16 %v903, %v901
      %v1070 = vpack.c.b16 %v906, %v904
      %v1071 = vpack.c.b16 %v907, %v905
      %v1072 = vpack.c.b16 %v910, %v908
      %v1073 = vpack.c.b16 %v911, %v909
      %v1074 = vpack.c.b16 %v914, %v912
      %v1075 = vpack.c.b16 %v915, %v913
      %v1076 = vpack.c.b16 %v918, %v916
      %v1077 = vpack.c.b16 %v919, %v917
      %v1078 = vpack.c.b16 %v922, %v920
      %v1079 = vpack.c.b16 %v923, %v921
      %v1080 = vpack.c.b16 %v926, %v924
      %v1081 = vpack.c.b16 %v927, %v925
      %v1082 = vpack.c.b16 %v930, %v928
      %v1083 = vpack.c.b16 %v931, %v929
      %v1084 = vpack.c.b16 %v934, %v932
      %v1085 = vpack.c.b16 %v935, %v933
      %v1086 = vpack.c.b16 %v938, %v936
      %v1087 = vpack.c.b16 %v939, %v937
      %v1088 = vpack.c.b16 %v942, %v940
      %v1089 = vpack.c.b16 %v943, %v941
      %v1090 = vpack.c.b16 %v946, %v944
      %v1091 = vpack.c.b16 %v947, %v945
      %v1092 = vpack.c.b16 %v950, %v948
      %v1093 = vpack.c.b16 %v951, %v949
      %v1094 = vpack.c.b16 %v954, %v952
      %v1095 = vpack.c.b16 %v955, %v953
      %v1096 = vpack.c.b16 %v958, %v956
      %v1097 = vpack.c.b16 %v959, %v957
      %v1098 = vpack.c.b16 %v962, %v960
      %v1099 = vpack.c.b16 %v963, %v961
      %v1100 = vpack.c.b16 %v966, %v964
      %v1101 = vpack.c.b16 %v967, %v965
      %v1102 = vpack.c.b16 %v970, %v968
      %v1103 = vpack.c.b16 %v971, %v969
      %v1104 = vpack.c.b16 %v974, %v972
      %v1105 = vpack.c.b16 %v975, %v973
      %v1106 = vpack.c.b16 %v978, %v976
      %v1107 = vpack.c.b16 %v979, %v977
      %v1108 = vpack.c.b16 %v982, %v980
      %v1109 = vpack.c.b16 %v983, %v981
      %v1110 = vpack.c.b16 %v986, %v984
      %v1111 = vpack.c.b16 %v987, %v985
      %v1112 = vpack.c.b16 %v990, %v988
      %v1113 = vpack.c.b16 %v991, %v989
      %v1114 = vpack.c.b16 %v994, %v992
      %v1115 = vpack.c.b16 %v995, %v993
      %v1116 = vpack.c.b16 %v998, %v996
      %v1117 = vpack.c.b16 %v999, %v997
      %v1118 = vpack.c.b16 %v1002, %v1000
      %v1119 = vpack.c.b16 %v1003, %v1001
      %v1120 = vpack.c.b16 %v1006, %v1004
      %v1121 = vpack.c.b16 %v1007, %v1005
      %v1122 = vpack.c.b16 %v1010, %v1008
      %v1123 = vpack.c.b16 %v1011, %v1009
      %v1124 = vpack.c.b16 %v1014, %v1012
      %v1125 = vpack.c.b16 %v1015, %v1013
      %v1126 = vpack.c.b16 %v1018, %v1016
      %v1127 = vpack.c.b16 %v1019, %v1017
      %v1128 = vpack.c.b16 %v1022, %v1020
      %v1129 = vpack.c.b16 %v1023, %v1021
      %v1130 = vpack.c.b16 %v1026, %v1024
      %v1131 = vpack.c.b16 %v1027, %v1025
      %v1132 = vpack.c.b16 %v1030, %v1028
      %v1133 = vpack.c.b16 %v1031, %v1029
      %v1134 = vpack.c.b16 %v1034, %v1032
      %v1135 = vpack.c.b16 %v1035, %v1033
      %v1136 = vpack.c.b16 %v1038, %v1036
      %v1137 = vpack.c.b16 %v1039, %v1037
      %v1138 = vpack.c.b16 %v1042, %v1040
      %v1139 = vpack.c.b16 %v1043, %v1041
      %1236 = vmatprep.subr.bf16.mxu0 %v1045
      %1237 = vmatpush1.bf16.msra.mxu0 %v1044
      %1238 = vmatprep.subr.bf16.mxu0 %v1047
      %1239 = vmatpush1.bf16.msra.mxu0 %v1046
      %1240 = vmatprep.subr.bf16.mxu0 %v1049
      %1241 = vmatpush1.bf16.msra.mxu0 %v1048
      %1242 = vmatprep.subr.bf16.mxu0 %v1051
      %1243 = vmatpush1.bf16.msra.mxu0 %v1050
      %1244 = vmatprep.subr.bf16.mxu0 %v1053
      %1245 = vmatpush1.bf16.msra.mxu0 %v1052
      %1246 = vmatprep.subr.bf16.mxu0 %v1055
      %1247 = vmatpush1.bf16.msra.mxu0 %v1054
      %1248 = vmatprep.subr.bf16.mxu0 %v1057
      %1249 = vmatpush1.bf16.msra.mxu0 %v1056
      %1250 = vmatprep.subr.bf16.mxu0 %v1059
      %1251 = vmatpush1.bf16.msra.mxu0 %v1058
      %1252 = vmatprep.subr.bf16.mxu0 %v1061
      %1253 = vmatpush1.bf16.msra.mxu0 %v1060
      %1254 = vmatprep.subr.bf16.mxu0 %v1063
      %1255 = vmatpush1.bf16.msra.mxu0 %v1062
      %1256 = vmatprep.subr.bf16.mxu0 %v1065
      %1257 = vmatpush1.bf16.msra.mxu0 %v1064
      %1258 = vmatprep.subr.bf16.mxu0 %v1067
      %1259 = vmatpush1.bf16.msra.mxu0 %v1066
      %1260 = vmatprep.subr.bf16.mxu0 %v1069
      %1261 = vmatpush1.bf16.msra.mxu0 %v1068
      %1262 = vmatprep.subr.bf16.mxu0 %v1071
      %1263 = vmatpush1.bf16.msra.mxu0 %v1070
      %1264 = vmatprep.subr.bf16.mxu0 %v1073
      %1265 = vmatpush1.bf16.msra.mxu0 %v1072
      %1266 = vmatprep.subr.bf16.mxu0 %v1075
      %1267 = vmatpush1.bf16.msra.mxu0 %v1074
      %1268 = vmatprep.mubr.bf16.mxu0 %v625
      %1269 = vmatmul.mubr.bf16.gmra.mrb[0].mxu0 %v624
      %v1270 = vpop.f32.mrb[0].mxu0
      %v1271 = vadd.f32 %v419, %v1270
      %v1272 = vpop.f32.mrb[0].mxu0
      %v1273 = vadd.f32 %v423, %v1272
      %v1274 = vpop.f32.mrb[0].mxu0
      %v1275 = vadd.f32 %v419, %v1274
      %v1276 = vpop.f32.mrb[0].mxu0
      %v1277 = vadd.f32 %v423, %v1276
      %1278 = vmatprep.mubr.bf16.mxu0 %v631
      %1279 = vmatmul.mubr.bf16.gmra.mrb[0].mxu0 %v630
      %v1280 = vpop.f32.mrb[0].mxu0
      %v1281 = vadd.f32 %v419, %v1280
      %v1282 = vpop.f32.mrb[0].mxu0
      %v1283 = vadd.f32 %v423, %v1282
      %v1284 = vpop.f32.mrb[0].mxu0
      %v1285 = vadd.f32 %v419, %v1284
      %v1286 = vpop.f32.mrb[0].mxu0
      %v1287 = vadd.f32 %v423, %v1286
      %1288 = vmatprep.mubr.bf16.mxu0 %v637
      %1289 = vmatmul.mubr.bf16.gmra.mrb[0].mxu0 %v636
      %v1290 = vpop.f32.mrb[0].mxu0
      %v1291 = vadd.f32 %v419, %v1290
      %v1292 = vpop.f32.mrb[0].mxu0
      %v1293 = vadd.f32 %v423, %v1292
      %v1294 = vpop.f32.mrb[0].mxu0
      %v1295 = vadd.f32 %v419, %v1294
      %v1296 = vpop.f32.mrb[0].mxu0
      %v1297 = vadd.f32 %v423, %v1296
      %1298 = vmatprep.mubr.bf16.mxu0 %v643
      %1299 = vmatmul.mubr.bf16.gmra.mrb[0].mxu0 %v642
      %v1300 = vpop.f32.mrb[0].mxu0
      %v1301 = vadd.f32 %v419, %v1300
      %v1302 = vpop.f32.mrb[0].mxu0
      %v1303 = vadd.f32 %v423, %v1302
      %v1304 = vpop.f32.mrb[0].mxu0
      %v1305 = vadd.f32 %v419, %v1304
      %v1306 = vpop.f32.mrb[0].mxu0
      %v1307 = vadd.f32 %v423, %v1306
      %1308 = vmatprep.mubr.bf16.mxu0 %v649
      %1309 = vmatmul.mubr.bf16.gmra.mrb[0].mxu0 %v648
      %v1310 = vpop.f32.mrb[0].mxu0
      %v1311 = vadd.f32 %v419, %v1310
      %v1312 = vpop.f32.mrb[0].mxu0
      %v1313 = vadd.f32 %v423, %v1312
      %v1314 = vpop.f32.mrb[0].mxu0
      %v1315 = vadd.f32 %v419, %v1314
      %v1316 = vpop.f32.mrb[0].mxu0
      %v1317 = vadd.f32 %v423, %v1316
      %1318 = vmatprep.mubr.bf16.mxu0 %v655
      %1319 = vmatmul.mubr.bf16.gmra.mrb[0].mxu0 %v654
      %v1320 = vpop.f32.mrb[0].mxu0
      %v1321 = vadd.f32 %v419, %v1320
      %v1322 = vpop.f32.mrb[0].mxu0
      %v1323 = vadd.f32 %v423, %v1322
      %v1324 = vpop.f32.mrb[0].mxu0
      %v1325 = vadd.f32 %v419, %v1324
      %v1326 = vpop.f32.mrb[0].mxu0
      %v1327 = vadd.f32 %v423, %v1326
      %1328 = vmatprep.mubr.bf16.mxu0 %v661
      %1329 = vmatmul.mubr.bf16.gmra.mrb[0].mxu0 %v660
      %v1330 = vpop.f32.mrb[0].mxu0
      %v1331 = vadd.f32 %v419, %v1330
      %v1332 = vpop.f32.mrb[0].mxu0
      %v1333 = vadd.f32 %v423, %v1332
      %v1334 = vpop.f32.mrb[0].mxu0
      %v1335 = vadd.f32 %v419, %v1334
      %v1336 = vpop.f32.mrb[0].mxu0
      %v1337 = vadd.f32 %v423, %v1336
      %1338 = vmatprep.mubr.bf16.mxu0 %v667
      %1339 = vmatmul.mubr.bf16.gmra.mrb[0].mxu0 %v666
      %v1340 = vpop.f32.mrb[0].mxu0
      %v1341 = vadd.f32 %v419, %v1340
      %v1342 = vpop.f32.mrb[0].mxu0
      %v1343 = vadd.f32 %v423, %v1342
      %v1344 = vpop.f32.mrb[0].mxu0
      %v1345 = vadd.f32 %v419, %v1344
      %v1346 = vpop.f32.mrb[0].mxu0
      %v1347 = vadd.f32 %v423, %v1346
      %1348 = vmatprep.mubr.bf16.mxu0 %v673
      %1349 = vmatmul.mubr.bf16.gmra.mrb[0].mxu0 %v672
      %v1350 = vpop.f32.mrb[0].mxu0
      %v1351 = vadd.f32 %v419, %v1350
      %v1352 = vpop.f32.mrb[0].mxu0
      %v1353 = vadd.f32 %v423, %v1352
      %v1354 = vpop.f32.mrb[0].mxu0
      %v1355 = vadd.f32 %v419, %v1354
      %v1356 = vpop.f32.mrb[0].mxu0
      %v1357 = vadd.f32 %v423, %v1356
      %1358 = vmatprep.mubr.bf16.mxu0 %v679
      %1359 = vmatmul.mubr.bf16.gmra.mrb[0].mxu0 %v678
      %v1360 = vpop.f32.mrb[0].mxu0
      %v1361 = vadd.f32 %v419, %v1360
      %v1362 = vpop.f32.mrb[0].mxu0
      %v1363 = vadd.f32 %v423, %v1362
      %v1364 = vpop.f32.mrb[0].mxu0
      %v1365 = vadd.f32 %v419, %v1364
      %v1366 = vpop.f32.mrb[0].mxu0
      %v1367 = vadd.f32 %v423, %v1366
      %1368 = vmatprep.mubr.bf16.mxu0 %v685
      %1369 = vmatmul.mubr.bf16.gmra.mrb[0].mxu0 %v684
      %v1370 = vpop.f32.mrb[0].mxu0
      %v1371 = vadd.f32 %v419, %v1370
      %v1372 = vpop.f32.mrb[0].mxu0
      %v1373 = vadd.f32 %v423, %v1372
      %v1374 = vpop.f32.mrb[0].mxu0
      %v1375 = vadd.f32 %v419, %v1374
      %v1376 = vpop.f32.mrb[0].mxu0
      %v1377 = vadd.f32 %v423, %v1376
      %1378 = vdwg.mxu0
      %1379 = vmatprep.subr.bf16.mxu0 %v1077
      %1380 = vmatpush1.bf16.msra.mxu0 %v1076
      %1381 = vmatprep.subr.bf16.mxu0 %v1079
      %1382 = vmatpush1.bf16.msra.mxu0 %v1078
      %1383 = vmatprep.subr.bf16.mxu0 %v1081
      %1384 = vmatpush1.bf16.msra.mxu0 %v1080
      %1385 = vmatprep.subr.bf16.mxu0 %v1083
      %1386 = vmatpush1.bf16.msra.mxu0 %v1082
      %1387 = vmatprep.subr.bf16.mxu0 %v1085
      %1388 = vmatpush1.bf16.msra.mxu0 %v1084
      %1389 = vmatprep.subr.bf16.mxu0 %v1087
      %1390 = vmatpush1.bf16.msra.mxu0 %v1086
      %1391 = vmatprep.subr.bf16.mxu0 %v1089
      %1392 = vmatpush1.bf16.msra.mxu0 %v1088
      %1393 = vmatprep.subr.bf16.mxu0 %v1091
      %1394 = vmatpush1.bf16.msra.mxu0 %v1090
      %1395 = vmatprep.subr.bf16.mxu0 %v1093
      %1396 = vmatpush1.bf16.msra.mxu0 %v1092
      %1397 = vmatprep.subr.bf16.mxu0 %v1095
      %1398 = vmatpush1.bf16.msra.mxu0 %v1094
      %1399 = vmatprep.subr.bf16.mxu0 %v1097
      %1400 = vmatpush1.bf16.msra.mxu0 %v1096
      %1401 = vmatprep.subr.bf16.mxu0 %v1099
      %1402 = vmatpush1.bf16.msra.mxu0 %v1098
      %1403 = vmatprep.subr.bf16.mxu0 %v1101
      %1404 = vmatpush1.bf16.msra.mxu0 %v1100
      %1405 = vmatprep.subr.bf16.mxu0 %v1103
      %1406 = vmatpush1.bf16.msra.mxu0 %v1102
      %1407 = vmatprep.subr.bf16.mxu0 %v1105
      %1408 = vmatpush1.bf16.msra.mxu0 %v1104
      %1409 = vmatprep.subr.bf16.mxu0 %v1107
      %1410 = vmatpush1.bf16.msra.mxu0 %v1106
      %1411 = vmatprep.mubr.bf16.mxu0 %v627
      %1412 = vmatmul.mubr.bf16.gmra.mrb[0].mxu0 %v626
      %v1413 = vpop.f32.mrb[0].mxu0
      %v1414 = vadd.f32 %v1271, %v1413
      %v1415 = vpop.f32.mrb[0].mxu0
      %v1416 = vadd.f32 %v1273, %v1415
      %v1417 = vpop.f32.mrb[0].mxu0
      %v1418 = vadd.f32 %v1275, %v1417
      %v1419 = vpop.f32.mrb[0].mxu0
      %v1420 = vadd.f32 %v1277, %v1419
      %1421 = vmatprep.mubr.bf16.mxu0 %v633
      %1422 = vmatmul.mubr.bf16.gmra.mrb[0].mxu0 %v632
      %v1423 = vpop.f32.mrb[0].mxu0
      %v1424 = vadd.f32 %v1281, %v1423
      %v1425 = vpop.f32.mrb[0].mxu0
      %v1426 = vadd.f32 %v1283, %v1425
      %v1427 = vpop.f32.mrb[0].mxu0
      %v1428 = vadd.f32 %v1285, %v1427
      %v1429 = vpop.f32.mrb[0].mxu0
      %v1430 = vadd.f32 %v1287, %v1429
      %1431 = vmatprep.mubr.bf16.mxu0 %v639
      %1432 = vmatmul.mubr.bf16.gmra.mrb[0].mxu0 %v638
      %v1433 = vpop.f32.mrb[0].mxu0
      %v1434 = vadd.f32 %v1291, %v1433
      %v1435 = vpop.f32.mrb[0].mxu0
      %v1436 = vadd.f32 %v1293, %v1435
      %v1437 = vpop.f32.mrb[0].mxu0
      %v1438 = vadd.f32 %v1295, %v1437
      %v1439 = vpop.f32.mrb[0].mxu0
      %v1440 = vadd.f32 %v1297, %v1439
      %1441 = vmatprep.mubr.bf16.mxu0 %v645
      %1442 = vmatmul.mubr.bf16.gmra.mrb[0].mxu0 %v644
      %v1443 = vpop.f32.mrb[0].mxu0
      %v1444 = vadd.f32 %v1301, %v1443
      %v1445 = vpop.f32.mrb[0].mxu0
      %v1446 = vadd.f32 %v1303, %v1445
      %v1447 = vpop.f32.mrb[0].mxu0
      %v1448 = vadd.f32 %v1305, %v1447
      %v1449 = vpop.f32.mrb[0].mxu0
      %v1450 = vadd.f32 %v1307, %v1449
      %1451 = vmatprep.mubr.bf16.mxu0 %v651
      %1452 = vmatmul.mubr.bf16.gmra.mrb[0].mxu0 %v650
      %v1453 = vpop.f32.mrb[0].mxu0
      %v1454 = vadd.f32 %v1311, %v1453
      %v1455 = vpop.f32.mrb[0].mxu0
      %v1456 = vadd.f32 %v1313, %v1455
      %v1457 = vpop.f32.mrb[0].mxu0
      %v1458 = vadd.f32 %v1315, %v1457
      %v1459 = vpop.f32.mrb[0].mxu0
      %v1460 = vadd.f32 %v1317, %v1459
      %1461 = vmatprep.mubr.bf16.mxu0 %v657
      %1462 = vmatmul.mubr.bf16.gmra.mrb[0].mxu0 %v656
      %v1463 = vpop.f32.mrb[0].mxu0
      %v1464 = vadd.f32 %v1321, %v1463
      %v1465 = vpop.f32.mrb[0].mxu0
      %v1466 = vadd.f32 %v1323, %v1465
      %v1467 = vpop.f32.mrb[0].mxu0
      %v1468 = vadd.f32 %v1325, %v1467
      %v1469 = vpop.f32.mrb[0].mxu0
      %v1470 = vadd.f32 %v1327, %v1469
      %1471 = vmatprep.mubr.bf16.mxu0 %v663
      %1472 = vmatmul.mubr.bf16.gmra.mrb[0].mxu0 %v662
      %v1473 = vpop.f32.mrb[0].mxu0
      %v1474 = vadd.f32 %v1331, %v1473
      %v1475 = vpop.f32.mrb[0].mxu0
      %v1476 = vadd.f32 %v1333, %v1475
      %v1477 = vpop.f32.mrb[0].mxu0
      %v1478 = vadd.f32 %v1335, %v1477
      %v1479 = vpop.f32.mrb[0].mxu0
      %v1480 = vadd.f32 %v1337, %v1479
      %1481 = vmatprep.mubr.bf16.mxu0 %v669
      %1482 = vmatmul.mubr.bf16.gmra.mrb[0].mxu0 %v668
      %v1483 = vpop.f32.mrb[0].mxu0
      %v1484 = vadd.f32 %v1341, %v1483
      %v1485 = vpop.f32.mrb[0].mxu0
      %v1486 = vadd.f32 %v1343, %v1485
      %v1487 = vpop.f32.mrb[0].mxu0
      %v1488 = vadd.f32 %v1345, %v1487
      %v1489 = vpop.f32.mrb[0].mxu0
      %v1490 = vadd.f32 %v1347, %v1489
      %1491 = vmatprep.mubr.bf16.mxu0 %v675
      %1492 = vmatmul.mubr.bf16.gmra.mrb[0].mxu0 %v674
      %v1493 = vpop.f32.mrb[0].mxu0
      %v1494 = vadd.f32 %v1351, %v1493
      %v1495 = vpop.f32.mrb[0].mxu0
      %v1496 = vadd.f32 %v1353, %v1495
      %v1497 = vpop.f32.mrb[0].mxu0
      %v1498 = vadd.f32 %v1355, %v1497
      %v1499 = vpop.f32.mrb[0].mxu0
      %v1500 = vadd.f32 %v1357, %v1499
      %1501 = vmatprep.mubr.bf16.mxu0 %v681
      %1502 = vmatmul.mubr.bf16.gmra.mrb[0].mxu0 %v680
      %v1503 = vpop.f32.mrb[0].mxu0
      %v1504 = vadd.f32 %v1361, %v1503
      %v1505 = vpop.f32.mrb[0].mxu0
      %v1506 = vadd.f32 %v1363, %v1505
      %v1507 = vpop.f32.mrb[0].mxu0
      %v1508 = vadd.f32 %v1365, %v1507
      %v1509 = vpop.f32.mrb[0].mxu0
      %v1510 = vadd.f32 %v1367, %v1509
      %1511 = vmatprep.mubr.bf16.mxu0 %v687
      %1512 = vmatmul.mubr.bf16.gmra.mrb[0].mxu0 %v686
      %v1513 = vpop.f32.mrb[0].mxu0
      %v1514 = vadd.f32 %v1371, %v1513
      %v1515 = vpop.f32.mrb[0].mxu0
      %v1516 = vadd.f32 %v1373, %v1515
      %v1517 = vpop.f32.mrb[0].mxu0
      %v1518 = vadd.f32 %v1375, %v1517
      %v1519 = vpop.f32.mrb[0].mxu0
      %v1520 = vadd.f32 %v1377, %v1519
      %1521 = vdwg.mxu0
      %1522 = vmatprep.subr.bf16.mxu0 %v1109
      %1523 = vmatpush1.bf16.msra.mxu0 %v1108
      %1524 = vmatprep.subr.bf16.mxu0 %v1111
      %1525 = vmatpush1.bf16.msra.mxu0 %v1110
      %1526 = vmatprep.subr.bf16.mxu0 %v1113
      %1527 = vmatpush1.bf16.msra.mxu0 %v1112
      %1528 = vmatprep.subr.bf16.mxu0 %v1115
      %1529 = vmatpush1.bf16.msra.mxu0 %v1114
      %1530 = vmatprep.subr.bf16.mxu0 %v1117
      %1531 = vmatpush1.bf16.msra.mxu0 %v1116
      %1532 = vmatprep.subr.bf16.mxu0 %v1119
      %1533 = vmatpush1.bf16.msra.mxu0 %v1118
      %1534 = vmatprep.subr.bf16.mxu0 %v1121
      %1535 = vmatpush1.bf16.msra.mxu0 %v1120
      %1536 = vmatprep.subr.bf16.mxu0 %v1123
      %1537 = vmatpush1.bf16.msra.mxu0 %v1122
      %1538 = vmatprep.subr.bf16.mxu0 %v1125
      %1539 = vmatpush1.bf16.msra.mxu0 %v1124
      %1540 = vmatprep.subr.bf16.mxu0 %v1127
      %1541 = vmatpush1.bf16.msra.mxu0 %v1126
      %1542 = vmatprep.subr.bf16.mxu0 %v1129
      %1543 = vmatpush1.bf16.msra.mxu0 %v1128
      %1544 = vmatprep.subr.bf16.mxu0 %v1131
      %1545 = vmatpush1.bf16.msra.mxu0 %v1130
      %1546 = vmatprep.subr.bf16.mxu0 %v1133
      %1547 = vmatpush1.bf16.msra.mxu0 %v1132
      %1548 = vmatprep.subr.bf16.mxu0 %v1135
      %1549 = vmatpush1.bf16.msra.mxu0 %v1134
      %1550 = vmatprep.subr.bf16.mxu0 %v1137
      %1551 = vmatpush1.bf16.msra.mxu0 %v1136
      %1552 = vmatprep.subr.bf16.mxu0 %v1139
      %1553 = vmatpush1.bf16.msra.mxu0 %v1138
      %1554 = vmatprep.mubr.bf16.mxu0 %v629
      %1555 = vmatmul.mubr.bf16.gmra.mrb[0].mxu0 %v628
      %v1556 = vpop.f32.mrb[0].mxu0
      %v1557 = vadd.f32 %v1414, %v1556
      %v1558 = vpop.f32.mrb[0].mxu0
      %v1559 = vadd.f32 %v1416, %v1558
      %v1560 = vpop.f32.mrb[0].mxu0
      %v1561 = vadd.f32 %v1418, %v1560
      %v1562 = vpop.f32.mrb[0].mxu0
      %v1563 = vadd.f32 %v1420, %v1562
      %1564 = vmatprep.mubr.bf16.mxu0 %v635
      %1565 = vmatmul.mubr.bf16.gmra.mrb[0].mxu0 %v634
      %v1566 = vpop.f32.mrb[0].mxu0
      %v1567 = vadd.f32 %v1424, %v1566
      %v1568 = vpop.f32.mrb[0].mxu0
      %v1569 = vadd.f32 %v1426, %v1568
      %v1570 = vpop.f32.mrb[0].mxu0
      %v1571 = vadd.f32 %v1428, %v1570
      %v1572 = vpop.f32.mrb[0].mxu0
      %v1573 = vadd.f32 %v1430, %v1572
      %1574 = vmatprep.mubr.bf16.mxu0 %v641
      %1575 = vmatmul.mubr.bf16.gmra.mrb[0].mxu0 %v640
      %v1576 = vpop.f32.mrb[0].mxu0
      %v1577 = vadd.f32 %v1434, %v1576
      %v1578 = vpop.f32.mrb[0].mxu0
      %v1579 = vadd.f32 %v1436, %v1578
      %v1580 = vpop.f32.mrb[0].mxu0
      %v1581 = vadd.f32 %v1438, %v1580
      %v1582 = vpop.f32.mrb[0].mxu0
      %v1583 = vadd.f32 %v1440, %v1582
      %1584 = vmatprep.mubr.bf16.mxu0 %v647
      %1585 = vmatmul.mubr.bf16.gmra.mrb[0].mxu0 %v646
      %v1586 = vpop.f32.mrb[0].mxu0
      %v1587 = vadd.f32 %v1444, %v1586
      %v1588 = vpop.f32.mrb[0].mxu0
      %v1589 = vadd.f32 %v1446, %v1588
      %v1590 = vpop.f32.mrb[0].mxu0
      %v1591 = vadd.f32 %v1448, %v1590
      %v1592 = vpop.f32.mrb[0].mxu0
      %v1593 = vadd.f32 %v1450, %v1592
      %1594 = vmatprep.mubr.bf16.mxu0 %v653
      %1595 = vmatmul.mubr.bf16.gmra.mrb[0].mxu0 %v652
      %v1596 = vpop.f32.mrb[0].mxu0
      %v1597 = vadd.f32 %v1454, %v1596
      %v1598 = vpop.f32.mrb[0].mxu0
      %v1599 = vadd.f32 %v1456, %v1598
      %v1600 = vpop.f32.mrb[0].mxu0
      %v1601 = vadd.f32 %v1458, %v1600
      %v1602 = vpop.f32.mrb[0].mxu0
      %v1603 = vadd.f32 %v1460, %v1602
      %1604 = vmatprep.mubr.bf16.mxu0 %v659
      %1605 = vmatmul.mubr.bf16.gmra.mrb[0].mxu0 %v658
      %v1606 = vpop.f32.mrb[0].mxu0
      %v1607 = vadd.f32 %v1464, %v1606
      %v1608 = vpop.f32.mrb[0].mxu0
      %v1609 = vadd.f32 %v1466, %v1608
      %v1610 = vpop.f32.mrb[0].mxu0
      %v1611 = vadd.f32 %v1468, %v1610
      %v1612 = vpop.f32.mrb[0].mxu0
      %v1613 = vadd.f32 %v1470, %v1612
      %1614 = vmatprep.mubr.bf16.mxu0 %v665
      %1615 = vmatmul.mubr.bf16.gmra.mrb[0].mxu0 %v664
      %v1616 = vpop.f32.mrb[0].mxu0
      %v1617 = vadd.f32 %v1474, %v1616
      %v1618 = vpop.f32.mrb[0].mxu0
      %v1619 = vadd.f32 %v1476, %v1618
      %v1620 = vpop.f32.mrb[0].mxu0
      %v1621 = vadd.f32 %v1478, %v1620
      %v1622 = vpop.f32.mrb[0].mxu0
      %v1623 = vadd.f32 %v1480, %v1622
      %1624 = vmatprep.mubr.bf16.mxu0 %v671
      %1625 = vmatmul.mubr.bf16.gmra.mrb[0].mxu0 %v670
      %v1626 = vpop.f32.mrb[0].mxu0
      %v1627 = vadd.f32 %v1484, %v1626
      %v1628 = vpop.f32.mrb[0].mxu0
      %v1629 = vadd.f32 %v1486, %v1628
      %v1630 = vpop.f32.mrb[0].mxu0
      %v1631 = vadd.f32 %v1488, %v1630
      %v1632 = vpop.f32.mrb[0].mxu0
      %v1633 = vadd.f32 %v1490, %v1632
      %1634 = vmatprep.mubr.bf16.mxu0 %v677
      %1635 = vmatmul.mubr.bf16.gmra.mrb[0].mxu0 %v676
      %v1636 = vpop.f32.mrb[0].mxu0
      %v1637 = vadd.f32 %v1494, %v1636
      %v1638 = vpop.f32.mrb[0].mxu0
      %v1639 = vadd.f32 %v1496, %v1638
      %v1640 = vpop.f32.mrb[0].mxu0
      %v1641 = vadd.f32 %v1498, %v1640
      %v1642 = vpop.f32.mrb[0].mxu0
      %v1643 = vadd.f32 %v1500, %v1642
      %1644 = vmatprep.mubr.bf16.mxu0 %v683
      %1645 = vmatmul.mubr.bf16.gmra.mrb[0].mxu0 %v682
      %v1646 = vpop.f32.mrb[0].mxu0
      %v1647 = vadd.f32 %v1504, %v1646
      %v1648 = vpop.f32.mrb[0].mxu0
      %v1649 = vadd.f32 %v1506, %v1648
      %v1650 = vpop.f32.mrb[0].mxu0
      %v1651 = vadd.f32 %v1508, %v1650
      %v1652 = vpop.f32.mrb[0].mxu0
      %v1653 = vadd.f32 %v1510, %v1652
      %1654 = vmatprep.mubr.bf16.mxu0 %v689
      %1655 = vmatmul.mubr.bf16.gmra.mrb[0].mxu0 %v688
      %v1656 = vpop.f32.mrb[0].mxu0
      %v1657 = vadd.f32 %v1514, %v1656
      %v1658 = vpop.f32.mrb[0].mxu0
      %v1659 = vadd.f32 %v1516, %v1658
      %v1660 = vpop.f32.mrb[0].mxu0
      %v1661 = vadd.f32 %v1518, %v1660
      %v1662 = vpop.f32.mrb[0].mxu0
      %v1663 = vadd.f32 %v1520, %v1662
      %1664 = vdwg.mxu0
      %v1665 = vsub.f32 0.0, %v1559
      %v1666 = vsub.f32 0.0, %v1563
      %v1667 = vsub.f32 0.0, %v1569
      %v1668 = vsub.f32 0.0, %v1573
      %v1669 = vsub.f32 0.0, %v1579
      %v1670 = vsub.f32 0.0, %v1583
      %v1671 = vsub.f32 0.0, %v1589
      %v1672 = vsub.f32 0.0, %v1593
      %v1673 = vsub.f32 0.0, %v1599
      %v1674 = vsub.f32 0.0, %v1603
      %v1675 = vsub.f32 0.0, %v1609
      %v1676 = vsub.f32 0.0, %v1613
      %v1677 = vsub.f32 0.0, %v1619
      %v1678 = vsub.f32 0.0, %v1623
      %v1679 = vsub.f32 0.0, %v1629
      %v1680 = vsub.f32 0.0, %v1633
      %v1681 = vsub.f32 0.0, %v1639
      %v1682 = vsub.f32 0.0, %v1643
      %v1683 = vsub.f32 0.0, %v1649
      %v1684 = vsub.f32 0.0, %v1653
      %v1685 = vsub.f32 0.0, %v1659
      %v1686 = vsub.f32 0.0, %v1663
      %v1687 = vmul.f32 %v1665, 1.442695
      %v1688 = vpow.pop %v1687
      %v1689 = vmul.f32 %v1666, 1.442695
      %v1690 = vpow.pop %v1689
      %v1691 = vmul.f32 %v1667, 1.442695
      %v1692 = vpow.pop %v1691
      %v1693 = vmul.f32 %v1668, 1.442695
      %v1694 = vpow.pop %v1693
      %v1695 = vmul.f32 %v1669, 1.442695
      %v1696 = vpow.pop %v1695
      %v1697 = vmul.f32 %v1670, 1.442695
      %v1698 = vpow.pop %v1697
      %v1699 = vmul.f32 %v1671, 1.442695
      %v1700 = vpow.pop %v1699
      %v1701 = vmul.f32 %v1672, 1.442695
      %v1702 = vpow.pop %v1701
      %v1703 = vmul.f32 %v1673, 1.442695
      %v1704 = vpow.pop %v1703
      %v1705 = vmul.f32 %v1674, 1.442695
      %v1706 = vpow.pop %v1705
      %v1707 = vmul.f32 %v1675, 1.442695
      %v1708 = vpow.pop %v1707
      %v1709 = vmul.f32 %v1676, 1.442695
      %v1710 = vpow.pop %v1709
      %v1711 = vmul.f32 %v1677, 1.442695
      %v1712 = vpow.pop %v1711
      %v1713 = vmul.f32 %v1678, 1.442695
      %v1714 = vpow.pop %v1713
      %v1715 = vmul.f32 %v1679, 1.442695
      %v1716 = vpow.pop %v1715
      %v1717 = vmul.f32 %v1680, 1.442695
      %v1718 = vpow.pop %v1717
      %v1719 = vmul.f32 %v1681, 1.442695
      %v1720 = vpow.pop %v1719
      %v1721 = vmul.f32 %v1682, 1.442695
      %v1722 = vpow.pop %v1721
      %v1723 = vmul.f32 %v1683, 1.442695
      %v1724 = vpow.pop %v1723
      %v1725 = vmul.f32 %v1684, 1.442695
      %v1726 = vpow.pop %v1725
      %v1727 = vmul.f32 %v1685, 1.442695
      %v1728 = vpow.pop %v1727
      %v1729 = vmul.f32 %v1686, 1.442695
      %v1730 = vpow.pop %v1729
      %v1731 = vadd.f32 %v1688, 1.0
      %v1732 = vadd.f32 %v1690, 1.0
      %v1733 = vadd.f32 %v1692, 1.0
      %v1734 = vadd.f32 %v1694, 1.0
      %v1735 = vadd.f32 %v1696, 1.0
      %v1736 = vadd.f32 %v1698, 1.0
      %v1737 = vadd.f32 %v1700, 1.0
      %v1738 = vadd.f32 %v1702, 1.0
      %v1739 = vadd.f32 %v1704, 1.0
      %v1740 = vadd.f32 %v1706, 1.0
      %v1741 = vadd.f32 %v1708, 1.0
      %v1742 = vadd.f32 %v1710, 1.0
      %v1743 = vadd.f32 %v1712, 1.0
      %v1744 = vadd.f32 %v1714, 1.0
      %v1745 = vadd.f32 %v1716, 1.0
      %v1746 = vadd.f32 %v1718, 1.0
      %v1747 = vadd.f32 %v1720, 1.0
      %v1748 = vadd.f32 %v1722, 1.0
      %v1749 = vadd.f32 %v1724, 1.0
      %v1750 = vadd.f32 %v1726, 1.0
      %v1751 = vadd.f32 %v1728, 1.0
      %v1752 = vadd.f32 %v1730, 1.0
      %v1753 = vrcp.pop %v1731
      %v1754 = vmul.f32 1.0, %v1753
      %v1755 = vrcp.pop %v1732
      %v1756 = vmul.f32 1.0, %v1755
      %v1757 = vrcp.pop %v1733
      %v1758 = vmul.f32 1.0, %v1757
      %v1759 = vrcp.pop %v1734
      %v1760 = vmul.f32 1.0, %v1759
      %v1761 = vrcp.pop %v1735
      %v1762 = vmul.f32 1.0, %v1761
      %v1763 = vrcp.pop %v1736
      %v1764 = vmul.f32 1.0, %v1763
      %v1765 = vrcp.pop %v1737
      %v1766 = vmul.f32 1.0, %v1765
      %v1767 = vrcp.pop %v1738
      %v1768 = vmul.f32 1.0, %v1767
      %v1769 = vrcp.pop %v1739
      %v1770 = vmul.f32 1.0, %v1769
      %v1771 = vrcp.pop %v1740
      %v1772 = vmul.f32 1.0, %v1771
      %v1773 = vrcp.pop %v1741
      %v1774 = vmul.f32 1.0, %v1773
      %v1775 = vrcp.pop %v1742
      %v1776 = vmul.f32 1.0, %v1775
      %v1777 = vrcp.pop %v1743
      %v1778 = vmul.f32 1.0, %v1777
      %v1779 = vrcp.pop %v1744
      %v1780 = vmul.f32 1.0, %v1779
      %v1781 = vrcp.pop %v1745
      %v1782 = vmul.f32 1.0, %v1781
      %v1783 = vrcp.pop %v1746
      %v1784 = vmul.f32 1.0, %v1783
      %v1785 = vrcp.pop %v1747
      %v1786 = vmul.f32 1.0, %v1785
      %v1787 = vrcp.pop %v1748
      %v1788 = vmul.f32 1.0, %v1787
      %v1789 = vrcp.pop %v1749
      %v1790 = vmul.f32 1.0, %v1789
      %v1791 = vrcp.pop %v1750
      %v1792 = vmul.f32 1.0, %v1791
      %v1793 = vrcp.pop %v1751
      %v1794 = vmul.f32 1.0, %v1793
      %v1795 = vrcp.pop %v1752
      %v1796 = vmul.f32 1.0, %v1795
      %v1797 = vmul.f32 %v1557, %v1754
      %v1798 = vmul.f32 %v1561, %v1756
      %v1799 = vmul.f32 %v1567, %v1758
      %v1800 = vmul.f32 %v1571, %v1760
      %v1801 = vmul.f32 %v1577, %v1762
      %v1802 = vmul.f32 %v1581, %v1764
      %v1803 = vmul.f32 %v1587, %v1766
      %v1804 = vmul.f32 %v1591, %v1768
      %v1805 = vmul.f32 %v1597, %v1770
      %v1806 = vmul.f32 %v1601, %v1772
      %v1807 = vmul.f32 %v1607, %v1774
      %v1808 = vmul.f32 %v1611, %v1776
      %v1809 = vmul.f32 %v1617, %v1778
      %v1810 = vmul.f32 %v1621, %v1780
      %v1811 = vmul.f32 %v1627, %v1782
      %v1812 = vmul.f32 %v1631, %v1784
      %v1813 = vmul.f32 %v1637, %v1786
      %v1814 = vmul.f32 %v1641, %v1788
      %v1815 = vmul.f32 %v1647, %v1790
      %v1816 = vmul.f32 %v1651, %v1792
      %v1817 = vmul.f32 %v1657, %v1794
      %v1818 = vmul.f32 %v1661, %v1796
      %v1819 = vadd.f32 %v1797, %v1798
      %v1820 = vadd.f32 %v1819, %v1799
      %v1821 = vadd.f32 %v1820, %v1800
      %v1822 = vadd.f32 %v1821, %v1801
      %v1823 = vadd.f32 %v1822, %v1802
      %v1824 = vadd.f32 %v1823, %v1803
      %v1825 = vadd.f32 %v1824, %v1804
      %v1826 = vadd.f32 %v1825, %v1805
      %v1827 = vadd.f32 %v1826, %v1806
      %v1828 = vadd.f32 %v1827, %v1807
      %v1829 = vadd.f32 %v1828, %v1808
      %v1830 = vadd.f32 %v1829, %v1809
      %v1831 = vadd.f32 %v1830, %v1810
      %v1832 = vadd.f32 %v1831, %v1811
      %v1833 = vadd.f32 %v1832, %v1812
      %v1834 = vadd.f32 %v1833, %v1813
      %v1835 = vadd.f32 %v1834, %v1814
      %v1836 = vadd.f32 %v1835, %v1815
      %v1837 = vadd.f32 %v1836, %v1816
      %v1838 = vadd.f32 %v1837, %v1817
      %v1839 = vadd.f32 %v1838, %v1818
      %v1840 = vrot.slane %v1839, 4
      %v1841 = vadd.f32 %v1839, %v1840
      %v1842 = vrot.slane %v1841, 2
      %v1843 = vadd.f32 %v1841, %v1842
      %v1844 = vrot.slane %v1843, 1
      %v1845 = vadd.f32 %v1843, %v1844
      %v1846 = vrcp.pop 176.0
      %v1847 = vmul.f32 %v1845, %v1846
      %v1848 = vsub.f32 %v1797, %v1847
      %v1849 = vsub.f32 %v1798, %v1847
      %v1850 = vsub.f32 %v1799, %v1847
      %v1851 = vsub.f32 %v1800, %v1847
      %v1852 = vsub.f32 %v1801, %v1847
      %v1853 = vsub.f32 %v1802, %v1847
      %v1854 = vsub.f32 %v1803, %v1847
      %v1855 = vsub.f32 %v1804, %v1847
      %v1856 = vsub.f32 %v1805, %v1847
      %v1857 = vsub.f32 %v1806, %v1847
      %v1858 = vsub.f32 %v1807, %v1847
      %v1859 = vsub.f32 %v1808, %v1847
      %v1860 = vsub.f32 %v1809, %v1847
      %v1861 = vsub.f32 %v1810, %v1847
      %v1862 = vsub.f32 %v1811, %v1847
      %v1863 = vsub.f32 %v1812, %v1847
      %v1864 = vsub.f32 %v1813, %v1847
      %v1865 = vsub.f32 %v1814, %v1847
      %v1866 = vsub.f32 %v1815, %v1847
      %v1867 = vsub.f32 %v1816, %v1847
      %v1868 = vsub.f32 %v1817, %v1847
      %v1869 = vsub.f32 %v1818, %v1847
      %v1870 = vmul.f32 %v1848, %v1848
      %v1871 = vmul.f32 %v1849, %v1849
      %v1872 = vmul.f32 %v1850, %v1850
      %v1873 = vmul.f32 %v1851, %v1851
      %v1874 = vmul.f32 %v1852, %v1852
      %v1875 = vmul.f32 %v1853, %v1853
      %v1876 = vmul.f32 %v1854, %v1854
      %v1877 = vmul.f32 %v1855, %v1855
      %v1878 = vmul.f32 %v1856, %v1856
      %v1879 = vmul.f32 %v1857, %v1857
      %v1880 = vmul.f32 %v1858, %v1858
      %v1881 = vmul.f32 %v1859, %v1859
      %v1882 = vmul.f32 %v1860, %v1860
      %v1883 = vmul.f32 %v1861, %v1861
      %v1884 = vmul.f32 %v1862, %v1862
      %v1885 = vmul.f32 %v1863, %v1863
      %v1886 = vmul.f32 %v1864, %v1864
      %v1887 = vmul.f32 %v1865, %v1865
      %v1888 = vmul.f32 %v1866, %v1866
      %v1889 = vmul.f32 %v1867, %v1867
      %v1890 = vmul.f32 %v1868, %v1868
      %v1891 = vmul.f32 %v1869, %v1869
      %v1892 = vadd.f32 %v1870, %v1871
      %v1893 = vadd.f32 %v1892, %v1872
      %v1894 = vadd.f32 %v1893, %v1873
      %v1895 = vadd.f32 %v1894, %v1874
      %v1896 = vadd.f32 %v1895, %v1875
      %v1897 = vadd.f32 %v1896, %v1876
      %v1898 = vadd.f32 %v1897, %v1877
      %v1899 = vadd.f32 %v1898, %v1878
      %v1900 = vadd.f32 %v1899, %v1879
      %v1901 = vadd.f32 %v1900, %v1880
      %v1902 = vadd.f32 %v1901, %v1881
      %v1903 = vadd.f32 %v1902, %v1882
      %v1904 = vadd.f32 %v1903, %v1883
      %v1905 = vadd.f32 %v1904, %v1884
      %v1906 = vadd.f32 %v1905, %v1885
      %v1907 = vadd.f32 %v1906, %v1886
      %v1908 = vadd.f32 %v1907, %v1887
      %v1909 = vadd.f32 %v1908, %v1888
      %v1910 = vadd.f32 %v1909, %v1889
      %v1911 = vadd.f32 %v1910, %v1890
      %v1912 = vadd.f32 %v1911, %v1891
      %v1913 = vrot.slane %v1912, 4
      %v1914 = vadd.f32 %v1912, %v1913
      %v1915 = vrot.slane %v1914, 2
      %v1916 = vadd.f32 %v1914, %v1915
      %v1917 = vrot.slane %v1916, 1
      %v1918 = vadd.f32 %v1916, %v1917
      %v1919 = vmul.f32 %v1918, %v1846
      %v1920 = vadd.f32 %v1919, 1e-05
      %v1921 = vrsqrt.pop %v1920
      %v1922 = vmul.f32 %v1848, %v1921
      %v1923 = vmul.f32 %v1849, %v1921
      %v1924 = vmul.f32 %v1850, %v1921
      %v1925 = vmul.f32 %v1851, %v1921
      %v1926 = vmul.f32 %v1852, %v1921
      %v1927 = vmul.f32 %v1853, %v1921
      %v1928 = vmul.f32 %v1854, %v1921
      %v1929 = vmul.f32 %v1855, %v1921
      %v1930 = vmul.f32 %v1856, %v1921
      %v1931 = vmul.f32 %v1857, %v1921
      %v1932 = vmul.f32 %v1858, %v1921
      %v1933 = vmul.f32 %v1859, %v1921
      %v1934 = vmul.f32 %v1860, %v1921
      %v1935 = vmul.f32 %v1861, %v1921
      %v1936 = vmul.f32 %v1862, %v1921
      %v1937 = vmul.f32 %v1863, %v1921
      %v1938 = vmul.f32 %v1864, %v1921
      %v1939 = vmul.f32 %v1865, %v1921
      %v1940 = vmul.f32 %v1866, %v1921
      %v1941 = vmul.f32 %v1867, %v1921
      %v1942 = vmul.f32 %v1868, %v1921
      %v1943 = vmul.f32 %v1869, %v1921
      %v1944 = vld [vmem:[%s3] sm:$0x1]
      %v1946 = vlaneseq
      %v1947 = vshrl.u32 %v1946, 7
      %v1948 = vsub.s32 0, %v1947
      %v1949 = vrot.slane %v1944, %v1948
      %v1951 = vmul.f32 %v1922, %v1949
      %v1952 = vmul.f32 %v1923, %v1949
      %v1953 = vmul.f32 %v1924, %v1949
      %v1954 = vmul.f32 %v1925, %v1949
      %v1955 = vmul.f32 %v1926, %v1949
      %v1956 = vmul.f32 %v1927, %v1949
      %v1957 = vmul.f32 %v1928, %v1949
      %v1958 = vmul.f32 %v1929, %v1949
      %v1959 = vmul.f32 %v1930, %v1949
      %v1960 = vmul.f32 %v1931, %v1949
      %v1961 = vmul.f32 %v1932, %v1949
      %v1962 = vmul.f32 %v1933, %v1949
      %v1963 = vmul.f32 %v1934, %v1949
      %v1964 = vmul.f32 %v1935, %v1949
      %v1965 = vmul.f32 %v1936, %v1949
      %v1966 = vmul.f32 %v1937, %v1949
      %v1967 = vmul.f32 %v1938, %v1949
      %v1968 = vmul.f32 %v1939, %v1949
      %v1969 = vmul.f32 %v1940, %v1949
      %v1970 = vmul.f32 %v1941, %v1949
      %v1971 = vmul.f32 %v1942, %v1949
      %v1972 = vmul.f32 %v1943, %v1949
      %v1973 = vld [vmem:[%s4] sm:$0x1]
      %v1975 = vlaneseq
      %v1976 = vshrl.u32 %v1975, 7
      %v1977 = vsub.s32 0, %v1976
      %v1978 = vrot.slane %v1973, %v1977
      %v1980 = vadd.f32 %v1951, %v1978
      %v1981 = vadd.f32 %v1952, %v1978
      %v1982 = vadd.f32 %v1953, %v1978
      %v1983 = vadd.f32 %v1954, %v1978
      %v1984 = vadd.f32 %v1955, %v1978
      %v1985 = vadd.f32 %v1956, %v1978
      %v1986 = vadd.f32 %v1957, %v1978
      %v1987 = vadd.f32 %v1958, %v1978
      %v1988 = vadd.f32 %v1959, %v1978
      %v1989 = vadd.f32 %v1960, %v1978
      %v1990 = vadd.f32 %v1961, %v1978
      %v1991 = vadd.f32 %v1962, %v1978
      %v1992 = vadd.f32 %v1963, %v1978
      %v1993 = vadd.f32 %v1964, %v1978
      %v1994 = vadd.f32 %v1965, %v1978
      %v1995 = vadd.f32 %v1966, %v1978
      %v1996 = vadd.f32 %v1967, %v1978
      %v1997 = vadd.f32 %v1968, %v1978
      %v1998 = vadd.f32 %v1969, %v1978
      %v1999 = vadd.f32 %v1970, %v1978
      %v2000 = vadd.f32 %v1971, %v1978
      %v2001 = vadd.f32 %v1972, %v1978
      %vm2002 = vcmp.ge.f32.partialorder %v1980, 0.0
      %vm2003 = vcmp.ge.f32.partialorder %v1981, 0.0
      %vm2004 = vcmp.ge.f32.partialorder %v1982, 0.0
      %vm2005 = vcmp.ge.f32.partialorder %v1983, 0.0
      %vm2006 = vcmp.ge.f32.partialorder %v1984, 0.0
      %vm2007 = vcmp.ge.f32.partialorder %v1985, 0.0
      %vm2008 = vcmp.ge.f32.partialorder %v1986, 0.0
      %vm2009 = vcmp.ge.f32.partialorder %v1987, 0.0
      %vm2010 = vcmp.ge.f32.partialorder %v1988, 0.0
      %vm2011 = vcmp.ge.f32.partialorder %v1989, 0.0
      %vm2012 = vcmp.ge.f32.partialorder %v1990, 0.0
      %vm2013 = vcmp.ge.f32.partialorder %v1991, 0.0
      %vm2014 = vcmp.ge.f32.partialorder %v1992, 0.0
      %vm2015 = vcmp.ge.f32.partialorder %v1993, 0.0
      %vm2016 = vcmp.ge.f32.partialorder %v1994, 0.0
      %vm2017 = vcmp.ge.f32.partialorder %v1995, 0.0
      %vm2018 = vcmp.ge.f32.partialorder %v1996, 0.0
      %vm2019 = vcmp.ge.f32.partialorder %v1997, 0.0
      %vm2020 = vcmp.ge.f32.partialorder %v1998, 0.0
      %vm2021 = vcmp.ge.f32.partialorder %v1999, 0.0
      %vm2022 = vcmp.ge.f32.partialorder %v2000, 0.0
      %vm2023 = vcmp.ge.f32.partialorder %v2001, 0.0
      %v2024 = vld [vmem:[%s5] sm:$0x1]
      %v2026 = vlaneseq
      %v2027 = vshrl.u32 %v2026, 7
      %v2028 = vsub.s32 0, %v2027
      %v2029 = vrot.slane %v2024, %v2028
      %v2031 = vmul.f32 %v2029, %v1980
      %v2032 = vmul.f32 %v2029, %v1981
      %v2033 = vmul.f32 %v2029, %v1982
      %v2034 = vmul.f32 %v2029, %v1983
      %v2035 = vmul.f32 %v2029, %v1984
      %v2036 = vmul.f32 %v2029, %v1985
      %v2037 = vmul.f32 %v2029, %v1986
      %v2038 = vmul.f32 %v2029, %v1987
      %v2039 = vmul.f32 %v2029, %v1988
      %v2040 = vmul.f32 %v2029, %v1989
      %v2041 = vmul.f32 %v2029, %v1990
      %v2042 = vmul.f32 %v2029, %v1991
      %v2043 = vmul.f32 %v2029, %v1992
      %v2044 = vmul.f32 %v2029, %v1993
      %v2045 = vmul.f32 %v2029, %v1994
      %v2046 = vmul.f32 %v2029, %v1995
      %v2047 = vmul.f32 %v2029, %v1996
      %v2048 = vmul.f32 %v2029, %v1997
      %v2049 = vmul.f32 %v2029, %v1998
      %v2050 = vmul.f32 %v2029, %v1999
      %v2051 = vmul.f32 %v2029, %v2000
      %v2052 = vmul.f32 %v2029, %v2001
      %v2053 = vsel %vm2002, %v1980, %v2031
      %v2054 = vsel %vm2003, %v1981, %v2032
      %v2055 = vsel %vm2004, %v1982, %v2033
      %v2056 = vsel %vm2005, %v1983, %v2034
      %v2057 = vsel %vm2006, %v1984, %v2035
      %v2058 = vsel %vm2007, %v1985, %v2036
      %v2059 = vsel %vm2008, %v1986, %v2037
      %v2060 = vsel %vm2009, %v1987, %v2038
      %v2061 = vsel %vm2010, %v1988, %v2039
      %v2062 = vsel %vm2011, %v1989, %v2040
      %v2063 = vsel %vm2012, %v1990, %v2041
      %v2064 = vsel %vm2013, %v1991, %v2042
      %v2065 = vsel %vm2014, %v1992, %v2043
      %v2066 = vsel %vm2015, %v1993, %v2044
      %v2067 = vsel %vm2016, %v1994, %v2045
      %v2068 = vsel %vm2017, %v1995, %v2046
      %v2069 = vsel %vm2018, %v1996, %v2047
      %v2070 = vsel %vm2019, %v1997, %v2048
      %v2071 = vsel %vm2020, %v1998, %v2049
      %v2072 = vsel %vm2021, %v1999, %v2050
      %v2073 = vsel %vm2022, %v2000, %v2051
      %v2074 = vsel %vm2023, %v2001, %v2052
      %2075 = vst [vmem:[%s251] sm:$0xff] %v2053
      %2076 = vst [vmem:[%s251 + $0x8] sm:$0xff] %v2054
      %2077 = vst [vmem:[%s251 + $0x10] sm:$0xff] %v2055
      %2078 = vst [vmem:[%s251 + $0x18] sm:$0xff] %v2056
      %2079 = vst [vmem:[%s251 + $0x20] sm:$0xff] %v2057
      %2080 = vst [vmem:[%s251 + $0x28] sm:$0xff] %v2058
      %2081 = vst [vmem:[%s251 + $0x30] sm:$0xff] %v2059
      %2082 = vst [vmem:[%s251 + $0x38] sm:$0xff] %v2060
      %2083 = vst [vmem:[%s251 + $0x40] sm:$0xff] %v2061
      %2084 = vst [vmem:[%s251 + $0x48] sm:$0xff] %v2062
      %2085 = vst [vmem:[%s251 + $0x50] sm:$0xff] %v2063
      %2086 = vst [vmem:[%s251 + $0x58] sm:$0xff] %v2064
      %2087 = vst [vmem:[%s251 + $0x60] sm:$0xff] %v2065
      %2088 = vst [vmem:[%s251 + $0x68] sm:$0xff] %v2066
      %2089 = vst [vmem:[%s251 + $0x70] sm:$0xff] %v2067
      %2090 = vst [vmem:[%s251 + $0x78] sm:$0xff] %v2068
      %2091 = vst [vmem:[%s251 + $0x80] sm:$0xff] %v2069
      %2092 = vst [vmem:[%s251 + $0x88] sm:$0xff] %v2070
      %2093 = vst [vmem:[%s251 + $0x90] sm:$0xff] %v2071
      %2094 = vst [vmem:[%s251 + $0x98] sm:$0xff] %v2072
      %2095 = vst [vmem:[%s251 + $0xa0] sm:$0xff] %v2073
      %2096 = vst [vmem:[%s251 + $0xa8] sm:$0xff] %v2074
      %p2097 = scmp.lt.s32.totalorder %s17, 1
      %s2098 = scalar_select %p2097, %s17, 1
      %s2099 = smul.addr %s2098, 22
      %s2100 = smul.addr %s2099, 8
      %s2101 = scalar_lea.vmem %s6, %s2100
      // Predicated region
      $region45: #{encoder_forward.7} parent=43 // pred_check
        %p2102 = pneg %p166
      $region46: #{encoder_forward.7} parent=43 // pred_check_branch
        %2104 = sbr.rel (%p2102) target = $region48
      $region47: #{encoder_forward.7} parent=43 // pred_region
        _
      $region48: #{encoder_forward.7} parent=43 // pred_fallthru
        _
    $region44: #{encoder_forward.7} parent=5 // pred_fallthru
      _
    %p2105 = scmp.le.s32.totalorder 2, %s12
    // Predicated region
    $region49: #{encoder_forward.7} parent=5 // pred_check
      %p2106 = pneg %p2105
    $region50: #{encoder_forward.7} parent=5 // pred_check_branch
      %2108 = sbr.rel (%p2106) target = $region52
    $region51: #{encoder_forward.7} parent=5 // pred_region
      %s2109 = ssub.s32 %s12, 2
      // Predicated region
      $region53: #{encoder_forward.7} parent=51 // pred_check
        %p2110 = pneg %p172
      $region54: #{encoder_forward.7} parent=51 // pred_check_branch
        %2112 = sbr.rel (%p2110) target = $region56
      $region55: #{encoder_forward.7} parent=51 // pred_region
        %p2113 = scmp.lt.s32.totalorder %s18, 1
        %s2114 = scalar_select %p2113, %s18, 1
        %s2115 = smul.addr %s2114, 22
        %s2116 = smul.addr %s2115, 8
        %s2117 = scalar_lea.vmem %s6, %s2116
      $region56: #{encoder_forward.7} parent=51 // pred_fallthru
        _
    $region52: #{encoder_forward.7} parent=5 // pred_fallthru
      _
  $region6: #{encoder_forward.7} parent=0 // loop_footer
    %s16 = sadd.s32 1, %s12
  $region7: #{encoder_forward.7} parent=0 // loop_footer_branch
    %11 = sbr.rel target = $region3
  $region8: #{encoder_forward.7} parent=0 // loop_exit
    _

// kernel: encoder_forward.8
$region0: #{encoder_forward.8}
  #allocation0 [shape = 'u32[]', space=smem, size = 0x4, offset = 0x4, fixed_abs, tag = 'smem constant byte address 0x4 - core index']
  #allocation1 [shape = 'u32[144,128]{1,0:T(1,128)}', space=vmem, size = 0x12000, scoped, tag = 'internal scratch']
  %s0 = inlined_call_operand.vmem [shape: bf16[2,80,768], index: 0, kind: input, shape index: {}]
  %s1 = inlined_call_operand.vmem [shape: bf16[768,256], index: 1, kind: input, shape index: {}]
  %s2 = inlined_call_operand.vmem [shape: f32[1,256], index: 2, kind: input, shape index: {}]
  %s3 = inlined_call_operand.vmem [shape: f32[1,128], index: 3, kind: input, shape index: {}]
  %s4 = inlined_call_operand.vmem [shape: f32[1,128], index: 4, kind: input, shape index: {}]
  %s5 = inlined_call_operand.vmem [shape: f32[1,128], index: 5, kind: input, shape index: {}]
  %s6 = inlined_call_operand.vmem [shape: f32[2,80,128], index: 6, kind: output, shape index: {}]
  %s7 = sld [smem:[#allocation0]]
  $region57: #{encoder_forward.8} parent=0
    _
  %s9 = ssub.s32 1, %s7
  %s10 = scalar_select 0, %s9, %s7
  loop: start=0, step=1, limit=4
  $region2: #{encoder_forward.8} parent=0 // loop_pre_header
    _
  $region3: #{encoder_forward.8} parent=0 // loop_header
    %s12 = sphi 0, %s16
    %p13 = scmp.ge.s32.totalorder %s12, 4
    %s22 = sphi 0, %s24
    %s25 = sphi 0, %s22
    %s26 = sphi 0, %s25
    %s42 = sphi 0, %s26
    %s46 = sphi 0, %s46
    %s48 = sphi 0, %s46
    %s49 = sphi 0, %s48
    %s63 = sphi 0, %s49
    %s67 = sphi 0, %s67
    %s69 = sphi 0, %s67
    %s70 = sphi 0, %s69
    %s84 = sphi 0, %s70
    %s88 = sphi 0, %s88
    %s90 = sphi 0, %s88
    %s91 = sphi 0, %s90
    %s105 = sphi 0, %s91
    %s109 = sphi 0, %s109
    %s111 = sphi 0, %s109
    %s112 = sphi 0, %s111
    %s126 = sphi 0, %s112
    %s130 = sphi 0, %s130
    %s132 = sphi 0, %s130
    %s133 = sphi 0, %s132
    %s147 = sphi 0, %s133
    %s153 = sphi 0, %s155
    %s156 = sphi 0, %s153
    %s157 = sphi 0, %s156
    %s173 = sphi 0, %s157
  $region4: #{encoder_forward.8} parent=0 // loop_header_branch
    %15 = sbr.rel (%p13) target = $region8
  $region5: #{encoder_forward.8} parent=0 // loop_body
    %s17 = ssub.s32 %s12, 1
    %s18 = ssub.s32 %s12, 2
    %s19 = sadd.s32 %s12, 1
    %s20 = ssub.s32 %s12, %s19
    %p21 = scmp.eq.s32.totalorder %s20, 0
    %s23 = sadd.s32 %s22, 1
    %s24 = scalar_select %p21, %s22, %s23
    %p27 = pneg %p21
    %p28 = scmp.eq.s32.totalorder %s12, 1
    %p29 = por %p27, %p28
    %p30 = scmp.ne.s32.totalorder %s22, %s25
    %p31 = scmp.eq.s32.totalorder %s12, 0
    %p32 = por %p30, %p31
    %p33 = scmp.ne.s32.totalorder %s22, %s25
    %p34 = scmp.eq.s32.totalorder %s17, 1
    %p35 = por %p33, %p34
    %p36 = scmp.ne.s32.totalorder %s25, %s26
    %p37 = scmp.eq.s32.totalorder %s17, 0
    %p38 = por %p36, %p37
    %p39 = scmp.ne.s32.totalorder %s25, %s26
    %p40 = scmp.eq.s32.totalorder %s18, 1
    %p41 = por %p39, %p40
    %p43 = scmp.ne.s32.totalorder %s26, %s42
    %p44 = scmp.eq.s32.totalorder %s18, 0
    %p45 = por %p43, %p44
    %s47 = sadd.s32 %s46, 1
    %p50 = scmp.eq.s32.totalorder %s12, 1
    %p51 = scmp.ne.s32.totalorder %s46, %s48
    %p52 = scmp.eq.s32.totalorder %s12, 0
    %p53 = por %p51, %p52
    %p54 = scmp.ne.s32.totalorder %s46, %s48
    %p55 = scmp.eq.s32.totalorder %s17, 1
    %p56 = por %p54, %p55
    %p57 = scmp.ne.s32.totalorder %s48, %s49
    %p58 = scmp.eq.s32.totalorder %s17, 0
    %p59 = por %p57, %p58
    %p60 = scmp.ne.s32.totalorder %s48, %s49
    %p61 = scmp.eq.s32.totalorder %s18, 1
    %p62 = por %p60, %p61
    %p64 = scmp.ne.s32.totalorder %s49, %s63
    %p65 = scmp.eq.s32.totalorder %s18, 0
    %p66 = por %p64, %p65
    %s68 = sadd.s32 %s67, 1
    %p71 = scmp.eq.s32.totalorder %s12, 1
    %p72 = scmp.ne.s32.totalorder %s67, %s69
    %p73 = scmp.eq.s32.totalorder %s12, 0
    %p74 = por %p72, %p73
    %p75 = scmp.ne.s32.totalorder %s67, %s69
    %p76 = scmp.eq.s32.totalorder %s17, 1
    %p77 = por %p75, %p76
    %p78 = scmp.ne.s32.totalorder %s69, %s70
    %p79 = scmp.eq.s32.totalorder %s17, 0
    %p80 = por %p78, %p79
    %p81 = scmp.ne.s32.totalorder %s69, %s70
    %p82 = scmp.eq.s32.totalorder %s18, 1
    %p83 = por %p81, %p82
    %p85 = scmp.ne.s32.totalorder %s70, %s84
    %p86 = scmp.eq.s32.totalorder %s18, 0
    %p87 = por %p85, %p86
    %s89 = sadd.s32 %s88, 1
    %p92 = scmp.eq.s32.totalorder %s12, 1
    %p93 = scmp.ne.s32.totalorder %s88, %s90
    %p94 = scmp.eq.s32.totalorder %s12, 0
    %p95 = por %p93, %p94
    %p96 = scmp.ne.s32.totalorder %s88, %s90
    %p97 = scmp.eq.s32.totalorder %s17, 1
    %p98 = por %p96, %p97
    %p99 = scmp.ne.s32.totalorder %s90, %s91
    %p100 = scmp.eq.s32.totalorder %s17, 0
    %p101 = por %p99, %p100
    %p102 = scmp.ne.s32.totalorder %s90, %s91
    %p103 = scmp.eq.s32.totalorder %s18, 1
    %p104 = por %p102, %p103
    %p106 = scmp.ne.s32.totalorder %s91, %s105
    %p107 = scmp.eq.s32.totalorder %s18, 0
    %p108 = por %p106, %p107
    %s110 = sadd.s32 %s109, 1
    %p113 = scmp.eq.s32.totalorder %s12, 1
    %p114 = scmp.ne.s32.totalorder %s109, %s111
    %p115 = scmp.eq.s32.totalorder %s12, 0
    %p116 = por %p114, %p115
    %p117 = scmp.ne.s32.totalorder %s109, %s111
    %p118 = scmp.eq.s32.totalorder %s17, 1
    %p119 = por %p117, %p118
    %p120 = scmp.ne.s32.totalorder %s111, %s112
    %p121 = scmp.eq.s32.totalorder %s17, 0
    %p122 = por %p120, %p121
    %p123 = scmp.ne.s32.totalorder %s111, %s112
    %p124 = scmp.eq.s32.totalorder %s18, 1
    %p125 = por %p123, %p124
    %p127 = scmp.ne.s32.totalorder %s112, %s126
    %p128 = scmp.eq.s32.totalorder %s18, 0
    %p129 = por %p127, %p128
    %s131 = sadd.s32 %s130, 1
    %p134 = scmp.eq.s32.totalorder %s12, 1
    %p135 = scmp.ne.s32.totalorder %s130, %s132
    %p136 = scmp.eq.s32.totalorder %s12, 0
    %p137 = por %p135, %p136
    %p138 = scmp.ne.s32.totalorder %s130, %s132
    %p139 = scmp.eq.s32.totalorder %s17, 1
    %p140 = por %p138, %p139
    %p141 = scmp.ne.s32.totalorder %s132, %s133
    %p142 = scmp.eq.s32.totalorder %s17, 0
    %p143 = por %p141, %p142
    %p144 = scmp.ne.s32.totalorder %s132, %s133
    %p145 = scmp.eq.s32.totalorder %s18, 1
    %p146 = por %p144, %p145
    %p148 = scmp.ne.s32.totalorder %s133, %s147
    %p149 = scmp.eq.s32.totalorder %s18, 0
    %p150 = por %p148, %p149
    %s151 = ssub.s32 %s12, %s19
    %p152 = scmp.eq.s32.totalorder %s151, 0
    %s154 = sadd.s32 %s153, 1
    %s155 = scalar_select %p152, %s153, %s154
    %p158 = pneg %p152
    %p159 = scmp.eq.s32.totalorder %s12, 1
    %p160 = por %p158, %p159
    %p161 = scmp.ne.s32.totalorder %s153, %s156
    %p162 = scmp.eq.s32.totalorder %s12, 0
    %p163 = por %p161, %p162
    %p164 = scmp.ne.s32.totalorder %s153, %s156
    %p165 = scmp.eq.s32.totalorder %s17, 1
    %p166 = por %p164, %p165
    %p167 = scmp.ne.s32.totalorder %s156, %s157
    %p168 = scmp.eq.s32.totalorder %s17, 0
    %p169 = por %p167, %p168
    %p170 = scmp.ne.s32.totalorder %s156, %s157
    %p171 = scmp.eq.s32.totalorder %s18, 1
    %p172 = por %p170, %p171
    %p174 = scmp.ne.s32.totalorder %s157, %s173
    %p175 = scmp.eq.s32.totalorder %s18, 0
    %p176 = por %p174, %p175
    %p177 = scmp.le.s32.totalorder 1, %s12
    %p178 = scmp.lt.s32.totalorder %s12, 3
    %p179 = pnand %p177, %p178
    %p180 = pneg %p179
    // Predicated region
    $region9: #{encoder_forward.8} parent=5 // pred_check
      _
    $region10: #{encoder_forward.8} parent=5 // pred_check_branch
      %182 = sbr.rel (%p179) target = $region12
    $region11: #{encoder_forward.8} parent=5 // pred_region
      %s183 = ssub.s32 %s12, 1
      // Predicated region
      $region13: #{encoder_forward.8} parent=11 // pred_check
        %p184 = pneg %p59
      $region14: #{encoder_forward.8} parent=11 // pred_check_branch
        %186 = sbr.rel (%p184) target = $region16
      $region15: #{encoder_forward.8} parent=11 // pred_region
        _
      $region16: #{encoder_forward.8} parent=11 // pred_fallthru
        _
      // Predicated region
      $region17: #{encoder_forward.8} parent=11 // pred_check
        %p187 = pneg %p80
      $region18: #{encoder_forward.8} parent=11 // pred_check_branch
        %189 = sbr.rel (%p187) target = $region20
      $region19: #{encoder_forward.8} parent=11 // pred_region
        _
      $region20: #{encoder_forward.8} parent=11 // pred_fallthru
        _
      // Predicated region
      $region21: #{encoder_forward.8} parent=11 // pred_check
        %p190 = pneg %p101
      $region22: #{encoder_forward.8} parent=11 // pred_check_branch
        %192 = sbr.rel (%p190) target = $region24
      $region23: #{encoder_forward.8} parent=11 // pred_region
        _
      $region24: #{encoder_forward.8} parent=11 // pred_fallthru
        _
      // Predicated region
      $region25: #{encoder_forward.8} parent=11 // pred_check
        %p193 = pneg %p122
      $region26: #{encoder_forward.8} parent=11 // pred_check_branch
        %195 = sbr.rel (%p193) target = $region28
      $region27: #{encoder_forward.8} parent=11 // pred_region
        _
      $region28: #{encoder_forward.8} parent=11 // pred_fallthru
        _
      // Predicated region
      $region29: #{encoder_forward.8} parent=11 // pred_check
        %p196 = pneg %p143
      $region30: #{encoder_forward.8} parent=11 // pred_check_branch
        %198 = sbr.rel (%p196) target = $region32
      $region31: #{encoder_forward.8} parent=11 // pred_region
        _
      $region32: #{encoder_forward.8} parent=11 // pred_fallthru
        _
    $region12: #{encoder_forward.8} parent=5 // pred_fallthru
      _
    %p199 = scmp.lt.s32.totalorder %s12, 2
    // Predicated region
    $region33: #{encoder_forward.8} parent=5 // pred_check
      %p200 = pneg %p199
    $region34: #{encoder_forward.8} parent=5 // pred_check_branch
      %202 = sbr.rel (%p200) target = $region36
    $region35: #{encoder_forward.8} parent=5 // pred_region
      // Predicated region
      $region37: #{encoder_forward.8} parent=35 // pred_check
        %p203 = pneg %p32
      $region38: #{encoder_forward.8} parent=35 // pred_check_branch
        %205 = sbr.rel (%p203) target = $region40
      $region39: #{encoder_forward.8} parent=35 // pred_region
        %p206 = scmp.lt.s32.totalorder %s12, 1
        %s207 = scalar_select %p206, %s12, 1
        %s208 = smul.addr %s207, 60
        %s209 = smul.addr %s208, 4
        %s210 = scalar_lea.vmem %s0, %s209
      $region40: #{encoder_forward.8} parent=35 // pred_fallthru
        _
    $region36: #{encoder_forward.8} parent=5 // pred_fallthru
      _
    %p211 = scmp.le.s32.totalorder 1, %s12
    %p212 = scmp.lt.s32.totalorder %s12, 3
    %p213 = pnand %p211, %p212
    %p214 = pneg %p213
    // Predicated region
    $region41: #{encoder_forward.8} parent=5 // pred_check
      _
    $region42: #{encoder_forward.8} parent=5 // pred_check_branch
      %216 = sbr.rel (%p213) target = $region44
    $region43: #{encoder_forward.8} parent=5 // pred_region
      %s217 = ssub.s32 %s12, 1
      %p218 = scmp.lt.s32.totalorder %s17, 1
      %s219 = scalar_select %p218, %s17, 1
      %s220 = smul.addr %s219, 60
      %s221 = smul.addr %s220, 4
      %s222 = scalar_lea.vmem %s0, %s221
      %p223 = pneg %p38
      %p224 = pneg %p35
      %p225 = pneg %p59
      %p226 = pneg %p56
      %p227 = pneg %p80
      %p228 = pneg %p77
      %p229 = pneg %p101
      %p230 = pneg %p98
      %p231 = pneg %p122
      %p232 = pneg %p119
      %p233 = pneg %p143
      %p234 = pneg %p140
      %p235 = pneg %p169
      %p236 = pneg %p166
      %p237 = scmp.lt.s32.totalorder %s17, 1
      %s238 = scalar_select %p237, %s17, 1
      %s239 = smul.addr %s238, 10
      %s240 = smul.addr %s239, 8
      %s241 = scalar_lea.vmem %s6, %s240
      %p242 = scmp.lt.s32.totalorder %s17, 1
      %s243 = scalar_select %p242, %s17, 1
      %s244 = smul.addr %s243, 60
      %s245 = smul.addr %s244, 4
      %s246 = scalar_lea.vmem %s0, %s245
      %p247 = scmp.lt.s32.totalorder %s17, 1
      %s248 = scalar_select %p247, %s17, 1
      %s249 = smul.addr %s248, 10
      %s250 = smul.addr %s249, 8
      %s251 = scalar_lea.vmem %s6, %s250
      %v252 = vld [vmem:[%s246] sm:$0xff]
      %v253 = vld [vmem:[%s246 + $0x8] sm:$0xff]
      %v254 = vld [vmem:[%s246 + $0x10] sm:$0xff]
      %v255 = vld [vmem:[%s246 + $0x18] sm:$0xff]
      %v256 = vld [vmem:[%s246 + $0x20] sm:$0xff]
      %v257 = vld [vmem:[%s246 + $0x28] sm:$0xff]
      %v258 = vld [vmem:[%s246 + $0x30] sm:$0xff]
      %v259 = vld [vmem:[%s246 + $0x38] sm:$0xff]
      %v260 = vld [vmem:[%s246 + $0x40] sm:$0xff]
      %v261 = vld [vmem:[%s246 + $0x48] sm:$0xff]
      %v262 = vld [vmem:[%s246 + $0x50] sm:$0xff]
      %v263 = vld [vmem:[%s246 + $0x58] sm:$0xff]
      %v264 = vld [vmem:[%s246 + $0x60] sm:$0xff]
      %v265 = vld [vmem:[%s246 + $0x68] sm:$0xff]
      %v266 = vld [vmem:[%s246 + $0x70] sm:$0xff]
      %v267 = vld [vmem:[%s246 + $0x78] sm:$0xff]
      %v268 = vld [vmem:[%s246 + $0x80] sm:$0xff]
      %v269 = vld [vmem:[%s246 + $0x88] sm:$0xff]
      %v270 = vld [vmem:[%s246 + $0x90] sm:$0xff]
      %v271 = vld [vmem:[%s246 + $0x98] sm:$0xff]
      %v272 = vld [vmem:[%s246 + $0xa0] sm:$0xff]
      %v273 = vld [vmem:[%s246 + $0xa8] sm:$0xff]
      %v274 = vld [vmem:[%s246 + $0xb0] sm:$0xff]
      %v275 = vld [vmem:[%s246 + $0xb8] sm:$0xff]
      %v276 = vld [vmem:[%s246 + $0xc0] sm:$0xff]
      %v277 = vld [vmem:[%s246 + $0xc8] sm:$0xff]
      %v278 = vld [vmem:[%s246 + $0xd0] sm:$0xff]
      %v279 = vld [vmem:[%s246 + $0xd8] sm:$0xff]
      %v280 = vld [vmem:[%s246 + $0xe0] sm:$0xff]
      %v281 = vld [vmem:[%s246 + $0xe8] sm:$0xff]
      %v282 = vld [vmem:[%s1] sm:$0xff]
      %v283 = vld [vmem:[%s1 + $0x8] sm:$0xff]
      %v284 = vld [vmem:[%s1 + $0x10] sm:$0xff]
      %v285 = vld [vmem:[%s1 + $0x18] sm:$0xff]
      %v286 = vld [vmem:[%s1 + $0x20] sm:$0xff]
      %v287 = vld [vmem:[%s1 + $0x28] sm:$0xff]
      %v288 = vld [vmem:[%s1 + $0x30] sm:$0xff]
      %v289 = vld [vmem:[%s1 + $0x38] sm:$0xff]
      %v290 = vld [vmem:[%s1 + $0x40] sm:$0xff]
      %v291 = vld [vmem:[%s1 + $0x48] sm:$0xff]
      %v292 = vld [vmem:[%s1 + $0x50] sm:$0xff]
      %v293 = vld [vmem:[%s1 + $0x58] sm:$0xff]
      %v294 = vld [vmem:[%s1 + $0x60] sm:$0xff]
      %v295 = vld [vmem:[%s1 + $0x68] sm:$0xff]
      %v296 = vld [vmem:[%s1 + $0x70] sm:$0xff]
      %v297 = vld [vmem:[%s1 + $0x78] sm:$0xff]
      %v298 = vld [vmem:[%s1 + $0x80] sm:$0xff]
      %v299 = vld [vmem:[%s1 + $0x88] sm:$0xff]
      %v300 = vld [vmem:[%s1 + $0x90] sm:$0xff]
      %v301 = vld [vmem:[%s1 + $0x98] sm:$0xff]
      %v302 = vld [vmem:[%s1 + $0xa0] sm:$0xff]
      %v303 = vld [vmem:[%s1 + $0xa8] sm:$0xff]
      %v304 = vld [vmem:[%s1 + $0xb0] sm:$0xff]
      %v305 = vld [vmem:[%s1 + $0xb8] sm:$0xff]
      %v306 = vld [vmem:[%s1 + $0xc0] sm:$0xff]
      %v307 = vld [vmem:[%s1 + $0xc8] sm:$0xff]
      %v308 = vld [vmem:[%s1 + $0xd0] sm:$0xff]
      %v309 = vld [vmem:[%s1 + $0xd8] sm:$0xff]
      %v310 = vld [vmem:[%s1 + $0xe0] sm:$0xff]
      %v311 = vld [vmem:[%s1 + $0xe8] sm:$0xff]
      %v312 = vld [vmem:[%s1 + $0xf0] sm:$0xff]
      %v313 = vld [vmem:[%s1 + $0xf8] sm:$0xff]
      %v314 = vld [vmem:[%s1 + $0x100] sm:$0xff]
      %v315 = vld [vmem:[%s1 + $0x108] sm:$0xff]
      %v316 = vld [vmem:[%s1 + $0x110] sm:$0xff]
      %v317 = vld [vmem:[%s1 + $0x118] sm:$0xff]
      %v318 = vld [vmem:[%s1 + $0x120] sm:$0xff]
      %v319 = vld [vmem:[%s1 + $0x128] sm:$0xff]
      %v320 = vld [vmem:[%s1 + $0x130] sm:$0xff]
      %v321 = vld [vmem:[%s1 + $0x138] sm:$0xff]
      %v322 = vld [vmem:[%s1 + $0x140] sm:$0xff]
      %v323 = vld [vmem:[%s1 + $0x148] sm:$0xff]
      %v324 = vld [vmem:[%s1 + $0x150] sm:$0xff]
      %v325 = vld [vmem:[%s1 + $0x158] sm:$0xff]
      %v326 = vld [vmem:[%s1 + $0x160] sm:$0xff]
      %v327 = vld [vmem:[%s1 + $0x168] sm:$0xff]
      %v328 = vld [vmem:[%s1 + $0x170] sm:$0xff]
      %v329 = vld [vmem:[%s1 + $0x178] sm:$0xff]
      %v330 = vld [vmem:[%s1 + $0x180] sm:$0xff]
      %v331 = vld [vmem:[%s1 + $0x188] sm:$0xff]
      %v332 = vld [vmem:[%s1 + $0x190] sm:$0xff]
      %v333 = vld [vmem:[%s1 + $0x198] sm:$0xff]
      %v334 = vld [vmem:[%s1 + $0x1a0] sm:$0xff]
      %v335 = vld [vmem:[%s1 + $0x1a8] sm:$0xff]
      %v336 = vld [vmem:[%s1 + $0x1b0] sm:$0xff]
      %v337 = vld [vmem:[%s1 + $0x1b8] sm:$0xff]
      %v338 = vld [vmem:[%s1 + $0x1c0] sm:$0xff]
      %v339 = vld [vmem:[%s1 + $0x1c8] sm:$0xff]
      %v340 = vld [vmem:[%s1 + $0x1d0] sm:$0xff]
      %v341 = vld [vmem:[%s1 + $0x1d8] sm:$0xff]
      %v342 = vld [vmem:[%s1 + $0x1e0] sm:$0xff]
      %v343 = vld [vmem:[%s1 + $0x1e8] sm:$0xff]
      %v344 = vld [vmem:[%s1 + $0x1f0] sm:$0xff]
      %v345 = vld [vmem:[%s1 + $0x1f8] sm:$0xff]
      %v346 = vld [vmem:[%s1 + $0x200] sm:$0xff]
      %v347 = vld [vmem:[%s1 + $0x208] sm:$0xff]
      %v348 = vld [vmem:[%s1 + $0x210] sm:$0xff]
      %v349 = vld [vmem:[%s1 + $0x218] sm:$0xff]
      %v350 = vld [vmem:[%s1 + $0x220] sm:$0xff]
      %v351 = vld [vmem:[%s1 + $0x228] sm:$0xff]
      %v352 = vld [vmem:[%s1 + $0x230] sm:$0xff]
      %v353 = vld [vmem:[%s1 + $0x238] sm:$0xff]
      %v354 = vld [vmem:[%s1 + $0x240] sm:$0xff]
      %v355 = vld [vmem:[%s1 + $0x248] sm:$0xff]
      %v356 = vld [vmem:[%s1 + $0x250] sm:$0xff]
      %v357 = vld [vmem:[%s1 + $0x258] sm:$0xff]
      %v358 = vld [vmem:[%s1 + $0x260] sm:$0xff]
      %v359 = vld [vmem:[%s1 + $0x268] sm:$0xff]
      %v360 = vld [vmem:[%s1 + $0x270] sm:$0xff]
      %v361 = vld [vmem:[%s1 + $0x278] sm:$0xff]
      %v362 = vld [vmem:[%s1 + $0x280] sm:$0xff]
      %v363 = vld [vmem:[%s1 + $0x288] sm:$0xff]
      %v364 = vld [vmem:[%s1 + $0x290] sm:$0xff]
      %v365 = vld [vmem:[%s1 + $0x298] sm:$0xff]
      %v366 = vld [vmem:[%s1 + $0x2a0] sm:$0xff]
      %v367 = vld [vmem:[%s1 + $0x2a8] sm:$0xff]
      %v368 = vld [vmem:[%s1 + $0x2b0] sm:$0xff]
      %v369 = vld [vmem:[%s1 + $0x2b8] sm:$0xff]
      %v370 = vld [vmem:[%s1 + $0x2c0] sm:$0xff]
      %v371 = vld [vmem:[%s1 + $0x2c8] sm:$0xff]
      %v372 = vld [vmem:[%s1 + $0x2d0] sm:$0xff]
      %v373 = vld [vmem:[%s1 + $0x2d8] sm:$0xff]
      %v374 = vld [vmem:[%s1 + $0x2e0] sm:$0xff]
      %v375 = vld [vmem:[%s1 + $0x2e8] sm:$0xff]
      %v376 = vld [vmem:[%s1 + $0x2f0] sm:$0xff]
      %v377 = vld [vmem:[%s1 + $0x2f8] sm:$0xff]
      %v378 = vld [vmem:[%s2] sm:$0x3]
      %v380 = vlaneseq
      %v381 = vshrl.u32 %v380, 7
      %v382 = vsub.s32 0, %v381
      %v383 = vrot.slane %v378, %v382
      %v384 = vlaneseq
      %v385 = vshrl.u32 %v384, 7
      %v386 = vsub.s32 1, %v385
      %v387 = vrot.slane %v378, %v386
      %v420 = vunpack.c.l.b16 %v252
      %v421 = vunpack.c.h.b16 %v252
      %v422 = vunpack.c.l.b16 %v253
      %v423 = vunpack.c.h.b16 %v253
      %v424 = vunpack.c.l.b16 %v254
      %v425 = vunpack.c.h.b16 %v254
      %v426 = vunpack.c.l.b16 %v255
      %v427 = vunpack.c.h.b16 %v255
      %v428 = vunpack.c.l.b16 %v256
      %v429 = vunpack.c.h.b16 %v256
      %v430 = vunpack.c.l.b16 %v257
      %v431 = vunpack.c.h.b16 %v257
      %v432 = vunpack.c.l.b16 %v258
      %v433 = vunpack.c.h.b16 %v258
      %v434 = vunpack.c.l.b16 %v259
      %v435 = vunpack.c.h.b16 %v259
      %v436 = vunpack.c.l.b16 %v260
      %v437 = vunpack.c.h.b16 %v260
      %v438 = vunpack.c.l.b16 %v261
      %v439 = vunpack.c.h.b16 %v261
      %v440 = vunpack.c.l.b16 %v262
      %v441 = vunpack.c.h.b16 %v262
      %v442 = vunpack.c.l.b16 %v263
      %v443 = vunpack.c.h.b16 %v263
      %v444 = vunpack.c.l.b16 %v264
      %v445 = vunpack.c.h.b16 %v264
      %v446 = vunpack.c.l.b16 %v265
      %v447 = vunpack.c.h.b16 %v265
      %v448 = vunpack.c.l.b16 %v266
      %v449 = vunpack.c.h.b16 %v266
      %v450 = vunpack.c.l.b16 %v267
      %v451 = vunpack.c.h.b16 %v267
      %v452 = vunpack.c.l.b16 %v268
      %v453 = vunpack.c.h.b16 %v268
      %v454 = vunpack.c.l.b16 %v269
      %v455 = vunpack.c.h.b16 %v269
      %v456 = vunpack.c.l.b16 %v270
      %v457 = vunpack.c.h.b16 %v270
      %v458 = vunpack.c.l.b16 %v271
      %v459 = vunpack.c.h.b16 %v271
      %v460 = vunpack.c.l.b16 %v272
      %v461 = vunpack.c.h.b16 %v272
      %v462 = vunpack.c.l.b16 %v273
      %v463 = vunpack.c.h.b16 %v273
      %v464 = vunpack.c.l.b16 %v274
      %v465 = vunpack.c.h.b16 %v274
      %v466 = vunpack.c.l.b16 %v275
      %v467 = vunpack.c.h.b16 %v275
      %v468 = vunpack.c.l.b16 %v276
      %v469 = vunpack.c.h.b16 %v276
      %v470 = vunpack.c.l.b16 %v277
      %v471 = vunpack.c.h.b16 %v277
      %v472 = vunpack.c.l.b16 %v278
      %v473 = vunpack.c.h.b16 %v278
      %v474 = vunpack.c.l.b16 %v279
      %v475 = vunpack.c.h.b16 %v279
      %v476 = vunpack.c.l.b16 %v280
      %v477 = vunpack.c.h.b16 %v280
      %v478 = vunpack.c.l.b16 %v281
      %v479 = vunpack.c.h.b16 %v281
      %v480 = vpack.c.b16 %v426, %v420
      %v481 = vpack.c.b16 %v427, %v421
      %v482 = vpack.c.b16 %v428, %v422
      %v483 = vpack.c.b16 %v429, %v423
      %v484 = vpack.c.b16 %v430, %v424
      %v485 = vpack.c.b16 %v431, %v425
      %v486 = vpack.c.b16 %v438, %v432
      %v487 = vpack.c.b16 %v439, %v433
      %v488 = vpack.c.b16 %v440, %v434
      %v489 = vpack.c.b16 %v441, %v435
      %v490 = vpack.c.b16 %v442, %v436
      %v491 = vpack.c.b16 %v443, %v437
      %v492 = vpack.c.b16 %v450, %v444
      %v493 = vpack.c.b16 %v451, %v445
      %v494 = vpack.c.b16 %v452, %v446
      %v495 = vpack.c.b16 %v453, %v447
      %v496 = vpack.c.b16 %v454, %v448
      %v497 = vpack.c.b16 %v455, %v449
      %v498 = vpack.c.b16 %v462, %v456
      %v499 = vpack.c.b16 %v463, %v457
      %v500 = vpack.c.b16 %v464, %v458
      %v501 = vpack.c.b16 %v465, %v459
      %v502 = vpack.c.b16 %v466, %v460
      %v503 = vpack.c.b16 %v467, %v461
      %v504 = vpack.c.b16 %v474, %v468
      %v505 = vpack.c.b16 %v475, %v469
      %v506 = vpack.c.b16 %v476, %v470
      %v507 = vpack.c.b16 %v477, %v471
      %v508 = vpack.c.b16 %v478, %v472
      %v509 = vpack.c.b16 %v479, %v473
      %v636 = vunpack.c.l.b16 %v282
      %v637 = vunpack.c.h.b16 %v282
      %v638 = vunpack.c.l.b16 %v283
      %v639 = vunpack.c.h.b16 %v283
      %v640 = vunpack.c.l.b16 %v284
      %v641 = vunpack.c.h.b16 %v284
      %v642 = vunpack.c.l.b16 %v285
      %v643 = vunpack.c.h.b16 %v285
      %v644 = vunpack.c.l.b16 %v286
      %v645 = vunpack.c.h.b16 %v286
      %v646 = vunpack.c.l.b16 %v287
      %v647 = vunpack.c.h.b16 %v287
      %v648 = vunpack.c.l.b16 %v288
      %v649 = vunpack.c.h.b16 %v288
      %v650 = vunpack.c.l.b16 %v289
      %v651 = vunpack.c.h.b16 %v289
      %v652 = vunpack.c.l.b16 %v290
      %v653 = vunpack.c.h.b16 %v290
      %v654 = vunpack.c.l.b16 %v291
      %v655 = vunpack.c.h.b16 %v291
      %v656 = vunpack.c.l.b16 %v292
      %v657 = vunpack.c.h.b16 %v292
      %v658 = vunpack.c.l.b16 %v293
      %v659 = vunpack.c.h.b16 %v293
      %v660 = vunpack.c.l.b16 %v294
      %v661 = vunpack.c.h.b16 %v294
      %v662 = vunpack.c.l.b16 %v295
      %v663 = vunpack.c.h.b16 %v295
      %v664 = vunpack.c.l.b16 %v296
      %v665 = vunpack.c.h.b16 %v296
      %v666 = vunpack.c.l.b16 %v297
      %v667 = vunpack.c.h.b16 %v297
      %v668 = vunpack.c.l.b16 %v298
      %v669 = vunpack.c.h.b16 %v298
      %v670 = vunpack.c.l.b16 %v299
      %v671 = vunpack.c.h.b16 %v299
      %v672 = vunpack.c.l.b16 %v300
      %v673 = vunpack.c.h.b16 %v300
      %v674 = vunpack.c.l.b16 %v301
      %v675 = vunpack.c.h.b16 %v301
      %v676 = vunpack.c.l.b16 %v302
      %v677 = vunpack.c.h.b16 %v302
      %v678 = vunpack.c.l.b16 %v303
      %v679 = vunpack.c.h.b16 %v303
      %v680 = vunpack.c.l.b16 %v304
      %v681 = vunpack.c.h.b16 %v304
      %v682 = vunpack.c.l.b16 %v305
      %v683 = vunpack.c.h.b16 %v305
      %v684 = vunpack.c.l.b16 %v306
      %v685 = vunpack.c.h.b16 %v306
      %v686 = vunpack.c.l.b16 %v307
      %v687 = vunpack.c.h.b16 %v307
      %v688 = vunpack.c.l.b16 %v308
      %v689 = vunpack.c.h.b16 %v308
      %v690 = vunpack.c.l.b16 %v309
      %v691 = vunpack.c.h.b16 %v309
      %v692 = vunpack.c.l.b16 %v310
      %v693 = vunpack.c.h.b16 %v310
      %v694 = vunpack.c.l.b16 %v311
      %v695 = vunpack.c.h.b16 %v311
      %v696 = vunpack.c.l.b16 %v312
      %v697 = vunpack.c.h.b16 %v312
      %v698 = vunpack.c.l.b16 %v313
      %v699 = vunpack.c.h.b16 %v313
      %v700 = vunpack.c.l.b16 %v314
      %v701 = vunpack.c.h.b16 %v314
      %v702 = vunpack.c.l.b16 %v315
      %v703 = vunpack.c.h.b16 %v315
      %v704 = vunpack.c.l.b16 %v316
      %v705 = vunpack.c.h.b16 %v316
      %v706 = vunpack.c.l.b16 %v317
      %v707 = vunpack.c.h.b16 %v317
      %v708 = vunpack.c.l.b16 %v318
      %v709 = vunpack.c.h.b16 %v318
      %v710 = vunpack.c.l.b16 %v319
      %v711 = vunpack.c.h.b16 %v319
      %v712 = vunpack.c.l.b16 %v320
      %v713 = vunpack.c.h.b16 %v320
      %v714 = vunpack.c.l.b16 %v321
      %v715 = vunpack.c.h.b16 %v321
      %v716 = vunpack.c.l.b16 %v322
      %v717 = vunpack.c.h.b16 %v322
      %v718 = vunpack.c.l.b16 %v323
      %v719 = vunpack.c.h.b16 %v323
      %v720 = vunpack.c.l.b16 %v324
      %v721 = vunpack.c.h.b16 %v324
      %v722 = vunpack.c.l.b16 %v325
      %v723 = vunpack.c.h.b16 %v325
      %v724 = vunpack.c.l.b16 %v326
      %v725 = vunpack.c.h.b16 %v326
      %v726 = vunpack.c.l.b16 %v327
      %v727 = vunpack.c.h.b16 %v327
      %v728 = vunpack.c.l.b16 %v328
      %v729 = vunpack.c.h.b16 %v328
      %v730 = vunpack.c.l.b16 %v329
      %v731 = vunpack.c.h.b16 %v329
      %v732 = vunpack.c.l.b16 %v330
      %v733 = vunpack.c.h.b16 %v330
      %v734 = vunpack.c.l.b16 %v331
      %v735 = vunpack.c.h.b16 %v331
      %v736 = vunpack.c.l.b16 %v332
      %v737 = vunpack.c.h.b16 %v332
      %v738 = vunpack.c.l.b16 %v333
      %v739 = vunpack.c.h.b16 %v333
      %v740 = vunpack.c.l.b16 %v334
      %v741 = vunpack.c.h.b16 %v334
      %v742 = vunpack.c.l.b16 %v335
      %v743 = vunpack.c.h.b16 %v335
      %v744 = vunpack.c.l.b16 %v336
      %v745 = vunpack.c.h.b16 %v336
      %v746 = vunpack.c.l.b16 %v337
      %v747 = vunpack.c.h.b16 %v337
      %v748 = vunpack.c.l.b16 %v338
      %v749 = vunpack.c.h.b16 %v338
      %v750 = vunpack.c.l.b16 %v339
      %v751 = vunpack.c.h.b16 %v339
      %v752 = vunpack.c.l.b16 %v340
      %v753 = vunpack.c.h.b16 %v340
      %v754 = vunpack.c.l.b16 %v341
      %v755 = vunpack.c.h.b16 %v341
      %v756 = vunpack.c.l.b16 %v342
      %v757 = vunpack.c.h.b16 %v342
      %v758 = vunpack.c.l.b16 %v343
      %v759 = vunpack.c.h.b16 %v343
      %v760 = vunpack.c.l.b16 %v344
      %v761 = vunpack.c.h.b16 %v344
      %v762 = vunpack.c.l.b16 %v345
      %v763 = vunpack.c.h.b16 %v345
      %v764 = vunpack.c.l.b16 %v346
      %v765 = vunpack.c.h.b16 %v346
      %v766 = vunpack.c.l.b16 %v347
      %v767 = vunpack.c.h.b16 %v347
      %v768 = vunpack.c.l.b16 %v348
      %v769 = vunpack.c.h.b16 %v348
      %v770 = vunpack.c.l.b16 %v349
      %v771 = vunpack.c.h.b16 %v349
      %v772 = vunpack.c.l.b16 %v350
      %v773 = vunpack.c.h.b16 %v350
      %v774 = vunpack.c.l.b16 %v351
      %v775 = vunpack.c.h.b16 %v351
      %v776 = vunpack.c.l.b16 %v352
      %v777 = vunpack.c.h.b16 %v352
      %v778 = vunpack.c.l.b16 %v353
      %v779 = vunpack.c.h.b16 %v353
      %v780 = vunpack.c.l.b16 %v354
      %v781 = vunpack.c.h.b16 %v354
      %v782 = vunpack.c.l.b16 %v355
      %v783 = vunpack.c.h.b16 %v355
      %v784 = vunpack.c.l.b16 %v356
      %v785 = vunpack.c.h.b16 %v356
      %v786 = vunpack.c.l.b16 %v357
      %v787 = vunpack.c.h.b16 %v357
      %v788 = vunpack.c.l.b16 %v358
      %v789 = vunpack.c.h.b16 %v358
      %v790 = vunpack.c.l.b16 %v359
      %v791 = vunpack.c.h.b16 %v359
      %v792 = vunpack.c.l.b16 %v360
      %v793 = vunpack.c.h.b16 %v360
      %v794 = vunpack.c.l.b16 %v361
      %v795 = vunpack.c.h.b16 %v361
      %v796 = vunpack.c.l.b16 %v362
      %v797 = vunpack.c.h.b16 %v362
      %v798 = vunpack.c.l.b16 %v363
      %v799 = vunpack.c.h.b16 %v363
      %v800 = vunpack.c.l.b16 %v364
      %v801 = vunpack.c.h.b16 %v364
      %v802 = vunpack.c.l.b16 %v365
      %v803 = vunpack.c.h.b16 %v365
      %v804 = vunpack.c.l.b16 %v366
      %v805 = vunpack.c.h.b16 %v366
      %v806 = vunpack.c.l.b16 %v367
      %v807 = vunpack.c.h.b16 %v367
      %v808 = vunpack.c.l.b16 %v368
      %v809 = vunpack.c.h.b16 %v368
      %v810 = vunpack.c.l.b16 %v369
      %v811 = vunpack.c.h.b16 %v369
      %v812 = vunpack.c.l.b16 %v370
      %v813 = vunpack.c.h.b16 %v370
      %v814 = vunpack.c.l.b16 %v371
      %v815 = vunpack.c.h.b16 %v371
      %v816 = vunpack.c.l.b16 %v372
      %v817 = vunpack.c.h.b16 %v372
      %v818 = vunpack.c.l.b16 %v373
      %v819 = vunpack.c.h.b16 %v373
      %v820 = vunpack.c.l.b16 %v374
      %v821 = vunpack.c.h.b16 %v374
      %v822 = vunpack.c.l.b16 %v375
      %v823 = vunpack.c.h.b16 %v375
      %v824 = vunpack.c.l.b16 %v376
      %v825 = vunpack.c.h.b16 %v376
      %v826 = vunpack.c.l.b16 %v377
      %v827 = vunpack.c.h.b16 %v377
      %v828 = vpack.c.b16 %v638, %v636
      %v829 = vpack.c.b16 %v639, %v637
      %v830 = vpack.c.b16 %v642, %v640
      %v831 = vpack.c.b16 %v643, %v641
      %v832 = vpack.c.b16 %v646, %v644
      %v833 = vpack.c.b16 %v647, %v645
      %v834 = vpack.c.b16 %v650, %v648
      %v835 = vpack.c.b16 %v651, %v649
      %v836 = vpack.c.b16 %v654, %v652
      %v837 = vpack.c.b16 %v655, %v653
      %v838 = vpack.c.b16 %v658, %v656
      %v839 = vpack.c.b16 %v659, %v657
      %v840 = vpack.c.b16 %v662, %v660
      %v841 = vpack.c.b16 %v663, %v661
      %v842 = vpack.c.b16 %v666, %v664
      %v843 = vpack.c.b16 %v667, %v665
      %v844 = vpack.c.b16 %v670, %v668
      %v845 = vpack.c.b16 %v671, %v669
      %v846 = vpack.c.b16 %v674, %v672
      %v847 = vpack.c.b16 %v675, %v673
      %v848 = vpack.c.b16 %v678, %v676
      %v849 = vpack.c.b16 %v679, %v677
      %v850 = vpack.c.b16 %v682, %v680
      %v851 = vpack.c.b16 %v683, %v681
      %v852 = vpack.c.b16 %v686, %v684
      %v853 = vpack.c.b16 %v687, %v685
      %v854 = vpack.c.b16 %v690, %v688
      %v855 = vpack.c.b16 %v691, %v689
      %v856 = vpack.c.b16 %v694, %v692
      %v857 = vpack.c.b16 %v695, %v693
      %v858 = vpack.c.b16 %v698, %v696
      %v859 = vpack.c.b16 %v699, %v697
      %v860 = vpack.c.b16 %v702, %v700
      %v861 = vpack.c.b16 %v703, %v701
      %v862 = vpack.c.b16 %v706, %v704
      %v863 = vpack.c.b16 %v707, %v705
      %v864 = vpack.c.b16 %v710, %v708
      %v865 = vpack.c.b16 %v711, %v709
      %v866 = vpack.c.b16 %v714, %v712
      %v867 = vpack.c.b16 %v715, %v713
      %v868 = vpack.c.b16 %v718, %v716
      %v869 = vpack.c.b16 %v719, %v717
      %v870 = vpack.c.b16 %v722, %v720
      %v871 = vpack.c.b16 %v723, %v721
      %v872 = vpack.c.b16 %v726, %v724
      %v873 = vpack.c.b16 %v727, %v725
      %v874 = vpack.c.b16 %v730, %v728
      %v875 = vpack.c.b16 %v731, %v729
      %v876 = vpack.c.b16 %v734, %v732
      %v877 = vpack.c.b16 %v735, %v733
      %v878 = vpack.c.b16 %v738, %v736
      %v879 = vpack.c.b16 %v739, %v737
      %v880 = vpack.c.b16 %v742, %v740
      %v881 = vpack.c.b16 %v743, %v741
      %v882 = vpack.c.b16 %v746, %v744
      %v883 = vpack.c.b16 %v747, %v745
      %v884 = vpack.c.b16 %v750, %v748
      %v885 = vpack.c.b16 %v751, %v749
      %v886 = vpack.c.b16 %v754, %v752
      %v887 = vpack.c.b16 %v755, %v753
      %v888 = vpack.c.b16 %v758, %v756
      %v889 = vpack.c.b16 %v759, %v757
      %v890 = vpack.c.b16 %v762, %v760
      %v891 = vpack.c.b16 %v763, %v761
      %v892 = vpack.c.b16 %v766, %v764
      %v893 = vpack.c.b16 %v767, %v765
      %v894 = vpack.c.b16 %v770, %v768
      %v895 = vpack.c.b16 %v771, %v769
      %v896 = vpack.c.b16 %v774, %v772
      %v897 = vpack.c.b16 %v775, %v773
      %v898 = vpack.c.b16 %v778, %v776
      %v899 = vpack.c.b16 %v779, %v777
      %v900 = vpack.c.b16 %v782, %v780
      %v901 = vpack.c.b16 %v783, %v781
      %v902 = vpack.c.b16 %v786, %v784
      %v903 = vpack.c.b16 %v787, %v785
      %v904 = vpack.c.b16 %v790, %v788
      %v905 = vpack.c.b16 %v791, %v789
      %v906 = vpack.c.b16 %v794, %v792
      %v907 = vpack.c.b16 %v795, %v793
      %v908 = vpack.c.b16 %v798, %v796
      %v909 = vpack.c.b16 %v799, %v797
      %v910 = vpack.c.b16 %v802, %v800
      %v911 = vpack.c.b16 %v803, %v801
      %v912 = vpack.c.b16 %v806, %v804
      %v913 = vpack.c.b16 %v807, %v805
      %v914 = vpack.c.b16 %v810, %v808
      %v915 = vpack.c.b16 %v811, %v809
      %v916 = vpack.c.b16 %v814, %v812
      %v917 = vpack.c.b16 %v815, %v813
      %v918 = vpack.c.b16 %v818, %v816
      %v919 = vpack.c.b16 %v819, %v817
      %v920 = vpack.c.b16 %v822, %v820
      %v921 = vpack.c.b16 %v823, %v821
      %v922 = vpack.c.b16 %v826, %v824
      %v923 = vpack.c.b16 %v827, %v825
      %1020 = vmatprep.subr.bf16.mxu0 %v829
      %1021 = vmatpush1.bf16.msra.mxu0 %v828
      %1022 = vmatprep.subr.bf16.mxu0 %v831
      %1023 = vmatpush1.bf16.msra.mxu0 %v830
      %1024 = vmatprep.subr.bf16.mxu0 %v833
      %1025 = vmatpush1.bf16.msra.mxu0 %v832
      %1026 = vmatprep.subr.bf16.mxu0 %v835
      %1027 = vmatpush1.bf16.msra.mxu0 %v834
      %1028 = vmatprep.subr.bf16.mxu0 %v837
      %1029 = vmatpush1.bf16.msra.mxu0 %v836
      %1030 = vmatprep.subr.bf16.mxu0 %v839
      %1031 = vmatpush1.bf16.msra.mxu0 %v838
      %1032 = vmatprep.subr.bf16.mxu0 %v841
      %1033 = vmatpush1.bf16.msra.mxu0 %v840
      %1034 = vmatprep.subr.bf16.mxu0 %v843
      %1035 = vmatpush1.bf16.msra.mxu0 %v842
      %1036 = vmatprep.subr.bf16.mxu0 %v845
      %1037 = vmatpush1.bf16.msra.mxu0 %v844
      %1038 = vmatprep.subr.bf16.mxu0 %v847
      %1039 = vmatpush1.bf16.msra.mxu0 %v846
      %1040 = vmatprep.subr.bf16.mxu0 %v849
      %1041 = vmatpush1.bf16.msra.mxu0 %v848
      %1042 = vmatprep.subr.bf16.mxu0 %v851
      %1043 = vmatpush1.bf16.msra.mxu0 %v850
      %1044 = vmatprep.subr.bf16.mxu0 %v853
      %1045 = vmatpush1.bf16.msra.mxu0 %v852
      %1046 = vmatprep.subr.bf16.mxu0 %v855
      %1047 = vmatpush1.bf16.msra.mxu0 %v854
      %1048 = vmatprep.subr.bf16.mxu0 %v857
      %1049 = vmatpush1.bf16.msra.mxu0 %v856
      %1050 = vmatprep.subr.bf16.mxu0 %v859
      %1051 = vmatpush1.bf16.msra.mxu0 %v858
      %1052 = vmatprep.mubr.bf16.mxu0 %v481
      %1053 = vmatmul.mubr.bf16.gmra.mrb[0].mxu0 %v480
      %v1054 = vpop.f32.mrb[0].mxu0
      %v1055 = vadd.f32 %v383, %v1054
      %v1056 = vpop.f32.mrb[0].mxu0
      %v1057 = vadd.f32 %v387, %v1056
      %v1058 = vpop.f32.mrb[0].mxu0
      %v1059 = vadd.f32 %v383, %v1058
      %v1060 = vpop.f32.mrb[0].mxu0
      %v1061 = vadd.f32 %v387, %v1060
      %1062 = vmatprep.mubr.bf16.mxu0 %v487
      %1063 = vmatmul.mubr.bf16.gmra.mrb[0].mxu0 %v486
      %v1064 = vpop.f32.mrb[0].mxu0
      %v1065 = vadd.f32 %v383, %v1064
      %v1066 = vpop.f32.mrb[0].mxu0
      %v1067 = vadd.f32 %v387, %v1066
      %v1068 = vpop.f32.mrb[0].mxu0
      %v1069 = vadd.f32 %v383, %v1068
      %v1070 = vpop.f32.mrb[0].mxu0
      %v1071 = vadd.f32 %v387, %v1070
      %1072 = vmatprep.mubr.bf16.mxu0 %v493
      %1073 = vmatmul.mubr.bf16.gmra.mrb[0].mxu0 %v492
      %v1074 = vpop.f32.mrb[0].mxu0
      %v1075 = vadd.f32 %v383, %v1074
      %v1076 = vpop.f32.mrb[0].mxu0
      %v1077 = vadd.f32 %v387, %v1076
      %v1078 = vpop.f32.mrb[0].mxu0
      %v1079 = vadd.f32 %v383, %v1078
      %v1080 = vpop.f32.mrb[0].mxu0
      %v1081 = vadd.f32 %v387, %v1080
      %1082 = vmatprep.mubr.bf16.mxu0 %v499
      %1083 = vmatmul.mubr.bf16.gmra.mrb[0].mxu0 %v498
      %v1084 = vpop.f32.mrb[0].mxu0
      %v1085 = vadd.f32 %v383, %v1084
      %v1086 = vpop.f32.mrb[0].mxu0
      %v1087 = vadd.f32 %v387, %v1086
      %v1088 = vpop.f32.mrb[0].mxu0
      %v1089 = vadd.f32 %v383, %v1088
      %v1090 = vpop.f32.mrb[0].mxu0
      %v1091 = vadd.f32 %v387, %v1090
      %1092 = vmatprep.mubr.bf16.mxu0 %v505
      %1093 = vmatmul.mubr.bf16.gmra.mrb[0].mxu0 %v504
      %v1094 = vpop.f32.mrb[0].mxu0
      %v1095 = vadd.f32 %v383, %v1094
      %v1096 = vpop.f32.mrb[0].mxu0
      %v1097 = vadd.f32 %v387, %v1096
      %v1098 = vpop.f32.mrb[0].mxu0
      %v1099 = vadd.f32 %v383, %v1098
      %v1100 = vpop.f32.mrb[0].mxu0
      %v1101 = vadd.f32 %v387, %v1100
      %1102 = vdwg.mxu0
      %1103 = vmatprep.subr.bf16.mxu0 %v861
      %1104 = vmatpush1.bf16.msra.mxu0 %v860
      %1105 = vmatprep.subr.bf16.mxu0 %v863
      %1106 = vmatpush1.bf16.msra.mxu0 %v862
      %1107 = vmatprep.subr.bf16.mxu0 %v865
      %1108 = vmatpush1.bf16.msra.mxu0 %v864
      %1109 = vmatprep.subr.bf16.mxu0 %v867
      %1110 = vmatpush1.bf16.msra.mxu0 %v866
      %1111 = vmatprep.subr.bf16.mxu0 %v869
      %1112 = vmatpush1.bf16.msra.mxu0 %v868
      %1113 = vmatprep.subr.bf16.mxu0 %v871
      %1114 = vmatpush1.bf16.msra.mxu0 %v870
      %1115 = vmatprep.subr.bf16.mxu0 %v873
      %1116 = vmatpush1.bf16.msra.mxu0 %v872
      %1117 = vmatprep.subr.bf16.mxu0 %v875
      %1118 = vmatpush1.bf16.msra.mxu0 %v874
      %1119 = vmatprep.subr.bf16.mxu0 %v877
      %1120 = vmatpush1.bf16.msra.mxu0 %v876
      %1121 = vmatprep.subr.bf16.mxu0 %v879
      %1122 = vmatpush1.bf16.msra.mxu0 %v878
      %1123 = vmatprep.subr.bf16.mxu0 %v881
      %1124 = vmatpush1.bf16.msra.mxu0 %v880
      %1125 = vmatprep.subr.bf16.mxu0 %v883
      %1126 = vmatpush1.bf16.msra.mxu0 %v882
      %1127 = vmatprep.subr.bf16.mxu0 %v885
      %1128 = vmatpush1.bf16.msra.mxu0 %v884
      %1129 = vmatprep.subr.bf16.mxu0 %v887
      %1130 = vmatpush1.bf16.msra.mxu0 %v886
      %1131 = vmatprep.subr.bf16.mxu0 %v889
      %1132 = vmatpush1.bf16.msra.mxu0 %v888
      %1133 = vmatprep.subr.bf16.mxu0 %v891
      %1134 = vmatpush1.bf16.msra.mxu0 %v890
      %1135 = vmatprep.mubr.bf16.mxu0 %v483
      %1136 = vmatmul.mubr.bf16.gmra.mrb[0].mxu0 %v482
      %v1137 = vpop.f32.mrb[0].mxu0
      %v1138 = vadd.f32 %v1055, %v1137
      %v1139 = vpop.f32.mrb[0].mxu0
      %v1140 = vadd.f32 %v1057, %v1139
      %v1141 = vpop.f32.mrb[0].mxu0
      %v1142 = vadd.f32 %v1059, %v1141
      %v1143 = vpop.f32.mrb[0].mxu0
      %v1144 = vadd.f32 %v1061, %v1143
      %1145 = vmatprep.mubr.bf16.mxu0 %v489
      %1146 = vmatmul.mubr.bf16.gmra.mrb[0].mxu0 %v488
      %v1147 = vpop.f32.mrb[0].mxu0
      %v1148 = vadd.f32 %v1065, %v1147
      %v1149 = vpop.f32.mrb[0].mxu0
      %v1150 = vadd.f32 %v1067, %v1149
      %v1151 = vpop.f32.mrb[0].mxu0
      %v1152 = vadd.f32 %v1069, %v1151
      %v1153 = vpop.f32.mrb[0].mxu0
      %v1154 = vadd.f32 %v1071, %v1153
      %1155 = vmatprep.mubr.bf16.mxu0 %v495
      %1156 = vmatmul.mubr.bf16.gmra.mrb[0].mxu0 %v494
      %v1157 = vpop.f32.mrb[0].mxu0
      %v1158 = vadd.f32 %v1075, %v1157
      %v1159 = vpop.f32.mrb[0].mxu0
      %v1160 = vadd.f32 %v1077, %v1159
      %v1161 = vpop.f32.mrb[0].mxu0
      %v1162 = vadd.f32 %v1079, %v1161
      %v1163 = vpop.f32.mrb[0].mxu0
      %v1164 = vadd.f32 %v1081, %v1163
      %1165 = vmatprep.mubr.bf16.mxu0 %v501
      %1166 = vmatmul.mubr.bf16.gmra.mrb[0].mxu0 %v500
      %v1167 = vpop.f32.mrb[0].mxu0
      %v1168 = vadd.f32 %v1085, %v1167
      %v1169 = vpop.f32.mrb[0].mxu0
      %v1170 = vadd.f32 %v1087, %v1169
      %v1171 = vpop.f32.mrb[0].mxu0
      %v1172 = vadd.f32 %v1089, %v1171
      %v1173 = vpop.f32.mrb[0].mxu0
      %v1174 = vadd.f32 %v1091, %v1173
      %1175 = vmatprep.mubr.bf16.mxu0 %v507
      %1176 = vmatmul.mubr.bf16.gmra.mrb[0].mxu0 %v506
      %v1177 = vpop.f32.mrb[0].mxu0
      %v1178 = vadd.f32 %v1095, %v1177
      %v1179 = vpop.f32.mrb[0].mxu0
      %v1180 = vadd.f32 %v1097, %v1179
      %v1181 = vpop.f32.mrb[0].mxu0
      %v1182 = vadd.f32 %v1099, %v1181
      %v1183 = vpop.f32.mrb[0].mxu0
      %v1184 = vadd.f32 %v1101, %v1183
      %1185 = vdwg.mxu0
      %1186 = vmatprep.subr.bf16.mxu0 %v893
      %1187 = vmatpush1.bf16.msra.mxu0 %v892
      %1188 = vmatprep.subr.bf16.mxu0 %v895
      %1189 = vmatpush1.bf16.msra.mxu0 %v894
      %1190 = vmatprep.subr.bf16.mxu0 %v897
      %1191 = vmatpush1.bf16.msra.mxu0 %v896
      %1192 = vmatprep.subr.bf16.mxu0 %v899
      %1193 = vmatpush1.bf16.msra.mxu0 %v898
      %1194 = vmatprep.subr.bf16.mxu0 %v901
      %1195 = vmatpush1.bf16.msra.mxu0 %v900
      %1196 = vmatprep.subr.bf16.mxu0 %v903
      %1197 = vmatpush1.bf16.msra.mxu0 %v902
      %1198 = vmatprep.subr.bf16.mxu0 %v905
      %1199 = vmatpush1.bf16.msra.mxu0 %v904
      %1200 = vmatprep.subr.bf16.mxu0 %v907
      %1201 = vmatpush1.bf16.msra.mxu0 %v906
      %1202 = vmatprep.subr.bf16.mxu0 %v909
      %1203 = vmatpush1.bf16.msra.mxu0 %v908
      %1204 = vmatprep.subr.bf16.mxu0 %v911
      %1205 = vmatpush1.bf16.msra.mxu0 %v910
      %1206 = vmatprep.subr.bf16.mxu0 %v913
      %1207 = vmatpush1.bf16.msra.mxu0 %v912
      %1208 = vmatprep.subr.bf16.mxu0 %v915
      %1209 = vmatpush1.bf16.msra.mxu0 %v914
      %1210 = vmatprep.subr.bf16.mxu0 %v917
      %1211 = vmatpush1.bf16.msra.mxu0 %v916
      %1212 = vmatprep.subr.bf16.mxu0 %v919
      %1213 = vmatpush1.bf16.msra.mxu0 %v918
      %1214 = vmatprep.subr.bf16.mxu0 %v921
      %1215 = vmatpush1.bf16.msra.mxu0 %v920
      %1216 = vmatprep.subr.bf16.mxu0 %v923
      %1217 = vmatpush1.bf16.msra.mxu0 %v922
      %1218 = vmatprep.mubr.bf16.mxu0 %v485
      %1219 = vmatmul.mubr.bf16.gmra.mrb[0].mxu0 %v484
      %v1220 = vpop.f32.mrb[0].mxu0
      %v1221 = vadd.f32 %v1138, %v1220
      %v1222 = vpop.f32.mrb[0].mxu0
      %v1223 = vadd.f32 %v1140, %v1222
      %v1224 = vpop.f32.mrb[0].mxu0
      %v1225 = vadd.f32 %v1142, %v1224
      %v1226 = vpop.f32.mrb[0].mxu0
      %v1227 = vadd.f32 %v1144, %v1226
      %1228 = vmatprep.mubr.bf16.mxu0 %v491
      %1229 = vmatmul.mubr.bf16.gmra.mrb[0].mxu0 %v490
      %v1230 = vpop.f32.mrb[0].mxu0
      %v1231 = vadd.f32 %v1148, %v1230
      %v1232 = vpop.f32.mrb[0].mxu0
      %v1233 = vadd.f32 %v1150, %v1232
      %v1234 = vpop.f32.mrb[0].mxu0
      %v1235 = vadd.f32 %v1152, %v1234
      %v1236 = vpop.f32.mrb[0].mxu0
      %v1237 = vadd.f32 %v1154, %v1236
      %1238 = vmatprep.mubr.bf16.mxu0 %v497
      %1239 = vmatmul.mubr.bf16.gmra.mrb[0].mxu0 %v496
      %v1240 = vpop.f32.mrb[0].mxu0
      %v1241 = vadd.f32 %v1158, %v1240
      %v1242 = vpop.f32.mrb[0].mxu0
      %v1243 = vadd.f32 %v1160, %v1242
      %v1244 = vpop.f32.mrb[0].mxu0
      %v1245 = vadd.f32 %v1162, %v1244
      %v1246 = vpop.f32.mrb[0].mxu0
      %v1247 = vadd.f32 %v1164, %v1246
      %1248 = vmatprep.mubr.bf16.mxu0 %v503
      %1249 = vmatmul.mubr.bf16.gmra.mrb[0].mxu0 %v502
      %v1250 = vpop.f32.mrb[0].mxu0
      %v1251 = vadd.f32 %v1168, %v1250
      %v1252 = vpop.f32.mrb[0].mxu0
      %v1253 = vadd.f32 %v1170, %v1252
      %v1254 = vpop.f32.mrb[0].mxu0
      %v1255 = vadd.f32 %v1172, %v1254
      %v1256 = vpop.f32.mrb[0].mxu0
      %v1257 = vadd.f32 %v1174, %v1256
      %1258 = vmatprep.mubr.bf16.mxu0 %v509
      %1259 = vmatmul.mubr.bf16.gmra.mrb[0].mxu0 %v508
      %v1260 = vpop.f32.mrb[0].mxu0
      %v1261 = vadd.f32 %v1178, %v1260
      %v1262 = vpop.f32.mrb[0].mxu0
      %v1263 = vadd.f32 %v1180, %v1262
      %v1264 = vpop.f32.mrb[0].mxu0
      %v1265 = vadd.f32 %v1182, %v1264
      %v1266 = vpop.f32.mrb[0].mxu0
      %v1267 = vadd.f32 %v1184, %v1266
      %1268 = vdwg.mxu0
      %v1269 = vsub.f32 0.0, %v1223
      %v1270 = vsub.f32 0.0, %v1227
      %v1271 = vsub.f32 0.0, %v1233
      %v1272 = vsub.f32 0.0, %v1237
      %v1273 = vsub.f32 0.0, %v1243
      %v1274 = vsub.f32 0.0, %v1247
      %v1275 = vsub.f32 0.0, %v1253
      %v1276 = vsub.f32 0.0, %v1257
      %v1277 = vsub.f32 0.0, %v1263
      %v1278 = vsub.f32 0.0, %v1267
      %v1279 = vmul.f32 %v1269, 1.442695
      %v1280 = vpow.pop %v1279
      %v1281 = vmul.f32 %v1270, 1.442695
      %v1282 = vpow.pop %v1281
      %v1283 = vmul.f32 %v1271, 1.442695
      %v1284 = vpow.pop %v1283
      %v1285 = vmul.f32 %v1272, 1.442695
      %v1286 = vpow.pop %v1285
      %v1287 = vmul.f32 %v1273, 1.442695
      %v1288 = vpow.pop %v1287
      %v1289 = vmul.f32 %v1274, 1.442695
      %v1290 = vpow.pop %v1289
      %v1291 = vmul.f32 %v1275, 1.442695
      %v1292 = vpow.pop %v1291
      %v1293 = vmul.f32 %v1276, 1.442695
      %v1294 = vpow.pop %v1293
      %v1295 = vmul.f32 %v1277, 1.442695
      %v1296 = vpow.pop %v1295
      %v1297 = vmul.f32 %v1278, 1.442695
      %v1298 = vpow.pop %v1297
      %v1299 = vadd.f32 %v1280, 1.0
      %v1300 = vadd.f32 %v1282, 1.0
      %v1301 = vadd.f32 %v1284, 1.0
      %v1302 = vadd.f32 %v1286, 1.0
      %v1303 = vadd.f32 %v1288, 1.0
      %v1304 = vadd.f32 %v1290, 1.0
      %v1305 = vadd.f32 %v1292, 1.0
      %v1306 = vadd.f32 %v1294, 1.0
      %v1307 = vadd.f32 %v1296, 1.0
      %v1308 = vadd.f32 %v1298, 1.0
      %v1309 = vrcp.pop %v1299
      %v1310 = vmul.f32 1.0, %v1309
      %v1311 = vrcp.pop %v1300
      %v1312 = vmul.f32 1.0, %v1311
      %v1313 = vrcp.pop %v1301
      %v1314 = vmul.f32 1.0, %v1313
      %v1315 = vrcp.pop %v1302
      %v1316 = vmul.f32 1.0, %v1315
      %v1317 = vrcp.pop %v1303
      %v1318 = vmul.f32 1.0, %v1317
      %v1319 = vrcp.pop %v1304
      %v1320 = vmul.f32 1.0, %v1319
      %v1321 = vrcp.pop %v1305
      %v1322 = vmul.f32 1.0, %v1321
      %v1323 = vrcp.pop %v1306
      %v1324 = vmul.f32 1.0, %v1323
      %v1325 = vrcp.pop %v1307
      %v1326 = vmul.f32 1.0, %v1325
      %v1327 = vrcp.pop %v1308
      %v1328 = vmul.f32 1.0, %v1327
      %v1329 = vmul.f32 %v1221, %v1310
      %v1330 = vmul.f32 %v1225, %v1312
      %v1331 = vmul.f32 %v1231, %v1314
      %v1332 = vmul.f32 %v1235, %v1316
      %v1333 = vmul.f32 %v1241, %v1318
      %v1334 = vmul.f32 %v1245, %v1320
      %v1335 = vmul.f32 %v1251, %v1322
      %v1336 = vmul.f32 %v1255, %v1324
      %v1337 = vmul.f32 %v1261, %v1326
      %v1338 = vmul.f32 %v1265, %v1328
      %v1339 = vadd.f32 %v1329, %v1330
      %v1340 = vadd.f32 %v1339, %v1331
      %v1341 = vadd.f32 %v1340, %v1332
      %v1342 = vadd.f32 %v1341, %v1333
      %v1343 = vadd.f32 %v1342, %v1334
      %v1344 = vadd.f32 %v1343, %v1335
      %v1345 = vadd.f32 %v1344, %v1336
      %v1346 = vadd.f32 %v1345, %v1337
      %v1347 = vadd.f32 %v1346, %v1338
      %v1348 = vrot.slane %v1347, 4
      %v1349 = vadd.f32 %v1347, %v1348
      %v1350 = vrot.slane %v1349, 2
      %v1351 = vadd.f32 %v1349, %v1350
      %v1352 = vrot.slane %v1351, 1
      %v1353 = vadd.f32 %v1351, %v1352
      %v1354 = vrcp.pop 80.0
      %v1355 = vmul.f32 %v1353, %v1354
      %v1356 = vsub.f32 %v1329, %v1355
      %v1357 = vsub.f32 %v1330, %v1355
      %v1358 = vsub.f32 %v1331, %v1355
      %v1359 = vsub.f32 %v1332, %v1355
      %v1360 = vsub.f32 %v1333, %v1355
      %v1361 = vsub.f32 %v1334, %v1355
      %v1362 = vsub.f32 %v1335, %v1355
      %v1363 = vsub.f32 %v1336, %v1355
      %v1364 = vsub.f32 %v1337, %v1355
      %v1365 = vsub.f32 %v1338, %v1355
      %v1366 = vmul.f32 %v1356, %v1356
      %v1367 = vmul.f32 %v1357, %v1357
      %v1368 = vmul.f32 %v1358, %v1358
      %v1369 = vmul.f32 %v1359, %v1359
      %v1370 = vmul.f32 %v1360, %v1360
      %v1371 = vmul.f32 %v1361, %v1361
      %v1372 = vmul.f32 %v1362, %v1362
      %v1373 = vmul.f32 %v1363, %v1363
      %v1374 = vmul.f32 %v1364, %v1364
      %v1375 = vmul.f32 %v1365, %v1365
      %v1376 = vadd.f32 %v1366, %v1367
      %v1377 = vadd.f32 %v1376, %v1368
      %v1378 = vadd.f32 %v1377, %v1369
      %v1379 = vadd.f32 %v1378, %v1370
      %v1380 = vadd.f32 %v1379, %v1371
      %v1381 = vadd.f32 %v1380, %v1372
      %v1382 = vadd.f32 %v1381, %v1373
      %v1383 = vadd.f32 %v1382, %v1374
      %v1384 = vadd.f32 %v1383, %v1375
      %v1385 = vrot.slane %v1384, 4
      %v1386 = vadd.f32 %v1384, %v1385
      %v1387 = vrot.slane %v1386, 2
      %v1388 = vadd.f32 %v1386, %v1387
      %v1389 = vrot.slane %v1388, 1
      %v1390 = vadd.f32 %v1388, %v1389
      %v1391 = vmul.f32 %v1390, %v1354
      %v1392 = vadd.f32 %v1391, 1e-05
      %v1393 = vrsqrt.pop %v1392
      %v1394 = vmul.f32 %v1356, %v1393
      %v1395 = vmul.f32 %v1357, %v1393
      %v1396 = vmul.f32 %v1358, %v1393
      %v1397 = vmul.f32 %v1359, %v1393
      %v1398 = vmul.f32 %v1360, %v1393
      %v1399 = vmul.f32 %v1361, %v1393
      %v1400 = vmul.f32 %v1362, %v1393
      %v1401 = vmul.f32 %v1363, %v1393
      %v1402 = vmul.f32 %v1364, %v1393
      %v1403 = vmul.f32 %v1365, %v1393
      %v1404 = vld [vmem:[%s3] sm:$0x1]
      %v1406 = vlaneseq
      %v1407 = vshrl.u32 %v1406, 7
      %v1408 = vsub.s32 0, %v1407
      %v1409 = vrot.slane %v1404, %v1408
      %v1411 = vmul.f32 %v1394, %v1409
      %v1412 = vmul.f32 %v1395, %v1409
      %v1413 = vmul.f32 %v1396, %v1409
      %v1414 = vmul.f32 %v1397, %v1409
      %v1415 = vmul.f32 %v1398, %v1409
      %v1416 = vmul.f32 %v1399, %v1409
      %v1417 = vmul.f32 %v1400, %v1409
      %v1418 = vmul.f32 %v1401, %v1409
      %v1419 = vmul.f32 %v1402, %v1409
      %v1420 = vmul.f32 %v1403, %v1409
      %v1421 = vld [vmem:[%s4] sm:$0x1]
      %v1423 = vlaneseq
      %v1424 = vshrl.u32 %v1423, 7
      %v1425 = vsub.s32 0, %v1424
      %v1426 = vrot.slane %v1421, %v1425
      %v1428 = vadd.f32 %v1411, %v1426
      %v1429 = vadd.f32 %v1412, %v1426
      %v1430 = vadd.f32 %v1413, %v1426
      %v1431 = vadd.f32 %v1414, %v1426
      %v1432 = vadd.f32 %v1415, %v1426
      %v1433 = vadd.f32 %v1416, %v1426
      %v1434 = vadd.f32 %v1417, %v1426
      %v1435 = vadd.f32 %v1418, %v1426
      %v1436 = vadd.f32 %v1419, %v1426
      %v1437 = vadd.f32 %v1420, %v1426
      %vm1438 = vcmp.ge.f32.partialorder %v1428, 0.0
      %vm1439 = vcmp.ge.f32.partialorder %v1429, 0.0
      %vm1440 = vcmp.ge.f32.partialorder %v1430, 0.0
      %vm1441 = vcmp.ge.f32.partialorder %v1431, 0.0
      %vm1442 = vcmp.ge.f32.partialorder %v1432, 0.0
      %vm1443 = vcmp.ge.f32.partialorder %v1433, 0.0
      %vm1444 = vcmp.ge.f32.partialorder %v1434, 0.0
      %vm1445 = vcmp.ge.f32.partialorder %v1435, 0.0
      %vm1446 = vcmp.ge.f32.partialorder %v1436, 0.0
      %vm1447 = vcmp.ge.f32.partialorder %v1437, 0.0
      %v1448 = vld [vmem:[%s5] sm:$0x1]
      %v1450 = vlaneseq
      %v1451 = vshrl.u32 %v1450, 7
      %v1452 = vsub.s32 0, %v1451
      %v1453 = vrot.slane %v1448, %v1452
      %v1455 = vmul.f32 %v1453, %v1428
      %v1456 = vmul.f32 %v1453, %v1429
      %v1457 = vmul.f32 %v1453, %v1430
      %v1458 = vmul.f32 %v1453, %v1431
      %v1459 = vmul.f32 %v1453, %v1432
      %v1460 = vmul.f32 %v1453, %v1433
      %v1461 = vmul.f32 %v1453, %v1434
      %v1462 = vmul.f32 %v1453, %v1435
      %v1463 = vmul.f32 %v1453, %v1436
      %v1464 = vmul.f32 %v1453, %v1437
      %v1465 = vsel %vm1438, %v1428, %v1455
      %v1466 = vsel %vm1439, %v1429, %v1456
      %v1467 = vsel %vm1440, %v1430, %v1457
      %v1468 = vsel %vm1441, %v1431, %v1458
      %v1469 = vsel %vm1442, %v1432, %v1459
      %v1470 = vsel %vm1443, %v1433, %v1460
      %v1471 = vsel %vm1444, %v1434, %v1461
      %v1472 = vsel %vm1445, %v1435, %v1462
      %v1473 = vsel %vm1446, %v1436, %v1463
      %v1474 = vsel %vm1447, %v1437, %v1464
      %1475 = vst [vmem:[%s251] sm:$0xff] %v1465
      %1476 = vst [vmem:[%s251 + $0x8] sm:$0xff] %v1466
      %1477 = vst [vmem:[%s251 + $0x10] sm:$0xff] %v1467
      %1478 = vst [vmem:[%s251 + $0x18] sm:$0xff] %v1468
      %1479 = vst [vmem:[%s251 + $0x20] sm:$0xff] %v1469
      %1480 = vst [vmem:[%s251 + $0x28] sm:$0xff] %v1470
      %1481 = vst [vmem:[%s251 + $0x30] sm:$0xff] %v1471
      %1482 = vst [vmem:[%s251 + $0x38] sm:$0xff] %v1472
      %1483 = vst [vmem:[%s251 + $0x40] sm:$0xff] %v1473
      %1484 = vst [vmem:[%s251 + $0x48] sm:$0xff] %v1474
      %p1485 = scmp.lt.s32.totalorder %s17, 1
      %s1486 = scalar_select %p1485, %s17, 1
      %s1487 = smul.addr %s1486, 10
      %s1488 = smul.addr %s1487, 8
      %s1489 = scalar_lea.vmem %s6, %s1488
      // Predicated region
      $region45: #{encoder_forward.8} parent=43 // pred_check
        %p1490 = pneg %p166
      $region46: #{encoder_forward.8} parent=43 // pred_check_branch
        %1492 = sbr.rel (%p1490) target = $region48
      $region47: #{encoder_forward.8} parent=43 // pred_region
        _
      $region48: #{encoder_forward.8} parent=43 // pred_fallthru
        _
    $region44: #{encoder_forward.8} parent=5 // pred_fallthru
      _
    %p1493 = scmp.le.s32.totalorder 2, %s12
    // Predicated region
    $region49: #{encoder_forward.8} parent=5 // pred_check
      %p1494 = pneg %p1493
    $region50: #{encoder_forward.8} parent=5 // pred_check_branch
      %1496 = sbr.rel (%p1494) target = $region52
    $region51: #{encoder_forward.8} parent=5 // pred_region
      %s1497 = ssub.s32 %s12, 2
      // Predicated region
      $region53: #{encoder_forward.8} parent=51 // pred_check
        %p1498 = pneg %p172
      $region54: #{encoder_forward.8} parent=51 // pred_check_branch
        %1500 = sbr.rel (%p1498) target = $region56
      $region55: #{encoder_forward.8} parent=51 // pred_region
        %p1501 = scmp.lt.s32.totalorder %s18, 1
        %s1502 = scalar_select %p1501, %s18, 1
        %s1503 = smul.addr %s1502, 10
        %s1504 = smul.addr %s1503, 8
        %s1505 = scalar_lea.vmem %s6, %s1504
      $region56: #{encoder_forward.8} parent=51 // pred_fallthru
        _
    $region52: #{encoder_forward.8} parent=5 // pred_fallthru
      _
  $region6: #{encoder_forward.8} parent=0 // loop_footer
    %s16 = sadd.s32 1, %s12
  $region7: #{encoder_forward.8} parent=0 // loop_footer_branch
    %11 = sbr.rel target = $region3
  $region8: #{encoder_forward.8} parent=0 // loop_exit
    _

// kernel: encoder_forward.9
$region0: #{encoder_forward.9}
  #allocation0 [shape = 'u32[]', space=smem, size = 0x4, offset = 0x4, fixed_abs, tag = 'smem constant byte address 0x4 - core index']
  #allocation1 [shape = 'u32[144,128]{1,0:T(1,128)}', space=vmem, size = 0x12000, scoped, tag = 'internal scratch']
  %s0 = inlined_call_operand.vmem [shape: bf16[2,32,768], index: 0, kind: input, shape index: {}]
  %s1 = inlined_call_operand.vmem [shape: bf16[768,256], index: 1, kind: input, shape index: {}]
  %s2 = inlined_call_operand.vmem [shape: f32[1,256], index: 2, kind: input, shape index: {}]
  %s3 = inlined_call_operand.vmem [shape: f32[1,128], index: 3, kind: input, shape index: {}]
  %s4 = inlined_call_operand.vmem [shape: f32[1,128], index: 4, kind: input, shape index: {}]
  %s5 = inlined_call_operand.vmem [shape: f32[1,128], index: 5, kind: input, shape index: {}]
  %s6 = inlined_call_operand.vmem [shape: f32[2,32,128], index: 6, kind: output, shape index: {}]
  %s7 = sld [smem:[#allocation0]]
  $region57: #{encoder_forward.9} parent=0
    _
  %s9 = ssub.s32 1, %s7
  %s10 = scalar_select 0, %s9, %s7
  loop: start=0, step=1, limit=4
  $region2: #{encoder_forward.9} parent=0 // loop_pre_header
    _
  $region3: #{encoder_forward.9} parent=0 // loop_header
    %s12 = sphi 0, %s16
    %p13 = scmp.ge.s32.totalorder %s12, 4
    %s22 = sphi 0, %s24
    %s25 = sphi 0, %s22
    %s26 = sphi 0, %s25
    %s42 = sphi 0, %s26
    %s46 = sphi 0, %s46
    %s48 = sphi 0, %s46
    %s49 = sphi 0, %s48
    %s63 = sphi 0, %s49
    %s67 = sphi 0, %s67
    %s69 = sphi 0, %s67
    %s70 = sphi 0, %s69
    %s84 = sphi 0, %s70
    %s88 = sphi 0, %s88
    %s90 = sphi 0, %s88
    %s91 = sphi 0, %s90
    %s105 = sphi 0, %s91
    %s109 = sphi 0, %s109
    %s111 = sphi 0, %s109
    %s112 = sphi 0, %s111
    %s126 = sphi 0, %s112
    %s130 = sphi 0, %s130
    %s132 = sphi 0, %s130
    %s133 = sphi 0, %s132
    %s147 = sphi 0, %s133
    %s153 = sphi 0, %s155
    %s156 = sphi 0, %s153
    %s157 = sphi 0, %s156
    %s173 = sphi 0, %s157
  $region4: #{encoder_forward.9} parent=0 // loop_header_branch
    %15 = sbr.rel (%p13) target = $region8
  $region5: #{encoder_forward.9} parent=0 // loop_body
    %s17 = ssub.s32 %s12, 1
    %s18 = ssub.s32 %s12, 2
    %s19 = sadd.s32 %s12, 1
    %s20 = ssub.s32 %s12, %s19
    %p21 = scmp.eq.s32.totalorder %s20, 0
    %s23 = sadd.s32 %s22, 1
    %s24 = scalar_select %p21, %s22, %s23
    %p27 = pneg %p21
    %p28 = scmp.eq.s32.totalorder %s12, 1
    %p29 = por %p27, %p28
    %p30 = scmp.ne.s32.totalorder %s22, %s25
    %p31 = scmp.eq.s32.totalorder %s12, 0
    %p32 = por %p30, %p31
    %p33 = scmp.ne.s32.totalorder %s22, %s25
    %p34 = scmp.eq.s32.totalorder %s17, 1
    %p35 = por %p33, %p34
    %p36 = scmp.ne.s32.totalorder %s25, %s26
    %p37 = scmp.eq.s32.totalorder %s17, 0
    %p38 = por %p36, %p37
    %p39 = scmp.ne.s32.totalorder %s25, %s26
    %p40 = scmp.eq.s32.totalorder %s18, 1
    %p41 = por %p39, %p40
    %p43 = scmp.ne.s32.totalorder %s26, %s42
    %p44 = scmp.eq.s32.totalorder %s18, 0
    %p45 = por %p43, %p44
    %s47 = sadd.s32 %s46, 1
    %p50 = scmp.eq.s32.totalorder %s12, 1
    %p51 = scmp.ne.s32.totalorder %s46, %s48
    %p52 = scmp.eq.s32.totalorder %s12, 0
    %p53 = por %p51, %p52
    %p54 = scmp.ne.s32.totalorder %s46, %s48
    %p55 = scmp.eq.s32.totalorder %s17, 1
    %p56 = por %p54, %p55
    %p57 = scmp.ne.s32.totalorder %s48, %s49
    %p58 = scmp.eq.s32.totalorder %s17, 0
    %p59 = por %p57, %p58
    %p60 = scmp.ne.s32.totalorder %s48, %s49
    %p61 = scmp.eq.s32.totalorder %s18, 1
    %p62 = por %p60, %p61
    %p64 = scmp.ne.s32.totalorder %s49, %s63
    %p65 = scmp.eq.s32.totalorder %s18, 0
    %p66 = por %p64, %p65
    %s68 = sadd.s32 %s67, 1
    %p71 = scmp.eq.s32.totalorder %s12, 1
    %p72 = scmp.ne.s32.totalorder %s67, %s69
    %p73 = scmp.eq.s32.totalorder %s12, 0
    %p74 = por %p72, %p73
    %p75 = scmp.ne.s32.totalorder %s67, %s69
    %p76 = scmp.eq.s32.totalorder %s17, 1
    %p77 = por %p75, %p76
    %p78 = scmp.ne.s32.totalorder %s69, %s70
    %p79 = scmp.eq.s32.totalorder %s17, 0
    %p80 = por %p78, %p79
    %p81 = scmp.ne.s32.totalorder %s69, %s70
    %p82 = scmp.eq.s32.totalorder %s18, 1
    %p83 = por %p81, %p82
    %p85 = scmp.ne.s32.totalorder %s70, %s84
    %p86 = scmp.eq.s32.totalorder %s18, 0
    %p87 = por %p85, %p86
    %s89 = sadd.s32 %s88, 1
    %p92 = scmp.eq.s32.totalorder %s12, 1
    %p93 = scmp.ne.s32.totalorder %s88, %s90
    %p94 = scmp.eq.s32.totalorder %s12, 0
    %p95 = por %p93, %p94
    %p96 = scmp.ne.s32.totalorder %s88, %s90
    %p97 = scmp.eq.s32.totalorder %s17, 1
    %p98 = por %p96, %p97
    %p99 = scmp.ne.s32.totalorder %s90, %s91
    %p100 = scmp.eq.s32.totalorder %s17, 0
    %p101 = por %p99, %p100
    %p102 = scmp.ne.s32.totalorder %s90, %s91
    %p103 = scmp.eq.s32.totalorder %s18, 1
    %p104 = por %p102, %p103
    %p106 = scmp.ne.s32.totalorder %s91, %s105
    %p107 = scmp.eq.s32.totalorder %s18, 0
    %p108 = por %p106, %p107
    %s110 = sadd.s32 %s109, 1
    %p113 = scmp.eq.s32.totalorder %s12, 1
    %p114 = scmp.ne.s32.totalorder %s109, %s111
    %p115 = scmp.eq.s32.totalorder %s12, 0
    %p116 = por %p114, %p115
    %p117 = scmp.ne.s32.totalorder %s109, %s111
    %p118 = scmp.eq.s32.totalorder %s17, 1
    %p119 = por %p117, %p118
    %p120 = scmp.ne.s32.totalorder %s111, %s112
    %p121 = scmp.eq.s32.totalorder %s17, 0
    %p122 = por %p120, %p121
    %p123 = scmp.ne.s32.totalorder %s111, %s112
    %p124 = scmp.eq.s32.totalorder %s18, 1
    %p125 = por %p123, %p124
    %p127 = scmp.ne.s32.totalorder %s112, %s126
    %p128 = scmp.eq.s32.totalorder %s18, 0
    %p129 = por %p127, %p128
    %s131 = sadd.s32 %s130, 1
    %p134 = scmp.eq.s32.totalorder %s12, 1
    %p135 = scmp.ne.s32.totalorder %s130, %s132
    %p136 = scmp.eq.s32.totalorder %s12, 0
    %p137 = por %p135, %p136
    %p138 = scmp.ne.s32.totalorder %s130, %s132
    %p139 = scmp.eq.s32.totalorder %s17, 1
    %p140 = por %p138, %p139
    %p141 = scmp.ne.s32.totalorder %s132, %s133
    %p142 = scmp.eq.s32.totalorder %s17, 0
    %p143 = por %p141, %p142
    %p144 = scmp.ne.s32.totalorder %s132, %s133
    %p145 = scmp.eq.s32.totalorder %s18, 1
    %p146 = por %p144, %p145
    %p148 = scmp.ne.s32.totalorder %s133, %s147
    %p149 = scmp.eq.s32.totalorder %s18, 0
    %p150 = por %p148, %p149
    %s151 = ssub.s32 %s12, %s19
    %p152 = scmp.eq.s32.totalorder %s151, 0
    %s154 = sadd.s32 %s153, 1
    %s155 = scalar_select %p152, %s153, %s154
    %p158 = pneg %p152
    %p159 = scmp.eq.s32.totalorder %s12, 1
    %p160 = por %p158, %p159
    %p161 = scmp.ne.s32.totalorder %s153, %s156
    %p162 = scmp.eq.s32.totalorder %s12, 0
    %p163 = por %p161, %p162
    %p164 = scmp.ne.s32.totalorder %s153, %s156
    %p165 = scmp.eq.s32.totalorder %s17, 1
    %p166 = por %p164, %p165
    %p167 = scmp.ne.s32.totalorder %s156, %s157
    %p168 = scmp.eq.s32.totalorder %s17, 0
    %p169 = por %p167, %p168
    %p170 = scmp.ne.s32.totalorder %s156, %s157
    %p171 = scmp.eq.s32.totalorder %s18, 1
    %p172 = por %p170, %p171
    %p174 = scmp.ne.s32.totalorder %s157, %s173
    %p175 = scmp.eq.s32.totalorder %s18, 0
    %p176 = por %p174, %p175
    %p177 = scmp.le.s32.totalorder 1, %s12
    %p178 = scmp.lt.s32.totalorder %s12, 3
    %p179 = pnand %p177, %p178
    %p180 = pneg %p179
    // Predicated region
    $region9: #{encoder_forward.9} parent=5 // pred_check
      _
    $region10: #{encoder_forward.9} parent=5 // pred_check_branch
      %182 = sbr.rel (%p179) target = $region12
    $region11: #{encoder_forward.9} parent=5 // pred_region
      %s183 = ssub.s32 %s12, 1
      // Predicated region
      $region13: #{encoder_forward.9} parent=11 // pred_check
        %p184 = pneg %p59
      $region14: #{encoder_forward.9} parent=11 // pred_check_branch
        %186 = sbr.rel (%p184) target = $region16
      $region15: #{encoder_forward.9} parent=11 // pred_region
        _
      $region16: #{encoder_forward.9} parent=11 // pred_fallthru
        _
      // Predicated region
      $region17: #{encoder_forward.9} parent=11 // pred_check
        %p187 = pneg %p80
      $region18: #{encoder_forward.9} parent=11 // pred_check_branch
        %189 = sbr.rel (%p187) target = $region20
      $region19: #{encoder_forward.9} parent=11 // pred_region
        _
      $region20: #{encoder_forward.9} parent=11 // pred_fallthru
        _
      // Predicated region
      $region21: #{encoder_forward.9} parent=11 // pred_check
        %p190 = pneg %p101
      $region22: #{encoder_forward.9} parent=11 // pred_check_branch
        %192 = sbr.rel (%p190) target = $region24
      $region23: #{encoder_forward.9} parent=11 // pred_region
        _
      $region24: #{encoder_forward.9} parent=11 // pred_fallthru
        _
      // Predicated region
      $region25: #{encoder_forward.9} parent=11 // pred_check
        %p193 = pneg %p122
      $region26: #{encoder_forward.9} parent=11 // pred_check_branch
        %195 = sbr.rel (%p193) target = $region28
      $region27: #{encoder_forward.9} parent=11 // pred_region
        _
      $region28: #{encoder_forward.9} parent=11 // pred_fallthru
        _
      // Predicated region
      $region29: #{encoder_forward.9} parent=11 // pred_check
        %p196 = pneg %p143
      $region30: #{encoder_forward.9} parent=11 // pred_check_branch
        %198 = sbr.rel (%p196) target = $region32
      $region31: #{encoder_forward.9} parent=11 // pred_region
        _
      $region32: #{encoder_forward.9} parent=11 // pred_fallthru
        _
    $region12: #{encoder_forward.9} parent=5 // pred_fallthru
      _
    %p199 = scmp.lt.s32.totalorder %s12, 2
    // Predicated region
    $region33: #{encoder_forward.9} parent=5 // pred_check
      %p200 = pneg %p199
    $region34: #{encoder_forward.9} parent=5 // pred_check_branch
      %202 = sbr.rel (%p200) target = $region36
    $region35: #{encoder_forward.9} parent=5 // pred_region
      // Predicated region
      $region37: #{encoder_forward.9} parent=35 // pred_check
        %p203 = pneg %p32
      $region38: #{encoder_forward.9} parent=35 // pred_check_branch
        %205 = sbr.rel (%p203) target = $region40
      $region39: #{encoder_forward.9} parent=35 // pred_region
        %p206 = scmp.lt.s32.totalorder %s12, 1
        %s207 = scalar_select %p206, %s12, 1
        %s208 = smul.addr %s207, 24
        %s209 = smul.addr %s208, 4
        %s210 = scalar_lea.vmem %s0, %s209
      $region40: #{encoder_forward.9} parent=35 // pred_fallthru
        _
    $region36: #{encoder_forward.9} parent=5 // pred_fallthru
      _
    %p211 = scmp.le.s32.totalorder 1, %s12
    %p212 = scmp.lt.s32.totalorder %s12, 3
    %p213 = pnand %p211, %p212
    %p214 = pneg %p213
    // Predicated region
    $region41: #{encoder_forward.9} parent=5 // pred_check
      _
    $region42: #{encoder_forward.9} parent=5 // pred_check_branch
      %216 = sbr.rel (%p213) target = $region44
    $region43: #{encoder_forward.9} parent=5 // pred_region
      %s217 = ssub.s32 %s12, 1
      %p218 = scmp.lt.s32.totalorder %s17, 1
      %s219 = scalar_select %p218, %s17, 1
      %s220 = smul.addr %s219, 24
      %s221 = smul.addr %s220, 4
      %s222 = scalar_lea.vmem %s0, %s221
      %p223 = pneg %p38
      %p224 = pneg %p35
      %p225 = pneg %p59
      %p226 = pneg %p56
      %p227 = pneg %p80
      %p228 = pneg %p77
      %p229 = pneg %p101
      %p230 = pneg %p98
      %p231 = pneg %p122
      %p232 = pneg %p119
      %p233 = pneg %p143
      %p234 = pneg %p140
      %p235 = pneg %p169
      %p236 = pneg %p166
      %p237 = scmp.lt.s32.totalorder %s17, 1
      %s238 = scalar_select %p237, %s17, 1
      %s239 = smul.addr %s238, 4
      %s240 = smul.addr %s239, 8
      %s241 = scalar_lea.vmem %s6, %s240
      %p242 = scmp.lt.s32.totalorder %s17, 1
      %s243 = scalar_select %p242, %s17, 1
      %s244 = smul.addr %s243, 24
      %s245 = smul.addr %s244, 4
      %s246 = scalar_lea.vmem %s0, %s245
      %p247 = scmp.lt.s32.totalorder %s17, 1
      %s248 = scalar_select %p247, %s17, 1
      %s249 = smul.addr %s248, 4
      %s250 = smul.addr %s249, 8
      %s251 = scalar_lea.vmem %s6, %s250
      %v252 = vld [vmem:[%s246] sm:$0xff]
      %v253 = vld [vmem:[%s246 + $0x8] sm:$0xff]
      %v254 = vld [vmem:[%s246 + $0x10] sm:$0xff]
      %v255 = vld [vmem:[%s246 + $0x18] sm:$0xff]
      %v256 = vld [vmem:[%s246 + $0x20] sm:$0xff]
      %v257 = vld [vmem:[%s246 + $0x28] sm:$0xff]
      %v258 = vld [vmem:[%s246 + $0x30] sm:$0xff]
      %v259 = vld [vmem:[%s246 + $0x38] sm:$0xff]
      %v260 = vld [vmem:[%s246 + $0x40] sm:$0xff]
      %v261 = vld [vmem:[%s246 + $0x48] sm:$0xff]
      %v262 = vld [vmem:[%s246 + $0x50] sm:$0xff]
      %v263 = vld [vmem:[%s246 + $0x58] sm:$0xff]
      %v264 = vld [vmem:[%s1] sm:$0xff]
      %v265 = vld [vmem:[%s1 + $0x8] sm:$0xff]
      %v266 = vld [vmem:[%s1 + $0x10] sm:$0xff]
      %v267 = vld [vmem:[%s1 + $0x18] sm:$0xff]
      %v268 = vld [vmem:[%s1 + $0x20] sm:$0xff]
      %v269 = vld [vmem:[%s1 + $0x28] sm:$0xff]
      %v270 = vld [vmem:[%s1 + $0x30] sm:$0xff]
      %v271 = vld [vmem:[%s1 + $0x38] sm:$0xff]
      %v272 = vld [vmem:[%s1 + $0x40] sm:$0xff]
      %v273 = vld [vmem:[%s1 + $0x48] sm:$0xff]
      %v274 = vld [vmem:[%s1 + $0x50] sm:$0xff]
      %v275 = vld [vmem:[%s1 + $0x58] sm:$0xff]
      %v276 = vld [vmem:[%s1 + $0x60] sm:$0xff]
      %v277 = vld [vmem:[%s1 + $0x68] sm:$0xff]
      %v278 = vld [vmem:[%s1 + $0x70] sm:$0xff]
      %v279 = vld [vmem:[%s1 + $0x78] sm:$0xff]
      %v280 = vld [vmem:[%s1 + $0x80] sm:$0xff]
      %v281 = vld [vmem:[%s1 + $0x88] sm:$0xff]
      %v282 = vld [vmem:[%s1 + $0x90] sm:$0xff]
      %v283 = vld [vmem:[%s1 + $0x98] sm:$0xff]
      %v284 = vld [vmem:[%s1 + $0xa0] sm:$0xff]
      %v285 = vld [vmem:[%s1 + $0xa8] sm:$0xff]
      %v286 = vld [vmem:[%s1 + $0xb0] sm:$0xff]
      %v287 = vld [vmem:[%s1 + $0xb8] sm:$0xff]
      %v288 = vld [vmem:[%s1 + $0xc0] sm:$0xff]
      %v289 = vld [vmem:[%s1 + $0xc8] sm:$0xff]
      %v290 = vld [vmem:[%s1 + $0xd0] sm:$0xff]
      %v291 = vld [vmem:[%s1 + $0xd8] sm:$0xff]
      %v292 = vld [vmem:[%s1 + $0xe0] sm:$0xff]
      %v293 = vld [vmem:[%s1 + $0xe8] sm:$0xff]
      %v294 = vld [vmem:[%s1 + $0xf0] sm:$0xff]
      %v295 = vld [vmem:[%s1 + $0xf8] sm:$0xff]
      %v296 = vld [vmem:[%s1 + $0x100] sm:$0xff]
      %v297 = vld [vmem:[%s1 + $0x108] sm:$0xff]
      %v298 = vld [vmem:[%s1 + $0x110] sm:$0xff]
      %v299 = vld [vmem:[%s1 + $0x118] sm:$0xff]
      %v300 = vld [vmem:[%s1 + $0x120] sm:$0xff]
      %v301 = vld [vmem:[%s1 + $0x128] sm:$0xff]
      %v302 = vld [vmem:[%s1 + $0x130] sm:$0xff]
      %v303 = vld [vmem:[%s1 + $0x138] sm:$0xff]
      %v304 = vld [vmem:[%s1 + $0x140] sm:$0xff]
      %v305 = vld [vmem:[%s1 + $0x148] sm:$0xff]
      %v306 = vld [vmem:[%s1 + $0x150] sm:$0xff]
      %v307 = vld [vmem:[%s1 + $0x158] sm:$0xff]
      %v308 = vld [vmem:[%s1 + $0x160] sm:$0xff]
      %v309 = vld [vmem:[%s1 + $0x168] sm:$0xff]
      %v310 = vld [vmem:[%s1 + $0x170] sm:$0xff]
      %v311 = vld [vmem:[%s1 + $0x178] sm:$0xff]
      %v312 = vld [vmem:[%s1 + $0x180] sm:$0xff]
      %v313 = vld [vmem:[%s1 + $0x188] sm:$0xff]
      %v314 = vld [vmem:[%s1 + $0x190] sm:$0xff]
      %v315 = vld [vmem:[%s1 + $0x198] sm:$0xff]
      %v316 = vld [vmem:[%s1 + $0x1a0] sm:$0xff]
      %v317 = vld [vmem:[%s1 + $0x1a8] sm:$0xff]
      %v318 = vld [vmem:[%s1 + $0x1b0] sm:$0xff]
      %v319 = vld [vmem:[%s1 + $0x1b8] sm:$0xff]
      %v320 = vld [vmem:[%s1 + $0x1c0] sm:$0xff]
      %v321 = vld [vmem:[%s1 + $0x1c8] sm:$0xff]
      %v322 = vld [vmem:[%s1 + $0x1d0] sm:$0xff]
      %v323 = vld [vmem:[%s1 + $0x1d8] sm:$0xff]
      %v324 = vld [vmem:[%s1 + $0x1e0] sm:$0xff]
      %v325 = vld [vmem:[%s1 + $0x1e8] sm:$0xff]
      %v326 = vld [vmem:[%s1 + $0x1f0] sm:$0xff]
      %v327 = vld [vmem:[%s1 + $0x1f8] sm:$0xff]
      %v328 = vld [vmem:[%s1 + $0x200] sm:$0xff]
      %v329 = vld [vmem:[%s1 + $0x208] sm:$0xff]
      %v330 = vld [vmem:[%s1 + $0x210] sm:$0xff]
      %v331 = vld [vmem:[%s1 + $0x218] sm:$0xff]
      %v332 = vld [vmem:[%s1 + $0x220] sm:$0xff]
      %v333 = vld [vmem:[%s1 + $0x228] sm:$0xff]
      %v334 = vld [vmem:[%s1 + $0x230] sm:$0xff]
      %v335 = vld [vmem:[%s1 + $0x238] sm:$0xff]
      %v336 = vld [vmem:[%s1 + $0x240] sm:$0xff]
      %v337 = vld [vmem:[%s1 + $0x248] sm:$0xff]
      %v338 = vld [vmem:[%s1 + $0x250] sm:$0xff]
      %v339 = vld [vmem:[%s1 + $0x258] sm:$0xff]
      %v340 = vld [vmem:[%s1 + $0x260] sm:$0xff]
      %v341 = vld [vmem:[%s1 + $0x268] sm:$0xff]
      %v342 = vld [vmem:[%s1 + $0x270] sm:$0xff]
      %v343 = vld [vmem:[%s1 + $0x278] sm:$0xff]
      %v344 = vld [vmem:[%s1 + $0x280] sm:$0xff]
      %v345 = vld [vmem:[%s1 + $0x288] sm:$0xff]
      %v346 = vld [vmem:[%s1 + $0x290] sm:$0xff]
      %v347 = vld [vmem:[%s1 + $0x298] sm:$0xff]
      %v348 = vld [vmem:[%s1 + $0x2a0] sm:$0xff]
      %v349 = vld [vmem:[%s1 + $0x2a8] sm:$0xff]
      %v350 = vld [vmem:[%s1 + $0x2b0] sm:$0xff]
      %v351 = vld [vmem:[%s1 + $0x2b8] sm:$0xff]
      %v352 = vld [vmem:[%s1 + $0x2c0] sm:$0xff]
      %v353 = vld [vmem:[%s1 + $0x2c8] sm:$0xff]
      %v354 = vld [vmem:[%s1 + $0x2d0] sm:$0xff]
      %v355 = vld [vmem:[%s1 + $0x2d8] sm:$0xff]
      %v356 = vld [vmem:[%s1 + $0x2e0] sm:$0xff]
      %v357 = vld [vmem:[%s1 + $0x2e8] sm:$0xff]
      %v358 = vld [vmem:[%s1 + $0x2f0] sm:$0xff]
      %v359 = vld [vmem:[%s1 + $0x2f8] sm:$0xff]
      %v360 = vld [vmem:[%s2] sm:$0x3]
      %v362 = vlaneseq
      %v363 = vshrl.u32 %v362, 7
      %v364 = vsub.s32 0, %v363
      %v365 = vrot.slane %v360, %v364
      %v366 = vlaneseq
      %v367 = vshrl.u32 %v366, 7
      %v368 = vsub.s32 1, %v367
      %v369 = vrot.slane %v360, %v368
      %v384 = vunpack.c.l.b16 %v252
      %v385 = vunpack.c.h.b16 %v252
      %v386 = vunpack.c.l.b16 %v253
      %v387 = vunpack.c.h.b16 %v253
      %v388 = vunpack.c.l.b16 %v254
      %v389 = vunpack.c.h.b16 %v254
      %v390 = vunpack.c.l.b16 %v255
      %v391 = vunpack.c.h.b16 %v255
      %v392 = vunpack.c.l.b16 %v256
      %v393 = vunpack.c.h.b16 %v256
      %v394 = vunpack.c.l.b16 %v257
      %v395 = vunpack.c.h.b16 %v257
      %v396 = vunpack.c.l.b16 %v258
      %v397 = vunpack.c.h.b16 %v258
      %v398 = vunpack.c.l.b16 %v259
      %v399 = vunpack.c.h.b16 %v259
      %v400 = vunpack.c.l.b16 %v260
      %v401 = vunpack.c.h.b16 %v260
      %v402 = vunpack.c.l.b16 %v261
      %v403 = vunpack.c.h.b16 %v261
      %v404 = vunpack.c.l.b16 %v262
      %v405 = vunpack.c.h.b16 %v262
      %v406 = vunpack.c.l.b16 %v263
      %v407 = vunpack.c.h.b16 %v263
      %v408 = vpack.c.b16 %v390, %v384
      %v409 = vpack.c.b16 %v391, %v385
      %v410 = vpack.c.b16 %v392, %v386
      %v411 = vpack.c.b16 %v393, %v387
      %v412 = vpack.c.b16 %v394, %v388
      %v413 = vpack.c.b16 %v395, %v389
      %v414 = vpack.c.b16 %v402, %v396
      %v415 = vpack.c.b16 %v403, %v397
      %v416 = vpack.c.b16 %v404, %v398
      %v417 = vpack.c.b16 %v405, %v399
      %v418 = vpack.c.b16 %v406, %v400
      %v419 = vpack.c.b16 %v407, %v401
      %v528 = vunpack.c.l.b16 %v264
      %v529 = vunpack.c.h.b16 %v264
      %v530 = vunpack.c.l.b16 %v265
      %v531 = vunpack.c.h.b16 %v265
      %v532 = vunpack.c.l.b16 %v266
      %v533 = vunpack.c.h.b16 %v266
      %v534 = vunpack.c.l.b16 %v267
      %v535 = vunpack.c.h.b16 %v267
      %v536 = vunpack.c.l.b16 %v268
      %v537 = vunpack.c.h.b16 %v268
      %v538 = vunpack.c.l.b16 %v269
      %v539 = vunpack.c.h.b16 %v269
      %v540 = vunpack.c.l.b16 %v270
      %v541 = vunpack.c.h.b16 %v270
      %v542 = vunpack.c.l.b16 %v271
      %v543 = vunpack.c.h.b16 %v271
      %v544 = vunpack.c.l.b16 %v272
      %v545 = vunpack.c.h.b16 %v272
      %v546 = vunpack.c.l.b16 %v273
      %v547 = vunpack.c.h.b16 %v273
      %v548 = vunpack.c.l.b16 %v274
      %v549 = vunpack.c.h.b16 %v274
      %v550 = vunpack.c.l.b16 %v275
      %v551 = vunpack.c.h.b16 %v275
      %v552 = vunpack.c.l.b16 %v276
      %v553 = vunpack.c.h.b16 %v276
      %v554 = vunpack.c.l.b16 %v277
      %v555 = vunpack.c.h.b16 %v277
      %v556 = vunpack.c.l.b16 %v278
      %v557 = vunpack.c.h.b16 %v278
      %v558 = vunpack.c.l.b16 %v279
      %v559 = vunpack.c.h.b16 %v279
      %v560 = vunpack.c.l.b16 %v280
      %v561 = vunpack.c.h.b16 %v280
      %v562 = vunpack.c.l.b16 %v281
      %v563 = vunpack.c.h.b16 %v281
      %v564 = vunpack.c.l.b16 %v282
      %v565 = vunpack.c.h.b16 %v282
      %v566 = vunpack.c.l.b16 %v283
      %v567 = vunpack.c.h.b16 %v283
      %v568 = vunpack.c.l.b16 %v284
      %v569 = vunpack.c.h.b16 %v284
      %v570 = vunpack.c.l.b16 %v285
      %v571 = vunpack.c.h.b16 %v285
      %v572 = vunpack.c.l.b16 %v286
      %v573 = vunpack.c.h.b16 %v286
      %v574 = vunpack.c.l.b16 %v287
      %v575 = vunpack.c.h.b16 %v287
      %v576 = vunpack.c.l.b16 %v288
      %v577 = vunpack.c.h.b16 %v288
      %v578 = vunpack.c.l.b16 %v289
      %v579 = vunpack.c.h.b16 %v289
      %v580 = vunpack.c.l.b16 %v290
      %v581 = vunpack.c.h.b16 %v290
      %v582 = vunpack.c.l.b16 %v291
      %v583 = vunpack.c.h.b16 %v291
      %v584 = vunpack.c.l.b16 %v292
      %v585 = vunpack.c.h.b16 %v292
      %v586 = vunpack.c.l.b16 %v293
      %v587 = vunpack.c.h.b16 %v293
      %v588 = vunpack.c.l.b16 %v294
      %v589 = vunpack.c.h.b16 %v294
      %v590 = vunpack.c.l.b16 %v295
      %v591 = vunpack.c.h.b16 %v295
      %v592 = vunpack.c.l.b16 %v296
      %v593 = vunpack.c.h.b16 %v296
      %v594 = vunpack.c.l.b16 %v297
      %v595 = vunpack.c.h.b16 %v297
      %v596 = vunpack.c.l.b16 %v298
      %v597 = vunpack.c.h.b16 %v298
      %v598 = vunpack.c.l.b16 %v299
      %v599 = vunpack.c.h.b16 %v299
      %v600 = vunpack.c.l.b16 %v300
      %v601 = vunpack.c.h.b16 %v300
      %v602 = vunpack.c.l.b16 %v301
      %v603 = vunpack.c.h.b16 %v301
      %v604 = vunpack.c.l.b16 %v302
      %v605 = vunpack.c.h.b16 %v302
      %v606 = vunpack.c.l.b16 %v303
      %v607 = vunpack.c.h.b16 %v303
      %v608 = vunpack.c.l.b16 %v304
      %v609 = vunpack.c.h.b16 %v304
      %v610 = vunpack.c.l.b16 %v305
      %v611 = vunpack.c.h.b16 %v305
      %v612 = vunpack.c.l.b16 %v306
      %v613 = vunpack.c.h.b16 %v306
      %v614 = vunpack.c.l.b16 %v307
      %v615 = vunpack.c.h.b16 %v307
      %v616 = vunpack.c.l.b16 %v308
      %v617 = vunpack.c.h.b16 %v308
      %v618 = vunpack.c.l.b16 %v309
      %v619 = vunpack.c.h.b16 %v309
      %v620 = vunpack.c.l.b16 %v310
      %v621 = vunpack.c.h.b16 %v310
      %v622 = vunpack.c.l.b16 %v311
      %v623 = vunpack.c.h.b16 %v311
      %v624 = vunpack.c.l.b16 %v312
      %v625 = vunpack.c.h.b16 %v312
      %v626 = vunpack.c.l.b16 %v313
      %v627 = vunpack.c.h.b16 %v313
      %v628 = vunpack.c.l.b16 %v314
      %v629 = vunpack.c.h.b16 %v314
      %v630 = vunpack.c.l.b16 %v315
      %v631 = vunpack.c.h.b16 %v315
      %v632 = vunpack.c.l.b16 %v316
      %v633 = vunpack.c.h.b16 %v316
      %v634 = vunpack.c.l.b16 %v317
      %v635 = vunpack.c.h.b16 %v317
      %v636 = vunpack.c.l.b16 %v318
      %v637 = vunpack.c.h.b16 %v318
      %v638 = vunpack.c.l.b16 %v319
      %v639 = vunpack.c.h.b16 %v319
      %v640 = vunpack.c.l.b16 %v320
      %v641 = vunpack.c.h.b16 %v320
      %v642 = vunpack.c.l.b16 %v321
      %v643 = vunpack.c.h.b16 %v321
      %v644 = vunpack.c.l.b16 %v322
      %v645 = vunpack.c.h.b16 %v322
      %v646 = vunpack.c.l.b16 %v323
      %v647 = vunpack.c.h.b16 %v323
      %v648 = vunpack.c.l.b16 %v324
      %v649 = vunpack.c.h.b16 %v324
      %v650 = vunpack.c.l.b16 %v325
      %v651 = vunpack.c.h.b16 %v325
      %v652 = vunpack.c.l.b16 %v326
      %v653 = vunpack.c.h.b16 %v326
      %v654 = vunpack.c.l.b16 %v327
      %v655 = vunpack.c.h.b16 %v327
      %v656 = vunpack.c.l.b16 %v328
      %v657 = vunpack.c.h.b16 %v328
      %v658 = vunpack.c.l.b16 %v329
      %v659 = vunpack.c.h.b16 %v329
      %v660 = vunpack.c.l.b16 %v330
      %v661 = vunpack.c.h.b16 %v330
      %v662 = vunpack.c.l.b16 %v331
      %v663 = vunpack.c.h.b16 %v331
      %v664 = vunpack.c.l.b16 %v332
      %v665 = vunpack.c.h.b16 %v332
      %v666 = vunpack.c.l.b16 %v333
      %v667 = vunpack.c.h.b16 %v333
      %v668 = vunpack.c.l.b16 %v334
      %v669 = vunpack.c.h.b16 %v334
      %v670 = vunpack.c.l.b16 %v335
      %v671 = vunpack.c.h.b16 %v335
      %v672 = vunpack.c.l.b16 %v336
      %v673 = vunpack.c.h.b16 %v336
      %v674 = vunpack.c.l.b16 %v337
      %v675 = vunpack.c.h.b16 %v337
      %v676 = vunpack.c.l.b16 %v338
      %v677 = vunpack.c.h.b16 %v338
      %v678 = vunpack.c.l.b16 %v339
      %v679 = vunpack.c.h.b16 %v339
      %v680 = vunpack.c.l.b16 %v340
      %v681 = vunpack.c.h.b16 %v340
      %v682 = vunpack.c.l.b16 %v341
      %v683 = vunpack.c.h.b16 %v341
      %v684 = vunpack.c.l.b16 %v342
      %v685 = vunpack.c.h.b16 %v342
      %v686 = vunpack.c.l.b16 %v343
      %v687 = vunpack.c.h.b16 %v343
      %v688 = vunpack.c.l.b16 %v344
      %v689 = vunpack.c.h.b16 %v344
      %v690 = vunpack.c.l.b16 %v345
      %v691 = vunpack.c.h.b16 %v345
      %v692 = vunpack.c.l.b16 %v346
      %v693 = vunpack.c.h.b16 %v346
      %v694 = vunpack.c.l.b16 %v347
      %v695 = vunpack.c.h.b16 %v347
      %v696 = vunpack.c.l.b16 %v348
      %v697 = vunpack.c.h.b16 %v348
      %v698 = vunpack.c.l.b16 %v349
      %v699 = vunpack.c.h.b16 %v349
      %v700 = vunpack.c.l.b16 %v350
      %v701 = vunpack.c.h.b16 %v350
      %v702 = vunpack.c.l.b16 %v351
      %v703 = vunpack.c.h.b16 %v351
      %v704 = vunpack.c.l.b16 %v352
      %v705 = vunpack.c.h.b16 %v352
      %v706 = vunpack.c.l.b16 %v353
      %v707 = vunpack.c.h.b16 %v353
      %v708 = vunpack.c.l.b16 %v354
      %v709 = vunpack.c.h.b16 %v354
      %v710 = vunpack.c.l.b16 %v355
      %v711 = vunpack.c.h.b16 %v355
      %v712 = vunpack.c.l.b16 %v356
      %v713 = vunpack.c.h.b16 %v356
      %v714 = vunpack.c.l.b16 %v357
      %v715 = vunpack.c.h.b16 %v357
      %v716 = vunpack.c.l.b16 %v358
      %v717 = vunpack.c.h.b16 %v358
      %v718 = vunpack.c.l.b16 %v359
      %v719 = vunpack.c.h.b16 %v359
      %v720 = vpack.c.b16 %v530, %v528
      %v721 = vpack.c.b16 %v531, %v529
      %v722 = vpack.c.b16 %v534, %v532
      %v723 = vpack.c.b16 %v535, %v533
      %v724 = vpack.c.b16 %v538, %v536
      %v725 = vpack.c.b16 %v539, %v537
      %v726 = vpack.c.b16 %v542, %v540
      %v727 = vpack.c.b16 %v543, %v541
      %v728 = vpack.c.b16 %v546, %v544
      %v729 = vpack.c.b16 %v547, %v545
      %v730 = vpack.c.b16 %v550, %v548
      %v731 = vpack.c.b16 %v551, %v549
      %v732 = vpack.c.b16 %v554, %v552
      %v733 = vpack.c.b16 %v555, %v553
      %v734 = vpack.c.b16 %v558, %v556
      %v735 = vpack.c.b16 %v559, %v557
      %v736 = vpack.c.b16 %v562, %v560
      %v737 = vpack.c.b16 %v563, %v561
      %v738 = vpack.c.b16 %v566, %v564
      %v739 = vpack.c.b16 %v567, %v565
      %v740 = vpack.c.b16 %v570, %v568
      %v741 = vpack.c.b16 %v571, %v569
      %v742 = vpack.c.b16 %v574, %v572
      %v743 = vpack.c.b16 %v575, %v573
      %v744 = vpack.c.b16 %v578, %v576
      %v745 = vpack.c.b16 %v579, %v577
      %v746 = vpack.c.b16 %v582, %v580
      %v747 = vpack.c.b16 %v583, %v581
      %v748 = vpack.c.b16 %v586, %v584
      %v749 = vpack.c.b16 %v587, %v585
      %v750 = vpack.c.b16 %v590, %v588
      %v751 = vpack.c.b16 %v591, %v589
      %v752 = vpack.c.b16 %v594, %v592
      %v753 = vpack.c.b16 %v595, %v593
      %v754 = vpack.c.b16 %v598, %v596
      %v755 = vpack.c.b16 %v599, %v597
      %v756 = vpack.c.b16 %v602, %v600
      %v757 = vpack.c.b16 %v603, %v601
      %v758 = vpack.c.b16 %v606, %v604
      %v759 = vpack.c.b16 %v607, %v605
      %v760 = vpack.c.b16 %v610, %v608
      %v761 = vpack.c.b16 %v611, %v609
      %v762 = vpack.c.b16 %v614, %v612
      %v763 = vpack.c.b16 %v615, %v613
      %v764 = vpack.c.b16 %v618, %v616
      %v765 = vpack.c.b16 %v619, %v617
      %v766 = vpack.c.b16 %v622, %v620
      %v767 = vpack.c.b16 %v623, %v621
      %v768 = vpack.c.b16 %v626, %v624
      %v769 = vpack.c.b16 %v627, %v625
      %v770 = vpack.c.b16 %v630, %v628
      %v771 = vpack.c.b16 %v631, %v629
      %v772 = vpack.c.b16 %v634, %v632
      %v773 = vpack.c.b16 %v635, %v633
      %v774 = vpack.c.b16 %v638, %v636
      %v775 = vpack.c.b16 %v639, %v637
      %v776 = vpack.c.b16 %v642, %v640
      %v777 = vpack.c.b16 %v643, %v641
      %v778 = vpack.c.b16 %v646, %v644
      %v779 = vpack.c.b16 %v647, %v645
      %v780 = vpack.c.b16 %v650, %v648
      %v781 = vpack.c.b16 %v651, %v649
      %v782 = vpack.c.b16 %v654, %v652
      %v783 = vpack.c.b16 %v655, %v653
      %v784 = vpack.c.b16 %v658, %v656
      %v785 = vpack.c.b16 %v659, %v657
      %v786 = vpack.c.b16 %v662, %v660
      %v787 = vpack.c.b16 %v663, %v661
      %v788 = vpack.c.b16 %v666, %v664
      %v789 = vpack.c.b16 %v667, %v665
      %v790 = vpack.c.b16 %v670, %v668
      %v791 = vpack.c.b16 %v671, %v669
      %v792 = vpack.c.b16 %v674, %v672
      %v793 = vpack.c.b16 %v675, %v673
      %v794 = vpack.c.b16 %v678, %v676
      %v795 = vpack.c.b16 %v679, %v677
      %v796 = vpack.c.b16 %v682, %v680
      %v797 = vpack.c.b16 %v683, %v681
      %v798 = vpack.c.b16 %v686, %v684
      %v799 = vpack.c.b16 %v687, %v685
      %v800 = vpack.c.b16 %v690, %v688
      %v801 = vpack.c.b16 %v691, %v689
      %v802 = vpack.c.b16 %v694, %v692
      %v803 = vpack.c.b16 %v695, %v693
      %v804 = vpack.c.b16 %v698, %v696
      %v805 = vpack.c.b16 %v699, %v697
      %v806 = vpack.c.b16 %v702, %v700
      %v807 = vpack.c.b16 %v703, %v701
      %v808 = vpack.c.b16 %v706, %v704
      %v809 = vpack.c.b16 %v707, %v705
      %v810 = vpack.c.b16 %v710, %v708
      %v811 = vpack.c.b16 %v711, %v709
      %v812 = vpack.c.b16 %v714, %v712
      %v813 = vpack.c.b16 %v715, %v713
      %v814 = vpack.c.b16 %v718, %v716
      %v815 = vpack.c.b16 %v719, %v717
      %912 = vmatprep.subr.bf16.mxu0 %v721
      %913 = vmatpush1.bf16.msra.mxu0 %v720
      %914 = vmatprep.subr.bf16.mxu0 %v723
      %915 = vmatpush1.bf16.msra.mxu0 %v722
      %916 = vmatprep.subr.bf16.mxu0 %v725
      %917 = vmatpush1.bf16.msra.mxu0 %v724
      %918 = vmatprep.subr.bf16.mxu0 %v727
      %919 = vmatpush1.bf16.msra.mxu0 %v726
      %920 = vmatprep.subr.bf16.mxu0 %v729
      %921 = vmatpush1.bf16.msra.mxu0 %v728
      %922 = vmatprep.subr.bf16.mxu0 %v731
      %923 = vmatpush1.bf16.msra.mxu0 %v730
      %924 = vmatprep.subr.bf16.mxu0 %v733
      %925 = vmatpush1.bf16.msra.mxu0 %v732
      %926 = vmatprep.subr.bf16.mxu0 %v735
      %927 = vmatpush1.bf16.msra.mxu0 %v734
      %928 = vmatprep.subr.bf16.mxu0 %v737
      %929 = vmatpush1.bf16.msra.mxu0 %v736
      %930 = vmatprep.subr.bf16.mxu0 %v739
      %931 = vmatpush1.bf16.msra.mxu0 %v738
      %932 = vmatprep.subr.bf16.mxu0 %v741
      %933 = vmatpush1.bf16.msra.mxu0 %v740
      %934 = vmatprep.subr.bf16.mxu0 %v743
      %935 = vmatpush1.bf16.msra.mxu0 %v742
      %936 = vmatprep.subr.bf16.mxu0 %v745
      %937 = vmatpush1.bf16.msra.mxu0 %v744
      %938 = vmatprep.subr.bf16.mxu0 %v747
      %939 = vmatpush1.bf16.msra.mxu0 %v746
      %940 = vmatprep.subr.bf16.mxu0 %v749
      %941 = vmatpush1.bf16.msra.mxu0 %v748
      %942 = vmatprep.subr.bf16.mxu0 %v751
      %943 = vmatpush1.bf16.msra.mxu0 %v750
      %944 = vmatprep.mubr.bf16.mxu0 %v409
      %945 = vmatmul.mubr.bf16.gmra.mrb[0].mxu0 %v408
      %v946 = vpop.f32.mrb[0].mxu0
      %v947 = vadd.f32 %v365, %v946
      %v948 = vpop.f32.mrb[0].mxu0
      %v949 = vadd.f32 %v369, %v948
      %v950 = vpop.f32.mrb[0].mxu0
      %v951 = vadd.f32 %v365, %v950
      %v952 = vpop.f32.mrb[0].mxu0
      %v953 = vadd.f32 %v369, %v952
      %954 = vmatprep.mubr.bf16.mxu0 %v415
      %955 = vmatmul.mubr.bf16.gmra.mrb[0].mxu0 %v414
      %v956 = vpop.f32.mrb[0].mxu0
      %v957 = vadd.f32 %v365, %v956
      %v958 = vpop.f32.mrb[0].mxu0
      %v959 = vadd.f32 %v369, %v958
      %v960 = vpop.f32.mrb[0].mxu0
      %v961 = vadd.f32 %v365, %v960
      %v962 = vpop.f32.mrb[0].mxu0
      %v963 = vadd.f32 %v369, %v962
      %964 = vdwg.mxu0
      %965 = vmatprep.subr.bf16.mxu0 %v753
      %966 = vmatpush1.bf16.msra.mxu0 %v752
      %967 = vmatprep.subr.bf16.mxu0 %v755
      %968 = vmatpush1.bf16.msra.mxu0 %v754
      %969 = vmatprep.subr.bf16.mxu0 %v757
      %970 = vmatpush1.bf16.msra.mxu0 %v756
      %971 = vmatprep.subr.bf16.mxu0 %v759
      %972 = vmatpush1.bf16.msra.mxu0 %v758
      %973 = vmatprep.subr.bf16.mxu0 %v761
      %974 = vmatpush1.bf16.msra.mxu0 %v760
      %975 = vmatprep.subr.bf16.mxu0 %v763
      %976 = vmatpush1.bf16.msra.mxu0 %v762
      %977 = vmatprep.subr.bf16.mxu0 %v765
      %978 = vmatpush1.bf16.msra.mxu0 %v764
      %979 = vmatprep.subr.bf16.mxu0 %v767
      %980 = vmatpush1.bf16.msra.mxu0 %v766
      %981 = vmatprep.subr.bf16.mxu0 %v769
      %982 = vmatpush1.bf16.msra.mxu0 %v768
      %983 = vmatprep.subr.bf16.mxu0 %v771
      %984 = vmatpush1.bf16.msra.mxu0 %v770
      %985 = vmatprep.subr.bf16.mxu0 %v773
      %986 = vmatpush1.bf16.msra.mxu0 %v772
      %987 = vmatprep.subr.bf16.mxu0 %v775
      %988 = vmatpush1.bf16.msra.mxu0 %v774
      %989 = vmatprep.subr.bf16.mxu0 %v777
      %990 = vmatpush1.bf16.msra.mxu0 %v776
      %991 = vmatprep.subr.bf16.mxu0 %v779
      %992 = vmatpush1.bf16.msra.mxu0 %v778
      %993 = vmatprep.subr.bf16.mxu0 %v781
      %994 = vmatpush1.bf16.msra.mxu0 %v780
      %995 = vmatprep.subr.bf16.mxu0 %v783
      %996 = vmatpush1.bf16.msra.mxu0 %v782
      %997 = vmatprep.mubr.bf16.mxu0 %v411
      %998 = vmatmul.mubr.bf16.gmra.mrb[0].mxu0 %v410
      %v999 = vpop.f32.mrb[0].mxu0
      %v1000 = vadd.f32 %v947, %v999
      %v1001 = vpop.f32.mrb[0].mxu0
      %v1002 = vadd.f32 %v949, %v1001
      %v1003 = vpop.f32.mrb[0].mxu0
      %v1004 = vadd.f32 %v951, %v1003
      %v1005 = vpop.f32.mrb[0].mxu0
      %v1006 = vadd.f32 %v953, %v1005
      %1007 = vmatprep.mubr.bf16.mxu0 %v417
      %1008 = vmatmul.mubr.bf16.gmra.mrb[0].mxu0 %v416
      %v1009 = vpop.f32.mrb[0].mxu0
      %v1010 = vadd.f32 %v957, %v1009
      %v1011 = vpop.f32.mrb[0].mxu0
      %v1012 = vadd.f32 %v959, %v1011
      %v1013 = vpop.f32.mrb[0].mxu0
      %v1014 = vadd.f32 %v961, %v1013
      %v1015 = vpop.f32.mrb[0].mxu0
      %v1016 = vadd.f32 %v963, %v1015
      %1017 = vdwg.mxu0
      %1018 = vmatprep.subr.bf16.mxu0 %v785
      %1019 = vmatpush1.bf16.msra.mxu0 %v784
      %1020 = vmatprep.subr.bf16.mxu0 %v787
      %1021 = vmatpush1.bf16.msra.mxu0 %v786
      %1022 = vmatprep.subr.bf16.mxu0 %v789
      %1023 = vmatpush1.bf16.msra.mxu0 %v788
      %1024 = vmatprep.subr.bf16.mxu0 %v791
      %1025 = vmatpush1.bf16.msra.mxu0 %v790
      %1026 = vmatprep.subr.bf16.mxu0 %v793
      %1027 = vmatpush1.bf16.msra.mxu0 %v792
      %1028 = vmatprep.subr.bf16.mxu0 %v795
      %1029 = vmatpush1.bf16.msra.mxu0 %v794
      %1030 = vmatprep.subr.bf16.mxu0 %v797
      %1031 = vmatpush1.bf16.msra.mxu0 %v796
      %1032 = vmatprep.subr.bf16.mxu0 %v799
      %1033 = vmatpush1.bf16.msra.mxu0 %v798
      %1034 = vmatprep.subr.bf16.mxu0 %v801
      %1035 = vmatpush1.bf16.msra.mxu0 %v800
      %1036 = vmatprep.subr.bf16.mxu0 %v803
      %1037 = vmatpush1.bf16.msra.mxu0 %v802
      %1038 = vmatprep.subr.bf16.mxu0 %v805
      %1039 = vmatpush1.bf16.msra.mxu0 %v804
      %1040 = vmatprep.subr.bf16.mxu0 %v807
      %1041 = vmatpush1.bf16.msra.mxu0 %v806
      %1042 = vmatprep.subr.bf16.mxu0 %v809
      %1043 = vmatpush1.bf16.msra.mxu0 %v808
      %1044 = vmatprep.subr.bf16.mxu0 %v811
      %1045 = vmatpush1.bf16.msra.mxu0 %v810
      %1046 = vmatprep.subr.bf16.mxu0 %v813
      %1047 = vmatpush1.bf16.msra.mxu0 %v812
      %1048 = vmatprep.subr.bf16.mxu0 %v815
      %1049 = vmatpush1.bf16.msra.mxu0 %v814
      %1050 = vmatprep.mubr.bf16.mxu0 %v413
      %1051 = vmatmul.mubr.bf16.gmra.mrb[0].mxu0 %v412
      %v1052 = vpop.f32.mrb[0].mxu0
      %v1053 = vadd.f32 %v1000, %v1052
      %v1054 = vpop.f32.mrb[0].mxu0
      %v1055 = vadd.f32 %v1002, %v1054
      %v1056 = vpop.f32.mrb[0].mxu0
      %v1057 = vadd.f32 %v1004, %v1056
      %v1058 = vpop.f32.mrb[0].mxu0
      %v1059 = vadd.f32 %v1006, %v1058
      %1060 = vmatprep.mubr.bf16.mxu0 %v419
      %1061 = vmatmul.mubr.bf16.gmra.mrb[0].mxu0 %v418
      %v1062 = vpop.f32.mrb[0].mxu0
      %v1063 = vadd.f32 %v1010, %v1062
      %v1064 = vpop.f32.mrb[0].mxu0
      %v1065 = vadd.f32 %v1012, %v1064
      %v1066 = vpop.f32.mrb[0].mxu0
      %v1067 = vadd.f32 %v1014, %v1066
      %v1068 = vpop.f32.mrb[0].mxu0
      %v1069 = vadd.f32 %v1016, %v1068
      %1070 = vdwg.mxu0
      %v1071 = vsub.f32 0.0, %v1055
      %v1072 = vsub.f32 0.0, %v1059
      %v1073 = vsub.f32 0.0, %v1065
      %v1074 = vsub.f32 0.0, %v1069
      %v1075 = vmul.f32 %v1071, 1.442695
      %v1076 = vpow.pop %v1075
      %v1077 = vmul.f32 %v1072, 1.442695
      %v1078 = vpow.pop %v1077
      %v1079 = vmul.f32 %v1073, 1.442695
      %v1080 = vpow.pop %v1079
      %v1081 = vmul.f32 %v1074, 1.442695
      %v1082 = vpow.pop %v1081
      %v1083 = vadd.f32 %v1076, 1.0
      %v1084 = vadd.f32 %v1078, 1.0
      %v1085 = vadd.f32 %v1080, 1.0
      %v1086 = vadd.f32 %v1082, 1.0
      %v1087 = vrcp.pop %v1083
      %v1088 = vmul.f32 1.0, %v1087
      %v1089 = vrcp.pop %v1084
      %v1090 = vmul.f32 1.0, %v1089
      %v1091 = vrcp.pop %v1085
      %v1092 = vmul.f32 1.0, %v1091
      %v1093 = vrcp.pop %v1086
      %v1094 = vmul.f32 1.0, %v1093
      %v1095 = vmul.f32 %v1053, %v1088
      %v1096 = vmul.f32 %v1057, %v1090
      %v1097 = vmul.f32 %v1063, %v1092
      %v1098 = vmul.f32 %v1067, %v1094
      %v1099 = vadd.f32 %v1095, %v1096
      %v1100 = vadd.f32 %v1099, %v1097
      %v1101 = vadd.f32 %v1100, %v1098
      %v1102 = vrot.slane %v1101, 4
      %v1103 = vadd.f32 %v1101, %v1102
      %v1104 = vrot.slane %v1103, 2
      %v1105 = vadd.f32 %v1103, %v1104
      %v1106 = vrot.slane %v1105, 1
      %v1107 = vadd.f32 %v1105, %v1106
      %v1108 = vrcp.pop 32.0
      %v1109 = vmul.f32 %v1107, %v1108
      %v1110 = vsub.f32 %v1095, %v1109
      %v1111 = vsub.f32 %v1096, %v1109
      %v1112 = vsub.f32 %v1097, %v1109
      %v1113 = vsub.f32 %v1098, %v1109
      %v1114 = vmul.f32 %v1110, %v1110
      %v1115 = vmul.f32 %v1111, %v1111
      %v1116 = vmul.f32 %v1112, %v1112
      %v1117 = vmul.f32 %v1113, %v1113
      %v1118 = vadd.f32 %v1114, %v1115
      %v1119 = vadd.f32 %v1118, %v1116
      %v1120 = vadd.f32 %v1119, %v1117
      %v1121 = vrot.slane %v1120, 4
      %v1122 = vadd.f32 %v1120, %v1121
      %v1123 = vrot.slane %v1122, 2
      %v1124 = vadd.f32 %v1122, %v1123
      %v1125 = vrot.slane %v1124, 1
      %v1126 = vadd.f32 %v1124, %v1125
      %v1127 = vmul.f32 %v1126, %v1108
      %v1128 = vadd.f32 %v1127, 1e-05
      %v1129 = vrsqrt.pop %v1128
      %v1130 = vmul.f32 %v1110, %v1129
      %v1131 = vmul.f32 %v1111, %v1129
      %v1132 = vmul.f32 %v1112, %v1129
      %v1133 = vmul.f32 %v1113, %v1129
      %v1134 = vld [vmem:[%s3] sm:$0x1]
      %v1136 = vlaneseq
      %v1137 = vshrl.u32 %v1136, 7
      %v1138 = vsub.s32 0, %v1137
      %v1139 = vrot.slane %v1134, %v1138
      %v1141 = vmul.f32 %v1130, %v1139
      %v1142 = vmul.f32 %v1131, %v1139
      %v1143 = vmul.f32 %v1132, %v1139
      %v1144 = vmul.f32 %v1133, %v1139
      %v1145 = vld [vmem:[%s4] sm:$0x1]
      %v1147 = vlaneseq
      %v1148 = vshrl.u32 %v1147, 7
      %v1149 = vsub.s32 0, %v1148
      %v1150 = vrot.slane %v1145, %v1149
      %v1152 = vadd.f32 %v1141, %v1150
      %v1153 = vadd.f32 %v1142, %v1150
      %v1154 = vadd.f32 %v1143, %v1150
      %v1155 = vadd.f32 %v1144, %v1150
      %vm1156 = vcmp.ge.f32.partialorder %v1152, 0.0
      %vm1157 = vcmp.ge.f32.partialorder %v1153, 0.0
      %vm1158 = vcmp.ge.f32.partialorder %v1154, 0.0
      %vm1159 = vcmp.ge.f32.partialorder %v1155, 0.0
      %v1160 = vld [vmem:[%s5] sm:$0x1]
      %v1162 = vlaneseq
      %v1163 = vshrl.u32 %v1162, 7
      %v1164 = vsub.s32 0, %v1163
      %v1165 = vrot.slane %v1160, %v1164
      %v1167 = vmul.f32 %v1165, %v1152
      %v1168 = vmul.f32 %v1165, %v1153
      %v1169 = vmul.f32 %v1165, %v1154
      %v1170 = vmul.f32 %v1165, %v1155
      %v1171 = vsel %vm1156, %v1152, %v1167
      %v1172 = vsel %vm1157, %v1153, %v1168
      %v1173 = vsel %vm1158, %v1154, %v1169
      %v1174 = vsel %vm1159, %v1155, %v1170
      %1175 = vst [vmem:[%s251] sm:$0xff] %v1171
      %1176 = vst [vmem:[%s251 + $0x8] sm:$0xff] %v1172
      %1177 = vst [vmem:[%s251 + $0x10] sm:$0xff] %v1173
      %1178 = vst [vmem:[%s251 + $0x18] sm:$0xff] %v1174
      %p1179 = scmp.lt.s32.totalorder %s17, 1
      %s1180 = scalar_select %p1179, %s17, 1
      %s1181 = smul.addr %s1180, 4
      %s1182 = smul.addr %s1181, 8
      %s1183 = scalar_lea.vmem %s6, %s1182
      // Predicated region
      $region45: #{encoder_forward.9} parent=43 // pred_check
        %p1184 = pneg %p166
      $region46: #{encoder_forward.9} parent=43 // pred_check_branch
        %1186 = sbr.rel (%p1184) target = $region48
      $region47: #{encoder_forward.9} parent=43 // pred_region
        _
      $region48: #{encoder_forward.9} parent=43 // pred_fallthru
        _
    $region44: #{encoder_forward.9} parent=5 // pred_fallthru
      _
    %p1187 = scmp.le.s32.totalorder 2, %s12
    // Predicated region
    $region49: #{encoder_forward.9} parent=5 // pred_check
      %p1188 = pneg %p1187
    $region50: #{encoder_forward.9} parent=5 // pred_check_branch
      %1190 = sbr.rel (%p1188) target = $region52
    $region51: #{encoder_forward.9} parent=5 // pred_region
      %s1191 = ssub.s32 %s12, 2
      // Predicated region
      $region53: #{encoder_forward.9} parent=51 // pred_check
        %p1192 = pneg %p172
      $region54: #{encoder_forward.9} parent=51 // pred_check_branch
        %1194 = sbr.rel (%p1192) target = $region56
      $region55: #{encoder_forward.9} parent=51 // pred_region
        %p1195 = scmp.lt.s32.totalorder %s18, 1
        %s1196 = scalar_select %p1195, %s18, 1
        %s1197 = smul.addr %s1196, 4
        %s1198 = smul.addr %s1197, 8
        %s1199 = scalar_lea.vmem %s6, %s1198
      $region56: #{encoder_forward.9} parent=51 // pred_fallthru
        _
    $region52: #{encoder_forward.9} parent=5 // pred_fallthru
      _
  $region6: #{encoder_forward.9} parent=0 // loop_footer
    %s16 = sadd.s32 1, %s12
  $region7: #{encoder_forward.9} parent=0 // loop_footer_branch
    %11 = sbr.rel target = $region3
  $region8: #{encoder_forward.9} parent=0 // loop_exit
    _

</llo_original>
